<compile_context>
chip_gen: v7x
topology: tpu7x:2x2x1
jax: 0.10.0
libtpu: 0.0.40
codegen_flags: <defaults>
</compile_context>

<pallas_src>
import functools

import jax
import jax.numpy as jnp
import numpy as np
from jax.experimental import pallas as pl
from jax.experimental.pallas import tpu as pltpu

_LANE = 128


def _round_up(x, m):
    return (x + m - 1) // m * m


@functools.lru_cache(maxsize=1)
def _tile_budget():
    """Per-generation tile caps / budgets.  Guarded get_tpu_info fallback."""
    vmem = None
    try:
        vmem = int(getattr(pltpu.get_tpu_info(), "vmem_capacity_bytes"))
    except Exception:
        vmem = None  # AOT / CPU lowering: fall through to the conservative plan
    if vmem is not None and vmem >= (100 << 20):      # v5e / v6e: 128 MiB VMEM
        return dict(tm_max=512, tn_max=256, tk_max=512,
                    collapse_budget=24 << 20, vmem_limit=96 << 20)
    # v7x (64 MiB VMEM) or unknown generation: explicit 48 MiB scoped limit.
    return dict(tm_max=512, tn_max=256, tk_max=512,
                collapse_budget=16 << 20, vmem_limit=48 << 20)


def _pick_tile(total, cap):
    """Largest multiple of 128 <= cap that divides `total` (total % 128 == 0)."""
    t = max(128, min(cap, total) // _LANE * _LANE)
    while total % t:
        t -= _LANE
    return t


# ----------------------------------------------------------------------------
# Pallas kernels
# ----------------------------------------------------------------------------
def _mm_kernel(a_ref, b_ref, s_ref, o_ref, *, relu):
    """out = [relu](A @ B + shift), whole K in one block, single store."""
    acc = jnp.dot(a_ref[...], b_ref[...], preferred_element_type=jnp.float32)
    acc = acc + s_ref[...]
    if relu:
        acc = jnp.maximum(acc, 0.0)
    o_ref[...] = acc.astype(o_ref.dtype)


def _mm_fused2_kernel(a_ref, b_ref, s_ref, w2_ref, s2_ref, o_ref, *, relu):
    """out = relu(A @ B + shift) @ W2 + shift2  (dec_cbr + dec_last fused)."""
    acc = jnp.dot(a_ref[...], b_ref[...], preferred_element_type=jnp.float32)
    acc = acc + s_ref[...]
    if relu:
        acc = jnp.maximum(acc, 0.0)
    acc = jnp.dot(acc.astype(w2_ref.dtype), w2_ref[...],
                  preferred_element_type=jnp.float32) + s2_ref[...]
    o_ref[...] = acc.astype(o_ref.dtype)


def _mm_kernel_ktiled(a_ref, b_ref, s_ref, o_ref, acc_ref, *, relu):
    """Fallback for very large K: f32 scratch accumulator, epilogue folded into
    the last K step (single output store).  Keep the reduction (k) axis last."""
    k = pl.program_id(2)

    @pl.when(k == 0)
    def _():
        acc_ref[...] = jnp.zeros_like(acc_ref)

    acc_ref[...] += jnp.dot(a_ref[...], b_ref[...],
                            preferred_element_type=jnp.float32)

    @pl.when(k == pl.num_programs(2) - 1)
    def _():
        out = acc_ref[...] + s_ref[...]
        if relu:
            out = jnp.maximum(out, 0.0)
        o_ref[...] = out.astype(o_ref.dtype)


# ----------------------------------------------------------------------------
# Weight packing (done ONCE at init / per upsample geometry)
# ----------------------------------------------------------------------------
def pack_weight(wmat, shift, weight_dtype=jnp.bfloat16):
    """Pad a (K, N) weight + (N,) shift to 128 boundaries; cast weights once."""
    wmat = jnp.asarray(wmat, jnp.float32)
    shift = jnp.asarray(shift, jnp.float32)
    K, N = wmat.shape
    Kp, Np = _round_up(K, _LANE), _round_up(N, _LANE)
    w_p = jnp.pad(wmat, ((0, Kp - K), (0, Np - N))).astype(weight_dtype)
    s_p = jnp.pad(shift[None, :], ((0, 0), (0, Np - N)))
    return dict(w=w_p, shift=s_p, K=K, N=N, Kp=Kp, Np=Np)


def _pack_np(wmat, shift):
    """Numpy (trace-safe, lru_cache-able) variant of pack_weight, f32 weights."""
    K, N = wmat.shape
    Kp, Np = _round_up(K, _LANE), _round_up(N, _LANE)
    w_p = np.pad(wmat.astype(np.float32), ((0, Kp - K), (0, Np - N)))
    s_p = np.pad(shift[None, :].astype(np.float32), ((0, 0), (0, Np - N)))
    return dict(w=w_p, shift=s_p, K=K, N=N, Kp=Kp, Np=Np)


# ----------------------------------------------------------------------------
# Fused matmul wrapper
# ----------------------------------------------------------------------------
def fused_matmul(a, packed, *, relu=False, out_dtype=jnp.bfloat16,
                 keep_n_pad=False, fuse2=None):
    """a:(M,K) @ packed (K,N) weights, fused shift/ReLU (+ optional second
    matmul `fuse2`) epilogue.  Output dtype `out_dtype`; padded output columns
    are kept when keep_n_pad (lets the next layer skip slice/re-pad glue)."""
    M, K = a.shape
    assert K == packed["K"], (K, packed["K"])
    Kp, Np, N = packed["Kp"], packed["Np"], packed["N"]

    budget = _tile_budget()
    w_dtype = packed["w"].dtype
    esize = jnp.dtype(w_dtype).itemsize
    out_esize = jnp.dtype(out_dtype).itemsize

    Mp = _round_up(M, 16)                       # bf16 sublane packing granularity
    tm = min(budget["tm_max"], Mp)
    Mp = _round_up(Mp, tm)
    tn = _pick_tile(Np, budget["tn_max"])

    # Collapse the K grid axis whenever one K-block fits the VMEM budget.
    ws = 2 * esize * (tm * Kp + Kp * tn) + 2 * out_esize * tm * tn
    collapse = ws <= budget["collapse_budget"]

    if fuse2 is not None and not (collapse and tn == Np and fuse2["Kp"] == Np):
        # Cannot fuse the second matmul here -> run the two layers separately.
        mid = fused_matmul(a, packed, relu=relu, out_dtype=jnp.bfloat16,
                           keep_n_pad=True)
        return fused_matmul(mid, fuse2, relu=False, out_dtype=out_dtype,
                            keep_n_pad=keep_n_pad)

    a_p = a.astype(w_dtype)
    if Mp != M or Kp != K:
        a_p = jnp.pad(a_p, ((0, Mp - M), (0, Kp - K)))

    vmem_limit = budget["vmem_limit"]

    if fuse2 is not None:
        Np2, N2 = fuse2["Np"], fuse2["N"]
        grid = (Mp // tm,)
        cost = pl.CostEstimate(
            flops=2 * Mp * Kp * Np + 2 * Mp * Np * Np2,
            transcendentals=0,
            bytes_accessed=(Mp * Kp + Kp * Np + Np + Np * Np2 + Np2) * esize
            + Mp * Np2 * out_esize)
        out = pl.pallas_call(
            functools.partial(_mm_fused2_kernel, relu=relu),
            out_shape=jax.ShapeDtypeStruct((Mp, Np2), out_dtype),
            grid_spec=pltpu.PrefetchScalarGridSpec(
                num_scalar_prefetch=0,
                grid=grid,
                in_specs=[
                    pl.BlockSpec((tm, Kp), lambda i: (i, 0)),
                    pl.BlockSpec((Kp, Np), lambda i: (0, 0)),
                    pl.BlockSpec((1, Np), lambda i: (0, 0)),
                    pl.BlockSpec((Np, Np2), lambda i: (0, 0)),
                    pl.BlockSpec((1, Np2), lambda i: (0, 0)),
                ],
                out_specs=pl.BlockSpec((tm, Np2), lambda i: (i, 0)),
            ),
            compiler_params=pltpu.CompilerParams(
                dimension_semantics=("parallel",),
                vmem_limit_bytes=vmem_limit),
            cost_estimate=cost,
        )(a_p, packed["w"], packed["shift"], fuse2["w"], fuse2["shift"])
        n_cols = Np2 if keep_n_pad else N2

    elif collapse:
        grid = (Mp // tm, Np // tn)
        cost = pl.CostEstimate(
            flops=2 * Mp * Np * Kp, transcendentals=0,
            bytes_accessed=(Mp * Kp + Kp * Np + Np) * esize + Mp * Np * out_esize)
        out = pl.pallas_call(
            functools.partial(_mm_kernel, relu=relu),
            out_shape=jax.ShapeDtypeStruct((Mp, Np), out_dtype),
            grid_spec=pltpu.PrefetchScalarGridSpec(
                num_scalar_prefetch=0,
                grid=grid,
                in_specs=[
                    pl.BlockSpec((tm, Kp), lambda i, j: (i, 0)),
                    pl.BlockSpec((Kp, tn), lambda i, j: (0, j)),
                    pl.BlockSpec((1, tn), lambda i, j: (0, j)),
                ],
                out_specs=pl.BlockSpec((tm, tn), lambda i, j: (i, j)),
            ),
            compiler_params=pltpu.CompilerParams(
                dimension_semantics=("parallel", "parallel"),
                vmem_limit_bytes=vmem_limit),
            cost_estimate=cost,
        )(a_p, packed["w"], packed["shift"])
        n_cols = Np if keep_n_pad else N

    else:
        tk = _pick_tile(Kp, budget["tk_max"])
        grid = (Mp // tm, Np // tn, Kp // tk)
        cost = pl.CostEstimate(
            flops=2 * Mp * Np * Kp, transcendentals=0,
            bytes_accessed=(Mp * Kp + Kp * Np + Np) * esize + Mp * Np * out_esize)
        out = pl.pallas_call(
            functools.partial(_mm_kernel_ktiled, relu=relu),
            out_shape=jax.ShapeDtypeStruct((Mp, Np), out_dtype),
            grid_spec=pltpu.PrefetchScalarGridSpec(
                num_scalar_prefetch=0,
                grid=grid,
                in_specs=[
                    pl.BlockSpec((tm, tk), lambda i, j, k: (i, k)),
                    pl.BlockSpec((tk, tn), lambda i, j, k: (k, j)),
                    pl.BlockSpec((1, tn), lambda i, j, k: (0, j)),
                ],
                out_specs=pl.BlockSpec((tm, tn), lambda i, j, k: (i, j)),
                scratch_shapes=[pltpu.VMEM((tm, tn), jnp.float32)],
            ),
            compiler_params=pltpu.CompilerParams(
                dimension_semantics=("parallel", "parallel", "arbitrary"),
                vmem_limit_bytes=vmem_limit),
            cost_estimate=cost,
        )(a_p, packed["w"], packed["shift"])
        n_cols = Np if keep_n_pad else N

    if Mp == M and n_cols == out.shape[1]:
        return out
    return out[:M, :n_cols]


# ----------------------------------------------------------------------------
# JAX glue: NHWC im2col, conv wrapper, bilinear upsample via matmul
# ----------------------------------------------------------------------------
def im2col_nhwc(x, kh, kw, stride, padding):
    """x: (N, H, W, C) -> (N*Ho*Wo, kh*kw*C), lane-dense (channels last)."""
    N, H, W, C = x.shape
    if kh == 1 and kw == 1 and stride == 1 and padding == 0:
        return x.reshape(N * H * W, C), H, W
    xp = jnp.pad(x, ((0, 0), (padding, padding), (padding, padding), (0, 0)))
    Ho = (H + 2 * padding - kh) // stride + 1
    Wo = (W + 2 * padding - kw) // stride + 1
    cols = []
    for i in range(kh):
        for j in range(kw):
            cols.append(xp[:, i:i + stride * Ho:stride,
                           j:j + stride * Wo:stride, :])
    col = jnp.concatenate(cols, axis=-1).reshape(N * Ho * Wo, kh * kw * C)
    return col, Ho, Wo


def conv2d_fused(x, layer, *, stride, padding, relu, out_dtype=jnp.bfloat16,
                 keep_n_pad=True, fuse2=None):
    """Conv2d on NHWC activations via im2col + fused Pallas matmul -> NHWC."""
    N = x.shape[0]
    col, Ho, Wo = im2col_nhwc(x, layer["kh"], layer["kw"], stride, padding)
    out = fused_matmul(col, layer, relu=relu, out_dtype=out_dtype,
                       keep_n_pad=keep_n_pad, fuse2=fuse2)
    return out.reshape(N, Ho, Wo, out.shape[-1])


def bilinear_matrix(out_size, in_size):
    """Row-stochastic interpolation matrix, align_corners=False (PyTorch default)."""
    i = np.arange(out_size)
    src = np.clip((i + 0.5) * in_size / out_size - 0.5, 0.0, in_size - 1)
    i0 = np.floor(src).astype(np.int64)
    i1 = np.minimum(i0 + 1, in_size - 1)
    w1 = (src - i0).astype(np.float32)
    w0 = 1.0 - w1
    Wm = np.zeros((out_size, in_size), dtype=np.float32)
    Wm[np.arange(out_size), i0] += w0
    Wm[np.arange(out_size), i1] += w1
    return Wm


@functools.lru_cache(maxsize=8)
def _kron_upsample_packed(h, w, H, W):
    """Pre-packed kron(Wh, Ww).T (f32, pure numpy -> safe to cache under jit)."""
    mat = np.kron(bilinear_matrix(H, h), bilinear_matrix(W, w)).T  # (h*w, H*W)
    return _pack_np(mat, np.zeros((H * W,), np.float32))


@functools.lru_cache(maxsize=16)
def _axis_upsample_packed(out_size, in_size):
    return _pack_np(bilinear_matrix(out_size, in_size).T,
                    np.zeros((out_size,), np.float32))


def bilinear_upsample(logits_nhwc, out_hw, max_kron_elems=1 << 22):
    """logits: (N, h, w, C) -> (N, C, H, W) bilinear (align_corners=False).
    Upsample weights are kept in f32 (tiny) for accuracy vs the f32 reference."""
    N, h, w, C = logits_nhwc.shape
    H, W = out_hw
    x = logits_nhwc.astype(jnp.float32).transpose(0, 3, 1, 2)     # (N, C, h, w)
    if (h, w) == (H, W):
        return x
    if h * w * H * W <= max_kron_elems:
        # Single fused matmul: (N*C, h*w) @ kron(Wh, Ww).T -> (N*C, H*W)
        pk = _kron_upsample_packed(h, w, H, W)
        y = fused_matmul(x.reshape(N * C, h * w), pk, relu=False,
                         out_dtype=jnp.float32, keep_n_pad=False)
        return y.reshape(N, C, H, W)
    # Separable two-pass fallback for large images (kron matrix would be huge).
    pw = _axis_upsample_packed(W, w)
    ph = _axis_upsample_packed(H, h)
    y = fused_matmul(x.reshape(N * C * h, w), pw, relu=False,
                     out_dtype=jnp.float32, keep_n_pad=False)       # (N*C*h, W)
    y = y.reshape(N, C, h, W).transpose(0, 1, 3, 2)                 # (N, C, W, h)
    z = fused_matmul(y.reshape(N * C * W, h), ph, relu=False,
                     out_dtype=jnp.float32, keep_n_pad=False)       # (N*C*W, H)
    return z.reshape(N, C, W, H).transpose(0, 1, 3, 2)


# ----------------------------------------------------------------------------
# Parameter construction (deterministic, synthetic).  BN folded into weights /
# shift; Cin padded to the previous layer's padded channel count so activations
# stay channel-padded between layers with no slice/re-pad glue.
# ----------------------------------------------------------------------------
def _wmat_nhwc(w, cin_pad):
    """(Cout, Cin, kh, kw) -> (kh*kw*cin_pad, Cout), matching im2col ordering."""
    cout, cin, kh, kw = w.shape
    if cin_pad > cin:
        w = jnp.pad(w, ((0, 0), (0, cin_pad - cin), (0, 0), (0, 0)))
    return w.transpose(2, 3, 1, 0).reshape(kh * kw * cin_pad, cout)


def make_conv_bn_layer(key, cin, cout, k, cin_pad=None, eps=1e-5):
    cin_pad = cin if cin_pad is None else cin_pad
    k1, k2, k3, k4, k5 = jax.random.split(key, 5)
    fan_in = cin * k * k
    w = jax.random.normal(k1, (cout, cin, k, k), jnp.float32) / np.sqrt(fan_in)
    gamma = 1.0 + 0.1 * jax.random.normal(k2, (cout,), jnp.float32)
    beta = 0.1 * jax.random.normal(k3, (cout,), jnp.float32)
    mean = 0.1 * jax.random.normal(k4, (cout,), jnp.float32)
    var = 1.0 + 0.1 * jnp.abs(jax.random.normal(k5, (cout,), jnp.float32))
    scale = gamma / jnp.sqrt(var + eps)
    shift = beta - mean * scale
    wmat = _wmat_nhwc(w, cin_pad) * scale[None, :]   # fold BN scale into weights
    layer = pack_weight(wmat, shift)                 # conv bias=False before BN
    layer.update(kh=k, kw=k)
    return layer


def make_conv_layer(key, cin, cout, k, cin_pad=None):
    cin_pad = cin if cin_pad is None else cin_pad
    k1, k2 = jax.random.split(key)
    fan_in = cin * k * k
    w = jax.random.normal(k1, (cout, cin, k, k), jnp.float32) / np.sqrt(fan_in)
    b = 0.1 * jax.random.normal(k2, (cout,), jnp.float32)
    layer = pack_weight(_wmat_nhwc(w, cin_pad), b)   # bias folded into shift
    layer.update(kh=k, kw=k)
    return layer


def init_params(key, num_classes, fc_dim=512):
    ks = jax.random.split(key, 5)
    enc1 = make_conv_bn_layer(ks[0], 3, 64, 3, cin_pad=3)
    enc2 = make_conv_bn_layer(ks[1], 64, 128, 3, cin_pad=enc1["Np"])
    enc3 = make_conv_bn_layer(ks[2], 128, fc_dim, 3, cin_pad=enc2["Np"])
    dec_cbr = make_conv_bn_layer(ks[3], fc_dim, fc_dim // 4, 3, cin_pad=enc3["Np"])
    dec_last = make_conv_layer(ks[4], fc_dim // 4, num_classes, 1,
                               cin_pad=dec_cbr["Np"])
    return dict(enc1=enc1, enc2=enc2, enc3=enc3,
                dec_cbr=dec_cbr, dec_last=dec_last)


# ----------------------------------------------------------------------------
# Forward pass (mirrors MITSemSegNet.forward: logits at input resolution, NCHW)
# ----------------------------------------------------------------------------
def mit_semseg_forward(params, x_nchw):
    seg_size = x_nchw.shape[-2:]
    h = x_nchw.transpose(0, 2, 3, 1)                   # NCHW -> NHWC once
    # encoder (bf16 activations, channel padding retained between layers)
    h = conv2d_fused(h, params["enc1"], stride=2, padding=1, relu=True)
    h = conv2d_fused(h, params["enc2"], stride=2, padding=1, relu=True)
    h = conv2d_fused(h, params["enc3"], stride=1, padding=1, relu=True)
    # decoder (C1): conv+BN+ReLU with the 1x1 classifier fused into the epilogue
    logits = conv2d_fused(h, params["dec_cbr"], stride=1, padding=1, relu=True,
                          out_dtype=jnp.float32, keep_n_pad=False,
                          fuse2=params["dec_last"])
    return bilinear_upsample(logits, seg_size)         # pred_dict['logits'], NCHW


if __name__ == "__main__":
    num_classes = 5
    key = jax.random.PRNGKey(0)
    kp, kx = jax.random.split(key)
    params = init_params(kp, num_classes)
    x = jax.random.normal(kx, (2, 3, 16, 16), jnp.float32)   # NCHW, RGB

    fwd = jax.jit(lambda inp: mit_semseg_forward(params, inp))
    logits = jax.block_until_ready(fwd(x))

    assert logits.shape == (2, num_classes, 16, 16), logits.shape
    assert bool(jnp.all(jnp.isfinite(logits)))
    print("KERNEL_OK")
</pallas_src>

<mosaic_0001>
module attributes {stable_mosaic.version = 11 : i64} {
  func.func @_mm_kernel(%arg0: i32, %arg1: i32, %arg2: memref<128x128xbf16, #tpu.memory_space<vmem>>, %arg3: memref<128x128xbf16, #tpu.memory_space<vmem>>, %arg4: memref<1x128xf32, #tpu.memory_space<vmem>>, %arg5: memref<128x128xbf16, #tpu.memory_space<vmem>>) attributes {dimension_semantics = [#tpu.dimension_semantics<parallel>, #tpu.dimension_semantics<parallel>], iteration_bounds = array<i64: 1, 1>, scalar_prefetch = 0 : i64, scratch_operands = 0 : i64, tpu.core_type = #tpu.core_type<tc>, window_params = [{transform_indices = @transform_0, window_bounds = array<i64: 128, 128>}, {transform_indices = @transform_1, window_bounds = array<i64: 128, 128>}, {transform_indices = @transform_2, window_bounds = array<i64: 1, 128>}, {transform_indices = @transform_3, window_bounds = array<i64: 128, 128>}]} {
    %c0 = arith.constant 0 : index
    %c0_0 = arith.constant 0 : index
    %0 = vector.load %arg2[%c0, %c0_0] : memref<128x128xbf16, #tpu.memory_space<vmem>>, vector<128x128xbf16>
    %c0_1 = arith.constant 0 : index
    %c0_2 = arith.constant 0 : index
    %1 = vector.load %arg3[%c0_1, %c0_2] : memref<128x128xbf16, #tpu.memory_space<vmem>>, vector<128x128xbf16>
    %cst = arith.constant dense<0.000000e+00> : vector<128x128xf32>
    %2 = tpu.matmul %0, %1, %cst {dimension_numbers = #tpu.dot_dimension_numbers<[1], [0], [0], [1], [0, 0, 1, 1], [], []>} : vector<128x128xbf16>, vector<128x128xbf16>, vector<128x128xf32> -> vector<128x128xf32>
    %c0_3 = arith.constant 0 : index
    %c0_4 = arith.constant 0 : index
    %3 = vector.load %arg4[%c0_3, %c0_4] : memref<1x128xf32, #tpu.memory_space<vmem>>, vector<1x128xf32>
    %4 = vector.broadcast %3 : vector<1x128xf32> to vector<128x128xf32>
    %5 = arith.addf %2, %4 : vector<128x128xf32>
    %cst_5 = arith.constant 0.000000e+00 : f32
    %6 = vector.broadcast %cst_5 : f32 to vector<128x128xf32>
    %7 = arith.maximumf %5, %6 : vector<128x128xf32>
    %8 = arith.truncf %7 : vector<128x128xf32> to vector<128x128xbf16>
    %c0_6 = arith.constant 0 : index
    %c0_7 = arith.constant 0 : index
    %9 = vector.load %arg5[%c0_6, %c0_7] : memref<128x128xbf16, #tpu.memory_space<vmem>>, vector<128x128xbf16>
    tpu.vector_store %arg5[%c0_6, %c0_7], %8 {strides = array<i32>} : memref<128x128xbf16, #tpu.memory_space<vmem>>, vector<128x128xbf16>,
    return
  }
  func.func @transform_0(%arg0: i32, %arg1: i32) -> (i32, i32) {
    %c0_i32 = arith.constant 0 : i32
    %c0_i32_0 = arith.constant 0 : i32
    return %arg0, %c0_i32 : i32, i32
  }
  func.func @transform_1(%arg0: i32, %arg1: i32) -> (i32, i32) {
    %c0_i32 = arith.constant 0 : i32
    %c0_i32_0 = arith.constant 0 : i32
    return %c0_i32, %arg1 : i32, i32
  }
  func.func @transform_2(%arg0: i32, %arg1: i32) -> (i32, i32) {
    %c0_i32 = arith.constant 0 : i32
    %c0_i32_0 = arith.constant 0 : i32
    return %c0_i32, %arg1 : i32, i32
  }
  func.func @transform_3(%arg0: i32, %arg1: i32) -> (i32, i32) {
    %c0_i32 = arith.constant 0 : i32
    return %arg0, %arg1 : i32, i32
  }
}

module attributes {stable_mosaic.version = 11 : i64} {
  func.func @_mm_kernel(%arg0: i32, %arg1: i32, %arg2: memref<32x1152xbf16, #tpu.memory_space<vmem>>, %arg3: memref<1152x128xbf16, #tpu.memory_space<vmem>>, %arg4: memref<1x128xf32, #tpu.memory_space<vmem>>, %arg5: memref<32x128xbf16, #tpu.memory_space<vmem>>) attributes {dimension_semantics = [#tpu.dimension_semantics<parallel>, #tpu.dimension_semantics<parallel>], iteration_bounds = array<i64: 1, 1>, scalar_prefetch = 0 : i64, scratch_operands = 0 : i64, tpu.core_type = #tpu.core_type<tc>, window_params = [{transform_indices = @transform_0, window_bounds = array<i64: 32, 1152>}, {transform_indices = @transform_1, window_bounds = array<i64: 1152, 128>}, {transform_indices = @transform_2, window_bounds = array<i64: 1, 128>}, {transform_indices = @transform_3, window_bounds = array<i64: 32, 128>}]} {
    %c0 = arith.constant 0 : index
    %c0_0 = arith.constant 0 : index
    %0 = vector.load %arg2[%c0, %c0_0] : memref<32x1152xbf16, #tpu.memory_space<vmem>>, vector<32x1152xbf16>
    %c0_1 = arith.constant 0 : index
    %c0_2 = arith.constant 0 : index
    %1 = vector.load %arg3[%c0_1, %c0_2] : memref<1152x128xbf16, #tpu.memory_space<vmem>>, vector<1152x128xbf16>
    %cst = arith.constant dense<0.000000e+00> : vector<32x128xf32>
    %2 = tpu.matmul %0, %1, %cst {dimension_numbers = #tpu.dot_dimension_numbers<[1], [0], [0], [1], [0, 0, 1, 1], [], []>} : vector<32x1152xbf16>, vector<1152x128xbf16>, vector<32x128xf32> -> vector<32x128xf32>
    %c0_3 = arith.constant 0 : index
    %c0_4 = arith.constant 0 : index
    %3 = vector.load %arg4[%c0_3, %c0_4] : memref<1x128xf32, #tpu.memory_space<vmem>>, vector<1x128xf32>
    %4 = vector.broadcast %3 : vector<1x128xf32> to vector<32x128xf32>
    %5 = arith.addf %2, %4 : vector<32x128xf32>
    %cst_5 = arith.constant 0.000000e+00 : f32
    %6 = vector.broadcast %cst_5 : f32 to vector<32x128xf32>
    %7 = arith.maximumf %5, %6 : vector<32x128xf32>
    %8 = arith.truncf %7 : vector<32x128xf32> to vector<32x128xbf16>
    %c0_6 = arith.constant 0 : index
    %c0_7 = arith.constant 0 : index
    %9 = vector.load %arg5[%c0_6, %c0_7] : memref<32x128xbf16, #tpu.memory_space<vmem>>, vector<32x128xbf16>
    tpu.vector_store %arg5[%c0_6, %c0_7], %8 {strides = array<i32>} : memref<32x128xbf16, #tpu.memory_space<vmem>>, vector<32x128xbf16>,
    return
  }
  func.func @transform_0(%arg0: i32, %arg1: i32) -> (i32, i32) {
    %c0_i32 = arith.constant 0 : i32
    %c0_i32_0 = arith.constant 0 : i32
    return %arg0, %c0_i32 : i32, i32
  }
  func.func @transform_1(%arg0: i32, %arg1: i32) -> (i32, i32) {
    %c0_i32 = arith.constant 0 : i32
    %c0_i32_0 = arith.constant 0 : i32
    return %c0_i32, %arg1 : i32, i32
  }
  func.func @transform_2(%arg0: i32, %arg1: i32) -> (i32, i32) {
    %c0_i32 = arith.constant 0 : i32
    %c0_i32_0 = arith.constant 0 : i32
    return %c0_i32, %arg1 : i32, i32
  }
  func.func @transform_3(%arg0: i32, %arg1: i32) -> (i32, i32) {
    %c0_i32 = arith.constant 0 : i32
    return %arg0, %arg1 : i32, i32
  }
}

module attributes {stable_mosaic.version = 11 : i64} {
  func.func @_mm_kernel(%arg0: i32, %arg1: i32, %arg2: memref<32x1152xbf16, #tpu.memory_space<vmem>>, %arg3: memref<1152x256xbf16, #tpu.memory_space<vmem>>, %arg4: memref<1x256xf32, #tpu.memory_space<vmem>>, %arg5: memref<32x256xbf16, #tpu.memory_space<vmem>>) attributes {dimension_semantics = [#tpu.dimension_semantics<parallel>, #tpu.dimension_semantics<parallel>], iteration_bounds = array<i64: 1, 2>, scalar_prefetch = 0 : i64, scratch_operands = 0 : i64, tpu.core_type = #tpu.core_type<tc>, window_params = [{transform_indices = @transform_0, window_bounds = array<i64: 32, 1152>}, {transform_indices = @transform_1, window_bounds = array<i64: 1152, 256>}, {transform_indices = @transform_2, window_bounds = array<i64: 1, 256>}, {transform_indices = @transform_3, window_bounds = array<i64: 32, 256>}]} {
    %c0 = arith.constant 0 : index
    %c0_0 = arith.constant 0 : index
    %0 = vector.load %arg2[%c0, %c0_0] : memref<32x1152xbf16, #tpu.memory_space<vmem>>, vector<32x1152xbf16>
    %c0_1 = arith.constant 0 : index
    %c0_2 = arith.constant 0 : index
    %1 = vector.load %arg3[%c0_1, %c0_2] : memref<1152x256xbf16, #tpu.memory_space<vmem>>, vector<1152x256xbf16>
    %cst = arith.constant dense<0.000000e+00> : vector<32x256xf32>
    %2 = tpu.matmul %0, %1, %cst {dimension_numbers = #tpu.dot_dimension_numbers<[1], [0], [0], [1], [0, 0, 1, 1], [], []>} : vector<32x1152xbf16>, vector<1152x256xbf16>, vector<32x256xf32> -> vector<32x256xf32>
    %c0_3 = arith.constant 0 : index
    %c0_4 = arith.constant 0 : index
    %3 = vector.load %arg4[%c0_3, %c0_4] : memref<1x256xf32, #tpu.memory_space<vmem>>, vector<1x256xf32>
    %4 = vector.broadcast %3 : vector<1x256xf32> to vector<32x256xf32>
    %5 = arith.addf %2, %4 : vector<32x256xf32>
    %cst_5 = arith.constant 0.000000e+00 : f32
    %6 = vector.broadcast %cst_5 : f32 to vector<32x256xf32>
    %7 = arith.maximumf %5, %6 : vector<32x256xf32>
    %8 = arith.truncf %7 : vector<32x256xf32> to vector<32x256xbf16>
    %c0_6 = arith.constant 0 : index
    %c0_7 = arith.constant 0 : index
    %9 = vector.load %arg5[%c0_6, %c0_7] : memref<32x256xbf16, #tpu.memory_space<vmem>>, vector<32x256xbf16>
    tpu.vector_store %arg5[%c0_6, %c0_7], %8 {strides = array<i32>} : memref<32x256xbf16, #tpu.memory_space<vmem>>, vector<32x256xbf16>,
    return
  }
  func.func @transform_0(%arg0: i32, %arg1: i32) -> (i32, i32) {
    %c0_i32 = arith.constant 0 : i32
    %c0_i32_0 = arith.constant 0 : i32
    return %arg0, %c0_i32 : i32, i32
  }
  func.func @transform_1(%arg0: i32, %arg1: i32) -> (i32, i32) {
    %c0_i32 = arith.constant 0 : i32
    %c0_i32_0 = arith.constant 0 : i32
    return %c0_i32, %arg1 : i32, i32
  }
  func.func @transform_2(%arg0: i32, %arg1: i32) -> (i32, i32) {
    %c0_i32 = arith.constant 0 : i32
    %c0_i32_0 = arith.constant 0 : i32
    return %c0_i32, %arg1 : i32, i32
  }
  func.func @transform_3(%arg0: i32, %arg1: i32) -> (i32, i32) {
    %c0_i32 = arith.constant 0 : i32
    return %arg0, %arg1 : i32, i32
  }
}

module attributes {stable_mosaic.version = 11 : i64} {
  func.func @_mm_fused2_kernel(%arg0: i32, %arg1: memref<32x4608xbf16, #tpu.memory_space<vmem>>, %arg2: memref<4608x128xbf16, #tpu.memory_space<vmem>>, %arg3: memref<1x128xf32, #tpu.memory_space<vmem>>, %arg4: memref<128x128xbf16, #tpu.memory_space<vmem>>, %arg5: memref<1x128xf32, #tpu.memory_space<vmem>>, %arg6: memref<32x128xf32, #tpu.memory_space<vmem>>) attributes {dimension_semantics = [#tpu.dimension_semantics<parallel>], iteration_bounds = array<i64: 1>, scalar_prefetch = 0 : i64, scratch_operands = 0 : i64, tpu.core_type = #tpu.core_type<tc>, window_params = [{transform_indices = @transform_0, window_bounds = array<i64: 32, 4608>}, {pipeline_mode = #tpu.pipeline_mode<synchronous>, transform_indices = @transform_1, window_bounds = array<i64: 4608, 128>}, {pipeline_mode = #tpu.pipeline_mode<synchronous>, transform_indices = @transform_2, window_bounds = array<i64: 1, 128>}, {pipeline_mode = #tpu.pipeline_mode<synchronous>, transform_indices = @transform_3, window_bounds = array<i64: 128, 128>}, {pipeline_mode = #tpu.pipeline_mode<synchronous>, transform_indices = @transform_4, window_bounds = array<i64: 1, 128>}, {transform_indices = @transform_5, window_bounds = array<i64: 32, 128>}]} {
    %c0 = arith.constant 0 : index
    %c0_0 = arith.constant 0 : index
    %0 = vector.load %arg1[%c0, %c0_0] : memref<32x4608xbf16, #tpu.memory_space<vmem>>, vector<32x4608xbf16>
    %c0_1 = arith.constant 0 : index
    %c0_2 = arith.constant 0 : index
    %1 = vector.load %arg2[%c0_1, %c0_2] : memref<4608x128xbf16, #tpu.memory_space<vmem>>, vector<4608x128xbf16>
    %cst = arith.constant dense<0.000000e+00> : vector<32x128xf32>
    %2 = tpu.matmul %0, %1, %cst {dimension_numbers = #tpu.dot_dimension_numbers<[1], [0], [0], [1], [0, 0, 1, 1], [], []>} : vector<32x4608xbf16>, vector<4608x128xbf16>, vector<32x128xf32> -> vector<32x128xf32>
    %c0_3 = arith.constant 0 : index
    %c0_4 = arith.constant 0 : index
    %3 = vector.load %arg3[%c0_3, %c0_4] : memref<1x128xf32, #tpu.memory_space<vmem>>, vector<1x128xf32>
    %4 = vector.broadcast %3 : vector<1x128xf32> to vector<32x128xf32>
    %5 = arith.addf %2, %4 : vector<32x128xf32>
    %cst_5 = arith.constant 0.000000e+00 : f32
    %6 = vector.broadcast %cst_5 : f32 to vector<32x128xf32>
    %7 = arith.maximumf %5, %6 : vector<32x128xf32>
    %8 = arith.truncf %7 : vector<32x128xf32> to vector<32x128xbf16>
    %c0_6 = arith.constant 0 : index
    %c0_7 = arith.constant 0 : index
    %9 = vector.load %arg4[%c0_6, %c0_7] : memref<128x128xbf16, #tpu.memory_space<vmem>>, vector<128x128xbf16>
    %cst_8 = arith.constant dense<0.000000e+00> : vector<32x128xf32>
    %10 = tpu.matmul %8, %9, %cst_8 {dimension_numbers = #tpu.dot_dimension_numbers<[1], [0], [0], [1], [0, 0, 1, 1], [], []>} : vector<32x128xbf16>, vector<128x128xbf16>, vector<32x128xf32> -> vector<32x128xf32>
    %c0_9 = arith.constant 0 : index
    %c0_10 = arith.constant 0 : index
    %11 = vector.load %arg5[%c0_9, %c0_10] : memref<1x128xf32, #tpu.memory_space<vmem>>, vector<1x128xf32>
    %12 = vector.broadcast %11 : vector<1x128xf32> to vector<32x128xf32>
    %13 = arith.addf %10, %12 : vector<32x128xf32>
    %c0_11 = arith.constant 0 : index
    %c0_12 = arith.constant 0 : index
    %14 = vector.load %arg6[%c0_11, %c0_12] : memref<32x128xf32, #tpu.memory_space<vmem>>, vector<32x128xf32>
    tpu.vector_store %arg6[%c0_11, %c0_12], %13 {strides = array<i32>} : memref<32x128xf32, #tpu.memory_space<vmem>>, vector<32x128xf32>,
    return
  }
  func.func @transform_0(%arg0: i32) -> (i32, i32) {
    %c0_i32 = arith.constant 0 : i32
    %c0_i32_0 = arith.constant 0 : i32
    return %arg0, %c0_i32 : i32, i32
  }
  func.func @transform_1(%arg0: i32) -> (i32, i32) {
    %c0_i32 = arith.constant 0 : i32
    %c0_i32_0 = arith.constant 0 : i32
    %c0_i32_1 = arith.constant 0 : i32
    return %c0_i32, %c0_i32_0 : i32, i32
  }
  func.func @transform_2(%arg0: i32) -> (i32, i32) {
    %c0_i32 = arith.constant 0 : i32
    %c0_i32_0 = arith.constant 0 : i32
    %c0_i32_1 = arith.constant 0 : i32
    return %c0_i32, %c0_i32_0 : i32, i32
  }
  func.func @transform_3(%arg0: i32) -> (i32, i32) {
    %c0_i32 = arith.constant 0 : i32
    %c0_i32_0 = arith.constant 0 : i32
    %c0_i32_1 = arith.constant 0 : i32
    return %c0_i32, %c0_i32_0 : i32, i32
  }
  func.func @transform_4(%arg0: i32) -> (i32, i32) {
    %c0_i32 = arith.constant 0 : i32
    %c0_i32_0 = arith.constant 0 : i32
    %c0_i32_1 = arith.constant 0 : i32
    return %c0_i32, %c0_i32_0 : i32, i32
  }
  func.func @transform_5(%arg0: i32) -> (i32, i32) {
    %c0_i32 = arith.constant 0 : i32
    %c0_i32_0 = arith.constant 0 : i32
    return %arg0, %c0_i32 : i32, i32
  }
}

module attributes {stable_mosaic.version = 11 : i64} {
  func.func @_mm_kernel(%arg0: i32, %arg1: i32, %arg2: memref<16x128xf32, #tpu.memory_space<vmem>>, %arg3: memref<128x256xf32, #tpu.memory_space<vmem>>, %arg4: memref<1x256xf32, #tpu.memory_space<vmem>>, %arg5: memref<16x256xf32, #tpu.memory_space<vmem>>) attributes {dimension_semantics = [#tpu.dimension_semantics<parallel>, #tpu.dimension_semantics<parallel>], iteration_bounds = array<i64: 1, 1>, scalar_prefetch = 0 : i64, scratch_operands = 0 : i64, tpu.core_type = #tpu.core_type<tc>, window_params = [{transform_indices = @transform_0, window_bounds = array<i64: 16, 128>}, {transform_indices = @transform_1, window_bounds = array<i64: 128, 256>}, {transform_indices = @transform_2, window_bounds = array<i64: 1, 256>}, {transform_indices = @transform_3, window_bounds = array<i64: 16, 256>}]} {
    %c0 = arith.constant 0 : index
    %c0_0 = arith.constant 0 : index
    %0 = vector.load %arg2[%c0, %c0_0] : memref<16x128xf32, #tpu.memory_space<vmem>>, vector<16x128xf32>
    %c0_1 = arith.constant 0 : index
    %c0_2 = arith.constant 0 : index
    %1 = vector.load %arg3[%c0_1, %c0_2] : memref<128x256xf32, #tpu.memory_space<vmem>>, vector<128x256xf32>
    %cst = arith.constant dense<0.000000e+00> : vector<16x256xf32>
    %2 = tpu.matmul %0, %1, %cst {dimension_numbers = #tpu.dot_dimension_numbers<[1], [0], [0], [1], [0, 0, 1, 1], [], []>} : vector<16x128xf32>, vector<128x256xf32>, vector<16x256xf32> -> vector<16x256xf32>
    %c0_3 = arith.constant 0 : index
    %c0_4 = arith.constant 0 : index
    %3 = vector.load %arg4[%c0_3, %c0_4] : memref<1x256xf32, #tpu.memory_space<vmem>>, vector<1x256xf32>
    %4 = vector.broadcast %3 : vector<1x256xf32> to vector<16x256xf32>
    %5 = arith.addf %2, %4 : vector<16x256xf32>
    %c0_5 = arith.constant 0 : index
    %c0_6 = arith.constant 0 : index
    %6 = vector.load %arg5[%c0_5, %c0_6] : memref<16x256xf32, #tpu.memory_space<vmem>>, vector<16x256xf32>
    tpu.vector_store %arg5[%c0_5, %c0_6], %5 {strides = array<i32>} : memref<16x256xf32, #tpu.memory_space<vmem>>, vector<16x256xf32>,
    return
  }
  func.func @transform_0(%arg0: i32, %arg1: i32) -> (i32, i32) {
    %c0_i32 = arith.constant 0 : i32
    %c0_i32_0 = arith.constant 0 : i32
    return %arg0, %c0_i32 : i32, i32
  }
  func.func @transform_1(%arg0: i32, %arg1: i32) -> (i32, i32) {
    %c0_i32 = arith.constant 0 : i32
    %c0_i32_0 = arith.constant 0 : i32
    return %c0_i32, %arg1 : i32, i32
  }
  func.func @transform_2(%arg0: i32, %arg1: i32) -> (i32, i32) {
    %c0_i32 = arith.constant 0 : i32
    %c0_i32_0 = arith.constant 0 : i32
    return %c0_i32, %arg1 : i32, i32
  }
  func.func @transform_3(%arg0: i32, %arg1: i32) -> (i32, i32) {
    %c0_i32 = arith.constant 0 : i32
    return %arg0, %arg1 : i32, i32
  }
}

</mosaic_0001>

<llo_original>
// kernel: _lambda_.5
$region0: #{_lambda_.5}
  #allocation0 [shape = 'u32[]', space=smem, size = 0x4, offset = 0x4, fixed_abs, tag = 'smem constant byte address 0x4 - core index']
  #allocation1 [shape = 'u32[144,128]{1,0:T(1,128)}', space=vmem, size = 0x12000, scoped, tag = 'internal scratch']
  %s0 = inlined_call_operand.vmem [shape: bf16[128,128], index: 0, kind: input, shape index: {}]
  %s1 = inlined_call_operand.vmem [shape: bf16[128,128], index: 1, kind: input, shape index: {}]
  %s2 = inlined_call_operand.vmem [shape: f32[1,128], index: 2, kind: input, shape index: {}]
  %s3 = inlined_call_operand.vmem [shape: bf16[128,128], index: 3, kind: output, shape index: {}]
  %s4 = sld [smem:[#allocation0]]
  $region22: #{_lambda_.5} parent=0
    _
  %s6 = ssub.s32 1, %s4
  %s7 = scalar_select 0, %s6, %s4
  // Predicated region
  $region2: #{_lambda_.5} parent=0 // pred_check
    _
  $region3: #{_lambda_.5} parent=0 // pred_check_branch
    %9 = sbr.rel (0) target = $region5
  $region4: #{_lambda_.5} parent=0 // pred_region
    _
  $region5: #{_lambda_.5} parent=0 // pred_fallthru
    _
  // Predicated region
  $region6: #{_lambda_.5} parent=0 // pred_check
    _
  $region7: #{_lambda_.5} parent=0 // pred_check_branch
    %11 = sbr.rel (0) target = $region9
  $region8: #{_lambda_.5} parent=0 // pred_region
    _
  $region9: #{_lambda_.5} parent=0 // pred_fallthru
    _
  // Predicated region
  $region10: #{_lambda_.5} parent=0 // pred_check
    _
  $region11: #{_lambda_.5} parent=0 // pred_check_branch
    %13 = sbr.rel (0) target = $region13
  $region12: #{_lambda_.5} parent=0 // pred_region
    _
  $region13: #{_lambda_.5} parent=0 // pred_fallthru
    _
  %v15 = vld [vmem:[%s0] sm:$0xf]
  %v16 = vld [vmem:[%s0 + $0x4] sm:$0xf]
  %v17 = vld [vmem:[%s0 + $0x8] sm:$0xf]
  %v18 = vld [vmem:[%s0 + $0xc] sm:$0xf]
  %v19 = vld [vmem:[%s0 + $0x10] sm:$0xf]
  %v20 = vld [vmem:[%s0 + $0x14] sm:$0xf]
  %v21 = vld [vmem:[%s0 + $0x18] sm:$0xf]
  %v22 = vld [vmem:[%s0 + $0x1c] sm:$0xf]
  %v23 = vld [vmem:[%s0 + $0x20] sm:$0xf]
  %v24 = vld [vmem:[%s0 + $0x24] sm:$0xf]
  %v25 = vld [vmem:[%s0 + $0x28] sm:$0xf]
  %v26 = vld [vmem:[%s0 + $0x2c] sm:$0xf]
  %v27 = vld [vmem:[%s0 + $0x30] sm:$0xf]
  %v28 = vld [vmem:[%s0 + $0x34] sm:$0xf]
  %v29 = vld [vmem:[%s0 + $0x38] sm:$0xf]
  %v30 = vld [vmem:[%s0 + $0x3c] sm:$0xf]
  %v31 = vld [vmem:[%s1] sm:$0xf]
  %v32 = vld [vmem:[%s1 + $0x4] sm:$0xf]
  %v33 = vld [vmem:[%s1 + $0x8] sm:$0xf]
  %v34 = vld [vmem:[%s1 + $0xc] sm:$0xf]
  %v35 = vld [vmem:[%s1 + $0x10] sm:$0xf]
  %v36 = vld [vmem:[%s1 + $0x14] sm:$0xf]
  %v37 = vld [vmem:[%s1 + $0x18] sm:$0xf]
  %v38 = vld [vmem:[%s1 + $0x1c] sm:$0xf]
  %v39 = vld [vmem:[%s1 + $0x20] sm:$0xf]
  %v40 = vld [vmem:[%s1 + $0x24] sm:$0xf]
  %v41 = vld [vmem:[%s1 + $0x28] sm:$0xf]
  %v42 = vld [vmem:[%s1 + $0x2c] sm:$0xf]
  %v43 = vld [vmem:[%s1 + $0x30] sm:$0xf]
  %v44 = vld [vmem:[%s1 + $0x34] sm:$0xf]
  %v45 = vld [vmem:[%s1 + $0x38] sm:$0xf]
  %v46 = vld [vmem:[%s1 + $0x3c] sm:$0xf]
  %v47 = vld [vmem:[%s2] sm:$0x1]
  %v49 = vlaneseq
  %v50 = vshrl.u32 %v49, 7
  %v51 = vsub.s32 0, %v50
  %v52 = vrot.slane %v47, %v51
  %v70 = vunpack.c.l.b16 %v15
  %v71 = vunpack.c.l.b16 %v16
  %v72 = vunpack.c.l.b16 %v17
  %v73 = vunpack.c.l.b16 %v18
  %v74 = vunpack.c.l.b16 %v19
  %v75 = vunpack.c.l.b16 %v20
  %v76 = vunpack.c.l.b16 %v21
  %v77 = vunpack.c.l.b16 %v22
  %v78 = vunpack.c.l.b16 %v23
  %v79 = vunpack.c.l.b16 %v24
  %v80 = vunpack.c.l.b16 %v25
  %v81 = vunpack.c.l.b16 %v26
  %v82 = vunpack.c.l.b16 %v27
  %v83 = vunpack.c.l.b16 %v28
  %v84 = vunpack.c.l.b16 %v29
  %v85 = vunpack.c.l.b16 %v30
  %v86 = vpack.c.b16 %v71, %v70
  %v87 = vpack.c.b16 %v73, %v72
  %v88 = vpack.c.b16 %v75, %v74
  %v89 = vpack.c.b16 %v77, %v76
  %v90 = vpack.c.b16 %v79, %v78
  %v91 = vpack.c.b16 %v81, %v80
  %v92 = vpack.c.b16 %v83, %v82
  %v93 = vpack.c.b16 %v85, %v84
  %v118 = vunpack.c.l.b16 %v31
  %v119 = vunpack.c.l.b16 %v32
  %v120 = vunpack.c.l.b16 %v33
  %v121 = vunpack.c.l.b16 %v34
  %v122 = vunpack.c.l.b16 %v35
  %v123 = vunpack.c.l.b16 %v36
  %v124 = vunpack.c.l.b16 %v37
  %v125 = vunpack.c.l.b16 %v38
  %v126 = vunpack.c.l.b16 %v39
  %v127 = vunpack.c.l.b16 %v40
  %v128 = vunpack.c.l.b16 %v41
  %v129 = vunpack.c.l.b16 %v42
  %v130 = vunpack.c.l.b16 %v43
  %v131 = vunpack.c.l.b16 %v44
  %v132 = vunpack.c.l.b16 %v45
  %v133 = vunpack.c.l.b16 %v46
  %v134 = vpack.c.b16 %v119, %v118
  %v135 = vpack.c.b16 %v121, %v120
  %v136 = vpack.c.b16 %v123, %v122
  %v137 = vpack.c.b16 %v125, %v124
  %v138 = vpack.c.b16 %v127, %v126
  %v139 = vpack.c.b16 %v129, %v128
  %v140 = vpack.c.b16 %v131, %v130
  %v141 = vpack.c.b16 %v133, %v132
  %150 = vmatprep.subr.bf16.mxu0 0
  %151 = vmatpush1.bf16.msra.mxu0 %v134
  %152 = vmatprep.subr.bf16.mxu0 0
  %153 = vmatpush1.bf16.msra.mxu0 %v135
  %154 = vmatprep.subr.bf16.mxu0 0
  %155 = vmatpush1.bf16.msra.mxu0 %v136
  %156 = vmatprep.subr.bf16.mxu0 0
  %157 = vmatpush1.bf16.msra.mxu0 %v137
  %158 = vmatprep.subr.bf16.mxu0 0
  %159 = vmatpush1.bf16.msra.mxu0 %v138
  %160 = vmatprep.subr.bf16.mxu0 0
  %161 = vmatpush1.bf16.msra.mxu0 %v139
  %162 = vmatprep.subr.bf16.mxu0 0
  %163 = vmatpush1.bf16.msra.mxu0 %v140
  %164 = vmatprep.subr.bf16.mxu0 0
  %165 = vmatpush1.bf16.msra.mxu0 %v141
  %166 = vmatprep.subr.bf16.mxu0 0
  %167 = vmatpush1.bf16.msra.mxu0 0
  %168 = vmatprep.subr.bf16.mxu0 0
  %169 = vmatpush1.bf16.msra.mxu0 0
  %170 = vmatprep.subr.bf16.mxu0 0
  %171 = vmatpush1.bf16.msra.mxu0 0
  %172 = vmatprep.subr.bf16.mxu0 0
  %173 = vmatpush1.bf16.msra.mxu0 0
  %174 = vmatprep.subr.bf16.mxu0 0
  %175 = vmatpush1.bf16.msra.mxu0 0
  %176 = vmatprep.subr.bf16.mxu0 0
  %177 = vmatpush1.bf16.msra.mxu0 0
  %178 = vmatprep.subr.bf16.mxu0 0
  %179 = vmatpush1.bf16.msra.mxu0 0
  %180 = vmatprep.subr.bf16.mxu0 0
  %181 = vmatpush1.bf16.msra.mxu0 0
  %182 = vmatprep.mubr.bf16.mxu0 0
  %183 = vmatmul.mubr.bf16.gmra.mrb[0].mxu0 %v86
  %v184 = vpop.f32.mrb[0].mxu0
  %v185 = vadd.f32 %v52, %v184
  %v186 = vpop.f32.mrb[0].mxu0
  %v187 = vpop.f32.mrb[0].mxu0
  %v188 = vadd.f32 %v52, %v187
  %v189 = vpop.f32.mrb[0].mxu0
  %190 = vmatprep.mubr.bf16.mxu0 0
  %191 = vmatmul.mubr.bf16.gmra.mrb[0].mxu0 %v87
  %v192 = vpop.f32.mrb[0].mxu0
  %v193 = vadd.f32 %v52, %v192
  %v194 = vpop.f32.mrb[0].mxu0
  %v195 = vpop.f32.mrb[0].mxu0
  %v196 = vadd.f32 %v52, %v195
  %v197 = vpop.f32.mrb[0].mxu0
  %198 = vmatprep.mubr.bf16.mxu0 0
  %199 = vmatmul.mubr.bf16.gmra.mrb[0].mxu0 %v88
  %v200 = vpop.f32.mrb[0].mxu0
  %v201 = vadd.f32 %v52, %v200
  %v202 = vpop.f32.mrb[0].mxu0
  %v203 = vpop.f32.mrb[0].mxu0
  %v204 = vadd.f32 %v52, %v203
  %v205 = vpop.f32.mrb[0].mxu0
  %206 = vmatprep.mubr.bf16.mxu0 0
  %207 = vmatmul.mubr.bf16.gmra.mrb[0].mxu0 %v89
  %v208 = vpop.f32.mrb[0].mxu0
  %v209 = vadd.f32 %v52, %v208
  %v210 = vpop.f32.mrb[0].mxu0
  %v211 = vpop.f32.mrb[0].mxu0
  %v212 = vadd.f32 %v52, %v211
  %v213 = vpop.f32.mrb[0].mxu0
  %214 = vmatprep.mubr.bf16.mxu0 0
  %215 = vmatmul.mubr.bf16.gmra.mrb[0].mxu0 %v90
  %v216 = vpop.f32.mrb[0].mxu0
  %v217 = vadd.f32 %v52, %v216
  %v218 = vpop.f32.mrb[0].mxu0
  %v219 = vpop.f32.mrb[0].mxu0
  %v220 = vadd.f32 %v52, %v219
  %v221 = vpop.f32.mrb[0].mxu0
  %222 = vmatprep.mubr.bf16.mxu0 0
  %223 = vmatmul.mubr.bf16.gmra.mrb[0].mxu0 %v91
  %v224 = vpop.f32.mrb[0].mxu0
  %v225 = vadd.f32 %v52, %v224
  %v226 = vpop.f32.mrb[0].mxu0
  %v227 = vpop.f32.mrb[0].mxu0
  %v228 = vadd.f32 %v52, %v227
  %v229 = vpop.f32.mrb[0].mxu0
  %230 = vmatprep.mubr.bf16.mxu0 0
  %231 = vmatmul.mubr.bf16.gmra.mrb[0].mxu0 %v92
  %v232 = vpop.f32.mrb[0].mxu0
  %v233 = vadd.f32 %v52, %v232
  %v234 = vpop.f32.mrb[0].mxu0
  %v235 = vpop.f32.mrb[0].mxu0
  %v236 = vadd.f32 %v52, %v235
  %v237 = vpop.f32.mrb[0].mxu0
  %238 = vmatprep.mubr.bf16.mxu0 0
  %239 = vmatmul.mubr.bf16.gmra.mrb[0].mxu0 %v93
  %v240 = vpop.f32.mrb[0].mxu0
  %v241 = vadd.f32 %v52, %v240
  %v242 = vpop.f32.mrb[0].mxu0
  %v243 = vpop.f32.mrb[0].mxu0
  %v244 = vadd.f32 %v52, %v243
  %v245 = vpop.f32.mrb[0].mxu0
  %246 = vdwg.mxu0
  %v247 = vmax.f32 %v185, 0.0
  %v248 = vmax.f32 %v188, 0.0
  %v249 = vmax.f32 %v193, 0.0
  %v250 = vmax.f32 %v196, 0.0
  %v251 = vmax.f32 %v201, 0.0
  %v252 = vmax.f32 %v204, 0.0
  %v253 = vmax.f32 %v209, 0.0
  %v254 = vmax.f32 %v212, 0.0
  %v255 = vmax.f32 %v217, 0.0
  %v256 = vmax.f32 %v220, 0.0
  %v257 = vmax.f32 %v225, 0.0
  %v258 = vmax.f32 %v228, 0.0
  %v259 = vmax.f32 %v233, 0.0
  %v260 = vmax.f32 %v236, 0.0
  %v261 = vmax.f32 %v241, 0.0
  %v262 = vmax.f32 %v244, 0.0
  %v263 = vpack.c.bf16 %v248, %v247
  %v264 = vpack.c.bf16 %v250, %v249
  %v265 = vpack.c.bf16 %v252, %v251
  %v266 = vpack.c.bf16 %v254, %v253
  %v267 = vpack.c.bf16 %v256, %v255
  %v268 = vpack.c.bf16 %v258, %v257
  %v269 = vpack.c.bf16 %v260, %v259
  %v270 = vpack.c.bf16 %v262, %v261
  %v279 = vunpack.c.l.b16 %v263
  %v280 = vunpack.c.h.b16 %v263
  %v281 = vunpack.c.l.b16 %v264
  %v282 = vunpack.c.h.b16 %v264
  %v283 = vunpack.c.l.b16 %v265
  %v284 = vunpack.c.h.b16 %v265
  %v285 = vunpack.c.l.b16 %v266
  %v286 = vunpack.c.h.b16 %v266
  %v287 = vunpack.c.l.b16 %v267
  %v288 = vunpack.c.h.b16 %v267
  %v289 = vunpack.c.l.b16 %v268
  %v290 = vunpack.c.h.b16 %v268
  %v291 = vunpack.c.l.b16 %v269
  %v292 = vunpack.c.h.b16 %v269
  %v293 = vunpack.c.l.b16 %v270
  %v294 = vunpack.c.h.b16 %v270
  %v295 = vpack.c.b16 %v279, %v279
  %v296 = vpack.c.b16 %v280, %v280
  %v297 = vpack.c.b16 %v281, %v281
  %v298 = vpack.c.b16 %v282, %v282
  %v299 = vpack.c.b16 %v283, %v283
  %v300 = vpack.c.b16 %v284, %v284
  %v301 = vpack.c.b16 %v285, %v285
  %v302 = vpack.c.b16 %v286, %v286
  %v303 = vpack.c.b16 %v287, %v287
  %v304 = vpack.c.b16 %v288, %v288
  %v305 = vpack.c.b16 %v289, %v289
  %v306 = vpack.c.b16 %v290, %v290
  %v307 = vpack.c.b16 %v291, %v291
  %v308 = vpack.c.b16 %v292, %v292
  %v309 = vpack.c.b16 %v293, %v293
  %v310 = vpack.c.b16 %v294, %v294
  %327 = vst [vmem:[%s3] sm:$0xf] %v295
  %328 = vst [vmem:[%s3 + $0x4] sm:$0xf] %v296
  %329 = vst [vmem:[%s3 + $0x8] sm:$0xf] %v297
  %330 = vst [vmem:[%s3 + $0xc] sm:$0xf] %v298
  %331 = vst [vmem:[%s3 + $0x10] sm:$0xf] %v299
  %332 = vst [vmem:[%s3 + $0x14] sm:$0xf] %v300
  %333 = vst [vmem:[%s3 + $0x18] sm:$0xf] %v301
  %334 = vst [vmem:[%s3 + $0x1c] sm:$0xf] %v302
  %335 = vst [vmem:[%s3 + $0x20] sm:$0xf] %v303
  %336 = vst [vmem:[%s3 + $0x24] sm:$0xf] %v304
  %337 = vst [vmem:[%s3 + $0x28] sm:$0xf] %v305
  %338 = vst [vmem:[%s3 + $0x2c] sm:$0xf] %v306
  %339 = vst [vmem:[%s3 + $0x30] sm:$0xf] %v307
  %340 = vst [vmem:[%s3 + $0x34] sm:$0xf] %v308
  %341 = vst [vmem:[%s3 + $0x38] sm:$0xf] %v309
  %342 = vst [vmem:[%s3 + $0x3c] sm:$0xf] %v310
  // Predicated region
  $region14: #{_lambda_.5} parent=0 // pred_check
    _
  $region15: #{_lambda_.5} parent=0 // pred_check_branch
    %344 = sbr.rel (0) target = $region17
  $region16: #{_lambda_.5} parent=0 // pred_region
    _
  $region17: #{_lambda_.5} parent=0 // pred_fallthru
    _
  // Predicated region
  $region18: #{_lambda_.5} parent=0 // pred_check
    _
  $region19: #{_lambda_.5} parent=0 // pred_check_branch
    %346 = sbr.rel (0) target = $region21
  $region20: #{_lambda_.5} parent=0 // pred_region
    _
  $region21: #{_lambda_.5} parent=0 // pred_fallthru
    _

// kernel: _lambda_.6
$region0: #{_lambda_.6}
  #allocation0 [shape = 'u32[]', space=smem, size = 0x4, offset = 0x4, fixed_abs, tag = 'smem constant byte address 0x4 - core index']
  #allocation1 [shape = 'u32[144,128]{1,0:T(1,128)}', space=vmem, size = 0x12000, scoped, tag = 'internal scratch']
  %s0 = inlined_call_operand.vmem [shape: bf16[32,1152], index: 0, kind: input, shape index: {}]
  %s1 = inlined_call_operand.vmem [shape: bf16[1152,128], index: 1, kind: input, shape index: {}]
  %s2 = inlined_call_operand.vmem [shape: f32[1,128], index: 2, kind: input, shape index: {}]
  %s3 = inlined_call_operand.vmem [shape: bf16[32,128], index: 3, kind: output, shape index: {}]
  %s4 = sld [smem:[#allocation0]]
  $region22: #{_lambda_.6} parent=0
    _
  %s6 = ssub.s32 1, %s4
  %s7 = scalar_select 0, %s6, %s4
  // Predicated region
  $region2: #{_lambda_.6} parent=0 // pred_check
    _
  $region3: #{_lambda_.6} parent=0 // pred_check_branch
    %9 = sbr.rel (0) target = $region5
  $region4: #{_lambda_.6} parent=0 // pred_region
    _
  $region5: #{_lambda_.6} parent=0 // pred_fallthru
    _
  // Predicated region
  $region6: #{_lambda_.6} parent=0 // pred_check
    _
  $region7: #{_lambda_.6} parent=0 // pred_check_branch
    %11 = sbr.rel (0) target = $region9
  $region8: #{_lambda_.6} parent=0 // pred_region
    _
  $region9: #{_lambda_.6} parent=0 // pred_fallthru
    _
  // Predicated region
  $region10: #{_lambda_.6} parent=0 // pred_check
    _
  $region11: #{_lambda_.6} parent=0 // pred_check_branch
    %13 = sbr.rel (0) target = $region13
  $region12: #{_lambda_.6} parent=0 // pred_region
    _
  $region13: #{_lambda_.6} parent=0 // pred_fallthru
    _
  %v15 = vld [vmem:[%s0] sm:$0xff]
  %v16 = vld [vmem:[%s0 + $0x8] sm:$0xff]
  %v17 = vld [vmem:[%s0 + $0x10] sm:$0xff]
  %v18 = vld [vmem:[%s0 + $0x18] sm:$0xff]
  %v19 = vld [vmem:[%s0 + $0x20] sm:$0xf]
  %v20 = vld [vmem:[%s0 + $0x24] sm:$0xff]
  %v21 = vld [vmem:[%s0 + $0x2c] sm:$0xff]
  %v22 = vld [vmem:[%s0 + $0x34] sm:$0xff]
  %v23 = vld [vmem:[%s0 + $0x3c] sm:$0xff]
  %v24 = vld [vmem:[%s0 + $0x44] sm:$0xf]
  %v25 = vld [vmem:[%s0 + $0x48] sm:$0xff]
  %v26 = vld [vmem:[%s0 + $0x50] sm:$0xff]
  %v27 = vld [vmem:[%s0 + $0x58] sm:$0xff]
  %v28 = vld [vmem:[%s0 + $0x60] sm:$0xff]
  %v29 = vld [vmem:[%s0 + $0x68] sm:$0xf]
  %v30 = vld [vmem:[%s0 + $0x6c] sm:$0xff]
  %v31 = vld [vmem:[%s0 + $0x74] sm:$0xff]
  %v32 = vld [vmem:[%s0 + $0x7c] sm:$0xff]
  %v33 = vld [vmem:[%s0 + $0x84] sm:$0xff]
  %v34 = vld [vmem:[%s0 + $0x8c] sm:$0xf]
  %v35 = vld [vmem:[%s1] sm:$0xf]
  %v36 = vld [vmem:[%s1 + $0x4] sm:$0xf]
  %v37 = vld [vmem:[%s1 + $0x8] sm:$0xf]
  %v38 = vld [vmem:[%s1 + $0xc] sm:$0xf]
  %v39 = vld [vmem:[%s1 + $0x10] sm:$0xf]
  %v40 = vld [vmem:[%s1 + $0x14] sm:$0xf]
  %v41 = vld [vmem:[%s1 + $0x18] sm:$0xf]
  %v42 = vld [vmem:[%s1 + $0x1c] sm:$0xf]
  %v43 = vld [vmem:[%s1 + $0x20] sm:$0xf]
  %v44 = vld [vmem:[%s1 + $0x24] sm:$0xf]
  %v45 = vld [vmem:[%s1 + $0x28] sm:$0xf]
  %v46 = vld [vmem:[%s1 + $0x2c] sm:$0xf]
  %v47 = vld [vmem:[%s1 + $0x30] sm:$0xf]
  %v48 = vld [vmem:[%s1 + $0x34] sm:$0xf]
  %v49 = vld [vmem:[%s1 + $0x38] sm:$0xf]
  %v50 = vld [vmem:[%s1 + $0x3c] sm:$0xf]
  %v51 = vld [vmem:[%s1 + $0x40] sm:$0xf]
  %v52 = vld [vmem:[%s1 + $0x44] sm:$0xf]
  %v53 = vld [vmem:[%s1 + $0x48] sm:$0xf]
  %v54 = vld [vmem:[%s1 + $0x4c] sm:$0xf]
  %v55 = vld [vmem:[%s1 + $0x50] sm:$0xf]
  %v56 = vld [vmem:[%s1 + $0x54] sm:$0xf]
  %v57 = vld [vmem:[%s1 + $0x58] sm:$0xf]
  %v58 = vld [vmem:[%s1 + $0x5c] sm:$0xf]
  %v59 = vld [vmem:[%s1 + $0x60] sm:$0xf]
  %v60 = vld [vmem:[%s1 + $0x64] sm:$0xf]
  %v61 = vld [vmem:[%s1 + $0x68] sm:$0xf]
  %v62 = vld [vmem:[%s1 + $0x6c] sm:$0xf]
  %v63 = vld [vmem:[%s1 + $0x70] sm:$0xf]
  %v64 = vld [vmem:[%s1 + $0x74] sm:$0xf]
  %v65 = vld [vmem:[%s1 + $0x78] sm:$0xf]
  %v66 = vld [vmem:[%s1 + $0x7c] sm:$0xf]
  %v67 = vld [vmem:[%s1 + $0x80] sm:$0xf]
  %v68 = vld [vmem:[%s1 + $0x84] sm:$0xf]
  %v69 = vld [vmem:[%s1 + $0x88] sm:$0xf]
  %v70 = vld [vmem:[%s1 + $0x8c] sm:$0xf]
  %v71 = vld [vmem:[%s1 + $0x90] sm:$0xf]
  %v72 = vld [vmem:[%s1 + $0x94] sm:$0xf]
  %v73 = vld [vmem:[%s1 + $0x98] sm:$0xf]
  %v74 = vld [vmem:[%s1 + $0x9c] sm:$0xf]
  %v75 = vld [vmem:[%s1 + $0xa0] sm:$0xf]
  %v76 = vld [vmem:[%s1 + $0xa4] sm:$0xf]
  %v77 = vld [vmem:[%s1 + $0xa8] sm:$0xf]
  %v78 = vld [vmem:[%s1 + $0xac] sm:$0xf]
  %v79 = vld [vmem:[%s1 + $0xb0] sm:$0xf]
  %v80 = vld [vmem:[%s1 + $0xb4] sm:$0xf]
  %v81 = vld [vmem:[%s1 + $0xb8] sm:$0xf]
  %v82 = vld [vmem:[%s1 + $0xbc] sm:$0xf]
  %v83 = vld [vmem:[%s1 + $0xc0] sm:$0xf]
  %v84 = vld [vmem:[%s1 + $0xc4] sm:$0xf]
  %v85 = vld [vmem:[%s1 + $0xc8] sm:$0xf]
  %v86 = vld [vmem:[%s1 + $0xcc] sm:$0xf]
  %v87 = vld [vmem:[%s1 + $0xd0] sm:$0xf]
  %v88 = vld [vmem:[%s1 + $0xd4] sm:$0xf]
  %v89 = vld [vmem:[%s1 + $0xd8] sm:$0xf]
  %v90 = vld [vmem:[%s1 + $0xdc] sm:$0xf]
  %v91 = vld [vmem:[%s1 + $0xe0] sm:$0xf]
  %v92 = vld [vmem:[%s1 + $0xe4] sm:$0xf]
  %v93 = vld [vmem:[%s1 + $0xe8] sm:$0xf]
  %v94 = vld [vmem:[%s1 + $0xec] sm:$0xf]
  %v95 = vld [vmem:[%s1 + $0xf0] sm:$0xf]
  %v96 = vld [vmem:[%s1 + $0xf4] sm:$0xf]
  %v97 = vld [vmem:[%s1 + $0xf8] sm:$0xf]
  %v98 = vld [vmem:[%s1 + $0xfc] sm:$0xf]
  %v99 = vld [vmem:[%s1 + $0x100] sm:$0xf]
  %v100 = vld [vmem:[%s1 + $0x104] sm:$0xf]
  %v101 = vld [vmem:[%s1 + $0x108] sm:$0xf]
  %v102 = vld [vmem:[%s1 + $0x10c] sm:$0xf]
  %v103 = vld [vmem:[%s1 + $0x110] sm:$0xf]
  %v104 = vld [vmem:[%s1 + $0x114] sm:$0xf]
  %v105 = vld [vmem:[%s1 + $0x118] sm:$0xf]
  %v106 = vld [vmem:[%s1 + $0x11c] sm:$0xf]
  %v107 = vld [vmem:[%s1 + $0x120] sm:$0xf]
  %v108 = vld [vmem:[%s1 + $0x124] sm:$0xf]
  %v109 = vld [vmem:[%s1 + $0x128] sm:$0xf]
  %v110 = vld [vmem:[%s1 + $0x12c] sm:$0xf]
  %v111 = vld [vmem:[%s1 + $0x130] sm:$0xf]
  %v112 = vld [vmem:[%s1 + $0x134] sm:$0xf]
  %v113 = vld [vmem:[%s1 + $0x138] sm:$0xf]
  %v114 = vld [vmem:[%s1 + $0x13c] sm:$0xf]
  %v115 = vld [vmem:[%s1 + $0x140] sm:$0xf]
  %v116 = vld [vmem:[%s1 + $0x144] sm:$0xf]
  %v117 = vld [vmem:[%s1 + $0x148] sm:$0xf]
  %v118 = vld [vmem:[%s1 + $0x14c] sm:$0xf]
  %v119 = vld [vmem:[%s1 + $0x150] sm:$0xf]
  %v120 = vld [vmem:[%s1 + $0x154] sm:$0xf]
  %v121 = vld [vmem:[%s1 + $0x158] sm:$0xf]
  %v122 = vld [vmem:[%s1 + $0x15c] sm:$0xf]
  %v123 = vld [vmem:[%s1 + $0x160] sm:$0xf]
  %v124 = vld [vmem:[%s1 + $0x164] sm:$0xf]
  %v125 = vld [vmem:[%s1 + $0x168] sm:$0xf]
  %v126 = vld [vmem:[%s1 + $0x16c] sm:$0xf]
  %v127 = vld [vmem:[%s1 + $0x170] sm:$0xf]
  %v128 = vld [vmem:[%s1 + $0x174] sm:$0xf]
  %v129 = vld [vmem:[%s1 + $0x178] sm:$0xf]
  %v130 = vld [vmem:[%s1 + $0x17c] sm:$0xf]
  %v131 = vld [vmem:[%s1 + $0x180] sm:$0xf]
  %v132 = vld [vmem:[%s1 + $0x184] sm:$0xf]
  %v133 = vld [vmem:[%s1 + $0x188] sm:$0xf]
  %v134 = vld [vmem:[%s1 + $0x18c] sm:$0xf]
  %v135 = vld [vmem:[%s1 + $0x190] sm:$0xf]
  %v136 = vld [vmem:[%s1 + $0x194] sm:$0xf]
  %v137 = vld [vmem:[%s1 + $0x198] sm:$0xf]
  %v138 = vld [vmem:[%s1 + $0x19c] sm:$0xf]
  %v139 = vld [vmem:[%s1 + $0x1a0] sm:$0xf]
  %v140 = vld [vmem:[%s1 + $0x1a4] sm:$0xf]
  %v141 = vld [vmem:[%s1 + $0x1a8] sm:$0xf]
  %v142 = vld [vmem:[%s1 + $0x1ac] sm:$0xf]
  %v143 = vld [vmem:[%s1 + $0x1b0] sm:$0xf]
  %v144 = vld [vmem:[%s1 + $0x1b4] sm:$0xf]
  %v145 = vld [vmem:[%s1 + $0x1b8] sm:$0xf]
  %v146 = vld [vmem:[%s1 + $0x1bc] sm:$0xf]
  %v147 = vld [vmem:[%s1 + $0x1c0] sm:$0xf]
  %v148 = vld [vmem:[%s1 + $0x1c4] sm:$0xf]
  %v149 = vld [vmem:[%s1 + $0x1c8] sm:$0xf]
  %v150 = vld [vmem:[%s1 + $0x1cc] sm:$0xf]
  %v151 = vld [vmem:[%s1 + $0x1d0] sm:$0xf]
  %v152 = vld [vmem:[%s1 + $0x1d4] sm:$0xf]
  %v153 = vld [vmem:[%s1 + $0x1d8] sm:$0xf]
  %v154 = vld [vmem:[%s1 + $0x1dc] sm:$0xf]
  %v155 = vld [vmem:[%s1 + $0x1e0] sm:$0xf]
  %v156 = vld [vmem:[%s1 + $0x1e4] sm:$0xf]
  %v157 = vld [vmem:[%s1 + $0x1e8] sm:$0xf]
  %v158 = vld [vmem:[%s1 + $0x1ec] sm:$0xf]
  %v159 = vld [vmem:[%s1 + $0x1f0] sm:$0xf]
  %v160 = vld [vmem:[%s1 + $0x1f4] sm:$0xf]
  %v161 = vld [vmem:[%s1 + $0x1f8] sm:$0xf]
  %v162 = vld [vmem:[%s1 + $0x1fc] sm:$0xf]
  %v163 = vld [vmem:[%s1 + $0x200] sm:$0xf]
  %v164 = vld [vmem:[%s1 + $0x204] sm:$0xf]
  %v165 = vld [vmem:[%s1 + $0x208] sm:$0xf]
  %v166 = vld [vmem:[%s1 + $0x20c] sm:$0xf]
  %v167 = vld [vmem:[%s1 + $0x210] sm:$0xf]
  %v168 = vld [vmem:[%s1 + $0x214] sm:$0xf]
  %v169 = vld [vmem:[%s1 + $0x218] sm:$0xf]
  %v170 = vld [vmem:[%s1 + $0x21c] sm:$0xf]
  %v171 = vld [vmem:[%s1 + $0x220] sm:$0xf]
  %v172 = vld [vmem:[%s1 + $0x224] sm:$0xf]
  %v173 = vld [vmem:[%s1 + $0x228] sm:$0xf]
  %v174 = vld [vmem:[%s1 + $0x22c] sm:$0xf]
  %v175 = vld [vmem:[%s1 + $0x230] sm:$0xf]
  %v176 = vld [vmem:[%s1 + $0x234] sm:$0xf]
  %v177 = vld [vmem:[%s1 + $0x238] sm:$0xf]
  %v178 = vld [vmem:[%s1 + $0x23c] sm:$0xf]
  %v179 = vld [vmem:[%s2] sm:$0x1]
  %v181 = vlaneseq
  %v182 = vshrl.u32 %v181, 7
  %v183 = vsub.s32 0, %v182
  %v184 = vrot.slane %v179, %v183
  %v206 = vunpack.c.l.b16 %v15
  %v207 = vunpack.c.h.b16 %v15
  %v208 = vunpack.c.l.b16 %v16
  %v209 = vunpack.c.h.b16 %v16
  %v210 = vunpack.c.l.b16 %v17
  %v211 = vunpack.c.h.b16 %v17
  %v212 = vunpack.c.l.b16 %v18
  %v213 = vunpack.c.h.b16 %v18
  %v214 = vunpack.c.l.b16 %v19
  %v215 = vunpack.c.l.b16 %v20
  %v216 = vunpack.c.h.b16 %v20
  %v217 = vunpack.c.l.b16 %v21
  %v218 = vunpack.c.h.b16 %v21
  %v219 = vunpack.c.l.b16 %v22
  %v220 = vunpack.c.h.b16 %v22
  %v221 = vunpack.c.l.b16 %v23
  %v222 = vunpack.c.h.b16 %v23
  %v223 = vunpack.c.l.b16 %v24
  %v224 = vunpack.c.l.b16 %v25
  %v225 = vunpack.c.h.b16 %v25
  %v226 = vunpack.c.l.b16 %v26
  %v227 = vunpack.c.h.b16 %v26
  %v228 = vunpack.c.l.b16 %v27
  %v229 = vunpack.c.h.b16 %v27
  %v230 = vunpack.c.l.b16 %v28
  %v231 = vunpack.c.h.b16 %v28
  %v232 = vunpack.c.l.b16 %v29
  %v233 = vunpack.c.l.b16 %v30
  %v234 = vunpack.c.h.b16 %v30
  %v235 = vunpack.c.l.b16 %v31
  %v236 = vunpack.c.h.b16 %v31
  %v237 = vunpack.c.l.b16 %v32
  %v238 = vunpack.c.h.b16 %v32
  %v239 = vunpack.c.l.b16 %v33
  %v240 = vunpack.c.h.b16 %v33
  %v241 = vunpack.c.l.b16 %v34
  %v242 = vpack.c.b16 %v215, %v206
  %v243 = vpack.c.b16 %v216, %v207
  %v244 = vpack.c.b16 %v217, %v208
  %v245 = vpack.c.b16 %v218, %v209
  %v246 = vpack.c.b16 %v219, %v210
  %v247 = vpack.c.b16 %v220, %v211
  %v248 = vpack.c.b16 %v221, %v212
  %v249 = vpack.c.b16 %v222, %v213
  %v250 = vpack.c.b16 %v223, %v214
  %v251 = vpack.c.b16 %v233, %v224
  %v252 = vpack.c.b16 %v234, %v225
  %v253 = vpack.c.b16 %v235, %v226
  %v254 = vpack.c.b16 %v236, %v227
  %v255 = vpack.c.b16 %v237, %v228
  %v256 = vpack.c.b16 %v238, %v229
  %v257 = vpack.c.b16 %v239, %v230
  %v258 = vpack.c.b16 %v240, %v231
  %v259 = vpack.c.b16 %v241, %v232
  %v422 = vunpack.c.l.b16 %v35
  %v423 = vunpack.c.l.b16 %v36
  %v424 = vunpack.c.l.b16 %v37
  %v425 = vunpack.c.l.b16 %v38
  %v426 = vunpack.c.l.b16 %v39
  %v427 = vunpack.c.l.b16 %v40
  %v428 = vunpack.c.l.b16 %v41
  %v429 = vunpack.c.l.b16 %v42
  %v430 = vunpack.c.l.b16 %v43
  %v431 = vunpack.c.l.b16 %v44
  %v432 = vunpack.c.l.b16 %v45
  %v433 = vunpack.c.l.b16 %v46
  %v434 = vunpack.c.l.b16 %v47
  %v435 = vunpack.c.l.b16 %v48
  %v436 = vunpack.c.l.b16 %v49
  %v437 = vunpack.c.l.b16 %v50
  %v438 = vunpack.c.l.b16 %v51
  %v439 = vunpack.c.l.b16 %v52
  %v440 = vunpack.c.l.b16 %v53
  %v441 = vunpack.c.l.b16 %v54
  %v442 = vunpack.c.l.b16 %v55
  %v443 = vunpack.c.l.b16 %v56
  %v444 = vunpack.c.l.b16 %v57
  %v445 = vunpack.c.l.b16 %v58
  %v446 = vunpack.c.l.b16 %v59
  %v447 = vunpack.c.l.b16 %v60
  %v448 = vunpack.c.l.b16 %v61
  %v449 = vunpack.c.l.b16 %v62
  %v450 = vunpack.c.l.b16 %v63
  %v451 = vunpack.c.l.b16 %v64
  %v452 = vunpack.c.l.b16 %v65
  %v453 = vunpack.c.l.b16 %v66
  %v454 = vunpack.c.l.b16 %v67
  %v455 = vunpack.c.l.b16 %v68
  %v456 = vunpack.c.l.b16 %v69
  %v457 = vunpack.c.l.b16 %v70
  %v458 = vunpack.c.l.b16 %v71
  %v459 = vunpack.c.l.b16 %v72
  %v460 = vunpack.c.l.b16 %v73
  %v461 = vunpack.c.l.b16 %v74
  %v462 = vunpack.c.l.b16 %v75
  %v463 = vunpack.c.l.b16 %v76
  %v464 = vunpack.c.l.b16 %v77
  %v465 = vunpack.c.l.b16 %v78
  %v466 = vunpack.c.l.b16 %v79
  %v467 = vunpack.c.l.b16 %v80
  %v468 = vunpack.c.l.b16 %v81
  %v469 = vunpack.c.l.b16 %v82
  %v470 = vunpack.c.l.b16 %v83
  %v471 = vunpack.c.l.b16 %v84
  %v472 = vunpack.c.l.b16 %v85
  %v473 = vunpack.c.l.b16 %v86
  %v474 = vunpack.c.l.b16 %v87
  %v475 = vunpack.c.l.b16 %v88
  %v476 = vunpack.c.l.b16 %v89
  %v477 = vunpack.c.l.b16 %v90
  %v478 = vunpack.c.l.b16 %v91
  %v479 = vunpack.c.l.b16 %v92
  %v480 = vunpack.c.l.b16 %v93
  %v481 = vunpack.c.l.b16 %v94
  %v482 = vunpack.c.l.b16 %v95
  %v483 = vunpack.c.l.b16 %v96
  %v484 = vunpack.c.l.b16 %v97
  %v485 = vunpack.c.l.b16 %v98
  %v486 = vunpack.c.l.b16 %v99
  %v487 = vunpack.c.l.b16 %v100
  %v488 = vunpack.c.l.b16 %v101
  %v489 = vunpack.c.l.b16 %v102
  %v490 = vunpack.c.l.b16 %v103
  %v491 = vunpack.c.l.b16 %v104
  %v492 = vunpack.c.l.b16 %v105
  %v493 = vunpack.c.l.b16 %v106
  %v494 = vunpack.c.l.b16 %v107
  %v495 = vunpack.c.l.b16 %v108
  %v496 = vunpack.c.l.b16 %v109
  %v497 = vunpack.c.l.b16 %v110
  %v498 = vunpack.c.l.b16 %v111
  %v499 = vunpack.c.l.b16 %v112
  %v500 = vunpack.c.l.b16 %v113
  %v501 = vunpack.c.l.b16 %v114
  %v502 = vunpack.c.l.b16 %v115
  %v503 = vunpack.c.l.b16 %v116
  %v504 = vunpack.c.l.b16 %v117
  %v505 = vunpack.c.l.b16 %v118
  %v506 = vunpack.c.l.b16 %v119
  %v507 = vunpack.c.l.b16 %v120
  %v508 = vunpack.c.l.b16 %v121
  %v509 = vunpack.c.l.b16 %v122
  %v510 = vunpack.c.l.b16 %v123
  %v511 = vunpack.c.l.b16 %v124
  %v512 = vunpack.c.l.b16 %v125
  %v513 = vunpack.c.l.b16 %v126
  %v514 = vunpack.c.l.b16 %v127
  %v515 = vunpack.c.l.b16 %v128
  %v516 = vunpack.c.l.b16 %v129
  %v517 = vunpack.c.l.b16 %v130
  %v518 = vunpack.c.l.b16 %v131
  %v519 = vunpack.c.l.b16 %v132
  %v520 = vunpack.c.l.b16 %v133
  %v521 = vunpack.c.l.b16 %v134
  %v522 = vunpack.c.l.b16 %v135
  %v523 = vunpack.c.l.b16 %v136
  %v524 = vunpack.c.l.b16 %v137
  %v525 = vunpack.c.l.b16 %v138
  %v526 = vunpack.c.l.b16 %v139
  %v527 = vunpack.c.l.b16 %v140
  %v528 = vunpack.c.l.b16 %v141
  %v529 = vunpack.c.l.b16 %v142
  %v530 = vunpack.c.l.b16 %v143
  %v531 = vunpack.c.l.b16 %v144
  %v532 = vunpack.c.l.b16 %v145
  %v533 = vunpack.c.l.b16 %v146
  %v534 = vunpack.c.l.b16 %v147
  %v535 = vunpack.c.l.b16 %v148
  %v536 = vunpack.c.l.b16 %v149
  %v537 = vunpack.c.l.b16 %v150
  %v538 = vunpack.c.l.b16 %v151
  %v539 = vunpack.c.l.b16 %v152
  %v540 = vunpack.c.l.b16 %v153
  %v541 = vunpack.c.l.b16 %v154
  %v542 = vunpack.c.l.b16 %v155
  %v543 = vunpack.c.l.b16 %v156
  %v544 = vunpack.c.l.b16 %v157
  %v545 = vunpack.c.l.b16 %v158
  %v546 = vunpack.c.l.b16 %v159
  %v547 = vunpack.c.l.b16 %v160
  %v548 = vunpack.c.l.b16 %v161
  %v549 = vunpack.c.l.b16 %v162
  %v550 = vunpack.c.l.b16 %v163
  %v551 = vunpack.c.l.b16 %v164
  %v552 = vunpack.c.l.b16 %v165
  %v553 = vunpack.c.l.b16 %v166
  %v554 = vunpack.c.l.b16 %v167
  %v555 = vunpack.c.l.b16 %v168
  %v556 = vunpack.c.l.b16 %v169
  %v557 = vunpack.c.l.b16 %v170
  %v558 = vunpack.c.l.b16 %v171
  %v559 = vunpack.c.l.b16 %v172
  %v560 = vunpack.c.l.b16 %v173
  %v561 = vunpack.c.l.b16 %v174
  %v562 = vunpack.c.l.b16 %v175
  %v563 = vunpack.c.l.b16 %v176
  %v564 = vunpack.c.l.b16 %v177
  %v565 = vunpack.c.l.b16 %v178
  %v566 = vpack.c.b16 %v423, %v422
  %v567 = vpack.c.b16 %v425, %v424
  %v568 = vpack.c.b16 %v427, %v426
  %v569 = vpack.c.b16 %v429, %v428
  %v570 = vpack.c.b16 %v431, %v430
  %v571 = vpack.c.b16 %v433, %v432
  %v572 = vpack.c.b16 %v435, %v434
  %v573 = vpack.c.b16 %v437, %v436
  %v574 = vpack.c.b16 %v439, %v438
  %v575 = vpack.c.b16 %v441, %v440
  %v576 = vpack.c.b16 %v443, %v442
  %v577 = vpack.c.b16 %v445, %v444
  %v578 = vpack.c.b16 %v447, %v446
  %v579 = vpack.c.b16 %v449, %v448
  %v580 = vpack.c.b16 %v451, %v450
  %v581 = vpack.c.b16 %v453, %v452
  %v582 = vpack.c.b16 %v455, %v454
  %v583 = vpack.c.b16 %v457, %v456
  %v584 = vpack.c.b16 %v459, %v458
  %v585 = vpack.c.b16 %v461, %v460
  %v586 = vpack.c.b16 %v463, %v462
  %v587 = vpack.c.b16 %v465, %v464
  %v588 = vpack.c.b16 %v467, %v466
  %v589 = vpack.c.b16 %v469, %v468
  %v590 = vpack.c.b16 %v471, %v470
  %v591 = vpack.c.b16 %v473, %v472
  %v592 = vpack.c.b16 %v475, %v474
  %v593 = vpack.c.b16 %v477, %v476
  %v594 = vpack.c.b16 %v479, %v478
  %v595 = vpack.c.b16 %v481, %v480
  %v596 = vpack.c.b16 %v483, %v482
  %v597 = vpack.c.b16 %v485, %v484
  %v598 = vpack.c.b16 %v487, %v486
  %v599 = vpack.c.b16 %v489, %v488
  %v600 = vpack.c.b16 %v491, %v490
  %v601 = vpack.c.b16 %v493, %v492
  %v602 = vpack.c.b16 %v495, %v494
  %v603 = vpack.c.b16 %v497, %v496
  %v604 = vpack.c.b16 %v499, %v498
  %v605 = vpack.c.b16 %v501, %v500
  %v606 = vpack.c.b16 %v503, %v502
  %v607 = vpack.c.b16 %v505, %v504
  %v608 = vpack.c.b16 %v507, %v506
  %v609 = vpack.c.b16 %v509, %v508
  %v610 = vpack.c.b16 %v511, %v510
  %v611 = vpack.c.b16 %v513, %v512
  %v612 = vpack.c.b16 %v515, %v514
  %v613 = vpack.c.b16 %v517, %v516
  %v614 = vpack.c.b16 %v519, %v518
  %v615 = vpack.c.b16 %v521, %v520
  %v616 = vpack.c.b16 %v523, %v522
  %v617 = vpack.c.b16 %v525, %v524
  %v618 = vpack.c.b16 %v527, %v526
  %v619 = vpack.c.b16 %v529, %v528
  %v620 = vpack.c.b16 %v531, %v530
  %v621 = vpack.c.b16 %v533, %v532
  %v622 = vpack.c.b16 %v535, %v534
  %v623 = vpack.c.b16 %v537, %v536
  %v624 = vpack.c.b16 %v539, %v538
  %v625 = vpack.c.b16 %v541, %v540
  %v626 = vpack.c.b16 %v543, %v542
  %v627 = vpack.c.b16 %v545, %v544
  %v628 = vpack.c.b16 %v547, %v546
  %v629 = vpack.c.b16 %v549, %v548
  %v630 = vpack.c.b16 %v551, %v550
  %v631 = vpack.c.b16 %v553, %v552
  %v632 = vpack.c.b16 %v555, %v554
  %v633 = vpack.c.b16 %v557, %v556
  %v634 = vpack.c.b16 %v559, %v558
  %v635 = vpack.c.b16 %v561, %v560
  %v636 = vpack.c.b16 %v563, %v562
  %v637 = vpack.c.b16 %v565, %v564
  %710 = vmatprep.subr.bf16.mxu0 0
  %711 = vmatpush1.bf16.msra.mxu0 %v566
  %712 = vmatprep.subr.bf16.mxu0 0
  %713 = vmatpush1.bf16.msra.mxu0 %v567
  %714 = vmatprep.subr.bf16.mxu0 0
  %715 = vmatpush1.bf16.msra.mxu0 %v568
  %716 = vmatprep.subr.bf16.mxu0 0
  %717 = vmatpush1.bf16.msra.mxu0 %v569
  %718 = vmatprep.subr.bf16.mxu0 0
  %719 = vmatpush1.bf16.msra.mxu0 %v570
  %720 = vmatprep.subr.bf16.mxu0 0
  %721 = vmatpush1.bf16.msra.mxu0 %v571
  %722 = vmatprep.subr.bf16.mxu0 0
  %723 = vmatpush1.bf16.msra.mxu0 %v572
  %724 = vmatprep.subr.bf16.mxu0 0
  %725 = vmatpush1.bf16.msra.mxu0 %v573
  %726 = vmatprep.subr.bf16.mxu0 0
  %727 = vmatpush1.bf16.msra.mxu0 %v574
  %728 = vmatprep.subr.bf16.mxu0 0
  %729 = vmatpush1.bf16.msra.mxu0 %v575
  %730 = vmatprep.subr.bf16.mxu0 0
  %731 = vmatpush1.bf16.msra.mxu0 %v576
  %732 = vmatprep.subr.bf16.mxu0 0
  %733 = vmatpush1.bf16.msra.mxu0 %v577
  %734 = vmatprep.subr.bf16.mxu0 0
  %735 = vmatpush1.bf16.msra.mxu0 %v578
  %736 = vmatprep.subr.bf16.mxu0 0
  %737 = vmatpush1.bf16.msra.mxu0 %v579
  %738 = vmatprep.subr.bf16.mxu0 0
  %739 = vmatpush1.bf16.msra.mxu0 %v580
  %740 = vmatprep.subr.bf16.mxu0 0
  %741 = vmatpush1.bf16.msra.mxu0 %v581
  %742 = vmatprep.mubr.bf16.mxu0 %v243
  %743 = vmatmul.mubr.bf16.gmra.mrb[0].mxu0 %v242
  %v744 = vpop.f32.mrb[0].mxu0
  %v745 = vadd.f32 %v184, %v744
  %v746 = vpop.f32.mrb[0].mxu0
  %v747 = vpop.f32.mrb[0].mxu0
  %v748 = vadd.f32 %v184, %v747
  %v749 = vpop.f32.mrb[0].mxu0
  %750 = vmatprep.mubr.bf16.mxu0 %v252
  %751 = vmatmul.mubr.bf16.gmra.mrb[0].mxu0 %v251
  %v752 = vpop.f32.mrb[0].mxu0
  %v753 = vadd.f32 %v184, %v752
  %v754 = vpop.f32.mrb[0].mxu0
  %v755 = vpop.f32.mrb[0].mxu0
  %v756 = vadd.f32 %v184, %v755
  %v757 = vpop.f32.mrb[0].mxu0
  %758 = vdwg.mxu0
  %759 = vmatprep.subr.bf16.mxu0 0
  %760 = vmatpush1.bf16.msra.mxu0 %v582
  %761 = vmatprep.subr.bf16.mxu0 0
  %762 = vmatpush1.bf16.msra.mxu0 %v583
  %763 = vmatprep.subr.bf16.mxu0 0
  %764 = vmatpush1.bf16.msra.mxu0 %v584
  %765 = vmatprep.subr.bf16.mxu0 0
  %766 = vmatpush1.bf16.msra.mxu0 %v585
  %767 = vmatprep.subr.bf16.mxu0 0
  %768 = vmatpush1.bf16.msra.mxu0 %v586
  %769 = vmatprep.subr.bf16.mxu0 0
  %770 = vmatpush1.bf16.msra.mxu0 %v587
  %771 = vmatprep.subr.bf16.mxu0 0
  %772 = vmatpush1.bf16.msra.mxu0 %v588
  %773 = vmatprep.subr.bf16.mxu0 0
  %774 = vmatpush1.bf16.msra.mxu0 %v589
  %775 = vmatprep.subr.bf16.mxu0 0
  %776 = vmatpush1.bf16.msra.mxu0 %v590
  %777 = vmatprep.subr.bf16.mxu0 0
  %778 = vmatpush1.bf16.msra.mxu0 %v591
  %779 = vmatprep.subr.bf16.mxu0 0
  %780 = vmatpush1.bf16.msra.mxu0 %v592
  %781 = vmatprep.subr.bf16.mxu0 0
  %782 = vmatpush1.bf16.msra.mxu0 %v593
  %783 = vmatprep.subr.bf16.mxu0 0
  %784 = vmatpush1.bf16.msra.mxu0 %v594
  %785 = vmatprep.subr.bf16.mxu0 0
  %786 = vmatpush1.bf16.msra.mxu0 %v595
  %787 = vmatprep.subr.bf16.mxu0 0
  %788 = vmatpush1.bf16.msra.mxu0 %v596
  %789 = vmatprep.subr.bf16.mxu0 0
  %790 = vmatpush1.bf16.msra.mxu0 %v597
  %791 = vmatprep.mubr.bf16.mxu0 %v245
  %792 = vmatmul.mubr.bf16.gmra.mrb[0].mxu0 %v244
  %v793 = vpop.f32.mrb[0].mxu0
  %v794 = vadd.f32 %v745, %v793
  %v795 = vpop.f32.mrb[0].mxu0
  %v796 = vpop.f32.mrb[0].mxu0
  %v797 = vadd.f32 %v748, %v796
  %v798 = vpop.f32.mrb[0].mxu0
  %799 = vmatprep.mubr.bf16.mxu0 %v254
  %800 = vmatmul.mubr.bf16.gmra.mrb[0].mxu0 %v253
  %v801 = vpop.f32.mrb[0].mxu0
  %v802 = vadd.f32 %v753, %v801
  %v803 = vpop.f32.mrb[0].mxu0
  %v804 = vpop.f32.mrb[0].mxu0
  %v805 = vadd.f32 %v756, %v804
  %v806 = vpop.f32.mrb[0].mxu0
  %807 = vdwg.mxu0
  %808 = vmatprep.subr.bf16.mxu0 0
  %809 = vmatpush1.bf16.msra.mxu0 %v598
  %810 = vmatprep.subr.bf16.mxu0 0
  %811 = vmatpush1.bf16.msra.mxu0 %v599
  %812 = vmatprep.subr.bf16.mxu0 0
  %813 = vmatpush1.bf16.msra.mxu0 %v600
  %814 = vmatprep.subr.bf16.mxu0 0
  %815 = vmatpush1.bf16.msra.mxu0 %v601
  %816 = vmatprep.subr.bf16.mxu0 0
  %817 = vmatpush1.bf16.msra.mxu0 %v602
  %818 = vmatprep.subr.bf16.mxu0 0
  %819 = vmatpush1.bf16.msra.mxu0 %v603
  %820 = vmatprep.subr.bf16.mxu0 0
  %821 = vmatpush1.bf16.msra.mxu0 %v604
  %822 = vmatprep.subr.bf16.mxu0 0
  %823 = vmatpush1.bf16.msra.mxu0 %v605
  %824 = vmatprep.subr.bf16.mxu0 0
  %825 = vmatpush1.bf16.msra.mxu0 %v606
  %826 = vmatprep.subr.bf16.mxu0 0
  %827 = vmatpush1.bf16.msra.mxu0 %v607
  %828 = vmatprep.subr.bf16.mxu0 0
  %829 = vmatpush1.bf16.msra.mxu0 %v608
  %830 = vmatprep.subr.bf16.mxu0 0
  %831 = vmatpush1.bf16.msra.mxu0 %v609
  %832 = vmatprep.subr.bf16.mxu0 0
  %833 = vmatpush1.bf16.msra.mxu0 %v610
  %834 = vmatprep.subr.bf16.mxu0 0
  %835 = vmatpush1.bf16.msra.mxu0 %v611
  %836 = vmatprep.subr.bf16.mxu0 0
  %837 = vmatpush1.bf16.msra.mxu0 %v612
  %838 = vmatprep.subr.bf16.mxu0 0
  %839 = vmatpush1.bf16.msra.mxu0 %v613
  %840 = vmatprep.mubr.bf16.mxu0 %v247
  %841 = vmatmul.mubr.bf16.gmra.mrb[0].mxu0 %v246
  %v842 = vpop.f32.mrb[0].mxu0
  %v843 = vadd.f32 %v794, %v842
  %v844 = vpop.f32.mrb[0].mxu0
  %v845 = vpop.f32.mrb[0].mxu0
  %v846 = vadd.f32 %v797, %v845
  %v847 = vpop.f32.mrb[0].mxu0
  %848 = vmatprep.mubr.bf16.mxu0 %v256
  %849 = vmatmul.mubr.bf16.gmra.mrb[0].mxu0 %v255
  %v850 = vpop.f32.mrb[0].mxu0
  %v851 = vadd.f32 %v802, %v850
  %v852 = vpop.f32.mrb[0].mxu0
  %v853 = vpop.f32.mrb[0].mxu0
  %v854 = vadd.f32 %v805, %v853
  %v855 = vpop.f32.mrb[0].mxu0
  %856 = vdwg.mxu0
  %857 = vmatprep.subr.bf16.mxu0 0
  %858 = vmatpush1.bf16.msra.mxu0 %v614
  %859 = vmatprep.subr.bf16.mxu0 0
  %860 = vmatpush1.bf16.msra.mxu0 %v615
  %861 = vmatprep.subr.bf16.mxu0 0
  %862 = vmatpush1.bf16.msra.mxu0 %v616
  %863 = vmatprep.subr.bf16.mxu0 0
  %864 = vmatpush1.bf16.msra.mxu0 %v617
  %865 = vmatprep.subr.bf16.mxu0 0
  %866 = vmatpush1.bf16.msra.mxu0 %v618
  %867 = vmatprep.subr.bf16.mxu0 0
  %868 = vmatpush1.bf16.msra.mxu0 %v619
  %869 = vmatprep.subr.bf16.mxu0 0
  %870 = vmatpush1.bf16.msra.mxu0 %v620
  %871 = vmatprep.subr.bf16.mxu0 0
  %872 = vmatpush1.bf16.msra.mxu0 %v621
  %873 = vmatprep.subr.bf16.mxu0 0
  %874 = vmatpush1.bf16.msra.mxu0 %v622
  %875 = vmatprep.subr.bf16.mxu0 0
  %876 = vmatpush1.bf16.msra.mxu0 %v623
  %877 = vmatprep.subr.bf16.mxu0 0
  %878 = vmatpush1.bf16.msra.mxu0 %v624
  %879 = vmatprep.subr.bf16.mxu0 0
  %880 = vmatpush1.bf16.msra.mxu0 %v625
  %881 = vmatprep.subr.bf16.mxu0 0
  %882 = vmatpush1.bf16.msra.mxu0 %v626
  %883 = vmatprep.subr.bf16.mxu0 0
  %884 = vmatpush1.bf16.msra.mxu0 %v627
  %885 = vmatprep.subr.bf16.mxu0 0
  %886 = vmatpush1.bf16.msra.mxu0 %v628
  %887 = vmatprep.subr.bf16.mxu0 0
  %888 = vmatpush1.bf16.msra.mxu0 %v629
  %889 = vmatprep.mubr.bf16.mxu0 %v249
  %890 = vmatmul.mubr.bf16.gmra.mrb[0].mxu0 %v248
  %v891 = vpop.f32.mrb[0].mxu0
  %v892 = vadd.f32 %v843, %v891
  %v893 = vpop.f32.mrb[0].mxu0
  %v894 = vpop.f32.mrb[0].mxu0
  %v895 = vadd.f32 %v846, %v894
  %v896 = vpop.f32.mrb[0].mxu0
  %897 = vmatprep.mubr.bf16.mxu0 %v258
  %898 = vmatmul.mubr.bf16.gmra.mrb[0].mxu0 %v257
  %v899 = vpop.f32.mrb[0].mxu0
  %v900 = vadd.f32 %v851, %v899
  %v901 = vpop.f32.mrb[0].mxu0
  %v902 = vpop.f32.mrb[0].mxu0
  %v903 = vadd.f32 %v854, %v902
  %v904 = vpop.f32.mrb[0].mxu0
  %905 = vdwg.mxu0
  %906 = vmatprep.subr.bf16.mxu0 0
  %907 = vmatpush1.bf16.msra.mxu0 %v630
  %908 = vmatprep.subr.bf16.mxu0 0
  %909 = vmatpush1.bf16.msra.mxu0 %v631
  %910 = vmatprep.subr.bf16.mxu0 0
  %911 = vmatpush1.bf16.msra.mxu0 %v632
  %912 = vmatprep.subr.bf16.mxu0 0
  %913 = vmatpush1.bf16.msra.mxu0 %v633
  %914 = vmatprep.subr.bf16.mxu0 0
  %915 = vmatpush1.bf16.msra.mxu0 %v634
  %916 = vmatprep.subr.bf16.mxu0 0
  %917 = vmatpush1.bf16.msra.mxu0 %v635
  %918 = vmatprep.subr.bf16.mxu0 0
  %919 = vmatpush1.bf16.msra.mxu0 %v636
  %920 = vmatprep.subr.bf16.mxu0 0
  %921 = vmatpush1.bf16.msra.mxu0 %v637
  %922 = vmatprep.subr.bf16.mxu0 0
  %923 = vmatpush1.bf16.msra.mxu0 0
  %924 = vmatprep.subr.bf16.mxu0 0
  %925 = vmatpush1.bf16.msra.mxu0 0
  %926 = vmatprep.subr.bf16.mxu0 0
  %927 = vmatpush1.bf16.msra.mxu0 0
  %928 = vmatprep.subr.bf16.mxu0 0
  %929 = vmatpush1.bf16.msra.mxu0 0
  %930 = vmatprep.subr.bf16.mxu0 0
  %931 = vmatpush1.bf16.msra.mxu0 0
  %932 = vmatprep.subr.bf16.mxu0 0
  %933 = vmatpush1.bf16.msra.mxu0 0
  %934 = vmatprep.subr.bf16.mxu0 0
  %935 = vmatpush1.bf16.msra.mxu0 0
  %936 = vmatprep.subr.bf16.mxu0 0
  %937 = vmatpush1.bf16.msra.mxu0 0
  %938 = vmatprep.mubr.bf16.mxu0 0
  %939 = vmatmul.mubr.bf16.gmra.mrb[0].mxu0 %v250
  %v940 = vpop.f32.mrb[0].mxu0
  %v941 = vadd.f32 %v892, %v940
  %v942 = vpop.f32.mrb[0].mxu0
  %v943 = vpop.f32.mrb[0].mxu0
  %v944 = vadd.f32 %v895, %v943
  %v945 = vpop.f32.mrb[0].mxu0
  %946 = vmatprep.mubr.bf16.mxu0 0
  %947 = vmatmul.mubr.bf16.gmra.mrb[0].mxu0 %v259
  %v948 = vpop.f32.mrb[0].mxu0
  %v949 = vadd.f32 %v900, %v948
  %v950 = vpop.f32.mrb[0].mxu0
  %v951 = vpop.f32.mrb[0].mxu0
  %v952 = vadd.f32 %v903, %v951
  %v953 = vpop.f32.mrb[0].mxu0
  %954 = vdwg.mxu0
  %v955 = vmax.f32 %v941, 0.0
  %v956 = vmax.f32 %v944, 0.0
  %v957 = vmax.f32 %v949, 0.0
  %v958 = vmax.f32 %v952, 0.0
  %v959 = vpack.c.bf16 %v956, %v955
  %v960 = vpack.c.bf16 %v958, %v957
  %v963 = vunpack.c.l.b16 %v959
  %v964 = vunpack.c.h.b16 %v959
  %v965 = vunpack.c.l.b16 %v960
  %v966 = vunpack.c.h.b16 %v960
  %v967 = vpack.c.b16 %v963, %v963
  %v968 = vpack.c.b16 %v964, %v964
  %v969 = vpack.c.b16 %v965, %v965
  %v970 = vpack.c.b16 %v966, %v966
  %975 = vst [vmem:[%s3] sm:$0xf] %v967
  %976 = vst [vmem:[%s3 + $0x4] sm:$0xf] %v968
  %977 = vst [vmem:[%s3 + $0x8] sm:$0xf] %v969
  %978 = vst [vmem:[%s3 + $0xc] sm:$0xf] %v970
  // Predicated region
  $region14: #{_lambda_.6} parent=0 // pred_check
    _
  $region15: #{_lambda_.6} parent=0 // pred_check_branch
    %980 = sbr.rel (0) target = $region17
  $region16: #{_lambda_.6} parent=0 // pred_region
    _
  $region17: #{_lambda_.6} parent=0 // pred_fallthru
    _
  // Predicated region
  $region18: #{_lambda_.6} parent=0 // pred_check
    _
  $region19: #{_lambda_.6} parent=0 // pred_check_branch
    %982 = sbr.rel (0) target = $region21
  $region20: #{_lambda_.6} parent=0 // pred_region
    _
  $region21: #{_lambda_.6} parent=0 // pred_fallthru
    _

// kernel: _lambda_.7
$region0: #{_lambda_.7}
  #allocation0 [shape = 'u32[]', space=smem, size = 0x4, offset = 0x4, fixed_abs, tag = 'smem constant byte address 0x4 - core index']
  #allocation1 [shape = 'u32[144,128]{1,0:T(1,128)}', space=vmem, size = 0x12000, scoped, tag = 'internal scratch']
  %s0 = inlined_call_operand.vmem [shape: bf16[32,1152], index: 0, kind: input, shape index: {}]
  %s1 = inlined_call_operand.vmem [shape: bf16[1152,512], index: 1, kind: input, shape index: {}]
  %s2 = inlined_call_operand.vmem [shape: f32[1,512], index: 2, kind: input, shape index: {}]
  %s3 = inlined_call_operand.vmem [shape: bf16[32,512], index: 3, kind: output, shape index: {}]
  %s4 = sld [smem:[#allocation0]]
  $region117: #{_lambda_.7} parent=0
    _
  %s6 = ssub.s32 1, %s4
  %s7 = scalar_select 0, %s6, %s4
  $region1: #{_lambda_.7} parent=0
    #allocation2 [shape = 'u8[1179648]{0}', space=vmem, size = 0x120000, scoped, tag = 'input window, operand 1']
    #allocation3 [shape = 'u8[32768]{0}', space=vmem, size = 0x8000, scoped, tag = 'output window, operand 0']
    loop: start=0, step=1, limit=4
    $region2: #{_lambda_.7} parent=1 // loop_pre_header
      _
    $region3: #{_lambda_.7} parent=1 // loop_header
      %s9 = sphi 0, %s13
      %p10 = scmp.ge.s32.totalorder %s9, 4
      %s16 = sphi 0, %s28
      %s17 = sphi 0, %s24
      %s18 = sphi 0, %s16
      %s19 = sphi 0, %s17
      %s20 = sphi 0, %s18
      %s21 = sphi 0, %s19
      %s31 = sphi 0, %s33
      %s34 = sphi 0, %s31
      %s35 = sphi 0, %s34
      %s51 = sphi 0, %s35
      %s57 = sphi 0, %s59
      %s60 = sphi 0, %s57
      %s61 = sphi 0, %s60
      %s77 = sphi 0, %s61
      %s83 = sphi 0, %s85
      %s86 = sphi 0, %s83
      %s87 = sphi 0, %s86
      %s103 = sphi 0, %s87
      %s111 = sphi 0, %s113
      %s114 = sphi 0, %s111
      %s115 = sphi 0, %s114
      %s131 = sphi 0, %s115
    $region4: #{_lambda_.7} parent=1 // loop_header_branch
      %12 = sbr.rel (%p10) target = $region8
    $region5: #{_lambda_.7} parent=1 // loop_body
      %s14 = ssub.s32 %s9, 1
      %s15 = ssub.s32 %s9, 2
      %s22 = sadd.s32 1, %s17
      %p23 = scmp.ge.s32.totalorder %s22, 2
      %s24 = scalar_select %p23, 0, %s22
      %s25 = sadd.s32 1, %s16
      %s26 = scalar_select %p23, %s25, %s16
      %p27 = scmp.ge.s32.totalorder %s26, 1
      %s28 = scalar_select %p27, 0, %s26
      %s29 = ssub.s32 %s16, %s28
      %p30 = scmp.eq.s32.totalorder %s29, 0
      %s32 = sadd.s32 %s31, 1
      %s33 = scalar_select %p30, %s31, %s32
      %p36 = pneg %p30
      %p37 = scmp.eq.s32.totalorder %s9, 1
      %p38 = por %p36, %p37
      %p39 = scmp.ne.s32.totalorder %s31, %s34
      %p40 = scmp.eq.s32.totalorder %s9, 0
      %p41 = por %p39, %p40
      %p42 = scmp.ne.s32.totalorder %s31, %s34
      %p43 = scmp.eq.s32.totalorder %s14, 1
      %p44 = por %p42, %p43
      %p45 = scmp.ne.s32.totalorder %s34, %s35
      %p46 = scmp.eq.s32.totalorder %s14, 0
      %p47 = por %p45, %p46
      %p48 = scmp.ne.s32.totalorder %s34, %s35
      %p49 = scmp.eq.s32.totalorder %s15, 1
      %p50 = por %p48, %p49
      %p52 = scmp.ne.s32.totalorder %s35, %s51
      %p53 = scmp.eq.s32.totalorder %s15, 0
      %p54 = por %p52, %p53
      %s55 = ssub.s32 %s17, %s24
      %p56 = scmp.eq.s32.totalorder %s55, 0
      %s58 = sadd.s32 %s57, 1
      %s59 = scalar_select %p56, %s57, %s58
      %p62 = pneg %p56
      %p63 = scmp.eq.s32.totalorder %s9, 1
      %p64 = por %p62, %p63
      %p65 = scmp.ne.s32.totalorder %s57, %s60
      %p66 = scmp.eq.s32.totalorder %s9, 0
      %p67 = por %p65, %p66
      %p68 = scmp.ne.s32.totalorder %s57, %s60
      %p69 = scmp.eq.s32.totalorder %s14, 1
      %p70 = por %p68, %p69
      %p71 = scmp.ne.s32.totalorder %s60, %s61
      %p72 = scmp.eq.s32.totalorder %s14, 0
      %p73 = por %p71, %p72
      %p74 = scmp.ne.s32.totalorder %s60, %s61
      %p75 = scmp.eq.s32.totalorder %s15, 1
      %p76 = por %p74, %p75
      %p78 = scmp.ne.s32.totalorder %s61, %s77
      %p79 = scmp.eq.s32.totalorder %s15, 0
      %p80 = por %p78, %p79
      %s81 = ssub.s32 %s17, %s24
      %p82 = scmp.eq.s32.totalorder %s81, 0
      %s84 = sadd.s32 %s83, 1
      %s85 = scalar_select %p82, %s83, %s84
      %p88 = pneg %p82
      %p89 = scmp.eq.s32.totalorder %s9, 1
      %p90 = por %p88, %p89
      %p91 = scmp.ne.s32.totalorder %s83, %s86
      %p92 = scmp.eq.s32.totalorder %s9, 0
      %p93 = por %p91, %p92
      %p94 = scmp.ne.s32.totalorder %s83, %s86
      %p95 = scmp.eq.s32.totalorder %s14, 1
      %p96 = por %p94, %p95
      %p97 = scmp.ne.s32.totalorder %s86, %s87
      %p98 = scmp.eq.s32.totalorder %s14, 0
      %p99 = por %p97, %p98
      %p100 = scmp.ne.s32.totalorder %s86, %s87
      %p101 = scmp.eq.s32.totalorder %s15, 1
      %p102 = por %p100, %p101
      %p104 = scmp.ne.s32.totalorder %s87, %s103
      %p105 = scmp.eq.s32.totalorder %s15, 0
      %p106 = por %p104, %p105
      %s107 = ssub.s32 %s16, %s28
      %s108 = ssub.s32 %s17, %s24
      %s109 = sor.u32 %s107, %s108
      %p110 = scmp.eq.s32.totalorder %s109, 0
      %s112 = sadd.s32 %s111, 1
      %s113 = scalar_select %p110, %s111, %s112
      %p116 = pneg %p110
      %p117 = scmp.eq.s32.totalorder %s9, 1
      %p118 = por %p116, %p117
      %p119 = scmp.ne.s32.totalorder %s111, %s114
      %p120 = scmp.eq.s32.totalorder %s9, 0
      %p121 = por %p119, %p120
      %p122 = scmp.ne.s32.totalorder %s111, %s114
      %p123 = scmp.eq.s32.totalorder %s14, 1
      %p124 = por %p122, %p123
      %p125 = scmp.ne.s32.totalorder %s114, %s115
      %p126 = scmp.eq.s32.totalorder %s14, 0
      %p127 = por %p125, %p126
      %p128 = scmp.ne.s32.totalorder %s114, %s115
      %p129 = scmp.eq.s32.totalorder %s15, 1
      %p130 = por %p128, %p129
      %p132 = scmp.ne.s32.totalorder %s115, %s131
      %p133 = scmp.eq.s32.totalorder %s15, 0
      %p134 = por %p132, %p133
      %p135 = scmp.le.s32.totalorder 1, %s9
      %p136 = scmp.lt.s32.totalorder %s9, 3
      %p137 = pnand %p135, %p136
      %p138 = pneg %p137
      // Predicated region
      $region9: #{_lambda_.7} parent=5 // pred_check
        _
      $region10: #{_lambda_.7} parent=5 // pred_check_branch
        %140 = sbr.rel (%p137) target = $region12
      $region11: #{_lambda_.7} parent=5 // pred_region
        %s141 = ssub.s32 %s9, 1
        // Predicated region
        $region13: #{_lambda_.7} parent=11 // pred_check
          %p142 = pneg %p47
        $region14: #{_lambda_.7} parent=11 // pred_check_branch
          %144 = sbr.rel (%p142) target = $region16
        $region15: #{_lambda_.7} parent=11 // pred_region
          %s145 = smul.u32 4, %s18
          %p146 = scmp.lt.s32.totalorder %s145, 3
          %s147 = scalar_select %p146, %s145, 3
          %s148 = smul.addr %s147, 9
          %s149 = smul.addr %s148, 4
          %s150 = scalar_lea.vmem %s0, %s149
          %s151 = smul.u32 4, %s18
        $region16: #{_lambda_.7} parent=11 // pred_fallthru
          _
      $region12: #{_lambda_.7} parent=5 // pred_fallthru
        _
      %p152 = scmp.lt.s32.totalorder %s9, 2
      // Predicated region
      $region17: #{_lambda_.7} parent=5 // pred_check
        %p153 = pneg %p152
      $region18: #{_lambda_.7} parent=5 // pred_check_branch
        %155 = sbr.rel (%p153) target = $region20
      $region19: #{_lambda_.7} parent=5 // pred_region
        // Predicated region
        $region21: #{_lambda_.7} parent=19 // pred_check
          %p156 = pneg %p67
        $region22: #{_lambda_.7} parent=19 // pred_check_branch
          %158 = sbr.rel (%p156) target = $region24
        $region23: #{_lambda_.7} parent=19 // pred_region
          %s159 = sand.u32 %s57, 1
          %s160 = sand.u32 %s57, 1
          %s161 = smul.addr %s160, 1152
          %s162 = scalar_lea.vmem [#allocation2], %s161
          %s163 = smul.u32 2, %s17
          %s164 = smul.addr %s163, 4
          %s165 = scalar_lea.vmem %s1, %s164
          // Predicated region
          $region25: #{_lambda_.7} parent=23 // pred_check
            _
          $region26: #{_lambda_.7} parent=23 // pred_check_branch
            %167 = sbr.rel (0) target = $region28
          $region27: #{_lambda_.7} parent=23 // pred_region
            // Predicated region
            $region29: #{_lambda_.7} parent=27 // pred_check
              _
            $region30: #{_lambda_.7} parent=27 // pred_check_branch
              %169 = sbr.rel (0) target = $region32
            $region31: #{_lambda_.7} parent=27 // pred_region
              // Predicated region
              $region44: #{_lambda_.7} parent=31 // pred_check
                _
              $region45: #{_lambda_.7} parent=31 // pred_check_branch
                %470 = sbr.rel (0) target = $region47
              $region46: #{_lambda_.7} parent=31 // pred_region
                loop: start=0, step=1, limit=1
                $region48: #{_lambda_.7} parent=46 // loop_pre_header
                  _
                $region49: #{_lambda_.7} parent=46 // loop_header
                  %s472 = sphi 0, %s476
                  %p473 = scmp.ge.s32.totalorder %s472, 1
                  %s477 = sphi %s165, %s165
                  %s478 = sphi %s162, %s162
                $region50: #{_lambda_.7} parent=46 // loop_header_branch
                  %475 = sbr.rel (%p473) target = $region54
                $region51: #{_lambda_.7} parent=46 // loop_body
                  %v479 = vld [vmem:[%s477] sm:$0xff]
                  %480 = vst [vmem:[%s478] sm:$0xff] %v479
                  %v481 = vld [vmem:[%s477 + $0x10] sm:$0xff]
                  %482 = vst [vmem:[%s478 + $0x8] sm:$0xff] %v481
                  %v483 = vld [vmem:[%s477 + $0x20] sm:$0xff]
                  %484 = vst [vmem:[%s478 + $0x10] sm:$0xff] %v483
                  %v485 = vld [vmem:[%s477 + $0x30] sm:$0xff]
                  %486 = vst [vmem:[%s478 + $0x18] sm:$0xff] %v485
                  %v487 = vld [vmem:[%s477 + $0x40] sm:$0xff]
                  %488 = vst [vmem:[%s478 + $0x20] sm:$0xff] %v487
                  %v489 = vld [vmem:[%s477 + $0x50] sm:$0xff]
                  %490 = vst [vmem:[%s478 + $0x28] sm:$0xff] %v489
                  %v491 = vld [vmem:[%s477 + $0x60] sm:$0xff]
                  %492 = vst [vmem:[%s478 + $0x30] sm:$0xff] %v491
                  %v493 = vld [vmem:[%s477 + $0x70] sm:$0xff]
                  %494 = vst [vmem:[%s478 + $0x38] sm:$0xff] %v493
                  %v495 = vld [vmem:[%s477 + $0x80] sm:$0xff]
                  %496 = vst [vmem:[%s478 + $0x40] sm:$0xff] %v495
                  %v497 = vld [vmem:[%s477 + $0x90] sm:$0xff]
                  %498 = vst [vmem:[%s478 + $0x48] sm:$0xff] %v497
                  %v499 = vld [vmem:[%s477 + $0xa0] sm:$0xff]
                  %500 = vst [vmem:[%s478 + $0x50] sm:$0xff] %v499
                  %v501 = vld [vmem:[%s477 + $0xb0] sm:$0xff]
                  %502 = vst [vmem:[%s478 + $0x58] sm:$0xff] %v501
                  %v503 = vld [vmem:[%s477 + $0xc0] sm:$0xff]
                  %504 = vst [vmem:[%s478 + $0x60] sm:$0xff] %v503
                  %v505 = vld [vmem:[%s477 + $0xd0] sm:$0xff]
                  %506 = vst [vmem:[%s478 + $0x68] sm:$0xff] %v505
                  %v507 = vld [vmem:[%s477 + $0xe0] sm:$0xff]
                  %508 = vst [vmem:[%s478 + $0x70] sm:$0xff] %v507
                  %v509 = vld [vmem:[%s477 + $0xf0] sm:$0xff]
                  %510 = vst [vmem:[%s478 + $0x78] sm:$0xff] %v509
                  %v511 = vld [vmem:[%s477 + $0x100] sm:$0xff]
                  %512 = vst [vmem:[%s478 + $0x80] sm:$0xff] %v511
                  %v513 = vld [vmem:[%s477 + $0x110] sm:$0xff]
                  %514 = vst [vmem:[%s478 + $0x88] sm:$0xff] %v513
                  %v515 = vld [vmem:[%s477 + $0x120] sm:$0xff]
                  %516 = vst [vmem:[%s478 + $0x90] sm:$0xff] %v515
                  %v517 = vld [vmem:[%s477 + $0x130] sm:$0xff]
                  %518 = vst [vmem:[%s478 + $0x98] sm:$0xff] %v517
                  %v519 = vld [vmem:[%s477 + $0x140] sm:$0xff]
                  %520 = vst [vmem:[%s478 + $0xa0] sm:$0xff] %v519
                  %v521 = vld [vmem:[%s477 + $0x150] sm:$0xff]
                  %522 = vst [vmem:[%s478 + $0xa8] sm:$0xff] %v521
                  %v523 = vld [vmem:[%s477 + $0x160] sm:$0xff]
                  %524 = vst [vmem:[%s478 + $0xb0] sm:$0xff] %v523
                  %v525 = vld [vmem:[%s477 + $0x170] sm:$0xff]
                  %526 = vst [vmem:[%s478 + $0xb8] sm:$0xff] %v525
                  %v527 = vld [vmem:[%s477 + $0x180] sm:$0xff]
                  %528 = vst [vmem:[%s478 + $0xc0] sm:$0xff] %v527
                  %v529 = vld [vmem:[%s477 + $0x190] sm:$0xff]
                  %530 = vst [vmem:[%s478 + $0xc8] sm:$0xff] %v529
                  %v531 = vld [vmem:[%s477 + $0x1a0] sm:$0xff]
                  %532 = vst [vmem:[%s478 + $0xd0] sm:$0xff] %v531
                  %v533 = vld [vmem:[%s477 + $0x1b0] sm:$0xff]
                  %534 = vst [vmem:[%s478 + $0xd8] sm:$0xff] %v533
                  %v535 = vld [vmem:[%s477 + $0x1c0] sm:$0xff]
                  %536 = vst [vmem:[%s478 + $0xe0] sm:$0xff] %v535
                  %v537 = vld [vmem:[%s477 + $0x1d0] sm:$0xff]
                  %538 = vst [vmem:[%s478 + $0xe8] sm:$0xff] %v537
                  %v539 = vld [vmem:[%s477 + $0x1e0] sm:$0xff]
                  %540 = vst [vmem:[%s478 + $0xf0] sm:$0xff] %v539
                  %v541 = vld [vmem:[%s477 + $0x1f0] sm:$0xff]
                  %542 = vst [vmem:[%s478 + $0xf8] sm:$0xff] %v541
                  %v543 = vld [vmem:[%s477 + $0x200] sm:$0xff]
                  %544 = vst [vmem:[%s478 + $0x100] sm:$0xff] %v543
                  %v545 = vld [vmem:[%s477 + $0x210] sm:$0xff]
                  %546 = vst [vmem:[%s478 + $0x108] sm:$0xff] %v545
                  %v547 = vld [vmem:[%s477 + $0x220] sm:$0xff]
                  %548 = vst [vmem:[%s478 + $0x110] sm:$0xff] %v547
                  %v549 = vld [vmem:[%s477 + $0x230] sm:$0xff]
                  %550 = vst [vmem:[%s478 + $0x118] sm:$0xff] %v549
                  %v551 = vld [vmem:[%s477 + $0x240] sm:$0xff]
                  %552 = vst [vmem:[%s478 + $0x120] sm:$0xff] %v551
                  %v553 = vld [vmem:[%s477 + $0x250] sm:$0xff]
                  %554 = vst [vmem:[%s478 + $0x128] sm:$0xff] %v553
                  %v555 = vld [vmem:[%s477 + $0x260] sm:$0xff]
                  %556 = vst [vmem:[%s478 + $0x130] sm:$0xff] %v555
                  %v557 = vld [vmem:[%s477 + $0x270] sm:$0xff]
                  %558 = vst [vmem:[%s478 + $0x138] sm:$0xff] %v557
                  %v559 = vld [vmem:[%s477 + $0x280] sm:$0xff]
                  %560 = vst [vmem:[%s478 + $0x140] sm:$0xff] %v559
                  %v561 = vld [vmem:[%s477 + $0x290] sm:$0xff]
                  %562 = vst [vmem:[%s478 + $0x148] sm:$0xff] %v561
                  %v563 = vld [vmem:[%s477 + $0x2a0] sm:$0xff]
                  %564 = vst [vmem:[%s478 + $0x150] sm:$0xff] %v563
                  %v565 = vld [vmem:[%s477 + $0x2b0] sm:$0xff]
                  %566 = vst [vmem:[%s478 + $0x158] sm:$0xff] %v565
                  %v567 = vld [vmem:[%s477 + $0x2c0] sm:$0xff]
                  %568 = vst [vmem:[%s478 + $0x160] sm:$0xff] %v567
                  %v569 = vld [vmem:[%s477 + $0x2d0] sm:$0xff]
                  %570 = vst [vmem:[%s478 + $0x168] sm:$0xff] %v569
                  %v571 = vld [vmem:[%s477 + $0x2e0] sm:$0xff]
                  %572 = vst [vmem:[%s478 + $0x170] sm:$0xff] %v571
                  %v573 = vld [vmem:[%s477 + $0x2f0] sm:$0xff]
                  %574 = vst [vmem:[%s478 + $0x178] sm:$0xff] %v573
                  %v575 = vld [vmem:[%s477 + $0x300] sm:$0xff]
                  %576 = vst [vmem:[%s478 + $0x180] sm:$0xff] %v575
                  %v577 = vld [vmem:[%s477 + $0x310] sm:$0xff]
                  %578 = vst [vmem:[%s478 + $0x188] sm:$0xff] %v577
                  %v579 = vld [vmem:[%s477 + $0x320] sm:$0xff]
                  %580 = vst [vmem:[%s478 + $0x190] sm:$0xff] %v579
                  %v581 = vld [vmem:[%s477 + $0x330] sm:$0xff]
                  %582 = vst [vmem:[%s478 + $0x198] sm:$0xff] %v581
                  %v583 = vld [vmem:[%s477 + $0x340] sm:$0xff]
                  %584 = vst [vmem:[%s478 + $0x1a0] sm:$0xff] %v583
                  %v585 = vld [vmem:[%s477 + $0x350] sm:$0xff]
                  %586 = vst [vmem:[%s478 + $0x1a8] sm:$0xff] %v585
                  %v587 = vld [vmem:[%s477 + $0x360] sm:$0xff]
                  %588 = vst [vmem:[%s478 + $0x1b0] sm:$0xff] %v587
                  %v589 = vld [vmem:[%s477 + $0x370] sm:$0xff]
                  %590 = vst [vmem:[%s478 + $0x1b8] sm:$0xff] %v589
                  %v591 = vld [vmem:[%s477 + $0x380] sm:$0xff]
                  %592 = vst [vmem:[%s478 + $0x1c0] sm:$0xff] %v591
                  %v593 = vld [vmem:[%s477 + $0x390] sm:$0xff]
                  %594 = vst [vmem:[%s478 + $0x1c8] sm:$0xff] %v593
                  %v595 = vld [vmem:[%s477 + $0x3a0] sm:$0xff]
                  %596 = vst [vmem:[%s478 + $0x1d0] sm:$0xff] %v595
                  %v597 = vld [vmem:[%s477 + $0x3b0] sm:$0xff]
                  %598 = vst [vmem:[%s478 + $0x1d8] sm:$0xff] %v597
                  %v599 = vld [vmem:[%s477 + $0x3c0] sm:$0xff]
                  %600 = vst [vmem:[%s478 + $0x1e0] sm:$0xff] %v599
                  %v601 = vld [vmem:[%s477 + $0x3d0] sm:$0xff]
                  %602 = vst [vmem:[%s478 + $0x1e8] sm:$0xff] %v601
                  %v603 = vld [vmem:[%s477 + $0x3e0] sm:$0xff]
                  %604 = vst [vmem:[%s478 + $0x1f0] sm:$0xff] %v603
                  %v605 = vld [vmem:[%s477 + $0x3f0] sm:$0xff]
                  %606 = vst [vmem:[%s478 + $0x1f8] sm:$0xff] %v605
                  %v607 = vld [vmem:[%s477 + $0x400] sm:$0xff]
                  %608 = vst [vmem:[%s478 + $0x200] sm:$0xff] %v607
                  %v609 = vld [vmem:[%s477 + $0x410] sm:$0xff]
                  %610 = vst [vmem:[%s478 + $0x208] sm:$0xff] %v609
                  %v611 = vld [vmem:[%s477 + $0x420] sm:$0xff]
                  %612 = vst [vmem:[%s478 + $0x210] sm:$0xff] %v611
                  %v613 = vld [vmem:[%s477 + $0x430] sm:$0xff]
                  %614 = vst [vmem:[%s478 + $0x218] sm:$0xff] %v613
                  %v615 = vld [vmem:[%s477 + $0x440] sm:$0xff]
                  %616 = vst [vmem:[%s478 + $0x220] sm:$0xff] %v615
                  %v617 = vld [vmem:[%s477 + $0x450] sm:$0xff]
                  %618 = vst [vmem:[%s478 + $0x228] sm:$0xff] %v617
                  %v619 = vld [vmem:[%s477 + $0x460] sm:$0xff]
                  %620 = vst [vmem:[%s478 + $0x230] sm:$0xff] %v619
                  %v621 = vld [vmem:[%s477 + $0x470] sm:$0xff]
                  %622 = vst [vmem:[%s478 + $0x238] sm:$0xff] %v621
                  %v623 = vld [vmem:[%s477 + $0x480] sm:$0xff]
                  %624 = vst [vmem:[%s478 + $0x240] sm:$0xff] %v623
                  %v625 = vld [vmem:[%s477 + $0x490] sm:$0xff]
                  %626 = vst [vmem:[%s478 + $0x248] sm:$0xff] %v625
                  %v627 = vld [vmem:[%s477 + $0x4a0] sm:$0xff]
                  %628 = vst [vmem:[%s478 + $0x250] sm:$0xff] %v627
                  %v629 = vld [vmem:[%s477 + $0x4b0] sm:$0xff]
                  %630 = vst [vmem:[%s478 + $0x258] sm:$0xff] %v629
                  %v631 = vld [vmem:[%s477 + $0x4c0] sm:$0xff]
                  %632 = vst [vmem:[%s478 + $0x260] sm:$0xff] %v631
                  %v633 = vld [vmem:[%s477 + $0x4d0] sm:$0xff]
                  %634 = vst [vmem:[%s478 + $0x268] sm:$0xff] %v633
                  %v635 = vld [vmem:[%s477 + $0x4e0] sm:$0xff]
                  %636 = vst [vmem:[%s478 + $0x270] sm:$0xff] %v635
                  %v637 = vld [vmem:[%s477 + $0x4f0] sm:$0xff]
                  %638 = vst [vmem:[%s478 + $0x278] sm:$0xff] %v637
                  %v639 = vld [vmem:[%s477 + $0x500] sm:$0xff]
                  %640 = vst [vmem:[%s478 + $0x280] sm:$0xff] %v639
                  %v641 = vld [vmem:[%s477 + $0x510] sm:$0xff]
                  %642 = vst [vmem:[%s478 + $0x288] sm:$0xff] %v641
                  %v643 = vld [vmem:[%s477 + $0x520] sm:$0xff]
                  %644 = vst [vmem:[%s478 + $0x290] sm:$0xff] %v643
                  %v645 = vld [vmem:[%s477 + $0x530] sm:$0xff]
                  %646 = vst [vmem:[%s478 + $0x298] sm:$0xff] %v645
                  %v647 = vld [vmem:[%s477 + $0x540] sm:$0xff]
                  %648 = vst [vmem:[%s478 + $0x2a0] sm:$0xff] %v647
                  %v649 = vld [vmem:[%s477 + $0x550] sm:$0xff]
                  %650 = vst [vmem:[%s478 + $0x2a8] sm:$0xff] %v649
                  %v651 = vld [vmem:[%s477 + $0x560] sm:$0xff]
                  %652 = vst [vmem:[%s478 + $0x2b0] sm:$0xff] %v651
                  %v653 = vld [vmem:[%s477 + $0x570] sm:$0xff]
                  %654 = vst [vmem:[%s478 + $0x2b8] sm:$0xff] %v653
                  %v655 = vld [vmem:[%s477 + $0x580] sm:$0xff]
                  %656 = vst [vmem:[%s478 + $0x2c0] sm:$0xff] %v655
                  %v657 = vld [vmem:[%s477 + $0x590] sm:$0xff]
                  %658 = vst [vmem:[%s478 + $0x2c8] sm:$0xff] %v657
                  %v659 = vld [vmem:[%s477 + $0x5a0] sm:$0xff]
                  %660 = vst [vmem:[%s478 + $0x2d0] sm:$0xff] %v659
                  %v661 = vld [vmem:[%s477 + $0x5b0] sm:$0xff]
                  %662 = vst [vmem:[%s478 + $0x2d8] sm:$0xff] %v661
                  %v663 = vld [vmem:[%s477 + $0x5c0] sm:$0xff]
                  %664 = vst [vmem:[%s478 + $0x2e0] sm:$0xff] %v663
                  %v665 = vld [vmem:[%s477 + $0x5d0] sm:$0xff]
                  %666 = vst [vmem:[%s478 + $0x2e8] sm:$0xff] %v665
                  %v667 = vld [vmem:[%s477 + $0x5e0] sm:$0xff]
                  %668 = vst [vmem:[%s478 + $0x2f0] sm:$0xff] %v667
                  %v669 = vld [vmem:[%s477 + $0x5f0] sm:$0xff]
                  %670 = vst [vmem:[%s478 + $0x2f8] sm:$0xff] %v669
                  %v671 = vld [vmem:[%s477 + $0x600] sm:$0xff]
                  %672 = vst [vmem:[%s478 + $0x300] sm:$0xff] %v671
                  %v673 = vld [vmem:[%s477 + $0x610] sm:$0xff]
                  %674 = vst [vmem:[%s478 + $0x308] sm:$0xff] %v673
                  %v675 = vld [vmem:[%s477 + $0x620] sm:$0xff]
                  %676 = vst [vmem:[%s478 + $0x310] sm:$0xff] %v675
                  %v677 = vld [vmem:[%s477 + $0x630] sm:$0xff]
                  %678 = vst [vmem:[%s478 + $0x318] sm:$0xff] %v677
                  %v679 = vld [vmem:[%s477 + $0x640] sm:$0xff]
                  %680 = vst [vmem:[%s478 + $0x320] sm:$0xff] %v679
                  %v681 = vld [vmem:[%s477 + $0x650] sm:$0xff]
                  %682 = vst [vmem:[%s478 + $0x328] sm:$0xff] %v681
                  %v683 = vld [vmem:[%s477 + $0x660] sm:$0xff]
                  %684 = vst [vmem:[%s478 + $0x330] sm:$0xff] %v683
                  %v685 = vld [vmem:[%s477 + $0x670] sm:$0xff]
                  %686 = vst [vmem:[%s478 + $0x338] sm:$0xff] %v685
                  %v687 = vld [vmem:[%s477 + $0x680] sm:$0xff]
                  %688 = vst [vmem:[%s478 + $0x340] sm:$0xff] %v687
                  %v689 = vld [vmem:[%s477 + $0x690] sm:$0xff]
                  %690 = vst [vmem:[%s478 + $0x348] sm:$0xff] %v689
                  %v691 = vld [vmem:[%s477 + $0x6a0] sm:$0xff]
                  %692 = vst [vmem:[%s478 + $0x350] sm:$0xff] %v691
                  %v693 = vld [vmem:[%s477 + $0x6b0] sm:$0xff]
                  %694 = vst [vmem:[%s478 + $0x358] sm:$0xff] %v693
                  %v695 = vld [vmem:[%s477 + $0x6c0] sm:$0xff]
                  %696 = vst [vmem:[%s478 + $0x360] sm:$0xff] %v695
                  %v697 = vld [vmem:[%s477 + $0x6d0] sm:$0xff]
                  %698 = vst [vmem:[%s478 + $0x368] sm:$0xff] %v697
                  %v699 = vld [vmem:[%s477 + $0x6e0] sm:$0xff]
                  %700 = vst [vmem:[%s478 + $0x370] sm:$0xff] %v699
                  %v701 = vld [vmem:[%s477 + $0x6f0] sm:$0xff]
                  %702 = vst [vmem:[%s478 + $0x378] sm:$0xff] %v701
                  %v703 = vld [vmem:[%s477 + $0x700] sm:$0xff]
                  %704 = vst [vmem:[%s478 + $0x380] sm:$0xff] %v703
                  %v705 = vld [vmem:[%s477 + $0x710] sm:$0xff]
                  %706 = vst [vmem:[%s478 + $0x388] sm:$0xff] %v705
                  %v707 = vld [vmem:[%s477 + $0x720] sm:$0xff]
                  %708 = vst [vmem:[%s478 + $0x390] sm:$0xff] %v707
                  %v709 = vld [vmem:[%s477 + $0x730] sm:$0xff]
                  %710 = vst [vmem:[%s478 + $0x398] sm:$0xff] %v709
                  %v711 = vld [vmem:[%s477 + $0x740] sm:$0xff]
                  %712 = vst [vmem:[%s478 + $0x3a0] sm:$0xff] %v711
                  %v713 = vld [vmem:[%s477 + $0x750] sm:$0xff]
                  %714 = vst [vmem:[%s478 + $0x3a8] sm:$0xff] %v713
                  %v715 = vld [vmem:[%s477 + $0x760] sm:$0xff]
                  %716 = vst [vmem:[%s478 + $0x3b0] sm:$0xff] %v715
                  %v717 = vld [vmem:[%s477 + $0x770] sm:$0xff]
                  %718 = vst [vmem:[%s478 + $0x3b8] sm:$0xff] %v717
                  %v719 = vld [vmem:[%s477 + $0x780] sm:$0xff]
                  %720 = vst [vmem:[%s478 + $0x3c0] sm:$0xff] %v719
                  %v721 = vld [vmem:[%s477 + $0x790] sm:$0xff]
                  %722 = vst [vmem:[%s478 + $0x3c8] sm:$0xff] %v721
                  %v723 = vld [vmem:[%s477 + $0x7a0] sm:$0xff]
                  %724 = vst [vmem:[%s478 + $0x3d0] sm:$0xff] %v723
                  %v725 = vld [vmem:[%s477 + $0x7b0] sm:$0xff]
                  %726 = vst [vmem:[%s478 + $0x3d8] sm:$0xff] %v725
                  %v727 = vld [vmem:[%s477 + $0x7c0] sm:$0xff]
                  %728 = vst [vmem:[%s478 + $0x3e0] sm:$0xff] %v727
                  %v729 = vld [vmem:[%s477 + $0x7d0] sm:$0xff]
                  %730 = vst [vmem:[%s478 + $0x3e8] sm:$0xff] %v729
                  %v731 = vld [vmem:[%s477 + $0x7e0] sm:$0xff]
                  %732 = vst [vmem:[%s478 + $0x3f0] sm:$0xff] %v731
                  %v733 = vld [vmem:[%s477 + $0x7f0] sm:$0xff]
                  %734 = vst [vmem:[%s478 + $0x3f8] sm:$0xff] %v733
                  %v735 = vld [vmem:[%s477 + $0x800] sm:$0xff]
                  %736 = vst [vmem:[%s478 + $0x400] sm:$0xff] %v735
                  %v737 = vld [vmem:[%s477 + $0x810] sm:$0xff]
                  %738 = vst [vmem:[%s478 + $0x408] sm:$0xff] %v737
                  %v739 = vld [vmem:[%s477 + $0x820] sm:$0xff]
                  %740 = vst [vmem:[%s478 + $0x410] sm:$0xff] %v739
                  %v741 = vld [vmem:[%s477 + $0x830] sm:$0xff]
                  %742 = vst [vmem:[%s478 + $0x418] sm:$0xff] %v741
                  %v743 = vld [vmem:[%s477 + $0x840] sm:$0xff]
                  %744 = vst [vmem:[%s478 + $0x420] sm:$0xff] %v743
                  %v745 = vld [vmem:[%s477 + $0x850] sm:$0xff]
                  %746 = vst [vmem:[%s478 + $0x428] sm:$0xff] %v745
                  %v747 = vld [vmem:[%s477 + $0x860] sm:$0xff]
                  %748 = vst [vmem:[%s478 + $0x430] sm:$0xff] %v747
                  %v749 = vld [vmem:[%s477 + $0x870] sm:$0xff]
                  %750 = vst [vmem:[%s478 + $0x438] sm:$0xff] %v749
                  %v751 = vld [vmem:[%s477 + $0x880] sm:$0xff]
                  %752 = vst [vmem:[%s478 + $0x440] sm:$0xff] %v751
                  %v753 = vld [vmem:[%s477 + $0x890] sm:$0xff]
                  %754 = vst [vmem:[%s478 + $0x448] sm:$0xff] %v753
                  %v755 = vld [vmem:[%s477 + $0x8a0] sm:$0xff]
                  %756 = vst [vmem:[%s478 + $0x450] sm:$0xff] %v755
                  %v757 = vld [vmem:[%s477 + $0x8b0] sm:$0xff]
                  %758 = vst [vmem:[%s478 + $0x458] sm:$0xff] %v757
                  %v759 = vld [vmem:[%s477 + $0x8c0] sm:$0xff]
                  %760 = vst [vmem:[%s478 + $0x460] sm:$0xff] %v759
                  %v761 = vld [vmem:[%s477 + $0x8d0] sm:$0xff]
                  %762 = vst [vmem:[%s478 + $0x468] sm:$0xff] %v761
                  %v763 = vld [vmem:[%s477 + $0x8e0] sm:$0xff]
                  %764 = vst [vmem:[%s478 + $0x470] sm:$0xff] %v763
                  %v765 = vld [vmem:[%s477 + $0x8f0] sm:$0xff]
                  %766 = vst [vmem:[%s478 + $0x478] sm:$0xff] %v765
                $region52: #{_lambda_.7} parent=46 // loop_footer
                  %s476 = sadd.s32 1, %s472
                $region53: #{_lambda_.7} parent=46 // loop_footer_branch
                  %471 = sbr.rel target = $region49
                $region54: #{_lambda_.7} parent=46 // loop_exit
                  _
              $region47: #{_lambda_.7} parent=31 // pred_fallthru
                _
              // Predicated region
              $region55: #{_lambda_.7} parent=31 // pred_check
                _
              $region56: #{_lambda_.7} parent=31 // pred_check_branch
                %768 = sbr.rel target = $region58
              $region57: #{_lambda_.7} parent=31 // pred_region
                _
              $region58: #{_lambda_.7} parent=31 // pred_fallthru
                _
            $region32: #{_lambda_.7} parent=27 // pred_fallthru
              _
            // Predicated region
            $region33: #{_lambda_.7} parent=27 // pred_check
              _
            $region34: #{_lambda_.7} parent=27 // pred_check_branch
              %171 = sbr.rel target = $region36
            $region35: #{_lambda_.7} parent=27 // pred_region
              loop: start=0, step=1, limit=1
              $region37: #{_lambda_.7} parent=35 // loop_pre_header
                _
              $region38: #{_lambda_.7} parent=35 // loop_header
                %s174 = sphi 0, %s178
                %p175 = scmp.ge.s32.totalorder %s174, 1
                %s179 = sphi %s165, %s165
                %s180 = sphi %s162, %s162
              $region39: #{_lambda_.7} parent=35 // loop_header_branch
                %177 = sbr.rel (%p175) target = $region43
              $region40: #{_lambda_.7} parent=35 // loop_body
                %v181 = vld [vmem:[%s179] sm:$0xff]
                %182 = vst [vmem:[%s180] sm:$0xff] %v181
                %v183 = vld [vmem:[%s179 + $0x10] sm:$0xff]
                %184 = vst [vmem:[%s180 + $0x8] sm:$0xff] %v183
                %v185 = vld [vmem:[%s179 + $0x20] sm:$0xff]
                %186 = vst [vmem:[%s180 + $0x10] sm:$0xff] %v185
                %v187 = vld [vmem:[%s179 + $0x30] sm:$0xff]
                %188 = vst [vmem:[%s180 + $0x18] sm:$0xff] %v187
                %v189 = vld [vmem:[%s179 + $0x40] sm:$0xff]
                %190 = vst [vmem:[%s180 + $0x20] sm:$0xff] %v189
                %v191 = vld [vmem:[%s179 + $0x50] sm:$0xff]
                %192 = vst [vmem:[%s180 + $0x28] sm:$0xff] %v191
                %v193 = vld [vmem:[%s179 + $0x60] sm:$0xff]
                %194 = vst [vmem:[%s180 + $0x30] sm:$0xff] %v193
                %v195 = vld [vmem:[%s179 + $0x70] sm:$0xff]
                %196 = vst [vmem:[%s180 + $0x38] sm:$0xff] %v195
                %v197 = vld [vmem:[%s179 + $0x80] sm:$0xff]
                %198 = vst [vmem:[%s180 + $0x40] sm:$0xff] %v197
                %v199 = vld [vmem:[%s179 + $0x90] sm:$0xff]
                %200 = vst [vmem:[%s180 + $0x48] sm:$0xff] %v199
                %v201 = vld [vmem:[%s179 + $0xa0] sm:$0xff]
                %202 = vst [vmem:[%s180 + $0x50] sm:$0xff] %v201
                %v203 = vld [vmem:[%s179 + $0xb0] sm:$0xff]
                %204 = vst [vmem:[%s180 + $0x58] sm:$0xff] %v203
                %v205 = vld [vmem:[%s179 + $0xc0] sm:$0xff]
                %206 = vst [vmem:[%s180 + $0x60] sm:$0xff] %v205
                %v207 = vld [vmem:[%s179 + $0xd0] sm:$0xff]
                %208 = vst [vmem:[%s180 + $0x68] sm:$0xff] %v207
                %v209 = vld [vmem:[%s179 + $0xe0] sm:$0xff]
                %210 = vst [vmem:[%s180 + $0x70] sm:$0xff] %v209
                %v211 = vld [vmem:[%s179 + $0xf0] sm:$0xff]
                %212 = vst [vmem:[%s180 + $0x78] sm:$0xff] %v211
                %v213 = vld [vmem:[%s179 + $0x100] sm:$0xff]
                %214 = vst [vmem:[%s180 + $0x80] sm:$0xff] %v213
                %v215 = vld [vmem:[%s179 + $0x110] sm:$0xff]
                %216 = vst [vmem:[%s180 + $0x88] sm:$0xff] %v215
                %v217 = vld [vmem:[%s179 + $0x120] sm:$0xff]
                %218 = vst [vmem:[%s180 + $0x90] sm:$0xff] %v217
                %v219 = vld [vmem:[%s179 + $0x130] sm:$0xff]
                %220 = vst [vmem:[%s180 + $0x98] sm:$0xff] %v219
                %v221 = vld [vmem:[%s179 + $0x140] sm:$0xff]
                %222 = vst [vmem:[%s180 + $0xa0] sm:$0xff] %v221
                %v223 = vld [vmem:[%s179 + $0x150] sm:$0xff]
                %224 = vst [vmem:[%s180 + $0xa8] sm:$0xff] %v223
                %v225 = vld [vmem:[%s179 + $0x160] sm:$0xff]
                %226 = vst [vmem:[%s180 + $0xb0] sm:$0xff] %v225
                %v227 = vld [vmem:[%s179 + $0x170] sm:$0xff]
                %228 = vst [vmem:[%s180 + $0xb8] sm:$0xff] %v227
                %v229 = vld [vmem:[%s179 + $0x180] sm:$0xff]
                %230 = vst [vmem:[%s180 + $0xc0] sm:$0xff] %v229
                %v231 = vld [vmem:[%s179 + $0x190] sm:$0xff]
                %232 = vst [vmem:[%s180 + $0xc8] sm:$0xff] %v231
                %v233 = vld [vmem:[%s179 + $0x1a0] sm:$0xff]
                %234 = vst [vmem:[%s180 + $0xd0] sm:$0xff] %v233
                %v235 = vld [vmem:[%s179 + $0x1b0] sm:$0xff]
                %236 = vst [vmem:[%s180 + $0xd8] sm:$0xff] %v235
                %v237 = vld [vmem:[%s179 + $0x1c0] sm:$0xff]
                %238 = vst [vmem:[%s180 + $0xe0] sm:$0xff] %v237
                %v239 = vld [vmem:[%s179 + $0x1d0] sm:$0xff]
                %240 = vst [vmem:[%s180 + $0xe8] sm:$0xff] %v239
                %v241 = vld [vmem:[%s179 + $0x1e0] sm:$0xff]
                %242 = vst [vmem:[%s180 + $0xf0] sm:$0xff] %v241
                %v243 = vld [vmem:[%s179 + $0x1f0] sm:$0xff]
                %244 = vst [vmem:[%s180 + $0xf8] sm:$0xff] %v243
                %v245 = vld [vmem:[%s179 + $0x200] sm:$0xff]
                %246 = vst [vmem:[%s180 + $0x100] sm:$0xff] %v245
                %v247 = vld [vmem:[%s179 + $0x210] sm:$0xff]
                %248 = vst [vmem:[%s180 + $0x108] sm:$0xff] %v247
                %v249 = vld [vmem:[%s179 + $0x220] sm:$0xff]
                %250 = vst [vmem:[%s180 + $0x110] sm:$0xff] %v249
                %v251 = vld [vmem:[%s179 + $0x230] sm:$0xff]
                %252 = vst [vmem:[%s180 + $0x118] sm:$0xff] %v251
                %v253 = vld [vmem:[%s179 + $0x240] sm:$0xff]
                %254 = vst [vmem:[%s180 + $0x120] sm:$0xff] %v253
                %v255 = vld [vmem:[%s179 + $0x250] sm:$0xff]
                %256 = vst [vmem:[%s180 + $0x128] sm:$0xff] %v255
                %v257 = vld [vmem:[%s179 + $0x260] sm:$0xff]
                %258 = vst [vmem:[%s180 + $0x130] sm:$0xff] %v257
                %v259 = vld [vmem:[%s179 + $0x270] sm:$0xff]
                %260 = vst [vmem:[%s180 + $0x138] sm:$0xff] %v259
                %v261 = vld [vmem:[%s179 + $0x280] sm:$0xff]
                %262 = vst [vmem:[%s180 + $0x140] sm:$0xff] %v261
                %v263 = vld [vmem:[%s179 + $0x290] sm:$0xff]
                %264 = vst [vmem:[%s180 + $0x148] sm:$0xff] %v263
                %v265 = vld [vmem:[%s179 + $0x2a0] sm:$0xff]
                %266 = vst [vmem:[%s180 + $0x150] sm:$0xff] %v265
                %v267 = vld [vmem:[%s179 + $0x2b0] sm:$0xff]
                %268 = vst [vmem:[%s180 + $0x158] sm:$0xff] %v267
                %v269 = vld [vmem:[%s179 + $0x2c0] sm:$0xff]
                %270 = vst [vmem:[%s180 + $0x160] sm:$0xff] %v269
                %v271 = vld [vmem:[%s179 + $0x2d0] sm:$0xff]
                %272 = vst [vmem:[%s180 + $0x168] sm:$0xff] %v271
                %v273 = vld [vmem:[%s179 + $0x2e0] sm:$0xff]
                %274 = vst [vmem:[%s180 + $0x170] sm:$0xff] %v273
                %v275 = vld [vmem:[%s179 + $0x2f0] sm:$0xff]
                %276 = vst [vmem:[%s180 + $0x178] sm:$0xff] %v275
                %v277 = vld [vmem:[%s179 + $0x300] sm:$0xff]
                %278 = vst [vmem:[%s180 + $0x180] sm:$0xff] %v277
                %v279 = vld [vmem:[%s179 + $0x310] sm:$0xff]
                %280 = vst [vmem:[%s180 + $0x188] sm:$0xff] %v279
                %v281 = vld [vmem:[%s179 + $0x320] sm:$0xff]
                %282 = vst [vmem:[%s180 + $0x190] sm:$0xff] %v281
                %v283 = vld [vmem:[%s179 + $0x330] sm:$0xff]
                %284 = vst [vmem:[%s180 + $0x198] sm:$0xff] %v283
                %v285 = vld [vmem:[%s179 + $0x340] sm:$0xff]
                %286 = vst [vmem:[%s180 + $0x1a0] sm:$0xff] %v285
                %v287 = vld [vmem:[%s179 + $0x350] sm:$0xff]
                %288 = vst [vmem:[%s180 + $0x1a8] sm:$0xff] %v287
                %v289 = vld [vmem:[%s179 + $0x360] sm:$0xff]
                %290 = vst [vmem:[%s180 + $0x1b0] sm:$0xff] %v289
                %v291 = vld [vmem:[%s179 + $0x370] sm:$0xff]
                %292 = vst [vmem:[%s180 + $0x1b8] sm:$0xff] %v291
                %v293 = vld [vmem:[%s179 + $0x380] sm:$0xff]
                %294 = vst [vmem:[%s180 + $0x1c0] sm:$0xff] %v293
                %v295 = vld [vmem:[%s179 + $0x390] sm:$0xff]
                %296 = vst [vmem:[%s180 + $0x1c8] sm:$0xff] %v295
                %v297 = vld [vmem:[%s179 + $0x3a0] sm:$0xff]
                %298 = vst [vmem:[%s180 + $0x1d0] sm:$0xff] %v297
                %v299 = vld [vmem:[%s179 + $0x3b0] sm:$0xff]
                %300 = vst [vmem:[%s180 + $0x1d8] sm:$0xff] %v299
                %v301 = vld [vmem:[%s179 + $0x3c0] sm:$0xff]
                %302 = vst [vmem:[%s180 + $0x1e0] sm:$0xff] %v301
                %v303 = vld [vmem:[%s179 + $0x3d0] sm:$0xff]
                %304 = vst [vmem:[%s180 + $0x1e8] sm:$0xff] %v303
                %v305 = vld [vmem:[%s179 + $0x3e0] sm:$0xff]
                %306 = vst [vmem:[%s180 + $0x1f0] sm:$0xff] %v305
                %v307 = vld [vmem:[%s179 + $0x3f0] sm:$0xff]
                %308 = vst [vmem:[%s180 + $0x1f8] sm:$0xff] %v307
                %v309 = vld [vmem:[%s179 + $0x400] sm:$0xff]
                %310 = vst [vmem:[%s180 + $0x200] sm:$0xff] %v309
                %v311 = vld [vmem:[%s179 + $0x410] sm:$0xff]
                %312 = vst [vmem:[%s180 + $0x208] sm:$0xff] %v311
                %v313 = vld [vmem:[%s179 + $0x420] sm:$0xff]
                %314 = vst [vmem:[%s180 + $0x210] sm:$0xff] %v313
                %v315 = vld [vmem:[%s179 + $0x430] sm:$0xff]
                %316 = vst [vmem:[%s180 + $0x218] sm:$0xff] %v315
                %v317 = vld [vmem:[%s179 + $0x440] sm:$0xff]
                %318 = vst [vmem:[%s180 + $0x220] sm:$0xff] %v317
                %v319 = vld [vmem:[%s179 + $0x450] sm:$0xff]
                %320 = vst [vmem:[%s180 + $0x228] sm:$0xff] %v319
                %v321 = vld [vmem:[%s179 + $0x460] sm:$0xff]
                %322 = vst [vmem:[%s180 + $0x230] sm:$0xff] %v321
                %v323 = vld [vmem:[%s179 + $0x470] sm:$0xff]
                %324 = vst [vmem:[%s180 + $0x238] sm:$0xff] %v323
                %v325 = vld [vmem:[%s179 + $0x480] sm:$0xff]
                %326 = vst [vmem:[%s180 + $0x240] sm:$0xff] %v325
                %v327 = vld [vmem:[%s179 + $0x490] sm:$0xff]
                %328 = vst [vmem:[%s180 + $0x248] sm:$0xff] %v327
                %v329 = vld [vmem:[%s179 + $0x4a0] sm:$0xff]
                %330 = vst [vmem:[%s180 + $0x250] sm:$0xff] %v329
                %v331 = vld [vmem:[%s179 + $0x4b0] sm:$0xff]
                %332 = vst [vmem:[%s180 + $0x258] sm:$0xff] %v331
                %v333 = vld [vmem:[%s179 + $0x4c0] sm:$0xff]
                %334 = vst [vmem:[%s180 + $0x260] sm:$0xff] %v333
                %v335 = vld [vmem:[%s179 + $0x4d0] sm:$0xff]
                %336 = vst [vmem:[%s180 + $0x268] sm:$0xff] %v335
                %v337 = vld [vmem:[%s179 + $0x4e0] sm:$0xff]
                %338 = vst [vmem:[%s180 + $0x270] sm:$0xff] %v337
                %v339 = vld [vmem:[%s179 + $0x4f0] sm:$0xff]
                %340 = vst [vmem:[%s180 + $0x278] sm:$0xff] %v339
                %v341 = vld [vmem:[%s179 + $0x500] sm:$0xff]
                %342 = vst [vmem:[%s180 + $0x280] sm:$0xff] %v341
                %v343 = vld [vmem:[%s179 + $0x510] sm:$0xff]
                %344 = vst [vmem:[%s180 + $0x288] sm:$0xff] %v343
                %v345 = vld [vmem:[%s179 + $0x520] sm:$0xff]
                %346 = vst [vmem:[%s180 + $0x290] sm:$0xff] %v345
                %v347 = vld [vmem:[%s179 + $0x530] sm:$0xff]
                %348 = vst [vmem:[%s180 + $0x298] sm:$0xff] %v347
                %v349 = vld [vmem:[%s179 + $0x540] sm:$0xff]
                %350 = vst [vmem:[%s180 + $0x2a0] sm:$0xff] %v349
                %v351 = vld [vmem:[%s179 + $0x550] sm:$0xff]
                %352 = vst [vmem:[%s180 + $0x2a8] sm:$0xff] %v351
                %v353 = vld [vmem:[%s179 + $0x560] sm:$0xff]
                %354 = vst [vmem:[%s180 + $0x2b0] sm:$0xff] %v353
                %v355 = vld [vmem:[%s179 + $0x570] sm:$0xff]
                %356 = vst [vmem:[%s180 + $0x2b8] sm:$0xff] %v355
                %v357 = vld [vmem:[%s179 + $0x580] sm:$0xff]
                %358 = vst [vmem:[%s180 + $0x2c0] sm:$0xff] %v357
                %v359 = vld [vmem:[%s179 + $0x590] sm:$0xff]
                %360 = vst [vmem:[%s180 + $0x2c8] sm:$0xff] %v359
                %v361 = vld [vmem:[%s179 + $0x5a0] sm:$0xff]
                %362 = vst [vmem:[%s180 + $0x2d0] sm:$0xff] %v361
                %v363 = vld [vmem:[%s179 + $0x5b0] sm:$0xff]
                %364 = vst [vmem:[%s180 + $0x2d8] sm:$0xff] %v363
                %v365 = vld [vmem:[%s179 + $0x5c0] sm:$0xff]
                %366 = vst [vmem:[%s180 + $0x2e0] sm:$0xff] %v365
                %v367 = vld [vmem:[%s179 + $0x5d0] sm:$0xff]
                %368 = vst [vmem:[%s180 + $0x2e8] sm:$0xff] %v367
                %v369 = vld [vmem:[%s179 + $0x5e0] sm:$0xff]
                %370 = vst [vmem:[%s180 + $0x2f0] sm:$0xff] %v369
                %v371 = vld [vmem:[%s179 + $0x5f0] sm:$0xff]
                %372 = vst [vmem:[%s180 + $0x2f8] sm:$0xff] %v371
                %v373 = vld [vmem:[%s179 + $0x600] sm:$0xff]
                %374 = vst [vmem:[%s180 + $0x300] sm:$0xff] %v373
                %v375 = vld [vmem:[%s179 + $0x610] sm:$0xff]
                %376 = vst [vmem:[%s180 + $0x308] sm:$0xff] %v375
                %v377 = vld [vmem:[%s179 + $0x620] sm:$0xff]
                %378 = vst [vmem:[%s180 + $0x310] sm:$0xff] %v377
                %v379 = vld [vmem:[%s179 + $0x630] sm:$0xff]
                %380 = vst [vmem:[%s180 + $0x318] sm:$0xff] %v379
                %v381 = vld [vmem:[%s179 + $0x640] sm:$0xff]
                %382 = vst [vmem:[%s180 + $0x320] sm:$0xff] %v381
                %v383 = vld [vmem:[%s179 + $0x650] sm:$0xff]
                %384 = vst [vmem:[%s180 + $0x328] sm:$0xff] %v383
                %v385 = vld [vmem:[%s179 + $0x660] sm:$0xff]
                %386 = vst [vmem:[%s180 + $0x330] sm:$0xff] %v385
                %v387 = vld [vmem:[%s179 + $0x670] sm:$0xff]
                %388 = vst [vmem:[%s180 + $0x338] sm:$0xff] %v387
                %v389 = vld [vmem:[%s179 + $0x680] sm:$0xff]
                %390 = vst [vmem:[%s180 + $0x340] sm:$0xff] %v389
                %v391 = vld [vmem:[%s179 + $0x690] sm:$0xff]
                %392 = vst [vmem:[%s180 + $0x348] sm:$0xff] %v391
                %v393 = vld [vmem:[%s179 + $0x6a0] sm:$0xff]
                %394 = vst [vmem:[%s180 + $0x350] sm:$0xff] %v393
                %v395 = vld [vmem:[%s179 + $0x6b0] sm:$0xff]
                %396 = vst [vmem:[%s180 + $0x358] sm:$0xff] %v395
                %v397 = vld [vmem:[%s179 + $0x6c0] sm:$0xff]
                %398 = vst [vmem:[%s180 + $0x360] sm:$0xff] %v397
                %v399 = vld [vmem:[%s179 + $0x6d0] sm:$0xff]
                %400 = vst [vmem:[%s180 + $0x368] sm:$0xff] %v399
                %v401 = vld [vmem:[%s179 + $0x6e0] sm:$0xff]
                %402 = vst [vmem:[%s180 + $0x370] sm:$0xff] %v401
                %v403 = vld [vmem:[%s179 + $0x6f0] sm:$0xff]
                %404 = vst [vmem:[%s180 + $0x378] sm:$0xff] %v403
                %v405 = vld [vmem:[%s179 + $0x700] sm:$0xff]
                %406 = vst [vmem:[%s180 + $0x380] sm:$0xff] %v405
                %v407 = vld [vmem:[%s179 + $0x710] sm:$0xff]
                %408 = vst [vmem:[%s180 + $0x388] sm:$0xff] %v407
                %v409 = vld [vmem:[%s179 + $0x720] sm:$0xff]
                %410 = vst [vmem:[%s180 + $0x390] sm:$0xff] %v409
                %v411 = vld [vmem:[%s179 + $0x730] sm:$0xff]
                %412 = vst [vmem:[%s180 + $0x398] sm:$0xff] %v411
                %v413 = vld [vmem:[%s179 + $0x740] sm:$0xff]
                %414 = vst [vmem:[%s180 + $0x3a0] sm:$0xff] %v413
                %v415 = vld [vmem:[%s179 + $0x750] sm:$0xff]
                %416 = vst [vmem:[%s180 + $0x3a8] sm:$0xff] %v415
                %v417 = vld [vmem:[%s179 + $0x760] sm:$0xff]
                %418 = vst [vmem:[%s180 + $0x3b0] sm:$0xff] %v417
                %v419 = vld [vmem:[%s179 + $0x770] sm:$0xff]
                %420 = vst [vmem:[%s180 + $0x3b8] sm:$0xff] %v419
                %v421 = vld [vmem:[%s179 + $0x780] sm:$0xff]
                %422 = vst [vmem:[%s180 + $0x3c0] sm:$0xff] %v421
                %v423 = vld [vmem:[%s179 + $0x790] sm:$0xff]
                %424 = vst [vmem:[%s180 + $0x3c8] sm:$0xff] %v423
                %v425 = vld [vmem:[%s179 + $0x7a0] sm:$0xff]
                %426 = vst [vmem:[%s180 + $0x3d0] sm:$0xff] %v425
                %v427 = vld [vmem:[%s179 + $0x7b0] sm:$0xff]
                %428 = vst [vmem:[%s180 + $0x3d8] sm:$0xff] %v427
                %v429 = vld [vmem:[%s179 + $0x7c0] sm:$0xff]
                %430 = vst [vmem:[%s180 + $0x3e0] sm:$0xff] %v429
                %v431 = vld [vmem:[%s179 + $0x7d0] sm:$0xff]
                %432 = vst [vmem:[%s180 + $0x3e8] sm:$0xff] %v431
                %v433 = vld [vmem:[%s179 + $0x7e0] sm:$0xff]
                %434 = vst [vmem:[%s180 + $0x3f0] sm:$0xff] %v433
                %v435 = vld [vmem:[%s179 + $0x7f0] sm:$0xff]
                %436 = vst [vmem:[%s180 + $0x3f8] sm:$0xff] %v435
                %v437 = vld [vmem:[%s179 + $0x800] sm:$0xff]
                %438 = vst [vmem:[%s180 + $0x400] sm:$0xff] %v437
                %v439 = vld [vmem:[%s179 + $0x810] sm:$0xff]
                %440 = vst [vmem:[%s180 + $0x408] sm:$0xff] %v439
                %v441 = vld [vmem:[%s179 + $0x820] sm:$0xff]
                %442 = vst [vmem:[%s180 + $0x410] sm:$0xff] %v441
                %v443 = vld [vmem:[%s179 + $0x830] sm:$0xff]
                %444 = vst [vmem:[%s180 + $0x418] sm:$0xff] %v443
                %v445 = vld [vmem:[%s179 + $0x840] sm:$0xff]
                %446 = vst [vmem:[%s180 + $0x420] sm:$0xff] %v445
                %v447 = vld [vmem:[%s179 + $0x850] sm:$0xff]
                %448 = vst [vmem:[%s180 + $0x428] sm:$0xff] %v447
                %v449 = vld [vmem:[%s179 + $0x860] sm:$0xff]
                %450 = vst [vmem:[%s180 + $0x430] sm:$0xff] %v449
                %v451 = vld [vmem:[%s179 + $0x870] sm:$0xff]
                %452 = vst [vmem:[%s180 + $0x438] sm:$0xff] %v451
                %v453 = vld [vmem:[%s179 + $0x880] sm:$0xff]
                %454 = vst [vmem:[%s180 + $0x440] sm:$0xff] %v453
                %v455 = vld [vmem:[%s179 + $0x890] sm:$0xff]
                %456 = vst [vmem:[%s180 + $0x448] sm:$0xff] %v455
                %v457 = vld [vmem:[%s179 + $0x8a0] sm:$0xff]
                %458 = vst [vmem:[%s180 + $0x450] sm:$0xff] %v457
                %v459 = vld [vmem:[%s179 + $0x8b0] sm:$0xff]
                %460 = vst [vmem:[%s180 + $0x458] sm:$0xff] %v459
                %v461 = vld [vmem:[%s179 + $0x8c0] sm:$0xff]
                %462 = vst [vmem:[%s180 + $0x460] sm:$0xff] %v461
                %v463 = vld [vmem:[%s179 + $0x8d0] sm:$0xff]
                %464 = vst [vmem:[%s180 + $0x468] sm:$0xff] %v463
                %v465 = vld [vmem:[%s179 + $0x8e0] sm:$0xff]
                %466 = vst [vmem:[%s180 + $0x470] sm:$0xff] %v465
                %v467 = vld [vmem:[%s179 + $0x8f0] sm:$0xff]
                %468 = vst [vmem:[%s180 + $0x478] sm:$0xff] %v467
              $region41: #{_lambda_.7} parent=35 // loop_footer
                %s178 = sadd.s32 1, %s174
              $region42: #{_lambda_.7} parent=35 // loop_footer_branch
                %173 = sbr.rel target = $region38
              $region43: #{_lambda_.7} parent=35 // loop_exit
                _
            $region36: #{_lambda_.7} parent=27 // pred_fallthru
              _
          $region28: #{_lambda_.7} parent=23 // pred_fallthru
            _
          %769 = vnop
        $region24: #{_lambda_.7} parent=19 // pred_fallthru
          _
        // Predicated region
        $region59: #{_lambda_.7} parent=19 // pred_check
          %p770 = pneg %p93
        $region60: #{_lambda_.7} parent=19 // pred_check_branch
          %772 = sbr.rel (%p770) target = $region62
        $region61: #{_lambda_.7} parent=19 // pred_region
          %s773 = smul.u32 2, %s17
          %p774 = scmp.lt.s32.totalorder %s773, 3
          %s775 = scalar_select %p774, %s773, 3
          %s776 = scalar_lea.vmem %s2, %s775
          %s777 = smul.u32 2, %s17
        $region62: #{_lambda_.7} parent=19 // pred_fallthru
          _
      $region20: #{_lambda_.7} parent=5 // pred_fallthru
        _
      %p778 = scmp.le.s32.totalorder 1, %s9
      %p779 = scmp.lt.s32.totalorder %s9, 3
      %p780 = pnand %p778, %p779
      %p781 = pneg %p780
      // Predicated region
      $region63: #{_lambda_.7} parent=5 // pred_check
        _
      $region64: #{_lambda_.7} parent=5 // pred_check_branch
        %783 = sbr.rel (%p780) target = $region66
      $region65: #{_lambda_.7} parent=5 // pred_region
        %s784 = ssub.s32 %s9, 1
        %s785 = sand.u32 %s60, 1
        %s786 = sand.u32 %s60, 1
        %s787 = smul.addr %s786, 1152
        %s788 = scalar_lea.vmem [#allocation2], %s787
        // Predicated region
        $region67: #{_lambda_.7} parent=65 // pred_check
          %p789 = pneg %p73
        $region68: #{_lambda_.7} parent=65 // pred_check_branch
          %791 = sbr.rel (%p789) target = $region70
        $region69: #{_lambda_.7} parent=65 // pred_region
          _
        $region70: #{_lambda_.7} parent=65 // pred_fallthru
          _
        %s792 = smul.u32 4, %s18
        %p793 = scmp.lt.s32.totalorder %s792, 3
        %s794 = scalar_select %p793, %s792, 3
        %s795 = smul.addr %s794, 9
        %s796 = smul.addr %s795, 4
        %s797 = scalar_lea.vmem %s0, %s796
        %p798 = pneg %p47
        %p799 = pneg %p44
        %s800 = sand.u32 %s60, 1
        %s801 = sand.u32 %s60, 1
        %s802 = smul.addr %s801, 1152
        %s803 = scalar_lea.vmem [#allocation2], %s802
        %p804 = pneg %p73
        %p805 = pneg %p70
        %s806 = smul.u32 2, %s19
        %p807 = scmp.lt.s32.totalorder %s806, 3
        %s808 = scalar_select %p807, %s806, 3
        %s809 = scalar_lea.vmem %s2, %s808
        %p810 = pneg %p99
        %p811 = pneg %p96
        %p812 = pneg %p127
        %p813 = pneg %p124
        %s814 = sand.u32 %s114, 1
        %s815 = sand.u32 %s114, 1
        %s816 = smul.addr %s815, 32
        %s817 = scalar_lea.vmem [#allocation3], %s816
        %s818 = smul.u32 4, %s18
        %p819 = scmp.lt.s32.totalorder %s818, 3
        %s820 = scalar_select %p819, %s818, 3
        %s821 = smul.addr %s820, 9
        %s822 = smul.addr %s821, 4
        %s823 = scalar_lea.vmem %s0, %s822
        %s824 = smul.u32 4, %s18
        %s825 = smul.u32 2, %s19
        %s826 = smul.u32 2, %s19
        %p827 = scmp.lt.s32.totalorder %s826, 3
        %s828 = scalar_select %p827, %s826, 3
        %s829 = scalar_lea.vmem %s2, %s828
        %s830 = smul.u32 2, %s19
        %s831 = smul.u32 4, %s18
        %s832 = smul.u32 2, %s19
        %v834 = vld [vmem:[%s823] sm:$0xff]
        %v835 = vld [vmem:[%s823 + $0x8] sm:$0xff]
        %v836 = vld [vmem:[%s823 + $0x10] sm:$0xff]
        %v837 = vld [vmem:[%s823 + $0x18] sm:$0xff]
        %v838 = vld [vmem:[%s823 + $0x20] sm:$0xf]
        %v839 = vld [vmem:[%s823 + $0x24] sm:$0xff]
        %v840 = vld [vmem:[%s823 + $0x2c] sm:$0xff]
        %v841 = vld [vmem:[%s823 + $0x34] sm:$0xff]
        %v842 = vld [vmem:[%s823 + $0x3c] sm:$0xff]
        %v843 = vld [vmem:[%s823 + $0x44] sm:$0xf]
        %v844 = vld [vmem:[%s823 + $0x48] sm:$0xff]
        %v845 = vld [vmem:[%s823 + $0x50] sm:$0xff]
        %v846 = vld [vmem:[%s823 + $0x58] sm:$0xff]
        %v847 = vld [vmem:[%s823 + $0x60] sm:$0xff]
        %v848 = vld [vmem:[%s823 + $0x68] sm:$0xf]
        %v849 = vld [vmem:[%s823 + $0x6c] sm:$0xff]
        %v850 = vld [vmem:[%s823 + $0x74] sm:$0xff]
        %v851 = vld [vmem:[%s823 + $0x7c] sm:$0xff]
        %v852 = vld [vmem:[%s823 + $0x84] sm:$0xff]
        %v853 = vld [vmem:[%s823 + $0x8c] sm:$0xf]
        %v854 = vld [vmem:[%s788] sm:$0xff]
        %v855 = vld [vmem:[%s788 + $0x8] sm:$0xff]
        %v856 = vld [vmem:[%s788 + $0x10] sm:$0xff]
        %v857 = vld [vmem:[%s788 + $0x18] sm:$0xff]
        %v858 = vld [vmem:[%s788 + $0x20] sm:$0xff]
        %v859 = vld [vmem:[%s788 + $0x28] sm:$0xff]
        %v860 = vld [vmem:[%s788 + $0x30] sm:$0xff]
        %v861 = vld [vmem:[%s788 + $0x38] sm:$0xff]
        %v862 = vld [vmem:[%s788 + $0x40] sm:$0xff]
        %v863 = vld [vmem:[%s788 + $0x48] sm:$0xff]
        %v864 = vld [vmem:[%s788 + $0x50] sm:$0xff]
        %v865 = vld [vmem:[%s788 + $0x58] sm:$0xff]
        %v866 = vld [vmem:[%s788 + $0x60] sm:$0xff]
        %v867 = vld [vmem:[%s788 + $0x68] sm:$0xff]
        %v868 = vld [vmem:[%s788 + $0x70] sm:$0xff]
        %v869 = vld [vmem:[%s788 + $0x78] sm:$0xff]
        %v870 = vld [vmem:[%s788 + $0x80] sm:$0xff]
        %v871 = vld [vmem:[%s788 + $0x88] sm:$0xff]
        %v872 = vld [vmem:[%s788 + $0x90] sm:$0xff]
        %v873 = vld [vmem:[%s788 + $0x98] sm:$0xff]
        %v874 = vld [vmem:[%s788 + $0xa0] sm:$0xff]
        %v875 = vld [vmem:[%s788 + $0xa8] sm:$0xff]
        %v876 = vld [vmem:[%s788 + $0xb0] sm:$0xff]
        %v877 = vld [vmem:[%s788 + $0xb8] sm:$0xff]
        %v878 = vld [vmem:[%s788 + $0xc0] sm:$0xff]
        %v879 = vld [vmem:[%s788 + $0xc8] sm:$0xff]
        %v880 = vld [vmem:[%s788 + $0xd0] sm:$0xff]
        %v881 = vld [vmem:[%s788 + $0xd8] sm:$0xff]
        %v882 = vld [vmem:[%s788 + $0xe0] sm:$0xff]
        %v883 = vld [vmem:[%s788 + $0xe8] sm:$0xff]
        %v884 = vld [vmem:[%s788 + $0xf0] sm:$0xff]
        %v885 = vld [vmem:[%s788 + $0xf8] sm:$0xff]
        %v886 = vld [vmem:[%s788 + $0x100] sm:$0xff]
        %v887 = vld [vmem:[%s788 + $0x108] sm:$0xff]
        %v888 = vld [vmem:[%s788 + $0x110] sm:$0xff]
        %v889 = vld [vmem:[%s788 + $0x118] sm:$0xff]
        %v890 = vld [vmem:[%s788 + $0x120] sm:$0xff]
        %v891 = vld [vmem:[%s788 + $0x128] sm:$0xff]
        %v892 = vld [vmem:[%s788 + $0x130] sm:$0xff]
        %v893 = vld [vmem:[%s788 + $0x138] sm:$0xff]
        %v894 = vld [vmem:[%s788 + $0x140] sm:$0xff]
        %v895 = vld [vmem:[%s788 + $0x148] sm:$0xff]
        %v896 = vld [vmem:[%s788 + $0x150] sm:$0xff]
        %v897 = vld [vmem:[%s788 + $0x158] sm:$0xff]
        %v898 = vld [vmem:[%s788 + $0x160] sm:$0xff]
        %v899 = vld [vmem:[%s788 + $0x168] sm:$0xff]
        %v900 = vld [vmem:[%s788 + $0x170] sm:$0xff]
        %v901 = vld [vmem:[%s788 + $0x178] sm:$0xff]
        %v902 = vld [vmem:[%s788 + $0x180] sm:$0xff]
        %v903 = vld [vmem:[%s788 + $0x188] sm:$0xff]
        %v904 = vld [vmem:[%s788 + $0x190] sm:$0xff]
        %v905 = vld [vmem:[%s788 + $0x198] sm:$0xff]
        %v906 = vld [vmem:[%s788 + $0x1a0] sm:$0xff]
        %v907 = vld [vmem:[%s788 + $0x1a8] sm:$0xff]
        %v908 = vld [vmem:[%s788 + $0x1b0] sm:$0xff]
        %v909 = vld [vmem:[%s788 + $0x1b8] sm:$0xff]
        %v910 = vld [vmem:[%s788 + $0x1c0] sm:$0xff]
        %v911 = vld [vmem:[%s788 + $0x1c8] sm:$0xff]
        %v912 = vld [vmem:[%s788 + $0x1d0] sm:$0xff]
        %v913 = vld [vmem:[%s788 + $0x1d8] sm:$0xff]
        %v914 = vld [vmem:[%s788 + $0x1e0] sm:$0xff]
        %v915 = vld [vmem:[%s788 + $0x1e8] sm:$0xff]
        %v916 = vld [vmem:[%s788 + $0x1f0] sm:$0xff]
        %v917 = vld [vmem:[%s788 + $0x1f8] sm:$0xff]
        %v918 = vld [vmem:[%s788 + $0x200] sm:$0xff]
        %v919 = vld [vmem:[%s788 + $0x208] sm:$0xff]
        %v920 = vld [vmem:[%s788 + $0x210] sm:$0xff]
        %v921 = vld [vmem:[%s788 + $0x218] sm:$0xff]
        %v922 = vld [vmem:[%s788 + $0x220] sm:$0xff]
        %v923 = vld [vmem:[%s788 + $0x228] sm:$0xff]
        %v924 = vld [vmem:[%s788 + $0x230] sm:$0xff]
        %v925 = vld [vmem:[%s788 + $0x238] sm:$0xff]
        %v926 = vld [vmem:[%s788 + $0x240] sm:$0xff]
        %v927 = vld [vmem:[%s788 + $0x248] sm:$0xff]
        %v928 = vld [vmem:[%s788 + $0x250] sm:$0xff]
        %v929 = vld [vmem:[%s788 + $0x258] sm:$0xff]
        %v930 = vld [vmem:[%s788 + $0x260] sm:$0xff]
        %v931 = vld [vmem:[%s788 + $0x268] sm:$0xff]
        %v932 = vld [vmem:[%s788 + $0x270] sm:$0xff]
        %v933 = vld [vmem:[%s788 + $0x278] sm:$0xff]
        %v934 = vld [vmem:[%s788 + $0x280] sm:$0xff]
        %v935 = vld [vmem:[%s788 + $0x288] sm:$0xff]
        %v936 = vld [vmem:[%s788 + $0x290] sm:$0xff]
        %v937 = vld [vmem:[%s788 + $0x298] sm:$0xff]
        %v938 = vld [vmem:[%s788 + $0x2a0] sm:$0xff]
        %v939 = vld [vmem:[%s788 + $0x2a8] sm:$0xff]
        %v940 = vld [vmem:[%s788 + $0x2b0] sm:$0xff]
        %v941 = vld [vmem:[%s788 + $0x2b8] sm:$0xff]
        %v942 = vld [vmem:[%s788 + $0x2c0] sm:$0xff]
        %v943 = vld [vmem:[%s788 + $0x2c8] sm:$0xff]
        %v944 = vld [vmem:[%s788 + $0x2d0] sm:$0xff]
        %v945 = vld [vmem:[%s788 + $0x2d8] sm:$0xff]
        %v946 = vld [vmem:[%s788 + $0x2e0] sm:$0xff]
        %v947 = vld [vmem:[%s788 + $0x2e8] sm:$0xff]
        %v948 = vld [vmem:[%s788 + $0x2f0] sm:$0xff]
        %v949 = vld [vmem:[%s788 + $0x2f8] sm:$0xff]
        %v950 = vld [vmem:[%s788 + $0x300] sm:$0xff]
        %v951 = vld [vmem:[%s788 + $0x308] sm:$0xff]
        %v952 = vld [vmem:[%s788 + $0x310] sm:$0xff]
        %v953 = vld [vmem:[%s788 + $0x318] sm:$0xff]
        %v954 = vld [vmem:[%s788 + $0x320] sm:$0xff]
        %v955 = vld [vmem:[%s788 + $0x328] sm:$0xff]
        %v956 = vld [vmem:[%s788 + $0x330] sm:$0xff]
        %v957 = vld [vmem:[%s788 + $0x338] sm:$0xff]
        %v958 = vld [vmem:[%s788 + $0x340] sm:$0xff]
        %v959 = vld [vmem:[%s788 + $0x348] sm:$0xff]
        %v960 = vld [vmem:[%s788 + $0x350] sm:$0xff]
        %v961 = vld [vmem:[%s788 + $0x358] sm:$0xff]
        %v962 = vld [vmem:[%s788 + $0x360] sm:$0xff]
        %v963 = vld [vmem:[%s788 + $0x368] sm:$0xff]
        %v964 = vld [vmem:[%s788 + $0x370] sm:$0xff]
        %v965 = vld [vmem:[%s788 + $0x378] sm:$0xff]
        %v966 = vld [vmem:[%s788 + $0x380] sm:$0xff]
        %v967 = vld [vmem:[%s788 + $0x388] sm:$0xff]
        %v968 = vld [vmem:[%s788 + $0x390] sm:$0xff]
        %v969 = vld [vmem:[%s788 + $0x398] sm:$0xff]
        %v970 = vld [vmem:[%s788 + $0x3a0] sm:$0xff]
        %v971 = vld [vmem:[%s788 + $0x3a8] sm:$0xff]
        %v972 = vld [vmem:[%s788 + $0x3b0] sm:$0xff]
        %v973 = vld [vmem:[%s788 + $0x3b8] sm:$0xff]
        %v974 = vld [vmem:[%s788 + $0x3c0] sm:$0xff]
        %v975 = vld [vmem:[%s788 + $0x3c8] sm:$0xff]
        %v976 = vld [vmem:[%s788 + $0x3d0] sm:$0xff]
        %v977 = vld [vmem:[%s788 + $0x3d8] sm:$0xff]
        %v978 = vld [vmem:[%s788 + $0x3e0] sm:$0xff]
        %v979 = vld [vmem:[%s788 + $0x3e8] sm:$0xff]
        %v980 = vld [vmem:[%s788 + $0x3f0] sm:$0xff]
        %v981 = vld [vmem:[%s788 + $0x3f8] sm:$0xff]
        %v982 = vld [vmem:[%s788 + $0x400] sm:$0xff]
        %v983 = vld [vmem:[%s788 + $0x408] sm:$0xff]
        %v984 = vld [vmem:[%s788 + $0x410] sm:$0xff]
        %v985 = vld [vmem:[%s788 + $0x418] sm:$0xff]
        %v986 = vld [vmem:[%s788 + $0x420] sm:$0xff]
        %v987 = vld [vmem:[%s788 + $0x428] sm:$0xff]
        %v988 = vld [vmem:[%s788 + $0x430] sm:$0xff]
        %v989 = vld [vmem:[%s788 + $0x438] sm:$0xff]
        %v990 = vld [vmem:[%s788 + $0x440] sm:$0xff]
        %v991 = vld [vmem:[%s788 + $0x448] sm:$0xff]
        %v992 = vld [vmem:[%s788 + $0x450] sm:$0xff]
        %v993 = vld [vmem:[%s788 + $0x458] sm:$0xff]
        %v994 = vld [vmem:[%s788 + $0x460] sm:$0xff]
        %v995 = vld [vmem:[%s788 + $0x468] sm:$0xff]
        %v996 = vld [vmem:[%s788 + $0x470] sm:$0xff]
        %v997 = vld [vmem:[%s788 + $0x478] sm:$0xff]
        %v998 = vld [vmem:[%s829] sm:$0x3]
        %v1000 = vlaneseq
        %v1001 = vshrl.u32 %v1000, 7
        %v1002 = vsub.s32 0, %v1001
        %v1003 = vrot.slane %v998, %v1002
        %v1004 = vlaneseq
        %v1005 = vshrl.u32 %v1004, 7
        %v1006 = vsub.s32 1, %v1005
        %v1007 = vrot.slane %v998, %v1006
        %v1030 = vunpack.c.l.b16 %v834
        %v1031 = vunpack.c.h.b16 %v834
        %v1032 = vunpack.c.l.b16 %v835
        %v1033 = vunpack.c.h.b16 %v835
        %v1034 = vunpack.c.l.b16 %v836
        %v1035 = vunpack.c.h.b16 %v836
        %v1036 = vunpack.c.l.b16 %v837
        %v1037 = vunpack.c.h.b16 %v837
        %v1038 = vunpack.c.l.b16 %v838
        %v1039 = vunpack.c.l.b16 %v839
        %v1040 = vunpack.c.h.b16 %v839
        %v1041 = vunpack.c.l.b16 %v840
        %v1042 = vunpack.c.h.b16 %v840
        %v1043 = vunpack.c.l.b16 %v841
        %v1044 = vunpack.c.h.b16 %v841
        %v1045 = vunpack.c.l.b16 %v842
        %v1046 = vunpack.c.h.b16 %v842
        %v1047 = vunpack.c.l.b16 %v843
        %v1048 = vunpack.c.l.b16 %v844
        %v1049 = vunpack.c.h.b16 %v844
        %v1050 = vunpack.c.l.b16 %v845
        %v1051 = vunpack.c.h.b16 %v845
        %v1052 = vunpack.c.l.b16 %v846
        %v1053 = vunpack.c.h.b16 %v846
        %v1054 = vunpack.c.l.b16 %v847
        %v1055 = vunpack.c.h.b16 %v847
        %v1056 = vunpack.c.l.b16 %v848
        %v1057 = vunpack.c.l.b16 %v849
        %v1058 = vunpack.c.h.b16 %v849
        %v1059 = vunpack.c.l.b16 %v850
        %v1060 = vunpack.c.h.b16 %v850
        %v1061 = vunpack.c.l.b16 %v851
        %v1062 = vunpack.c.h.b16 %v851
        %v1063 = vunpack.c.l.b16 %v852
        %v1064 = vunpack.c.h.b16 %v852
        %v1065 = vunpack.c.l.b16 %v853
        %v1066 = vpack.c.b16 %v1039, %v1030
        %v1067 = vpack.c.b16 %v1040, %v1031
        %v1068 = vpack.c.b16 %v1041, %v1032
        %v1069 = vpack.c.b16 %v1042, %v1033
        %v1070 = vpack.c.b16 %v1043, %v1034
        %v1071 = vpack.c.b16 %v1044, %v1035
        %v1072 = vpack.c.b16 %v1045, %v1036
        %v1073 = vpack.c.b16 %v1046, %v1037
        %v1074 = vpack.c.b16 %v1047, %v1038
        %v1075 = vpack.c.b16 %v1057, %v1048
        %v1076 = vpack.c.b16 %v1058, %v1049
        %v1077 = vpack.c.b16 %v1059, %v1050
        %v1078 = vpack.c.b16 %v1060, %v1051
        %v1079 = vpack.c.b16 %v1061, %v1052
        %v1080 = vpack.c.b16 %v1062, %v1053
        %v1081 = vpack.c.b16 %v1063, %v1054
        %v1082 = vpack.c.b16 %v1064, %v1055
        %v1083 = vpack.c.b16 %v1065, %v1056
        %v1246 = vunpack.c.l.b16 %v854
        %v1247 = vunpack.c.h.b16 %v854
        %v1248 = vunpack.c.l.b16 %v855
        %v1249 = vunpack.c.h.b16 %v855
        %v1250 = vunpack.c.l.b16 %v856
        %v1251 = vunpack.c.h.b16 %v856
        %v1252 = vunpack.c.l.b16 %v857
        %v1253 = vunpack.c.h.b16 %v857
        %v1254 = vunpack.c.l.b16 %v858
        %v1255 = vunpack.c.h.b16 %v858
        %v1256 = vunpack.c.l.b16 %v859
        %v1257 = vunpack.c.h.b16 %v859
        %v1258 = vunpack.c.l.b16 %v860
        %v1259 = vunpack.c.h.b16 %v860
        %v1260 = vunpack.c.l.b16 %v861
        %v1261 = vunpack.c.h.b16 %v861
        %v1262 = vunpack.c.l.b16 %v862
        %v1263 = vunpack.c.h.b16 %v862
        %v1264 = vunpack.c.l.b16 %v863
        %v1265 = vunpack.c.h.b16 %v863
        %v1266 = vunpack.c.l.b16 %v864
        %v1267 = vunpack.c.h.b16 %v864
        %v1268 = vunpack.c.l.b16 %v865
        %v1269 = vunpack.c.h.b16 %v865
        %v1270 = vunpack.c.l.b16 %v866
        %v1271 = vunpack.c.h.b16 %v866
        %v1272 = vunpack.c.l.b16 %v867
        %v1273 = vunpack.c.h.b16 %v867
        %v1274 = vunpack.c.l.b16 %v868
        %v1275 = vunpack.c.h.b16 %v868
        %v1276 = vunpack.c.l.b16 %v869
        %v1277 = vunpack.c.h.b16 %v869
        %v1278 = vunpack.c.l.b16 %v870
        %v1279 = vunpack.c.h.b16 %v870
        %v1280 = vunpack.c.l.b16 %v871
        %v1281 = vunpack.c.h.b16 %v871
        %v1282 = vunpack.c.l.b16 %v872
        %v1283 = vunpack.c.h.b16 %v872
        %v1284 = vunpack.c.l.b16 %v873
        %v1285 = vunpack.c.h.b16 %v873
        %v1286 = vunpack.c.l.b16 %v874
        %v1287 = vunpack.c.h.b16 %v874
        %v1288 = vunpack.c.l.b16 %v875
        %v1289 = vunpack.c.h.b16 %v875
        %v1290 = vunpack.c.l.b16 %v876
        %v1291 = vunpack.c.h.b16 %v876
        %v1292 = vunpack.c.l.b16 %v877
        %v1293 = vunpack.c.h.b16 %v877
        %v1294 = vunpack.c.l.b16 %v878
        %v1295 = vunpack.c.h.b16 %v878
        %v1296 = vunpack.c.l.b16 %v879
        %v1297 = vunpack.c.h.b16 %v879
        %v1298 = vunpack.c.l.b16 %v880
        %v1299 = vunpack.c.h.b16 %v880
        %v1300 = vunpack.c.l.b16 %v881
        %v1301 = vunpack.c.h.b16 %v881
        %v1302 = vunpack.c.l.b16 %v882
        %v1303 = vunpack.c.h.b16 %v882
        %v1304 = vunpack.c.l.b16 %v883
        %v1305 = vunpack.c.h.b16 %v883
        %v1306 = vunpack.c.l.b16 %v884
        %v1307 = vunpack.c.h.b16 %v884
        %v1308 = vunpack.c.l.b16 %v885
        %v1309 = vunpack.c.h.b16 %v885
        %v1310 = vunpack.c.l.b16 %v886
        %v1311 = vunpack.c.h.b16 %v886
        %v1312 = vunpack.c.l.b16 %v887
        %v1313 = vunpack.c.h.b16 %v887
        %v1314 = vunpack.c.l.b16 %v888
        %v1315 = vunpack.c.h.b16 %v888
        %v1316 = vunpack.c.l.b16 %v889
        %v1317 = vunpack.c.h.b16 %v889
        %v1318 = vunpack.c.l.b16 %v890
        %v1319 = vunpack.c.h.b16 %v890
        %v1320 = vunpack.c.l.b16 %v891
        %v1321 = vunpack.c.h.b16 %v891
        %v1322 = vunpack.c.l.b16 %v892
        %v1323 = vunpack.c.h.b16 %v892
        %v1324 = vunpack.c.l.b16 %v893
        %v1325 = vunpack.c.h.b16 %v893
        %v1326 = vunpack.c.l.b16 %v894
        %v1327 = vunpack.c.h.b16 %v894
        %v1328 = vunpack.c.l.b16 %v895
        %v1329 = vunpack.c.h.b16 %v895
        %v1330 = vunpack.c.l.b16 %v896
        %v1331 = vunpack.c.h.b16 %v896
        %v1332 = vunpack.c.l.b16 %v897
        %v1333 = vunpack.c.h.b16 %v897
        %v1334 = vunpack.c.l.b16 %v898
        %v1335 = vunpack.c.h.b16 %v898
        %v1336 = vunpack.c.l.b16 %v899
        %v1337 = vunpack.c.h.b16 %v899
        %v1338 = vunpack.c.l.b16 %v900
        %v1339 = vunpack.c.h.b16 %v900
        %v1340 = vunpack.c.l.b16 %v901
        %v1341 = vunpack.c.h.b16 %v901
        %v1342 = vunpack.c.l.b16 %v902
        %v1343 = vunpack.c.h.b16 %v902
        %v1344 = vunpack.c.l.b16 %v903
        %v1345 = vunpack.c.h.b16 %v903
        %v1346 = vunpack.c.l.b16 %v904
        %v1347 = vunpack.c.h.b16 %v904
        %v1348 = vunpack.c.l.b16 %v905
        %v1349 = vunpack.c.h.b16 %v905
        %v1350 = vunpack.c.l.b16 %v906
        %v1351 = vunpack.c.h.b16 %v906
        %v1352 = vunpack.c.l.b16 %v907
        %v1353 = vunpack.c.h.b16 %v907
        %v1354 = vunpack.c.l.b16 %v908
        %v1355 = vunpack.c.h.b16 %v908
        %v1356 = vunpack.c.l.b16 %v909
        %v1357 = vunpack.c.h.b16 %v909
        %v1358 = vunpack.c.l.b16 %v910
        %v1359 = vunpack.c.h.b16 %v910
        %v1360 = vunpack.c.l.b16 %v911
        %v1361 = vunpack.c.h.b16 %v911
        %v1362 = vunpack.c.l.b16 %v912
        %v1363 = vunpack.c.h.b16 %v912
        %v1364 = vunpack.c.l.b16 %v913
        %v1365 = vunpack.c.h.b16 %v913
        %v1366 = vunpack.c.l.b16 %v914
        %v1367 = vunpack.c.h.b16 %v914
        %v1368 = vunpack.c.l.b16 %v915
        %v1369 = vunpack.c.h.b16 %v915
        %v1370 = vunpack.c.l.b16 %v916
        %v1371 = vunpack.c.h.b16 %v916
        %v1372 = vunpack.c.l.b16 %v917
        %v1373 = vunpack.c.h.b16 %v917
        %v1374 = vunpack.c.l.b16 %v918
        %v1375 = vunpack.c.h.b16 %v918
        %v1376 = vunpack.c.l.b16 %v919
        %v1377 = vunpack.c.h.b16 %v919
        %v1378 = vunpack.c.l.b16 %v920
        %v1379 = vunpack.c.h.b16 %v920
        %v1380 = vunpack.c.l.b16 %v921
        %v1381 = vunpack.c.h.b16 %v921
        %v1382 = vunpack.c.l.b16 %v922
        %v1383 = vunpack.c.h.b16 %v922
        %v1384 = vunpack.c.l.b16 %v923
        %v1385 = vunpack.c.h.b16 %v923
        %v1386 = vunpack.c.l.b16 %v924
        %v1387 = vunpack.c.h.b16 %v924
        %v1388 = vunpack.c.l.b16 %v925
        %v1389 = vunpack.c.h.b16 %v925
        %v1390 = vunpack.c.l.b16 %v926
        %v1391 = vunpack.c.h.b16 %v926
        %v1392 = vunpack.c.l.b16 %v927
        %v1393 = vunpack.c.h.b16 %v927
        %v1394 = vunpack.c.l.b16 %v928
        %v1395 = vunpack.c.h.b16 %v928
        %v1396 = vunpack.c.l.b16 %v929
        %v1397 = vunpack.c.h.b16 %v929
        %v1398 = vunpack.c.l.b16 %v930
        %v1399 = vunpack.c.h.b16 %v930
        %v1400 = vunpack.c.l.b16 %v931
        %v1401 = vunpack.c.h.b16 %v931
        %v1402 = vunpack.c.l.b16 %v932
        %v1403 = vunpack.c.h.b16 %v932
        %v1404 = vunpack.c.l.b16 %v933
        %v1405 = vunpack.c.h.b16 %v933
        %v1406 = vunpack.c.l.b16 %v934
        %v1407 = vunpack.c.h.b16 %v934
        %v1408 = vunpack.c.l.b16 %v935
        %v1409 = vunpack.c.h.b16 %v935
        %v1410 = vunpack.c.l.b16 %v936
        %v1411 = vunpack.c.h.b16 %v936
        %v1412 = vunpack.c.l.b16 %v937
        %v1413 = vunpack.c.h.b16 %v937
        %v1414 = vunpack.c.l.b16 %v938
        %v1415 = vunpack.c.h.b16 %v938
        %v1416 = vunpack.c.l.b16 %v939
        %v1417 = vunpack.c.h.b16 %v939
        %v1418 = vunpack.c.l.b16 %v940
        %v1419 = vunpack.c.h.b16 %v940
        %v1420 = vunpack.c.l.b16 %v941
        %v1421 = vunpack.c.h.b16 %v941
        %v1422 = vunpack.c.l.b16 %v942
        %v1423 = vunpack.c.h.b16 %v942
        %v1424 = vunpack.c.l.b16 %v943
        %v1425 = vunpack.c.h.b16 %v943
        %v1426 = vunpack.c.l.b16 %v944
        %v1427 = vunpack.c.h.b16 %v944
        %v1428 = vunpack.c.l.b16 %v945
        %v1429 = vunpack.c.h.b16 %v945
        %v1430 = vunpack.c.l.b16 %v946
        %v1431 = vunpack.c.h.b16 %v946
        %v1432 = vunpack.c.l.b16 %v947
        %v1433 = vunpack.c.h.b16 %v947
        %v1434 = vunpack.c.l.b16 %v948
        %v1435 = vunpack.c.h.b16 %v948
        %v1436 = vunpack.c.l.b16 %v949
        %v1437 = vunpack.c.h.b16 %v949
        %v1438 = vunpack.c.l.b16 %v950
        %v1439 = vunpack.c.h.b16 %v950
        %v1440 = vunpack.c.l.b16 %v951
        %v1441 = vunpack.c.h.b16 %v951
        %v1442 = vunpack.c.l.b16 %v952
        %v1443 = vunpack.c.h.b16 %v952
        %v1444 = vunpack.c.l.b16 %v953
        %v1445 = vunpack.c.h.b16 %v953
        %v1446 = vunpack.c.l.b16 %v954
        %v1447 = vunpack.c.h.b16 %v954
        %v1448 = vunpack.c.l.b16 %v955
        %v1449 = vunpack.c.h.b16 %v955
        %v1450 = vunpack.c.l.b16 %v956
        %v1451 = vunpack.c.h.b16 %v956
        %v1452 = vunpack.c.l.b16 %v957
        %v1453 = vunpack.c.h.b16 %v957
        %v1454 = vunpack.c.l.b16 %v958
        %v1455 = vunpack.c.h.b16 %v958
        %v1456 = vunpack.c.l.b16 %v959
        %v1457 = vunpack.c.h.b16 %v959
        %v1458 = vunpack.c.l.b16 %v960
        %v1459 = vunpack.c.h.b16 %v960
        %v1460 = vunpack.c.l.b16 %v961
        %v1461 = vunpack.c.h.b16 %v961
        %v1462 = vunpack.c.l.b16 %v962
        %v1463 = vunpack.c.h.b16 %v962
        %v1464 = vunpack.c.l.b16 %v963
        %v1465 = vunpack.c.h.b16 %v963
        %v1466 = vunpack.c.l.b16 %v964
        %v1467 = vunpack.c.h.b16 %v964
        %v1468 = vunpack.c.l.b16 %v965
        %v1469 = vunpack.c.h.b16 %v965
        %v1470 = vunpack.c.l.b16 %v966
        %v1471 = vunpack.c.h.b16 %v966
        %v1472 = vunpack.c.l.b16 %v967
        %v1473 = vunpack.c.h.b16 %v967
        %v1474 = vunpack.c.l.b16 %v968
        %v1475 = vunpack.c.h.b16 %v968
        %v1476 = vunpack.c.l.b16 %v969
        %v1477 = vunpack.c.h.b16 %v969
        %v1478 = vunpack.c.l.b16 %v970
        %v1479 = vunpack.c.h.b16 %v970
        %v1480 = vunpack.c.l.b16 %v971
        %v1481 = vunpack.c.h.b16 %v971
        %v1482 = vunpack.c.l.b16 %v972
        %v1483 = vunpack.c.h.b16 %v972
        %v1484 = vunpack.c.l.b16 %v973
        %v1485 = vunpack.c.h.b16 %v973
        %v1486 = vunpack.c.l.b16 %v974
        %v1487 = vunpack.c.h.b16 %v974
        %v1488 = vunpack.c.l.b16 %v975
        %v1489 = vunpack.c.h.b16 %v975
        %v1490 = vunpack.c.l.b16 %v976
        %v1491 = vunpack.c.h.b16 %v976
        %v1492 = vunpack.c.l.b16 %v977
        %v1493 = vunpack.c.h.b16 %v977
        %v1494 = vunpack.c.l.b16 %v978
        %v1495 = vunpack.c.h.b16 %v978
        %v1496 = vunpack.c.l.b16 %v979
        %v1497 = vunpack.c.h.b16 %v979
        %v1498 = vunpack.c.l.b16 %v980
        %v1499 = vunpack.c.h.b16 %v980
        %v1500 = vunpack.c.l.b16 %v981
        %v1501 = vunpack.c.h.b16 %v981
        %v1502 = vunpack.c.l.b16 %v982
        %v1503 = vunpack.c.h.b16 %v982
        %v1504 = vunpack.c.l.b16 %v983
        %v1505 = vunpack.c.h.b16 %v983
        %v1506 = vunpack.c.l.b16 %v984
        %v1507 = vunpack.c.h.b16 %v984
        %v1508 = vunpack.c.l.b16 %v985
        %v1509 = vunpack.c.h.b16 %v985
        %v1510 = vunpack.c.l.b16 %v986
        %v1511 = vunpack.c.h.b16 %v986
        %v1512 = vunpack.c.l.b16 %v987
        %v1513 = vunpack.c.h.b16 %v987
        %v1514 = vunpack.c.l.b16 %v988
        %v1515 = vunpack.c.h.b16 %v988
        %v1516 = vunpack.c.l.b16 %v989
        %v1517 = vunpack.c.h.b16 %v989
        %v1518 = vunpack.c.l.b16 %v990
        %v1519 = vunpack.c.h.b16 %v990
        %v1520 = vunpack.c.l.b16 %v991
        %v1521 = vunpack.c.h.b16 %v991
        %v1522 = vunpack.c.l.b16 %v992
        %v1523 = vunpack.c.h.b16 %v992
        %v1524 = vunpack.c.l.b16 %v993
        %v1525 = vunpack.c.h.b16 %v993
        %v1526 = vunpack.c.l.b16 %v994
        %v1527 = vunpack.c.h.b16 %v994
        %v1528 = vunpack.c.l.b16 %v995
        %v1529 = vunpack.c.h.b16 %v995
        %v1530 = vunpack.c.l.b16 %v996
        %v1531 = vunpack.c.h.b16 %v996
        %v1532 = vunpack.c.l.b16 %v997
        %v1533 = vunpack.c.h.b16 %v997
        %v1534 = vpack.c.b16 %v1248, %v1246
        %v1535 = vpack.c.b16 %v1249, %v1247
        %v1536 = vpack.c.b16 %v1252, %v1250
        %v1537 = vpack.c.b16 %v1253, %v1251
        %v1538 = vpack.c.b16 %v1256, %v1254
        %v1539 = vpack.c.b16 %v1257, %v1255
        %v1540 = vpack.c.b16 %v1260, %v1258
        %v1541 = vpack.c.b16 %v1261, %v1259
        %v1542 = vpack.c.b16 %v1264, %v1262
        %v1543 = vpack.c.b16 %v1265, %v1263
        %v1544 = vpack.c.b16 %v1268, %v1266
        %v1545 = vpack.c.b16 %v1269, %v1267
        %v1546 = vpack.c.b16 %v1272, %v1270
        %v1547 = vpack.c.b16 %v1273, %v1271
        %v1548 = vpack.c.b16 %v1276, %v1274
        %v1549 = vpack.c.b16 %v1277, %v1275
        %v1550 = vpack.c.b16 %v1280, %v1278
        %v1551 = vpack.c.b16 %v1281, %v1279
        %v1552 = vpack.c.b16 %v1284, %v1282
        %v1553 = vpack.c.b16 %v1285, %v1283
        %v1554 = vpack.c.b16 %v1288, %v1286
        %v1555 = vpack.c.b16 %v1289, %v1287
        %v1556 = vpack.c.b16 %v1292, %v1290
        %v1557 = vpack.c.b16 %v1293, %v1291
        %v1558 = vpack.c.b16 %v1296, %v1294
        %v1559 = vpack.c.b16 %v1297, %v1295
        %v1560 = vpack.c.b16 %v1300, %v1298
        %v1561 = vpack.c.b16 %v1301, %v1299
        %v1562 = vpack.c.b16 %v1304, %v1302
        %v1563 = vpack.c.b16 %v1305, %v1303
        %v1564 = vpack.c.b16 %v1308, %v1306
        %v1565 = vpack.c.b16 %v1309, %v1307
        %v1566 = vpack.c.b16 %v1312, %v1310
        %v1567 = vpack.c.b16 %v1313, %v1311
        %v1568 = vpack.c.b16 %v1316, %v1314
        %v1569 = vpack.c.b16 %v1317, %v1315
        %v1570 = vpack.c.b16 %v1320, %v1318
        %v1571 = vpack.c.b16 %v1321, %v1319
        %v1572 = vpack.c.b16 %v1324, %v1322
        %v1573 = vpack.c.b16 %v1325, %v1323
        %v1574 = vpack.c.b16 %v1328, %v1326
        %v1575 = vpack.c.b16 %v1329, %v1327
        %v1576 = vpack.c.b16 %v1332, %v1330
        %v1577 = vpack.c.b16 %v1333, %v1331
        %v1578 = vpack.c.b16 %v1336, %v1334
        %v1579 = vpack.c.b16 %v1337, %v1335
        %v1580 = vpack.c.b16 %v1340, %v1338
        %v1581 = vpack.c.b16 %v1341, %v1339
        %v1582 = vpack.c.b16 %v1344, %v1342
        %v1583 = vpack.c.b16 %v1345, %v1343
        %v1584 = vpack.c.b16 %v1348, %v1346
        %v1585 = vpack.c.b16 %v1349, %v1347
        %v1586 = vpack.c.b16 %v1352, %v1350
        %v1587 = vpack.c.b16 %v1353, %v1351
        %v1588 = vpack.c.b16 %v1356, %v1354
        %v1589 = vpack.c.b16 %v1357, %v1355
        %v1590 = vpack.c.b16 %v1360, %v1358
        %v1591 = vpack.c.b16 %v1361, %v1359
        %v1592 = vpack.c.b16 %v1364, %v1362
        %v1593 = vpack.c.b16 %v1365, %v1363
        %v1594 = vpack.c.b16 %v1368, %v1366
        %v1595 = vpack.c.b16 %v1369, %v1367
        %v1596 = vpack.c.b16 %v1372, %v1370
        %v1597 = vpack.c.b16 %v1373, %v1371
        %v1598 = vpack.c.b16 %v1376, %v1374
        %v1599 = vpack.c.b16 %v1377, %v1375
        %v1600 = vpack.c.b16 %v1380, %v1378
        %v1601 = vpack.c.b16 %v1381, %v1379
        %v1602 = vpack.c.b16 %v1384, %v1382
        %v1603 = vpack.c.b16 %v1385, %v1383
        %v1604 = vpack.c.b16 %v1388, %v1386
        %v1605 = vpack.c.b16 %v1389, %v1387
        %v1606 = vpack.c.b16 %v1392, %v1390
        %v1607 = vpack.c.b16 %v1393, %v1391
        %v1608 = vpack.c.b16 %v1396, %v1394
        %v1609 = vpack.c.b16 %v1397, %v1395
        %v1610 = vpack.c.b16 %v1400, %v1398
        %v1611 = vpack.c.b16 %v1401, %v1399
        %v1612 = vpack.c.b16 %v1404, %v1402
        %v1613 = vpack.c.b16 %v1405, %v1403
        %v1614 = vpack.c.b16 %v1408, %v1406
        %v1615 = vpack.c.b16 %v1409, %v1407
        %v1616 = vpack.c.b16 %v1412, %v1410
        %v1617 = vpack.c.b16 %v1413, %v1411
        %v1618 = vpack.c.b16 %v1416, %v1414
        %v1619 = vpack.c.b16 %v1417, %v1415
        %v1620 = vpack.c.b16 %v1420, %v1418
        %v1621 = vpack.c.b16 %v1421, %v1419
        %v1622 = vpack.c.b16 %v1424, %v1422
        %v1623 = vpack.c.b16 %v1425, %v1423
        %v1624 = vpack.c.b16 %v1428, %v1426
        %v1625 = vpack.c.b16 %v1429, %v1427
        %v1626 = vpack.c.b16 %v1432, %v1430
        %v1627 = vpack.c.b16 %v1433, %v1431
        %v1628 = vpack.c.b16 %v1436, %v1434
        %v1629 = vpack.c.b16 %v1437, %v1435
        %v1630 = vpack.c.b16 %v1440, %v1438
        %v1631 = vpack.c.b16 %v1441, %v1439
        %v1632 = vpack.c.b16 %v1444, %v1442
        %v1633 = vpack.c.b16 %v1445, %v1443
        %v1634 = vpack.c.b16 %v1448, %v1446
        %v1635 = vpack.c.b16 %v1449, %v1447
        %v1636 = vpack.c.b16 %v1452, %v1450
        %v1637 = vpack.c.b16 %v1453, %v1451
        %v1638 = vpack.c.b16 %v1456, %v1454
        %v1639 = vpack.c.b16 %v1457, %v1455
        %v1640 = vpack.c.b16 %v1460, %v1458
        %v1641 = vpack.c.b16 %v1461, %v1459
        %v1642 = vpack.c.b16 %v1464, %v1462
        %v1643 = vpack.c.b16 %v1465, %v1463
        %v1644 = vpack.c.b16 %v1468, %v1466
        %v1645 = vpack.c.b16 %v1469, %v1467
        %v1646 = vpack.c.b16 %v1472, %v1470
        %v1647 = vpack.c.b16 %v1473, %v1471
        %v1648 = vpack.c.b16 %v1476, %v1474
        %v1649 = vpack.c.b16 %v1477, %v1475
        %v1650 = vpack.c.b16 %v1480, %v1478
        %v1651 = vpack.c.b16 %v1481, %v1479
        %v1652 = vpack.c.b16 %v1484, %v1482
        %v1653 = vpack.c.b16 %v1485, %v1483
        %v1654 = vpack.c.b16 %v1488, %v1486
        %v1655 = vpack.c.b16 %v1489, %v1487
        %v1656 = vpack.c.b16 %v1492, %v1490
        %v1657 = vpack.c.b16 %v1493, %v1491
        %v1658 = vpack.c.b16 %v1496, %v1494
        %v1659 = vpack.c.b16 %v1497, %v1495
        %v1660 = vpack.c.b16 %v1500, %v1498
        %v1661 = vpack.c.b16 %v1501, %v1499
        %v1662 = vpack.c.b16 %v1504, %v1502
        %v1663 = vpack.c.b16 %v1505, %v1503
        %v1664 = vpack.c.b16 %v1508, %v1506
        %v1665 = vpack.c.b16 %v1509, %v1507
        %v1666 = vpack.c.b16 %v1512, %v1510
        %v1667 = vpack.c.b16 %v1513, %v1511
        %v1668 = vpack.c.b16 %v1516, %v1514
        %v1669 = vpack.c.b16 %v1517, %v1515
        %v1670 = vpack.c.b16 %v1520, %v1518
        %v1671 = vpack.c.b16 %v1521, %v1519
        %v1672 = vpack.c.b16 %v1524, %v1522
        %v1673 = vpack.c.b16 %v1525, %v1523
        %v1674 = vpack.c.b16 %v1528, %v1526
        %v1675 = vpack.c.b16 %v1529, %v1527
        %v1676 = vpack.c.b16 %v1532, %v1530
        %v1677 = vpack.c.b16 %v1533, %v1531
        %1822 = vmatprep.subr.bf16.mxu0 %v1535
        %1823 = vmatpush1.bf16.msra.mxu0 %v1534
        %1824 = vmatprep.subr.bf16.mxu0 %v1537
        %1825 = vmatpush1.bf16.msra.mxu0 %v1536
        %1826 = vmatprep.subr.bf16.mxu0 %v1539
        %1827 = vmatpush1.bf16.msra.mxu0 %v1538
        %1828 = vmatprep.subr.bf16.mxu0 %v1541
        %1829 = vmatpush1.bf16.msra.mxu0 %v1540
        %1830 = vmatprep.subr.bf16.mxu0 %v1543
        %1831 = vmatpush1.bf16.msra.mxu0 %v1542
        %1832 = vmatprep.subr.bf16.mxu0 %v1545
        %1833 = vmatpush1.bf16.msra.mxu0 %v1544
        %1834 = vmatprep.subr.bf16.mxu0 %v1547
        %1835 = vmatpush1.bf16.msra.mxu0 %v1546
        %1836 = vmatprep.subr.bf16.mxu0 %v1549
        %1837 = vmatpush1.bf16.msra.mxu0 %v1548
        %1838 = vmatprep.subr.bf16.mxu0 %v1551
        %1839 = vmatpush1.bf16.msra.mxu0 %v1550
        %1840 = vmatprep.subr.bf16.mxu0 %v1553
        %1841 = vmatpush1.bf16.msra.mxu0 %v1552
        %1842 = vmatprep.subr.bf16.mxu0 %v1555
        %1843 = vmatpush1.bf16.msra.mxu0 %v1554
        %1844 = vmatprep.subr.bf16.mxu0 %v1557
        %1845 = vmatpush1.bf16.msra.mxu0 %v1556
        %1846 = vmatprep.subr.bf16.mxu0 %v1559
        %1847 = vmatpush1.bf16.msra.mxu0 %v1558
        %1848 = vmatprep.subr.bf16.mxu0 %v1561
        %1849 = vmatpush1.bf16.msra.mxu0 %v1560
        %1850 = vmatprep.subr.bf16.mxu0 %v1563
        %1851 = vmatpush1.bf16.msra.mxu0 %v1562
        %1852 = vmatprep.subr.bf16.mxu0 %v1565
        %1853 = vmatpush1.bf16.msra.mxu0 %v1564
        %1854 = vmatprep.mubr.bf16.mxu0 %v1067
        %1855 = vmatmul.mubr.bf16.gmra.mrb[0].mxu0 %v1066
        %v1856 = vpop.f32.mrb[0].mxu0
        %v1857 = vadd.f32 %v1003, %v1856
        %v1858 = vpop.f32.mrb[0].mxu0
        %v1859 = vadd.f32 %v1007, %v1858
        %v1860 = vpop.f32.mrb[0].mxu0
        %v1861 = vadd.f32 %v1003, %v1860
        %v1862 = vpop.f32.mrb[0].mxu0
        %v1863 = vadd.f32 %v1007, %v1862
        %1864 = vmatprep.mubr.bf16.mxu0 %v1076
        %1865 = vmatmul.mubr.bf16.gmra.mrb[0].mxu0 %v1075
        %v1866 = vpop.f32.mrb[0].mxu0
        %v1867 = vadd.f32 %v1003, %v1866
        %v1868 = vpop.f32.mrb[0].mxu0
        %v1869 = vadd.f32 %v1007, %v1868
        %v1870 = vpop.f32.mrb[0].mxu0
        %v1871 = vadd.f32 %v1003, %v1870
        %v1872 = vpop.f32.mrb[0].mxu0
        %v1873 = vadd.f32 %v1007, %v1872
        %1874 = vdwg.mxu0
        %1875 = vmatprep.subr.bf16.mxu0 %v1567
        %1876 = vmatpush1.bf16.msra.mxu0 %v1566
        %1877 = vmatprep.subr.bf16.mxu0 %v1569
        %1878 = vmatpush1.bf16.msra.mxu0 %v1568
        %1879 = vmatprep.subr.bf16.mxu0 %v1571
        %1880 = vmatpush1.bf16.msra.mxu0 %v1570
        %1881 = vmatprep.subr.bf16.mxu0 %v1573
        %1882 = vmatpush1.bf16.msra.mxu0 %v1572
        %1883 = vmatprep.subr.bf16.mxu0 %v1575
        %1884 = vmatpush1.bf16.msra.mxu0 %v1574
        %1885 = vmatprep.subr.bf16.mxu0 %v1577
        %1886 = vmatpush1.bf16.msra.mxu0 %v1576
        %1887 = vmatprep.subr.bf16.mxu0 %v1579
        %1888 = vmatpush1.bf16.msra.mxu0 %v1578
        %1889 = vmatprep.subr.bf16.mxu0 %v1581
        %1890 = vmatpush1.bf16.msra.mxu0 %v1580
        %1891 = vmatprep.subr.bf16.mxu0 %v1583
        %1892 = vmatpush1.bf16.msra.mxu0 %v1582
        %1893 = vmatprep.subr.bf16.mxu0 %v1585
        %1894 = vmatpush1.bf16.msra.mxu0 %v1584
        %1895 = vmatprep.subr.bf16.mxu0 %v1587
        %1896 = vmatpush1.bf16.msra.mxu0 %v1586
        %1897 = vmatprep.subr.bf16.mxu0 %v1589
        %1898 = vmatpush1.bf16.msra.mxu0 %v1588
        %1899 = vmatprep.subr.bf16.mxu0 %v1591
        %1900 = vmatpush1.bf16.msra.mxu0 %v1590
        %1901 = vmatprep.subr.bf16.mxu0 %v1593
        %1902 = vmatpush1.bf16.msra.mxu0 %v1592
        %1903 = vmatprep.subr.bf16.mxu0 %v1595
        %1904 = vmatpush1.bf16.msra.mxu0 %v1594
        %1905 = vmatprep.subr.bf16.mxu0 %v1597
        %1906 = vmatpush1.bf16.msra.mxu0 %v1596
        %1907 = vmatprep.mubr.bf16.mxu0 %v1069
        %1908 = vmatmul.mubr.bf16.gmra.mrb[0].mxu0 %v1068
        %v1909 = vpop.f32.mrb[0].mxu0
        %v1910 = vadd.f32 %v1857, %v1909
        %v1911 = vpop.f32.mrb[0].mxu0
        %v1912 = vadd.f32 %v1859, %v1911
        %v1913 = vpop.f32.mrb[0].mxu0
        %v1914 = vadd.f32 %v1861, %v1913
        %v1915 = vpop.f32.mrb[0].mxu0
        %v1916 = vadd.f32 %v1863, %v1915
        %1917 = vmatprep.mubr.bf16.mxu0 %v1078
        %1918 = vmatmul.mubr.bf16.gmra.mrb[0].mxu0 %v1077
        %v1919 = vpop.f32.mrb[0].mxu0
        %v1920 = vadd.f32 %v1867, %v1919
        %v1921 = vpop.f32.mrb[0].mxu0
        %v1922 = vadd.f32 %v1869, %v1921
        %v1923 = vpop.f32.mrb[0].mxu0
        %v1924 = vadd.f32 %v1871, %v1923
        %v1925 = vpop.f32.mrb[0].mxu0
        %v1926 = vadd.f32 %v1873, %v1925
        %1927 = vdwg.mxu0
        %1928 = vmatprep.subr.bf16.mxu0 %v1599
        %1929 = vmatpush1.bf16.msra.mxu0 %v1598
        %1930 = vmatprep.subr.bf16.mxu0 %v1601
        %1931 = vmatpush1.bf16.msra.mxu0 %v1600
        %1932 = vmatprep.subr.bf16.mxu0 %v1603
        %1933 = vmatpush1.bf16.msra.mxu0 %v1602
        %1934 = vmatprep.subr.bf16.mxu0 %v1605
        %1935 = vmatpush1.bf16.msra.mxu0 %v1604
        %1936 = vmatprep.subr.bf16.mxu0 %v1607
        %1937 = vmatpush1.bf16.msra.mxu0 %v1606
        %1938 = vmatprep.subr.bf16.mxu0 %v1609
        %1939 = vmatpush1.bf16.msra.mxu0 %v1608
        %1940 = vmatprep.subr.bf16.mxu0 %v1611
        %1941 = vmatpush1.bf16.msra.mxu0 %v1610
        %1942 = vmatprep.subr.bf16.mxu0 %v1613
        %1943 = vmatpush1.bf16.msra.mxu0 %v1612
        %1944 = vmatprep.subr.bf16.mxu0 %v1615
        %1945 = vmatpush1.bf16.msra.mxu0 %v1614
        %1946 = vmatprep.subr.bf16.mxu0 %v1617
        %1947 = vmatpush1.bf16.msra.mxu0 %v1616
        %1948 = vmatprep.subr.bf16.mxu0 %v1619
        %1949 = vmatpush1.bf16.msra.mxu0 %v1618
        %1950 = vmatprep.subr.bf16.mxu0 %v1621
        %1951 = vmatpush1.bf16.msra.mxu0 %v1620
        %1952 = vmatprep.subr.bf16.mxu0 %v1623
        %1953 = vmatpush1.bf16.msra.mxu0 %v1622
        %1954 = vmatprep.subr.bf16.mxu0 %v1625
        %1955 = vmatpush1.bf16.msra.mxu0 %v1624
        %1956 = vmatprep.subr.bf16.mxu0 %v1627
        %1957 = vmatpush1.bf16.msra.mxu0 %v1626
        %1958 = vmatprep.subr.bf16.mxu0 %v1629
        %1959 = vmatpush1.bf16.msra.mxu0 %v1628
        %1960 = vmatprep.mubr.bf16.mxu0 %v1071
        %1961 = vmatmul.mubr.bf16.gmra.mrb[0].mxu0 %v1070
        %v1962 = vpop.f32.mrb[0].mxu0
        %v1963 = vadd.f32 %v1910, %v1962
        %v1964 = vpop.f32.mrb[0].mxu0
        %v1965 = vadd.f32 %v1912, %v1964
        %v1966 = vpop.f32.mrb[0].mxu0
        %v1967 = vadd.f32 %v1914, %v1966
        %v1968 = vpop.f32.mrb[0].mxu0
        %v1969 = vadd.f32 %v1916, %v1968
        %1970 = vmatprep.mubr.bf16.mxu0 %v1080
        %1971 = vmatmul.mubr.bf16.gmra.mrb[0].mxu0 %v1079
        %v1972 = vpop.f32.mrb[0].mxu0
        %v1973 = vadd.f32 %v1920, %v1972
        %v1974 = vpop.f32.mrb[0].mxu0
        %v1975 = vadd.f32 %v1922, %v1974
        %v1976 = vpop.f32.mrb[0].mxu0
        %v1977 = vadd.f32 %v1924, %v1976
        %v1978 = vpop.f32.mrb[0].mxu0
        %v1979 = vadd.f32 %v1926, %v1978
        %1980 = vdwg.mxu0
        %1981 = vmatprep.subr.bf16.mxu0 %v1631
        %1982 = vmatpush1.bf16.msra.mxu0 %v1630
        %1983 = vmatprep.subr.bf16.mxu0 %v1633
        %1984 = vmatpush1.bf16.msra.mxu0 %v1632
        %1985 = vmatprep.subr.bf16.mxu0 %v1635
        %1986 = vmatpush1.bf16.msra.mxu0 %v1634
        %1987 = vmatprep.subr.bf16.mxu0 %v1637
        %1988 = vmatpush1.bf16.msra.mxu0 %v1636
        %1989 = vmatprep.subr.bf16.mxu0 %v1639
        %1990 = vmatpush1.bf16.msra.mxu0 %v1638
        %1991 = vmatprep.subr.bf16.mxu0 %v1641
        %1992 = vmatpush1.bf16.msra.mxu0 %v1640
        %1993 = vmatprep.subr.bf16.mxu0 %v1643
        %1994 = vmatpush1.bf16.msra.mxu0 %v1642
        %1995 = vmatprep.subr.bf16.mxu0 %v1645
        %1996 = vmatpush1.bf16.msra.mxu0 %v1644
        %1997 = vmatprep.subr.bf16.mxu0 %v1647
        %1998 = vmatpush1.bf16.msra.mxu0 %v1646
        %1999 = vmatprep.subr.bf16.mxu0 %v1649
        %2000 = vmatpush1.bf16.msra.mxu0 %v1648
        %2001 = vmatprep.subr.bf16.mxu0 %v1651
        %2002 = vmatpush1.bf16.msra.mxu0 %v1650
        %2003 = vmatprep.subr.bf16.mxu0 %v1653
        %2004 = vmatpush1.bf16.msra.mxu0 %v1652
        %2005 = vmatprep.subr.bf16.mxu0 %v1655
        %2006 = vmatpush1.bf16.msra.mxu0 %v1654
        %2007 = vmatprep.subr.bf16.mxu0 %v1657
        %2008 = vmatpush1.bf16.msra.mxu0 %v1656
        %2009 = vmatprep.subr.bf16.mxu0 %v1659
        %2010 = vmatpush1.bf16.msra.mxu0 %v1658
        %2011 = vmatprep.subr.bf16.mxu0 %v1661
        %2012 = vmatpush1.bf16.msra.mxu0 %v1660
        %2013 = vmatprep.mubr.bf16.mxu0 %v1073
        %2014 = vmatmul.mubr.bf16.gmra.mrb[0].mxu0 %v1072
        %v2015 = vpop.f32.mrb[0].mxu0
        %v2016 = vadd.f32 %v1963, %v2015
        %v2017 = vpop.f32.mrb[0].mxu0
        %v2018 = vadd.f32 %v1965, %v2017
        %v2019 = vpop.f32.mrb[0].mxu0
        %v2020 = vadd.f32 %v1967, %v2019
        %v2021 = vpop.f32.mrb[0].mxu0
        %v2022 = vadd.f32 %v1969, %v2021
        %2023 = vmatprep.mubr.bf16.mxu0 %v1082
        %2024 = vmatmul.mubr.bf16.gmra.mrb[0].mxu0 %v1081
        %v2025 = vpop.f32.mrb[0].mxu0
        %v2026 = vadd.f32 %v1973, %v2025
        %v2027 = vpop.f32.mrb[0].mxu0
        %v2028 = vadd.f32 %v1975, %v2027
        %v2029 = vpop.f32.mrb[0].mxu0
        %v2030 = vadd.f32 %v1977, %v2029
        %v2031 = vpop.f32.mrb[0].mxu0
        %v2032 = vadd.f32 %v1979, %v2031
        %2033 = vdwg.mxu0
        %2034 = vmatprep.subr.bf16.mxu0 %v1663
        %2035 = vmatpush1.bf16.msra.mxu0 %v1662
        %2036 = vmatprep.subr.bf16.mxu0 %v1665
        %2037 = vmatpush1.bf16.msra.mxu0 %v1664
        %2038 = vmatprep.subr.bf16.mxu0 %v1667
        %2039 = vmatpush1.bf16.msra.mxu0 %v1666
        %2040 = vmatprep.subr.bf16.mxu0 %v1669
        %2041 = vmatpush1.bf16.msra.mxu0 %v1668
        %2042 = vmatprep.subr.bf16.mxu0 %v1671
        %2043 = vmatpush1.bf16.msra.mxu0 %v1670
        %2044 = vmatprep.subr.bf16.mxu0 %v1673
        %2045 = vmatpush1.bf16.msra.mxu0 %v1672
        %2046 = vmatprep.subr.bf16.mxu0 %v1675
        %2047 = vmatpush1.bf16.msra.mxu0 %v1674
        %2048 = vmatprep.subr.bf16.mxu0 %v1677
        %2049 = vmatpush1.bf16.msra.mxu0 %v1676
        %2050 = vmatprep.subr.bf16.mxu0 0
        %2051 = vmatpush1.bf16.msra.mxu0 0
        %2052 = vmatprep.subr.bf16.mxu0 0
        %2053 = vmatpush1.bf16.msra.mxu0 0
        %2054 = vmatprep.subr.bf16.mxu0 0
        %2055 = vmatpush1.bf16.msra.mxu0 0
        %2056 = vmatprep.subr.bf16.mxu0 0
        %2057 = vmatpush1.bf16.msra.mxu0 0
        %2058 = vmatprep.subr.bf16.mxu0 0
        %2059 = vmatpush1.bf16.msra.mxu0 0
        %2060 = vmatprep.subr.bf16.mxu0 0
        %2061 = vmatpush1.bf16.msra.mxu0 0
        %2062 = vmatprep.subr.bf16.mxu0 0
        %2063 = vmatpush1.bf16.msra.mxu0 0
        %2064 = vmatprep.subr.bf16.mxu0 0
        %2065 = vmatpush1.bf16.msra.mxu0 0
        %2066 = vmatprep.mubr.bf16.mxu0 0
        %2067 = vmatmul.mubr.bf16.gmra.mrb[0].mxu0 %v1074
        %v2068 = vpop.f32.mrb[0].mxu0
        %v2069 = vadd.f32 %v2016, %v2068
        %v2070 = vpop.f32.mrb[0].mxu0
        %v2071 = vadd.f32 %v2018, %v2070
        %v2072 = vpop.f32.mrb[0].mxu0
        %v2073 = vadd.f32 %v2020, %v2072
        %v2074 = vpop.f32.mrb[0].mxu0
        %v2075 = vadd.f32 %v2022, %v2074
        %2076 = vmatprep.mubr.bf16.mxu0 0
        %2077 = vmatmul.mubr.bf16.gmra.mrb[0].mxu0 %v1083
        %v2078 = vpop.f32.mrb[0].mxu0
        %v2079 = vadd.f32 %v2026, %v2078
        %v2080 = vpop.f32.mrb[0].mxu0
        %v2081 = vadd.f32 %v2028, %v2080
        %v2082 = vpop.f32.mrb[0].mxu0
        %v2083 = vadd.f32 %v2030, %v2082
        %v2084 = vpop.f32.mrb[0].mxu0
        %v2085 = vadd.f32 %v2032, %v2084
        %2086 = vdwg.mxu0
        %v2087 = vmax.f32 %v2069, 0.0
        %v2088 = vmax.f32 %v2071, 0.0
        %v2089 = vmax.f32 %v2073, 0.0
        %v2090 = vmax.f32 %v2075, 0.0
        %v2091 = vmax.f32 %v2079, 0.0
        %v2092 = vmax.f32 %v2081, 0.0
        %v2093 = vmax.f32 %v2083, 0.0
        %v2094 = vmax.f32 %v2085, 0.0
        %v2095 = vpack.c.bf16 %v2089, %v2087
        %v2096 = vpack.c.bf16 %v2090, %v2088
        %v2097 = vpack.c.bf16 %v2093, %v2091
        %v2098 = vpack.c.bf16 %v2094, %v2092
        %v2103 = vunpack.c.l.b16 %v2095
        %v2104 = vunpack.c.l.b16 %v2096
        %v2105 = vunpack.c.h.b16 %v2095
        %v2106 = vunpack.c.h.b16 %v2096
        %v2107 = vunpack.c.l.b16 %v2097
        %v2108 = vunpack.c.l.b16 %v2098
        %v2109 = vunpack.c.h.b16 %v2097
        %v2110 = vunpack.c.h.b16 %v2098
        %v2111 = vpack.c.b16 %v2104, %v2103
        %v2112 = vpack.c.b16 %v2106, %v2105
        %v2113 = vpack.c.b16 %v2108, %v2107
        %v2114 = vpack.c.b16 %v2110, %v2109
        %2119 = vst [vmem:[%s817] sm:$0xff] %v2111
        %2120 = vst [vmem:[%s817 + $0x8] sm:$0xff] %v2112
        %2121 = vst [vmem:[%s817 + $0x10] sm:$0xff] %v2113
        %2122 = vst [vmem:[%s817 + $0x18] sm:$0xff] %v2114
        %s2123 = sand.u32 %s114, 1
        %s2124 = sand.u32 %s114, 1
        %s2125 = smul.addr %s2124, 32
        %s2126 = scalar_lea.vmem [#allocation3], %s2125
        // Predicated region
        $region71: #{_lambda_.7} parent=65 // pred_check
          %p2127 = pneg %p124
        $region72: #{_lambda_.7} parent=65 // pred_check_branch
          %2129 = sbr.rel (%p2127) target = $region74
        $region73: #{_lambda_.7} parent=65 // pred_region
          %s2130 = smul.u32 4, %s18
          %s2131 = smul.u32 2, %s19
          %s2132 = smul.addr %s2130, 4
          %s2133 = sadd.s32 %s2131, %s2132
          %s2134 = smul.addr %s2133, 4
          %s2135 = scalar_lea.vmem %s3, %s2134
          // Predicated region
          $region75: #{_lambda_.7} parent=73 // pred_check
            _
          $region76: #{_lambda_.7} parent=73 // pred_check_branch
            %2137 = sbr.rel (0) target = $region78
          $region77: #{_lambda_.7} parent=73 // pred_region
            // Predicated region
            $region79: #{_lambda_.7} parent=77 // pred_check
              _
            $region80: #{_lambda_.7} parent=77 // pred_check_branch
              %2139 = sbr.rel (0) target = $region82
            $region81: #{_lambda_.7} parent=77 // pred_region
              // Predicated region
              $region94: #{_lambda_.7} parent=81 // pred_check
                _
              $region95: #{_lambda_.7} parent=81 // pred_check_branch
                %2160 = sbr.rel (0) target = $region97
              $region96: #{_lambda_.7} parent=81 // pred_region
                loop: start=0, step=1, limit=1
                $region98: #{_lambda_.7} parent=96 // loop_pre_header
                  _
                $region99: #{_lambda_.7} parent=96 // loop_header
                  %s2162 = sphi 0, %s2166
                  %p2163 = scmp.ge.s32.totalorder %s2162, 1
                  %s2167 = sphi %s2126, %s2126
                  %s2168 = sphi %s2135, %s2135
                $region100: #{_lambda_.7} parent=96 // loop_header_branch
                  %2165 = sbr.rel (%p2163) target = $region104
                $region101: #{_lambda_.7} parent=96 // loop_body
                  %v2169 = vld [vmem:[%s2167] sm:$0xff]
                  %2170 = vst [vmem:[%s2168] sm:$0xff] %v2169
                  %v2171 = vld [vmem:[%s2167 + $0x8] sm:$0xff]
                  %2172 = vst [vmem:[%s2168 + $0x10] sm:$0xff] %v2171
                  %v2173 = vld [vmem:[%s2167 + $0x10] sm:$0xff]
                  %2174 = vst [vmem:[%s2168 + $0x20] sm:$0xff] %v2173
                  %v2175 = vld [vmem:[%s2167 + $0x18] sm:$0xff]
                  %2176 = vst [vmem:[%s2168 + $0x30] sm:$0xff] %v2175
                $region102: #{_lambda_.7} parent=96 // loop_footer
                  %s2166 = sadd.s32 1, %s2162
                $region103: #{_lambda_.7} parent=96 // loop_footer_branch
                  %2161 = sbr.rel target = $region99
                $region104: #{_lambda_.7} parent=96 // loop_exit
                  _
              $region97: #{_lambda_.7} parent=81 // pred_fallthru
                _
              // Predicated region
              $region105: #{_lambda_.7} parent=81 // pred_check
                _
              $region106: #{_lambda_.7} parent=81 // pred_check_branch
                %2178 = sbr.rel target = $region108
              $region107: #{_lambda_.7} parent=81 // pred_region
                _
              $region108: #{_lambda_.7} parent=81 // pred_fallthru
                _
            $region82: #{_lambda_.7} parent=77 // pred_fallthru
              _
            // Predicated region
            $region83: #{_lambda_.7} parent=77 // pred_check
              _
            $region84: #{_lambda_.7} parent=77 // pred_check_branch
              %2141 = sbr.rel target = $region86
            $region85: #{_lambda_.7} parent=77 // pred_region
              loop: start=0, step=1, limit=1
              $region87: #{_lambda_.7} parent=85 // loop_pre_header
                _
              $region88: #{_lambda_.7} parent=85 // loop_header
                %s2144 = sphi 0, %s2148
                %p2145 = scmp.ge.s32.totalorder %s2144, 1
                %s2149 = sphi %s2126, %s2126
                %s2150 = sphi %s2135, %s2135
              $region89: #{_lambda_.7} parent=85 // loop_header_branch
                %2147 = sbr.rel (%p2145) target = $region93
              $region90: #{_lambda_.7} parent=85 // loop_body
                %v2151 = vld [vmem:[%s2149] sm:$0xff]
                %2152 = vst [vmem:[%s2150] sm:$0xff] %v2151
                %v2153 = vld [vmem:[%s2149 + $0x8] sm:$0xff]
                %2154 = vst [vmem:[%s2150 + $0x10] sm:$0xff] %v2153
                %v2155 = vld [vmem:[%s2149 + $0x10] sm:$0xff]
                %2156 = vst [vmem:[%s2150 + $0x20] sm:$0xff] %v2155
                %v2157 = vld [vmem:[%s2149 + $0x18] sm:$0xff]
                %2158 = vst [vmem:[%s2150 + $0x30] sm:$0xff] %v2157
              $region91: #{_lambda_.7} parent=85 // loop_footer
                %s2148 = sadd.s32 1, %s2144
              $region92: #{_lambda_.7} parent=85 // loop_footer_branch
                %2143 = sbr.rel target = $region88
              $region93: #{_lambda_.7} parent=85 // loop_exit
                _
            $region86: #{_lambda_.7} parent=77 // pred_fallthru
              _
          $region78: #{_lambda_.7} parent=73 // pred_fallthru
            _
          %2179 = vnop
        $region74: #{_lambda_.7} parent=65 // pred_fallthru
          _
      $region66: #{_lambda_.7} parent=5 // pred_fallthru
        _
      %p2180 = scmp.le.s32.totalorder 2, %s9
      // Predicated region
      $region109: #{_lambda_.7} parent=5 // pred_check
        %p2181 = pneg %p2180
      $region110: #{_lambda_.7} parent=5 // pred_check_branch
        %2183 = sbr.rel (%p2181) target = $region112
      $region111: #{_lambda_.7} parent=5 // pred_region
        %s2184 = ssub.s32 %s9, 2
        // Predicated region
        $region113: #{_lambda_.7} parent=111 // pred_check
          %p2185 = pneg %p130
        $region114: #{_lambda_.7} parent=111 // pred_check_branch
          %2187 = sbr.rel (%p2185) target = $region116
        $region115: #{_lambda_.7} parent=111 // pred_region
          %s2188 = sand.u32 %s115, 1
          %s2189 = sand.u32 %s115, 1
          %s2190 = smul.addr %s2189, 32
          %s2191 = scalar_lea.vmem [#allocation3], %s2190
        $region116: #{_lambda_.7} parent=111 // pred_fallthru
          _
      $region112: #{_lambda_.7} parent=5 // pred_fallthru
        _
    $region6: #{_lambda_.7} parent=1 // loop_footer
      %s13 = sadd.s32 1, %s9
    $region7: #{_lambda_.7} parent=1 // loop_footer_branch
      %8 = sbr.rel target = $region3
    $region8: #{_lambda_.7} parent=1 // loop_exit
      _

// kernel: _lambda_.9
$region0: #{_lambda_.9}
  #allocation0 [shape = 'u32[]', space=smem, size = 0x4, offset = 0x4, fixed_abs, tag = 'smem constant byte address 0x4 - core index']
  #allocation1 [shape = 'u32[144,128]{1,0:T(1,128)}', space=vmem, size = 0x12000, scoped, tag = 'internal scratch']
  %s0 = inlined_call_operand.vmem [shape: f32[16,128], index: 0, kind: input, shape index: {}]
  %s1 = inlined_call_operand.vmem [shape: f32[128,256], index: 1, kind: input, shape index: {}]
  %s2 = inlined_call_operand.vmem [shape: f32[1,256], index: 2, kind: input, shape index: {}]
  %s3 = inlined_call_operand.vmem [shape: f32[16,256], index: 3, kind: output, shape index: {}]
  %s4 = sld [smem:[#allocation0]]
  $region22: #{_lambda_.9} parent=0
    _
  %s6 = ssub.s32 1, %s4
  %s7 = scalar_select 0, %s6, %s4
  // Predicated region
  $region2: #{_lambda_.9} parent=0 // pred_check
    _
  $region3: #{_lambda_.9} parent=0 // pred_check_branch
    %9 = sbr.rel (0) target = $region5
  $region4: #{_lambda_.9} parent=0 // pred_region
    _
  $region5: #{_lambda_.9} parent=0 // pred_fallthru
    _
  // Predicated region
  $region6: #{_lambda_.9} parent=0 // pred_check
    _
  $region7: #{_lambda_.9} parent=0 // pred_check_branch
    %11 = sbr.rel (0) target = $region9
  $region8: #{_lambda_.9} parent=0 // pred_region
    _
  $region9: #{_lambda_.9} parent=0 // pred_fallthru
    _
  // Predicated region
  $region10: #{_lambda_.9} parent=0 // pred_check
    _
  $region11: #{_lambda_.9} parent=0 // pred_check_branch
    %13 = sbr.rel (0) target = $region13
  $region12: #{_lambda_.9} parent=0 // pred_region
    _
  $region13: #{_lambda_.9} parent=0 // pred_fallthru
    _
  %v14 = vld [vmem:[%s0] sm:$0xff]
  %v15 = vld [vmem:[%s0 + $0x8] sm:$0xff]
  %v16 = vld [vmem:[%s1] sm:$0xff]
  %v17 = vld [vmem:[%s1 + $0x8] sm:$0xff]
  %v18 = vld [vmem:[%s1 + $0x10] sm:$0xff]
  %v19 = vld [vmem:[%s1 + $0x18] sm:$0xff]
  %v20 = vld [vmem:[%s1 + $0x20] sm:$0xff]
  %v21 = vld [vmem:[%s1 + $0x28] sm:$0xff]
  %v22 = vld [vmem:[%s1 + $0x30] sm:$0xff]
  %v23 = vld [vmem:[%s1 + $0x38] sm:$0xff]
  %v24 = vld [vmem:[%s1 + $0x40] sm:$0xff]
  %v25 = vld [vmem:[%s1 + $0x48] sm:$0xff]
  %v26 = vld [vmem:[%s1 + $0x50] sm:$0xff]
  %v27 = vld [vmem:[%s1 + $0x58] sm:$0xff]
  %v28 = vld [vmem:[%s1 + $0x60] sm:$0xff]
  %v29 = vld [vmem:[%s1 + $0x68] sm:$0xff]
  %v30 = vld [vmem:[%s1 + $0x70] sm:$0xff]
  %v31 = vld [vmem:[%s1 + $0x78] sm:$0xff]
  %v32 = vld [vmem:[%s1 + $0x80] sm:$0xff]
  %v33 = vld [vmem:[%s1 + $0x88] sm:$0xff]
  %v34 = vld [vmem:[%s1 + $0x90] sm:$0xff]
  %v35 = vld [vmem:[%s1 + $0x98] sm:$0xff]
  %v36 = vld [vmem:[%s1 + $0xa0] sm:$0xff]
  %v37 = vld [vmem:[%s1 + $0xa8] sm:$0xff]
  %v38 = vld [vmem:[%s1 + $0xb0] sm:$0xff]
  %v39 = vld [vmem:[%s1 + $0xb8] sm:$0xff]
  %v40 = vld [vmem:[%s1 + $0xc0] sm:$0xff]
  %v41 = vld [vmem:[%s1 + $0xc8] sm:$0xff]
  %v42 = vld [vmem:[%s1 + $0xd0] sm:$0xff]
  %v43 = vld [vmem:[%s1 + $0xd8] sm:$0xff]
  %v44 = vld [vmem:[%s1 + $0xe0] sm:$0xff]
  %v45 = vld [vmem:[%s1 + $0xe8] sm:$0xff]
  %v46 = vld [vmem:[%s1 + $0xf0] sm:$0xff]
  %v47 = vld [vmem:[%s1 + $0xf8] sm:$0xff]
  %v48 = vld [vmem:[%s2] sm:$0x3]
  %v50 = vlaneseq
  %v51 = vshrl.u32 %v50, 7
  %v52 = vsub.s32 0, %v51
  %v53 = vrot.slane %v48, %v52
  %v54 = vlaneseq
  %v55 = vshrl.u32 %v54, 7
  %v56 = vsub.s32 1, %v55
  %v57 = vrot.slane %v48, %v56
  %60 = vmatprep.subr.mxu0 %v17
  %61 = vmatpush1.msra.mxu0 %v16
  %62 = vmatprep.subr.mxu0 %v19
  %63 = vmatpush1.msra.mxu0 %v18
  %64 = vmatprep.subr.mxu0 %v21
  %65 = vmatpush1.msra.mxu0 %v20
  %66 = vmatprep.subr.mxu0 %v23
  %67 = vmatpush1.msra.mxu0 %v22
  %68 = vmatprep.subr.mxu0 %v25
  %69 = vmatpush1.msra.mxu0 %v24
  %70 = vmatprep.subr.mxu0 %v27
  %71 = vmatpush1.msra.mxu0 %v26
  %72 = vmatprep.subr.mxu0 %v29
  %73 = vmatpush1.msra.mxu0 %v28
  %74 = vmatprep.subr.mxu0 %v31
  %75 = vmatpush1.msra.mxu0 %v30
  %76 = vmatprep.subr.mxu0 %v33
  %77 = vmatpush1.msra.mxu0 %v32
  %78 = vmatprep.subr.mxu0 %v35
  %79 = vmatpush1.msra.mxu0 %v34
  %80 = vmatprep.subr.mxu0 %v37
  %81 = vmatpush1.msra.mxu0 %v36
  %82 = vmatprep.subr.mxu0 %v39
  %83 = vmatpush1.msra.mxu0 %v38
  %84 = vmatprep.subr.mxu0 %v41
  %85 = vmatpush1.msra.mxu0 %v40
  %86 = vmatprep.subr.mxu0 %v43
  %87 = vmatpush1.msra.mxu0 %v42
  %88 = vmatprep.subr.mxu0 %v45
  %89 = vmatpush1.msra.mxu0 %v44
  %90 = vmatprep.subr.mxu0 %v47
  %91 = vmatpush1.msra.mxu0 %v46
  %92 = vmatprep.subr.mxu0 0.0
  %93 = vmatpush1.msra.mxu0 0.0
  %94 = vmatprep.subr.mxu0 0.0
  %95 = vmatpush1.msra.mxu0 0.0
  %96 = vmatprep.subr.mxu0 0.0
  %97 = vmatpush1.msra.mxu0 0.0
  %98 = vmatprep.subr.mxu0 0.0
  %99 = vmatpush1.msra.mxu0 0.0
  %100 = vmatprep.subr.mxu0 0.0
  %101 = vmatpush1.msra.mxu0 0.0
  %102 = vmatprep.subr.mxu0 0.0
  %103 = vmatpush1.msra.mxu0 0.0
  %104 = vmatprep.subr.mxu0 0.0
  %105 = vmatpush1.msra.mxu0 0.0
  %106 = vmatprep.subr.mxu0 0.0
  %107 = vmatpush1.msra.mxu0 0.0
  %108 = vmatprep.subr.mxu0 0.0
  %109 = vmatpush1.msra.mxu0 0.0
  %110 = vmatprep.subr.mxu0 0.0
  %111 = vmatpush1.msra.mxu0 0.0
  %112 = vmatprep.subr.mxu0 0.0
  %113 = vmatpush1.msra.mxu0 0.0
  %114 = vmatprep.subr.mxu0 0.0
  %115 = vmatpush1.msra.mxu0 0.0
  %116 = vmatprep.subr.mxu0 0.0
  %117 = vmatpush1.msra.mxu0 0.0
  %118 = vmatprep.subr.mxu0 0.0
  %119 = vmatpush1.msra.mxu0 0.0
  %120 = vmatprep.subr.mxu0 0.0
  %121 = vmatpush1.msra.mxu0 0.0
  %122 = vmatprep.subr.mxu0 0.0
  %123 = vmatpush1.msra.mxu0 0.0
  %124 = vmatprep.mubr.f32.mxu0 0.0
  %125 = vmatmul.mubr.f32.gmra.mrb[0].mxu0 %v14
  %v126 = vpop.f32.mrb[0].mxu0
  %v127 = vadd.f32 %v53, %v126
  %v128 = vpop.f32.mrb[0].mxu0
  %v129 = vadd.f32 %v57, %v128
  %130 = vmatprep.mubr.f32.mxu0 0.0
  %131 = vmatmul.mubr.f32.gmra.mrb[0].mxu0 %v15
  %v132 = vpop.f32.mrb[0].mxu0
  %v133 = vadd.f32 %v53, %v132
  %v134 = vpop.f32.mrb[0].mxu0
  %v135 = vadd.f32 %v57, %v134
  %136 = vdwg.mxu0
  %137 = vst [vmem:[%s3] sm:$0xff] %v127
  %138 = vst [vmem:[%s3 + $0x8] sm:$0xff] %v129
  %139 = vst [vmem:[%s3 + $0x10] sm:$0xff] %v133
  %140 = vst [vmem:[%s3 + $0x18] sm:$0xff] %v135
  // Predicated region
  $region14: #{_lambda_.9} parent=0 // pred_check
    _
  $region15: #{_lambda_.9} parent=0 // pred_check_branch
    %142 = sbr.rel (0) target = $region17
  $region16: #{_lambda_.9} parent=0 // pred_region
    _
  $region17: #{_lambda_.9} parent=0 // pred_fallthru
    _
  // Predicated region
  $region18: #{_lambda_.9} parent=0 // pred_check
    _
  $region19: #{_lambda_.9} parent=0 // pred_check_branch
    %144 = sbr.rel (0) target = $region21
  $region20: #{_lambda_.9} parent=0 // pred_region
    _
  $region21: #{_lambda_.9} parent=0 // pred_fallthru
    _

// kernel: _lambda_.8
$region0: #{_lambda_.8}
  #allocation0 [shape = 'u32[]', space=smem, size = 0x4, offset = 0x4, fixed_abs, tag = 'smem constant byte address 0x4 - core index']
  #allocation1 [shape = 'u32[144,128]{1,0:T(1,128)}', space=vmem, size = 0x12000, scoped, tag = 'internal scratch']
  %s0 = inlined_call_operand.vmem [shape: bf16[32,4608], index: 0, kind: input, shape index: {}]
  %s1 = inlined_call_operand.vmem [shape: bf16[4608,128], index: 1, kind: input, shape index: {}]
  %s2 = inlined_call_operand.vmem [shape: f32[1,128], index: 2, kind: input, shape index: {}]
  %s3 = inlined_call_operand.vmem [shape: bf16[128,128], index: 3, kind: input, shape index: {}]
  %s4 = inlined_call_operand.vmem [shape: f32[1,128], index: 4, kind: input, shape index: {}]
  %s5 = inlined_call_operand.vmem [shape: f32[32,128], index: 5, kind: output, shape index: {}]
  %s6 = sld [smem:[#allocation0]]
  $region30: #{_lambda_.8} parent=0
    _
  %s8 = ssub.s32 1, %s6
  %s9 = scalar_select 0, %s8, %s6
  // Predicated region
  $region2: #{_lambda_.8} parent=0 // pred_check
    _
  $region3: #{_lambda_.8} parent=0 // pred_check_branch
    %11 = sbr.rel (0) target = $region5
  $region4: #{_lambda_.8} parent=0 // pred_region
    _
  $region5: #{_lambda_.8} parent=0 // pred_fallthru
    _
  // Predicated region
  $region6: #{_lambda_.8} parent=0 // pred_check
    _
  $region7: #{_lambda_.8} parent=0 // pred_check_branch
    %13 = sbr.rel (0) target = $region9
  $region8: #{_lambda_.8} parent=0 // pred_region
    _
  $region9: #{_lambda_.8} parent=0 // pred_fallthru
    _
  // Predicated region
  $region10: #{_lambda_.8} parent=0 // pred_check
    _
  $region11: #{_lambda_.8} parent=0 // pred_check_branch
    %15 = sbr.rel (0) target = $region13
  $region12: #{_lambda_.8} parent=0 // pred_region
    _
  $region13: #{_lambda_.8} parent=0 // pred_fallthru
    _
  // Predicated region
  $region14: #{_lambda_.8} parent=0 // pred_check
    _
  $region15: #{_lambda_.8} parent=0 // pred_check_branch
    %17 = sbr.rel (0) target = $region17
  $region16: #{_lambda_.8} parent=0 // pred_region
    _
  $region17: #{_lambda_.8} parent=0 // pred_fallthru
    _
  // Predicated region
  $region18: #{_lambda_.8} parent=0 // pred_check
    _
  $region19: #{_lambda_.8} parent=0 // pred_check_branch
    %19 = sbr.rel (0) target = $region21
  $region20: #{_lambda_.8} parent=0 // pred_region
    _
  $region21: #{_lambda_.8} parent=0 // pred_fallthru
    _
  %v21 = vld [vmem:[%s0] sm:$0xff]
  %v22 = vld [vmem:[%s0 + $0x8] sm:$0xff]
  %v23 = vld [vmem:[%s0 + $0x10] sm:$0xff]
  %v24 = vld [vmem:[%s0 + $0x18] sm:$0xff]
  %v25 = vld [vmem:[%s0 + $0x20] sm:$0xff]
  %v26 = vld [vmem:[%s0 + $0x28] sm:$0xff]
  %v27 = vld [vmem:[%s0 + $0x30] sm:$0xff]
  %v28 = vld [vmem:[%s0 + $0x38] sm:$0xff]
  %v29 = vld [vmem:[%s0 + $0x40] sm:$0xff]
  %v30 = vld [vmem:[%s0 + $0x48] sm:$0xff]
  %v31 = vld [vmem:[%s0 + $0x50] sm:$0xff]
  %v32 = vld [vmem:[%s0 + $0x58] sm:$0xff]
  %v33 = vld [vmem:[%s0 + $0x60] sm:$0xff]
  %v34 = vld [vmem:[%s0 + $0x68] sm:$0xff]
  %v35 = vld [vmem:[%s0 + $0x70] sm:$0xff]
  %v36 = vld [vmem:[%s0 + $0x78] sm:$0xff]
  %v37 = vld [vmem:[%s0 + $0x80] sm:$0xff]
  %v38 = vld [vmem:[%s0 + $0x88] sm:$0xff]
  %v39 = vld [vmem:[%s0 + $0x90] sm:$0xff]
  %v40 = vld [vmem:[%s0 + $0x98] sm:$0xff]
  %v41 = vld [vmem:[%s0 + $0xa0] sm:$0xff]
  %v42 = vld [vmem:[%s0 + $0xa8] sm:$0xff]
  %v43 = vld [vmem:[%s0 + $0xb0] sm:$0xff]
  %v44 = vld [vmem:[%s0 + $0xb8] sm:$0xff]
  %v45 = vld [vmem:[%s0 + $0xc0] sm:$0xff]
  %v46 = vld [vmem:[%s0 + $0xc8] sm:$0xff]
  %v47 = vld [vmem:[%s0 + $0xd0] sm:$0xff]
  %v48 = vld [vmem:[%s0 + $0xd8] sm:$0xff]
  %v49 = vld [vmem:[%s0 + $0xe0] sm:$0xff]
  %v50 = vld [vmem:[%s0 + $0xe8] sm:$0xff]
  %v51 = vld [vmem:[%s0 + $0xf0] sm:$0xff]
  %v52 = vld [vmem:[%s0 + $0xf8] sm:$0xff]
  %v53 = vld [vmem:[%s0 + $0x100] sm:$0xff]
  %v54 = vld [vmem:[%s0 + $0x108] sm:$0xff]
  %v55 = vld [vmem:[%s0 + $0x110] sm:$0xff]
  %v56 = vld [vmem:[%s0 + $0x118] sm:$0xff]
  %v57 = vld [vmem:[%s0 + $0x120] sm:$0xff]
  %v58 = vld [vmem:[%s0 + $0x128] sm:$0xff]
  %v59 = vld [vmem:[%s0 + $0x130] sm:$0xff]
  %v60 = vld [vmem:[%s0 + $0x138] sm:$0xff]
  %v61 = vld [vmem:[%s0 + $0x140] sm:$0xff]
  %v62 = vld [vmem:[%s0 + $0x148] sm:$0xff]
  %v63 = vld [vmem:[%s0 + $0x150] sm:$0xff]
  %v64 = vld [vmem:[%s0 + $0x158] sm:$0xff]
  %v65 = vld [vmem:[%s0 + $0x160] sm:$0xff]
  %v66 = vld [vmem:[%s0 + $0x168] sm:$0xff]
  %v67 = vld [vmem:[%s0 + $0x170] sm:$0xff]
  %v68 = vld [vmem:[%s0 + $0x178] sm:$0xff]
  %v69 = vld [vmem:[%s0 + $0x180] sm:$0xff]
  %v70 = vld [vmem:[%s0 + $0x188] sm:$0xff]
  %v71 = vld [vmem:[%s0 + $0x190] sm:$0xff]
  %v72 = vld [vmem:[%s0 + $0x198] sm:$0xff]
  %v73 = vld [vmem:[%s0 + $0x1a0] sm:$0xff]
  %v74 = vld [vmem:[%s0 + $0x1a8] sm:$0xff]
  %v75 = vld [vmem:[%s0 + $0x1b0] sm:$0xff]
  %v76 = vld [vmem:[%s0 + $0x1b8] sm:$0xff]
  %v77 = vld [vmem:[%s0 + $0x1c0] sm:$0xff]
  %v78 = vld [vmem:[%s0 + $0x1c8] sm:$0xff]
  %v79 = vld [vmem:[%s0 + $0x1d0] sm:$0xff]
  %v80 = vld [vmem:[%s0 + $0x1d8] sm:$0xff]
  %v81 = vld [vmem:[%s0 + $0x1e0] sm:$0xff]
  %v82 = vld [vmem:[%s0 + $0x1e8] sm:$0xff]
  %v83 = vld [vmem:[%s0 + $0x1f0] sm:$0xff]
  %v84 = vld [vmem:[%s0 + $0x1f8] sm:$0xff]
  %v85 = vld [vmem:[%s0 + $0x200] sm:$0xff]
  %v86 = vld [vmem:[%s0 + $0x208] sm:$0xff]
  %v87 = vld [vmem:[%s0 + $0x210] sm:$0xff]
  %v88 = vld [vmem:[%s0 + $0x218] sm:$0xff]
  %v89 = vld [vmem:[%s0 + $0x220] sm:$0xff]
  %v90 = vld [vmem:[%s0 + $0x228] sm:$0xff]
  %v91 = vld [vmem:[%s0 + $0x230] sm:$0xff]
  %v92 = vld [vmem:[%s0 + $0x238] sm:$0xff]
  %v93 = vld [vmem:[%s1] sm:$0xf]
  %v94 = vld [vmem:[%s1 + $0x4] sm:$0xf]
  %v95 = vld [vmem:[%s1 + $0x8] sm:$0xf]
  %v96 = vld [vmem:[%s1 + $0xc] sm:$0xf]
  %v97 = vld [vmem:[%s1 + $0x10] sm:$0xf]
  %v98 = vld [vmem:[%s1 + $0x14] sm:$0xf]
  %v99 = vld [vmem:[%s1 + $0x18] sm:$0xf]
  %v100 = vld [vmem:[%s1 + $0x1c] sm:$0xf]
  %v101 = vld [vmem:[%s1 + $0x20] sm:$0xf]
  %v102 = vld [vmem:[%s1 + $0x24] sm:$0xf]
  %v103 = vld [vmem:[%s1 + $0x28] sm:$0xf]
  %v104 = vld [vmem:[%s1 + $0x2c] sm:$0xf]
  %v105 = vld [vmem:[%s1 + $0x30] sm:$0xf]
  %v106 = vld [vmem:[%s1 + $0x34] sm:$0xf]
  %v107 = vld [vmem:[%s1 + $0x38] sm:$0xf]
  %v108 = vld [vmem:[%s1 + $0x3c] sm:$0xf]
  %v109 = vld [vmem:[%s1 + $0x40] sm:$0xf]
  %v110 = vld [vmem:[%s1 + $0x44] sm:$0xf]
  %v111 = vld [vmem:[%s1 + $0x48] sm:$0xf]
  %v112 = vld [vmem:[%s1 + $0x4c] sm:$0xf]
  %v113 = vld [vmem:[%s1 + $0x50] sm:$0xf]
  %v114 = vld [vmem:[%s1 + $0x54] sm:$0xf]
  %v115 = vld [vmem:[%s1 + $0x58] sm:$0xf]
  %v116 = vld [vmem:[%s1 + $0x5c] sm:$0xf]
  %v117 = vld [vmem:[%s1 + $0x60] sm:$0xf]
  %v118 = vld [vmem:[%s1 + $0x64] sm:$0xf]
  %v119 = vld [vmem:[%s1 + $0x68] sm:$0xf]
  %v120 = vld [vmem:[%s1 + $0x6c] sm:$0xf]
  %v121 = vld [vmem:[%s1 + $0x70] sm:$0xf]
  %v122 = vld [vmem:[%s1 + $0x74] sm:$0xf]
  %v123 = vld [vmem:[%s1 + $0x78] sm:$0xf]
  %v124 = vld [vmem:[%s1 + $0x7c] sm:$0xf]
  %v125 = vld [vmem:[%s1 + $0x80] sm:$0xf]
  %v126 = vld [vmem:[%s1 + $0x84] sm:$0xf]
  %v127 = vld [vmem:[%s1 + $0x88] sm:$0xf]
  %v128 = vld [vmem:[%s1 + $0x8c] sm:$0xf]
  %v129 = vld [vmem:[%s1 + $0x90] sm:$0xf]
  %v130 = vld [vmem:[%s1 + $0x94] sm:$0xf]
  %v131 = vld [vmem:[%s1 + $0x98] sm:$0xf]
  %v132 = vld [vmem:[%s1 + $0x9c] sm:$0xf]
  %v133 = vld [vmem:[%s1 + $0xa0] sm:$0xf]
  %v134 = vld [vmem:[%s1 + $0xa4] sm:$0xf]
  %v135 = vld [vmem:[%s1 + $0xa8] sm:$0xf]
  %v136 = vld [vmem:[%s1 + $0xac] sm:$0xf]
  %v137 = vld [vmem:[%s1 + $0xb0] sm:$0xf]
  %v138 = vld [vmem:[%s1 + $0xb4] sm:$0xf]
  %v139 = vld [vmem:[%s1 + $0xb8] sm:$0xf]
  %v140 = vld [vmem:[%s1 + $0xbc] sm:$0xf]
  %v141 = vld [vmem:[%s1 + $0xc0] sm:$0xf]
  %v142 = vld [vmem:[%s1 + $0xc4] sm:$0xf]
  %v143 = vld [vmem:[%s1 + $0xc8] sm:$0xf]
  %v144 = vld [vmem:[%s1 + $0xcc] sm:$0xf]
  %v145 = vld [vmem:[%s1 + $0xd0] sm:$0xf]
  %v146 = vld [vmem:[%s1 + $0xd4] sm:$0xf]
  %v147 = vld [vmem:[%s1 + $0xd8] sm:$0xf]
  %v148 = vld [vmem:[%s1 + $0xdc] sm:$0xf]
  %v149 = vld [vmem:[%s1 + $0xe0] sm:$0xf]
  %v150 = vld [vmem:[%s1 + $0xe4] sm:$0xf]
  %v151 = vld [vmem:[%s1 + $0xe8] sm:$0xf]
  %v152 = vld [vmem:[%s1 + $0xec] sm:$0xf]
  %v153 = vld [vmem:[%s1 + $0xf0] sm:$0xf]
  %v154 = vld [vmem:[%s1 + $0xf4] sm:$0xf]
  %v155 = vld [vmem:[%s1 + $0xf8] sm:$0xf]
  %v156 = vld [vmem:[%s1 + $0xfc] sm:$0xf]
  %v157 = vld [vmem:[%s1 + $0x100] sm:$0xf]
  %v158 = vld [vmem:[%s1 + $0x104] sm:$0xf]
  %v159 = vld [vmem:[%s1 + $0x108] sm:$0xf]
  %v160 = vld [vmem:[%s1 + $0x10c] sm:$0xf]
  %v161 = vld [vmem:[%s1 + $0x110] sm:$0xf]
  %v162 = vld [vmem:[%s1 + $0x114] sm:$0xf]
  %v163 = vld [vmem:[%s1 + $0x118] sm:$0xf]
  %v164 = vld [vmem:[%s1 + $0x11c] sm:$0xf]
  %v165 = vld [vmem:[%s1 + $0x120] sm:$0xf]
  %v166 = vld [vmem:[%s1 + $0x124] sm:$0xf]
  %v167 = vld [vmem:[%s1 + $0x128] sm:$0xf]
  %v168 = vld [vmem:[%s1 + $0x12c] sm:$0xf]
  %v169 = vld [vmem:[%s1 + $0x130] sm:$0xf]
  %v170 = vld [vmem:[%s1 + $0x134] sm:$0xf]
  %v171 = vld [vmem:[%s1 + $0x138] sm:$0xf]
  %v172 = vld [vmem:[%s1 + $0x13c] sm:$0xf]
  %v173 = vld [vmem:[%s1 + $0x140] sm:$0xf]
  %v174 = vld [vmem:[%s1 + $0x144] sm:$0xf]
  %v175 = vld [vmem:[%s1 + $0x148] sm:$0xf]
  %v176 = vld [vmem:[%s1 + $0x14c] sm:$0xf]
  %v177 = vld [vmem:[%s1 + $0x150] sm:$0xf]
  %v178 = vld [vmem:[%s1 + $0x154] sm:$0xf]
  %v179 = vld [vmem:[%s1 + $0x158] sm:$0xf]
  %v180 = vld [vmem:[%s1 + $0x15c] sm:$0xf]
  %v181 = vld [vmem:[%s1 + $0x160] sm:$0xf]
  %v182 = vld [vmem:[%s1 + $0x164] sm:$0xf]
  %v183 = vld [vmem:[%s1 + $0x168] sm:$0xf]
  %v184 = vld [vmem:[%s1 + $0x16c] sm:$0xf]
  %v185 = vld [vmem:[%s1 + $0x170] sm:$0xf]
  %v186 = vld [vmem:[%s1 + $0x174] sm:$0xf]
  %v187 = vld [vmem:[%s1 + $0x178] sm:$0xf]
  %v188 = vld [vmem:[%s1 + $0x17c] sm:$0xf]
  %v189 = vld [vmem:[%s1 + $0x180] sm:$0xf]
  %v190 = vld [vmem:[%s1 + $0x184] sm:$0xf]
  %v191 = vld [vmem:[%s1 + $0x188] sm:$0xf]
  %v192 = vld [vmem:[%s1 + $0x18c] sm:$0xf]
  %v193 = vld [vmem:[%s1 + $0x190] sm:$0xf]
  %v194 = vld [vmem:[%s1 + $0x194] sm:$0xf]
  %v195 = vld [vmem:[%s1 + $0x198] sm:$0xf]
  %v196 = vld [vmem:[%s1 + $0x19c] sm:$0xf]
  %v197 = vld [vmem:[%s1 + $0x1a0] sm:$0xf]
  %v198 = vld [vmem:[%s1 + $0x1a4] sm:$0xf]
  %v199 = vld [vmem:[%s1 + $0x1a8] sm:$0xf]
  %v200 = vld [vmem:[%s1 + $0x1ac] sm:$0xf]
  %v201 = vld [vmem:[%s1 + $0x1b0] sm:$0xf]
  %v202 = vld [vmem:[%s1 + $0x1b4] sm:$0xf]
  %v203 = vld [vmem:[%s1 + $0x1b8] sm:$0xf]
  %v204 = vld [vmem:[%s1 + $0x1bc] sm:$0xf]
  %v205 = vld [vmem:[%s1 + $0x1c0] sm:$0xf]
  %v206 = vld [vmem:[%s1 + $0x1c4] sm:$0xf]
  %v207 = vld [vmem:[%s1 + $0x1c8] sm:$0xf]
  %v208 = vld [vmem:[%s1 + $0x1cc] sm:$0xf]
  %v209 = vld [vmem:[%s1 + $0x1d0] sm:$0xf]
  %v210 = vld [vmem:[%s1 + $0x1d4] sm:$0xf]
  %v211 = vld [vmem:[%s1 + $0x1d8] sm:$0xf]
  %v212 = vld [vmem:[%s1 + $0x1dc] sm:$0xf]
  %v213 = vld [vmem:[%s1 + $0x1e0] sm:$0xf]
  %v214 = vld [vmem:[%s1 + $0x1e4] sm:$0xf]
  %v215 = vld [vmem:[%s1 + $0x1e8] sm:$0xf]
  %v216 = vld [vmem:[%s1 + $0x1ec] sm:$0xf]
  %v217 = vld [vmem:[%s1 + $0x1f0] sm:$0xf]
  %v218 = vld [vmem:[%s1 + $0x1f4] sm:$0xf]
  %v219 = vld [vmem:[%s1 + $0x1f8] sm:$0xf]
  %v220 = vld [vmem:[%s1 + $0x1fc] sm:$0xf]
  %v221 = vld [vmem:[%s1 + $0x200] sm:$0xf]
  %v222 = vld [vmem:[%s1 + $0x204] sm:$0xf]
  %v223 = vld [vmem:[%s1 + $0x208] sm:$0xf]
  %v224 = vld [vmem:[%s1 + $0x20c] sm:$0xf]
  %v225 = vld [vmem:[%s1 + $0x210] sm:$0xf]
  %v226 = vld [vmem:[%s1 + $0x214] sm:$0xf]
  %v227 = vld [vmem:[%s1 + $0x218] sm:$0xf]
  %v228 = vld [vmem:[%s1 + $0x21c] sm:$0xf]
  %v229 = vld [vmem:[%s1 + $0x220] sm:$0xf]
  %v230 = vld [vmem:[%s1 + $0x224] sm:$0xf]
  %v231 = vld [vmem:[%s1 + $0x228] sm:$0xf]
  %v232 = vld [vmem:[%s1 + $0x22c] sm:$0xf]
  %v233 = vld [vmem:[%s1 + $0x230] sm:$0xf]
  %v234 = vld [vmem:[%s1 + $0x234] sm:$0xf]
  %v235 = vld [vmem:[%s1 + $0x238] sm:$0xf]
  %v236 = vld [vmem:[%s1 + $0x23c] sm:$0xf]
  %v237 = vld [vmem:[%s1 + $0x240] sm:$0xf]
  %v238 = vld [vmem:[%s1 + $0x244] sm:$0xf]
  %v239 = vld [vmem:[%s1 + $0x248] sm:$0xf]
  %v240 = vld [vmem:[%s1 + $0x24c] sm:$0xf]
  %v241 = vld [vmem:[%s1 + $0x250] sm:$0xf]
  %v242 = vld [vmem:[%s1 + $0x254] sm:$0xf]
  %v243 = vld [vmem:[%s1 + $0x258] sm:$0xf]
  %v244 = vld [vmem:[%s1 + $0x25c] sm:$0xf]
  %v245 = vld [vmem:[%s1 + $0x260] sm:$0xf]
  %v246 = vld [vmem:[%s1 + $0x264] sm:$0xf]
  %v247 = vld [vmem:[%s1 + $0x268] sm:$0xf]
  %v248 = vld [vmem:[%s1 + $0x26c] sm:$0xf]
  %v249 = vld [vmem:[%s1 + $0x270] sm:$0xf]
  %v250 = vld [vmem:[%s1 + $0x274] sm:$0xf]
  %v251 = vld [vmem:[%s1 + $0x278] sm:$0xf]
  %v252 = vld [vmem:[%s1 + $0x27c] sm:$0xf]
  %v253 = vld [vmem:[%s1 + $0x280] sm:$0xf]
  %v254 = vld [vmem:[%s1 + $0x284] sm:$0xf]
  %v255 = vld [vmem:[%s1 + $0x288] sm:$0xf]
  %v256 = vld [vmem:[%s1 + $0x28c] sm:$0xf]
  %v257 = vld [vmem:[%s1 + $0x290] sm:$0xf]
  %v258 = vld [vmem:[%s1 + $0x294] sm:$0xf]
  %v259 = vld [vmem:[%s1 + $0x298] sm:$0xf]
  %v260 = vld [vmem:[%s1 + $0x29c] sm:$0xf]
  %v261 = vld [vmem:[%s1 + $0x2a0] sm:$0xf]
  %v262 = vld [vmem:[%s1 + $0x2a4] sm:$0xf]
  %v263 = vld [vmem:[%s1 + $0x2a8] sm:$0xf]
  %v264 = vld [vmem:[%s1 + $0x2ac] sm:$0xf]
  %v265 = vld [vmem:[%s1 + $0x2b0] sm:$0xf]
  %v266 = vld [vmem:[%s1 + $0x2b4] sm:$0xf]
  %v267 = vld [vmem:[%s1 + $0x2b8] sm:$0xf]
  %v268 = vld [vmem:[%s1 + $0x2bc] sm:$0xf]
  %v269 = vld [vmem:[%s1 + $0x2c0] sm:$0xf]
  %v270 = vld [vmem:[%s1 + $0x2c4] sm:$0xf]
  %v271 = vld [vmem:[%s1 + $0x2c8] sm:$0xf]
  %v272 = vld [vmem:[%s1 + $0x2cc] sm:$0xf]
  %v273 = vld [vmem:[%s1 + $0x2d0] sm:$0xf]
  %v274 = vld [vmem:[%s1 + $0x2d4] sm:$0xf]
  %v275 = vld [vmem:[%s1 + $0x2d8] sm:$0xf]
  %v276 = vld [vmem:[%s1 + $0x2dc] sm:$0xf]
  %v277 = vld [vmem:[%s1 + $0x2e0] sm:$0xf]
  %v278 = vld [vmem:[%s1 + $0x2e4] sm:$0xf]
  %v279 = vld [vmem:[%s1 + $0x2e8] sm:$0xf]
  %v280 = vld [vmem:[%s1 + $0x2ec] sm:$0xf]
  %v281 = vld [vmem:[%s1 + $0x2f0] sm:$0xf]
  %v282 = vld [vmem:[%s1 + $0x2f4] sm:$0xf]
  %v283 = vld [vmem:[%s1 + $0x2f8] sm:$0xf]
  %v284 = vld [vmem:[%s1 + $0x2fc] sm:$0xf]
  %v285 = vld [vmem:[%s1 + $0x300] sm:$0xf]
  %v286 = vld [vmem:[%s1 + $0x304] sm:$0xf]
  %v287 = vld [vmem:[%s1 + $0x308] sm:$0xf]
  %v288 = vld [vmem:[%s1 + $0x30c] sm:$0xf]
  %v289 = vld [vmem:[%s1 + $0x310] sm:$0xf]
  %v290 = vld [vmem:[%s1 + $0x314] sm:$0xf]
  %v291 = vld [vmem:[%s1 + $0x318] sm:$0xf]
  %v292 = vld [vmem:[%s1 + $0x31c] sm:$0xf]
  %v293 = vld [vmem:[%s1 + $0x320] sm:$0xf]
  %v294 = vld [vmem:[%s1 + $0x324] sm:$0xf]
  %v295 = vld [vmem:[%s1 + $0x328] sm:$0xf]
  %v296 = vld [vmem:[%s1 + $0x32c] sm:$0xf]
  %v297 = vld [vmem:[%s1 + $0x330] sm:$0xf]
  %v298 = vld [vmem:[%s1 + $0x334] sm:$0xf]
  %v299 = vld [vmem:[%s1 + $0x338] sm:$0xf]
  %v300 = vld [vmem:[%s1 + $0x33c] sm:$0xf]
  %v301 = vld [vmem:[%s1 + $0x340] sm:$0xf]
  %v302 = vld [vmem:[%s1 + $0x344] sm:$0xf]
  %v303 = vld [vmem:[%s1 + $0x348] sm:$0xf]
  %v304 = vld [vmem:[%s1 + $0x34c] sm:$0xf]
  %v305 = vld [vmem:[%s1 + $0x350] sm:$0xf]
  %v306 = vld [vmem:[%s1 + $0x354] sm:$0xf]
  %v307 = vld [vmem:[%s1 + $0x358] sm:$0xf]
  %v308 = vld [vmem:[%s1 + $0x35c] sm:$0xf]
  %v309 = vld [vmem:[%s1 + $0x360] sm:$0xf]
  %v310 = vld [vmem:[%s1 + $0x364] sm:$0xf]
  %v311 = vld [vmem:[%s1 + $0x368] sm:$0xf]
  %v312 = vld [vmem:[%s1 + $0x36c] sm:$0xf]
  %v313 = vld [vmem:[%s1 + $0x370] sm:$0xf]
  %v314 = vld [vmem:[%s1 + $0x374] sm:$0xf]
  %v315 = vld [vmem:[%s1 + $0x378] sm:$0xf]
  %v316 = vld [vmem:[%s1 + $0x37c] sm:$0xf]
  %v317 = vld [vmem:[%s1 + $0x380] sm:$0xf]
  %v318 = vld [vmem:[%s1 + $0x384] sm:$0xf]
  %v319 = vld [vmem:[%s1 + $0x388] sm:$0xf]
  %v320 = vld [vmem:[%s1 + $0x38c] sm:$0xf]
  %v321 = vld [vmem:[%s1 + $0x390] sm:$0xf]
  %v322 = vld [vmem:[%s1 + $0x394] sm:$0xf]
  %v323 = vld [vmem:[%s1 + $0x398] sm:$0xf]
  %v324 = vld [vmem:[%s1 + $0x39c] sm:$0xf]
  %v325 = vld [vmem:[%s1 + $0x3a0] sm:$0xf]
  %v326 = vld [vmem:[%s1 + $0x3a4] sm:$0xf]
  %v327 = vld [vmem:[%s1 + $0x3a8] sm:$0xf]
  %v328 = vld [vmem:[%s1 + $0x3ac] sm:$0xf]
  %v329 = vld [vmem:[%s1 + $0x3b0] sm:$0xf]
  %v330 = vld [vmem:[%s1 + $0x3b4] sm:$0xf]
  %v331 = vld [vmem:[%s1 + $0x3b8] sm:$0xf]
  %v332 = vld [vmem:[%s1 + $0x3bc] sm:$0xf]
  %v333 = vld [vmem:[%s1 + $0x3c0] sm:$0xf]
  %v334 = vld [vmem:[%s1 + $0x3c4] sm:$0xf]
  %v335 = vld [vmem:[%s1 + $0x3c8] sm:$0xf]
  %v336 = vld [vmem:[%s1 + $0x3cc] sm:$0xf]
  %v337 = vld [vmem:[%s1 + $0x3d0] sm:$0xf]
  %v338 = vld [vmem:[%s1 + $0x3d4] sm:$0xf]
  %v339 = vld [vmem:[%s1 + $0x3d8] sm:$0xf]
  %v340 = vld [vmem:[%s1 + $0x3dc] sm:$0xf]
  %v341 = vld [vmem:[%s1 + $0x3e0] sm:$0xf]
  %v342 = vld [vmem:[%s1 + $0x3e4] sm:$0xf]
  %v343 = vld [vmem:[%s1 + $0x3e8] sm:$0xf]
  %v344 = vld [vmem:[%s1 + $0x3ec] sm:$0xf]
  %v345 = vld [vmem:[%s1 + $0x3f0] sm:$0xf]
  %v346 = vld [vmem:[%s1 + $0x3f4] sm:$0xf]
  %v347 = vld [vmem:[%s1 + $0x3f8] sm:$0xf]
  %v348 = vld [vmem:[%s1 + $0x3fc] sm:$0xf]
  %v349 = vld [vmem:[%s1 + $0x400] sm:$0xf]
  %v350 = vld [vmem:[%s1 + $0x404] sm:$0xf]
  %v351 = vld [vmem:[%s1 + $0x408] sm:$0xf]
  %v352 = vld [vmem:[%s1 + $0x40c] sm:$0xf]
  %v353 = vld [vmem:[%s1 + $0x410] sm:$0xf]
  %v354 = vld [vmem:[%s1 + $0x414] sm:$0xf]
  %v355 = vld [vmem:[%s1 + $0x418] sm:$0xf]
  %v356 = vld [vmem:[%s1 + $0x41c] sm:$0xf]
  %v357 = vld [vmem:[%s1 + $0x420] sm:$0xf]
  %v358 = vld [vmem:[%s1 + $0x424] sm:$0xf]
  %v359 = vld [vmem:[%s1 + $0x428] sm:$0xf]
  %v360 = vld [vmem:[%s1 + $0x42c] sm:$0xf]
  %v361 = vld [vmem:[%s1 + $0x430] sm:$0xf]
  %v362 = vld [vmem:[%s1 + $0x434] sm:$0xf]
  %v363 = vld [vmem:[%s1 + $0x438] sm:$0xf]
  %v364 = vld [vmem:[%s1 + $0x43c] sm:$0xf]
  %v365 = vld [vmem:[%s1 + $0x440] sm:$0xf]
  %v366 = vld [vmem:[%s1 + $0x444] sm:$0xf]
  %v367 = vld [vmem:[%s1 + $0x448] sm:$0xf]
  %v368 = vld [vmem:[%s1 + $0x44c] sm:$0xf]
  %v369 = vld [vmem:[%s1 + $0x450] sm:$0xf]
  %v370 = vld [vmem:[%s1 + $0x454] sm:$0xf]
  %v371 = vld [vmem:[%s1 + $0x458] sm:$0xf]
  %v372 = vld [vmem:[%s1 + $0x45c] sm:$0xf]
  %v373 = vld [vmem:[%s1 + $0x460] sm:$0xf]
  %v374 = vld [vmem:[%s1 + $0x464] sm:$0xf]
  %v375 = vld [vmem:[%s1 + $0x468] sm:$0xf]
  %v376 = vld [vmem:[%s1 + $0x46c] sm:$0xf]
  %v377 = vld [vmem:[%s1 + $0x470] sm:$0xf]
  %v378 = vld [vmem:[%s1 + $0x474] sm:$0xf]
  %v379 = vld [vmem:[%s1 + $0x478] sm:$0xf]
  %v380 = vld [vmem:[%s1 + $0x47c] sm:$0xf]
  %v381 = vld [vmem:[%s1 + $0x480] sm:$0xf]
  %v382 = vld [vmem:[%s1 + $0x484] sm:$0xf]
  %v383 = vld [vmem:[%s1 + $0x488] sm:$0xf]
  %v384 = vld [vmem:[%s1 + $0x48c] sm:$0xf]
  %v385 = vld [vmem:[%s1 + $0x490] sm:$0xf]
  %v386 = vld [vmem:[%s1 + $0x494] sm:$0xf]
  %v387 = vld [vmem:[%s1 + $0x498] sm:$0xf]
  %v388 = vld [vmem:[%s1 + $0x49c] sm:$0xf]
  %v389 = vld [vmem:[%s1 + $0x4a0] sm:$0xf]
  %v390 = vld [vmem:[%s1 + $0x4a4] sm:$0xf]
  %v391 = vld [vmem:[%s1 + $0x4a8] sm:$0xf]
  %v392 = vld [vmem:[%s1 + $0x4ac] sm:$0xf]
  %v393 = vld [vmem:[%s1 + $0x4b0] sm:$0xf]
  %v394 = vld [vmem:[%s1 + $0x4b4] sm:$0xf]
  %v395 = vld [vmem:[%s1 + $0x4b8] sm:$0xf]
  %v396 = vld [vmem:[%s1 + $0x4bc] sm:$0xf]
  %v397 = vld [vmem:[%s1 + $0x4c0] sm:$0xf]
  %v398 = vld [vmem:[%s1 + $0x4c4] sm:$0xf]
  %v399 = vld [vmem:[%s1 + $0x4c8] sm:$0xf]
  %v400 = vld [vmem:[%s1 + $0x4cc] sm:$0xf]
  %v401 = vld [vmem:[%s1 + $0x4d0] sm:$0xf]
  %v402 = vld [vmem:[%s1 + $0x4d4] sm:$0xf]
  %v403 = vld [vmem:[%s1 + $0x4d8] sm:$0xf]
  %v404 = vld [vmem:[%s1 + $0x4dc] sm:$0xf]
  %v405 = vld [vmem:[%s1 + $0x4e0] sm:$0xf]
  %v406 = vld [vmem:[%s1 + $0x4e4] sm:$0xf]
  %v407 = vld [vmem:[%s1 + $0x4e8] sm:$0xf]
  %v408 = vld [vmem:[%s1 + $0x4ec] sm:$0xf]
  %v409 = vld [vmem:[%s1 + $0x4f0] sm:$0xf]
  %v410 = vld [vmem:[%s1 + $0x4f4] sm:$0xf]
  %v411 = vld [vmem:[%s1 + $0x4f8] sm:$0xf]
  %v412 = vld [vmem:[%s1 + $0x4fc] sm:$0xf]
  %v413 = vld [vmem:[%s1 + $0x500] sm:$0xf]
  %v414 = vld [vmem:[%s1 + $0x504] sm:$0xf]
  %v415 = vld [vmem:[%s1 + $0x508] sm:$0xf]
  %v416 = vld [vmem:[%s1 + $0x50c] sm:$0xf]
  %v417 = vld [vmem:[%s1 + $0x510] sm:$0xf]
  %v418 = vld [vmem:[%s1 + $0x514] sm:$0xf]
  %v419 = vld [vmem:[%s1 + $0x518] sm:$0xf]
  %v420 = vld [vmem:[%s1 + $0x51c] sm:$0xf]
  %v421 = vld [vmem:[%s1 + $0x520] sm:$0xf]
  %v422 = vld [vmem:[%s1 + $0x524] sm:$0xf]
  %v423 = vld [vmem:[%s1 + $0x528] sm:$0xf]
  %v424 = vld [vmem:[%s1 + $0x52c] sm:$0xf]
  %v425 = vld [vmem:[%s1 + $0x530] sm:$0xf]
  %v426 = vld [vmem:[%s1 + $0x534] sm:$0xf]
  %v427 = vld [vmem:[%s1 + $0x538] sm:$0xf]
  %v428 = vld [vmem:[%s1 + $0x53c] sm:$0xf]
  %v429 = vld [vmem:[%s1 + $0x540] sm:$0xf]
  %v430 = vld [vmem:[%s1 + $0x544] sm:$0xf]
  %v431 = vld [vmem:[%s1 + $0x548] sm:$0xf]
  %v432 = vld [vmem:[%s1 + $0x54c] sm:$0xf]
  %v433 = vld [vmem:[%s1 + $0x550] sm:$0xf]
  %v434 = vld [vmem:[%s1 + $0x554] sm:$0xf]
  %v435 = vld [vmem:[%s1 + $0x558] sm:$0xf]
  %v436 = vld [vmem:[%s1 + $0x55c] sm:$0xf]
  %v437 = vld [vmem:[%s1 + $0x560] sm:$0xf]
  %v438 = vld [vmem:[%s1 + $0x564] sm:$0xf]
  %v439 = vld [vmem:[%s1 + $0x568] sm:$0xf]
  %v440 = vld [vmem:[%s1 + $0x56c] sm:$0xf]
  %v441 = vld [vmem:[%s1 + $0x570] sm:$0xf]
  %v442 = vld [vmem:[%s1 + $0x574] sm:$0xf]
  %v443 = vld [vmem:[%s1 + $0x578] sm:$0xf]
  %v444 = vld [vmem:[%s1 + $0x57c] sm:$0xf]
  %v445 = vld [vmem:[%s1 + $0x580] sm:$0xf]
  %v446 = vld [vmem:[%s1 + $0x584] sm:$0xf]
  %v447 = vld [vmem:[%s1 + $0x588] sm:$0xf]
  %v448 = vld [vmem:[%s1 + $0x58c] sm:$0xf]
  %v449 = vld [vmem:[%s1 + $0x590] sm:$0xf]
  %v450 = vld [vmem:[%s1 + $0x594] sm:$0xf]
  %v451 = vld [vmem:[%s1 + $0x598] sm:$0xf]
  %v452 = vld [vmem:[%s1 + $0x59c] sm:$0xf]
  %v453 = vld [vmem:[%s1 + $0x5a0] sm:$0xf]
  %v454 = vld [vmem:[%s1 + $0x5a4] sm:$0xf]
  %v455 = vld [vmem:[%s1 + $0x5a8] sm:$0xf]
  %v456 = vld [vmem:[%s1 + $0x5ac] sm:$0xf]
  %v457 = vld [vmem:[%s1 + $0x5b0] sm:$0xf]
  %v458 = vld [vmem:[%s1 + $0x5b4] sm:$0xf]
  %v459 = vld [vmem:[%s1 + $0x5b8] sm:$0xf]
  %v460 = vld [vmem:[%s1 + $0x5bc] sm:$0xf]
  %v461 = vld [vmem:[%s1 + $0x5c0] sm:$0xf]
  %v462 = vld [vmem:[%s1 + $0x5c4] sm:$0xf]
  %v463 = vld [vmem:[%s1 + $0x5c8] sm:$0xf]
  %v464 = vld [vmem:[%s1 + $0x5cc] sm:$0xf]
  %v465 = vld [vmem:[%s1 + $0x5d0] sm:$0xf]
  %v466 = vld [vmem:[%s1 + $0x5d4] sm:$0xf]
  %v467 = vld [vmem:[%s1 + $0x5d8] sm:$0xf]
  %v468 = vld [vmem:[%s1 + $0x5dc] sm:$0xf]
  %v469 = vld [vmem:[%s1 + $0x5e0] sm:$0xf]
  %v470 = vld [vmem:[%s1 + $0x5e4] sm:$0xf]
  %v471 = vld [vmem:[%s1 + $0x5e8] sm:$0xf]
  %v472 = vld [vmem:[%s1 + $0x5ec] sm:$0xf]
  %v473 = vld [vmem:[%s1 + $0x5f0] sm:$0xf]
  %v474 = vld [vmem:[%s1 + $0x5f4] sm:$0xf]
  %v475 = vld [vmem:[%s1 + $0x5f8] sm:$0xf]
  %v476 = vld [vmem:[%s1 + $0x5fc] sm:$0xf]
  %v477 = vld [vmem:[%s1 + $0x600] sm:$0xf]
  %v478 = vld [vmem:[%s1 + $0x604] sm:$0xf]
  %v479 = vld [vmem:[%s1 + $0x608] sm:$0xf]
  %v480 = vld [vmem:[%s1 + $0x60c] sm:$0xf]
  %v481 = vld [vmem:[%s1 + $0x610] sm:$0xf]
  %v482 = vld [vmem:[%s1 + $0x614] sm:$0xf]
  %v483 = vld [vmem:[%s1 + $0x618] sm:$0xf]
  %v484 = vld [vmem:[%s1 + $0x61c] sm:$0xf]
  %v485 = vld [vmem:[%s1 + $0x620] sm:$0xf]
  %v486 = vld [vmem:[%s1 + $0x624] sm:$0xf]
  %v487 = vld [vmem:[%s1 + $0x628] sm:$0xf]
  %v488 = vld [vmem:[%s1 + $0x62c] sm:$0xf]
  %v489 = vld [vmem:[%s1 + $0x630] sm:$0xf]
  %v490 = vld [vmem:[%s1 + $0x634] sm:$0xf]
  %v491 = vld [vmem:[%s1 + $0x638] sm:$0xf]
  %v492 = vld [vmem:[%s1 + $0x63c] sm:$0xf]
  %v493 = vld [vmem:[%s1 + $0x640] sm:$0xf]
  %v494 = vld [vmem:[%s1 + $0x644] sm:$0xf]
  %v495 = vld [vmem:[%s1 + $0x648] sm:$0xf]
  %v496 = vld [vmem:[%s1 + $0x64c] sm:$0xf]
  %v497 = vld [vmem:[%s1 + $0x650] sm:$0xf]
  %v498 = vld [vmem:[%s1 + $0x654] sm:$0xf]
  %v499 = vld [vmem:[%s1 + $0x658] sm:$0xf]
  %v500 = vld [vmem:[%s1 + $0x65c] sm:$0xf]
  %v501 = vld [vmem:[%s1 + $0x660] sm:$0xf]
  %v502 = vld [vmem:[%s1 + $0x664] sm:$0xf]
  %v503 = vld [vmem:[%s1 + $0x668] sm:$0xf]
  %v504 = vld [vmem:[%s1 + $0x66c] sm:$0xf]
  %v505 = vld [vmem:[%s1 + $0x670] sm:$0xf]
  %v506 = vld [vmem:[%s1 + $0x674] sm:$0xf]
  %v507 = vld [vmem:[%s1 + $0x678] sm:$0xf]
  %v508 = vld [vmem:[%s1 + $0x67c] sm:$0xf]
  %v509 = vld [vmem:[%s1 + $0x680] sm:$0xf]
  %v510 = vld [vmem:[%s1 + $0x684] sm:$0xf]
  %v511 = vld [vmem:[%s1 + $0x688] sm:$0xf]
  %v512 = vld [vmem:[%s1 + $0x68c] sm:$0xf]
  %v513 = vld [vmem:[%s1 + $0x690] sm:$0xf]
  %v514 = vld [vmem:[%s1 + $0x694] sm:$0xf]
  %v515 = vld [vmem:[%s1 + $0x698] sm:$0xf]
  %v516 = vld [vmem:[%s1 + $0x69c] sm:$0xf]
  %v517 = vld [vmem:[%s1 + $0x6a0] sm:$0xf]
  %v518 = vld [vmem:[%s1 + $0x6a4] sm:$0xf]
  %v519 = vld [vmem:[%s1 + $0x6a8] sm:$0xf]
  %v520 = vld [vmem:[%s1 + $0x6ac] sm:$0xf]
  %v521 = vld [vmem:[%s1 + $0x6b0] sm:$0xf]
  %v522 = vld [vmem:[%s1 + $0x6b4] sm:$0xf]
  %v523 = vld [vmem:[%s1 + $0x6b8] sm:$0xf]
  %v524 = vld [vmem:[%s1 + $0x6bc] sm:$0xf]
  %v525 = vld [vmem:[%s1 + $0x6c0] sm:$0xf]
  %v526 = vld [vmem:[%s1 + $0x6c4] sm:$0xf]
  %v527 = vld [vmem:[%s1 + $0x6c8] sm:$0xf]
  %v528 = vld [vmem:[%s1 + $0x6cc] sm:$0xf]
  %v529 = vld [vmem:[%s1 + $0x6d0] sm:$0xf]
  %v530 = vld [vmem:[%s1 + $0x6d4] sm:$0xf]
  %v531 = vld [vmem:[%s1 + $0x6d8] sm:$0xf]
  %v532 = vld [vmem:[%s1 + $0x6dc] sm:$0xf]
  %v533 = vld [vmem:[%s1 + $0x6e0] sm:$0xf]
  %v534 = vld [vmem:[%s1 + $0x6e4] sm:$0xf]
  %v535 = vld [vmem:[%s1 + $0x6e8] sm:$0xf]
  %v536 = vld [vmem:[%s1 + $0x6ec] sm:$0xf]
  %v537 = vld [vmem:[%s1 + $0x6f0] sm:$0xf]
  %v538 = vld [vmem:[%s1 + $0x6f4] sm:$0xf]
  %v539 = vld [vmem:[%s1 + $0x6f8] sm:$0xf]
  %v540 = vld [vmem:[%s1 + $0x6fc] sm:$0xf]
  %v541 = vld [vmem:[%s1 + $0x700] sm:$0xf]
  %v542 = vld [vmem:[%s1 + $0x704] sm:$0xf]
  %v543 = vld [vmem:[%s1 + $0x708] sm:$0xf]
  %v544 = vld [vmem:[%s1 + $0x70c] sm:$0xf]
  %v545 = vld [vmem:[%s1 + $0x710] sm:$0xf]
  %v546 = vld [vmem:[%s1 + $0x714] sm:$0xf]
  %v547 = vld [vmem:[%s1 + $0x718] sm:$0xf]
  %v548 = vld [vmem:[%s1 + $0x71c] sm:$0xf]
  %v549 = vld [vmem:[%s1 + $0x720] sm:$0xf]
  %v550 = vld [vmem:[%s1 + $0x724] sm:$0xf]
  %v551 = vld [vmem:[%s1 + $0x728] sm:$0xf]
  %v552 = vld [vmem:[%s1 + $0x72c] sm:$0xf]
  %v553 = vld [vmem:[%s1 + $0x730] sm:$0xf]
  %v554 = vld [vmem:[%s1 + $0x734] sm:$0xf]
  %v555 = vld [vmem:[%s1 + $0x738] sm:$0xf]
  %v556 = vld [vmem:[%s1 + $0x73c] sm:$0xf]
  %v557 = vld [vmem:[%s1 + $0x740] sm:$0xf]
  %v558 = vld [vmem:[%s1 + $0x744] sm:$0xf]
  %v559 = vld [vmem:[%s1 + $0x748] sm:$0xf]
  %v560 = vld [vmem:[%s1 + $0x74c] sm:$0xf]
  %v561 = vld [vmem:[%s1 + $0x750] sm:$0xf]
  %v562 = vld [vmem:[%s1 + $0x754] sm:$0xf]
  %v563 = vld [vmem:[%s1 + $0x758] sm:$0xf]
  %v564 = vld [vmem:[%s1 + $0x75c] sm:$0xf]
  %v565 = vld [vmem:[%s1 + $0x760] sm:$0xf]
  %v566 = vld [vmem:[%s1 + $0x764] sm:$0xf]
  %v567 = vld [vmem:[%s1 + $0x768] sm:$0xf]
  %v568 = vld [vmem:[%s1 + $0x76c] sm:$0xf]
  %v569 = vld [vmem:[%s1 + $0x770] sm:$0xf]
  %v570 = vld [vmem:[%s1 + $0x774] sm:$0xf]
  %v571 = vld [vmem:[%s1 + $0x778] sm:$0xf]
  %v572 = vld [vmem:[%s1 + $0x77c] sm:$0xf]
  %v573 = vld [vmem:[%s1 + $0x780] sm:$0xf]
  %v574 = vld [vmem:[%s1 + $0x784] sm:$0xf]
  %v575 = vld [vmem:[%s1 + $0x788] sm:$0xf]
  %v576 = vld [vmem:[%s1 + $0x78c] sm:$0xf]
  %v577 = vld [vmem:[%s1 + $0x790] sm:$0xf]
  %v578 = vld [vmem:[%s1 + $0x794] sm:$0xf]
  %v579 = vld [vmem:[%s1 + $0x798] sm:$0xf]
  %v580 = vld [vmem:[%s1 + $0x79c] sm:$0xf]
  %v581 = vld [vmem:[%s1 + $0x7a0] sm:$0xf]
  %v582 = vld [vmem:[%s1 + $0x7a4] sm:$0xf]
  %v583 = vld [vmem:[%s1 + $0x7a8] sm:$0xf]
  %v584 = vld [vmem:[%s1 + $0x7ac] sm:$0xf]
  %v585 = vld [vmem:[%s1 + $0x7b0] sm:$0xf]
  %v586 = vld [vmem:[%s1 + $0x7b4] sm:$0xf]
  %v587 = vld [vmem:[%s1 + $0x7b8] sm:$0xf]
  %v588 = vld [vmem:[%s1 + $0x7bc] sm:$0xf]
  %v589 = vld [vmem:[%s1 + $0x7c0] sm:$0xf]
  %v590 = vld [vmem:[%s1 + $0x7c4] sm:$0xf]
  %v591 = vld [vmem:[%s1 + $0x7c8] sm:$0xf]
  %v592 = vld [vmem:[%s1 + $0x7cc] sm:$0xf]
  %v593 = vld [vmem:[%s1 + $0x7d0] sm:$0xf]
  %v594 = vld [vmem:[%s1 + $0x7d4] sm:$0xf]
  %v595 = vld [vmem:[%s1 + $0x7d8] sm:$0xf]
  %v596 = vld [vmem:[%s1 + $0x7dc] sm:$0xf]
  %v597 = vld [vmem:[%s1 + $0x7e0] sm:$0xf]
  %v598 = vld [vmem:[%s1 + $0x7e4] sm:$0xf]
  %v599 = vld [vmem:[%s1 + $0x7e8] sm:$0xf]
  %v600 = vld [vmem:[%s1 + $0x7ec] sm:$0xf]
  %v601 = vld [vmem:[%s1 + $0x7f0] sm:$0xf]
  %v602 = vld [vmem:[%s1 + $0x7f4] sm:$0xf]
  %v603 = vld [vmem:[%s1 + $0x7f8] sm:$0xf]
  %v604 = vld [vmem:[%s1 + $0x7fc] sm:$0xf]
  %v605 = vld [vmem:[%s1 + $0x800] sm:$0xf]
  %v606 = vld [vmem:[%s1 + $0x804] sm:$0xf]
  %v607 = vld [vmem:[%s1 + $0x808] sm:$0xf]
  %v608 = vld [vmem:[%s1 + $0x80c] sm:$0xf]
  %v609 = vld [vmem:[%s1 + $0x810] sm:$0xf]
  %v610 = vld [vmem:[%s1 + $0x814] sm:$0xf]
  %v611 = vld [vmem:[%s1 + $0x818] sm:$0xf]
  %v612 = vld [vmem:[%s1 + $0x81c] sm:$0xf]
  %v613 = vld [vmem:[%s1 + $0x820] sm:$0xf]
  %v614 = vld [vmem:[%s1 + $0x824] sm:$0xf]
  %v615 = vld [vmem:[%s1 + $0x828] sm:$0xf]
  %v616 = vld [vmem:[%s1 + $0x82c] sm:$0xf]
  %v617 = vld [vmem:[%s1 + $0x830] sm:$0xf]
  %v618 = vld [vmem:[%s1 + $0x834] sm:$0xf]
  %v619 = vld [vmem:[%s1 + $0x838] sm:$0xf]
  %v620 = vld [vmem:[%s1 + $0x83c] sm:$0xf]
  %v621 = vld [vmem:[%s1 + $0x840] sm:$0xf]
  %v622 = vld [vmem:[%s1 + $0x844] sm:$0xf]
  %v623 = vld [vmem:[%s1 + $0x848] sm:$0xf]
  %v624 = vld [vmem:[%s1 + $0x84c] sm:$0xf]
  %v625 = vld [vmem:[%s1 + $0x850] sm:$0xf]
  %v626 = vld [vmem:[%s1 + $0x854] sm:$0xf]
  %v627 = vld [vmem:[%s1 + $0x858] sm:$0xf]
  %v628 = vld [vmem:[%s1 + $0x85c] sm:$0xf]
  %v629 = vld [vmem:[%s1 + $0x860] sm:$0xf]
  %v630 = vld [vmem:[%s1 + $0x864] sm:$0xf]
  %v631 = vld [vmem:[%s1 + $0x868] sm:$0xf]
  %v632 = vld [vmem:[%s1 + $0x86c] sm:$0xf]
  %v633 = vld [vmem:[%s1 + $0x870] sm:$0xf]
  %v634 = vld [vmem:[%s1 + $0x874] sm:$0xf]
  %v635 = vld [vmem:[%s1 + $0x878] sm:$0xf]
  %v636 = vld [vmem:[%s1 + $0x87c] sm:$0xf]
  %v637 = vld [vmem:[%s1 + $0x880] sm:$0xf]
  %v638 = vld [vmem:[%s1 + $0x884] sm:$0xf]
  %v639 = vld [vmem:[%s1 + $0x888] sm:$0xf]
  %v640 = vld [vmem:[%s1 + $0x88c] sm:$0xf]
  %v641 = vld [vmem:[%s1 + $0x890] sm:$0xf]
  %v642 = vld [vmem:[%s1 + $0x894] sm:$0xf]
  %v643 = vld [vmem:[%s1 + $0x898] sm:$0xf]
  %v644 = vld [vmem:[%s1 + $0x89c] sm:$0xf]
  %v645 = vld [vmem:[%s1 + $0x8a0] sm:$0xf]
  %v646 = vld [vmem:[%s1 + $0x8a4] sm:$0xf]
  %v647 = vld [vmem:[%s1 + $0x8a8] sm:$0xf]
  %v648 = vld [vmem:[%s1 + $0x8ac] sm:$0xf]
  %v649 = vld [vmem:[%s1 + $0x8b0] sm:$0xf]
  %v650 = vld [vmem:[%s1 + $0x8b4] sm:$0xf]
  %v651 = vld [vmem:[%s1 + $0x8b8] sm:$0xf]
  %v652 = vld [vmem:[%s1 + $0x8bc] sm:$0xf]
  %v653 = vld [vmem:[%s1 + $0x8c0] sm:$0xf]
  %v654 = vld [vmem:[%s1 + $0x8c4] sm:$0xf]
  %v655 = vld [vmem:[%s1 + $0x8c8] sm:$0xf]
  %v656 = vld [vmem:[%s1 + $0x8cc] sm:$0xf]
  %v657 = vld [vmem:[%s1 + $0x8d0] sm:$0xf]
  %v658 = vld [vmem:[%s1 + $0x8d4] sm:$0xf]
  %v659 = vld [vmem:[%s1 + $0x8d8] sm:$0xf]
  %v660 = vld [vmem:[%s1 + $0x8dc] sm:$0xf]
  %v661 = vld [vmem:[%s1 + $0x8e0] sm:$0xf]
  %v662 = vld [vmem:[%s1 + $0x8e4] sm:$0xf]
  %v663 = vld [vmem:[%s1 + $0x8e8] sm:$0xf]
  %v664 = vld [vmem:[%s1 + $0x8ec] sm:$0xf]
  %v665 = vld [vmem:[%s1 + $0x8f0] sm:$0xf]
  %v666 = vld [vmem:[%s1 + $0x8f4] sm:$0xf]
  %v667 = vld [vmem:[%s1 + $0x8f8] sm:$0xf]
  %v668 = vld [vmem:[%s1 + $0x8fc] sm:$0xf]
  %v669 = vld [vmem:[%s2] sm:$0x1]
  %v671 = vlaneseq
  %v672 = vshrl.u32 %v671, 7
  %v673 = vsub.s32 0, %v672
  %v674 = vrot.slane %v669, %v673
  %v748 = vunpack.c.l.b16 %v21
  %v749 = vunpack.c.h.b16 %v21
  %v750 = vunpack.c.l.b16 %v22
  %v751 = vunpack.c.h.b16 %v22
  %v752 = vunpack.c.l.b16 %v23
  %v753 = vunpack.c.h.b16 %v23
  %v754 = vunpack.c.l.b16 %v24
  %v755 = vunpack.c.h.b16 %v24
  %v756 = vunpack.c.l.b16 %v25
  %v757 = vunpack.c.h.b16 %v25
  %v758 = vunpack.c.l.b16 %v26
  %v759 = vunpack.c.h.b16 %v26
  %v760 = vunpack.c.l.b16 %v27
  %v761 = vunpack.c.h.b16 %v27
  %v762 = vunpack.c.l.b16 %v28
  %v763 = vunpack.c.h.b16 %v28
  %v764 = vunpack.c.l.b16 %v29
  %v765 = vunpack.c.h.b16 %v29
  %v766 = vunpack.c.l.b16 %v30
  %v767 = vunpack.c.h.b16 %v30
  %v768 = vunpack.c.l.b16 %v31
  %v769 = vunpack.c.h.b16 %v31
  %v770 = vunpack.c.l.b16 %v32
  %v771 = vunpack.c.h.b16 %v32
  %v772 = vunpack.c.l.b16 %v33
  %v773 = vunpack.c.h.b16 %v33
  %v774 = vunpack.c.l.b16 %v34
  %v775 = vunpack.c.h.b16 %v34
  %v776 = vunpack.c.l.b16 %v35
  %v777 = vunpack.c.h.b16 %v35
  %v778 = vunpack.c.l.b16 %v36
  %v779 = vunpack.c.h.b16 %v36
  %v780 = vunpack.c.l.b16 %v37
  %v781 = vunpack.c.h.b16 %v37
  %v782 = vunpack.c.l.b16 %v38
  %v783 = vunpack.c.h.b16 %v38
  %v784 = vunpack.c.l.b16 %v39
  %v785 = vunpack.c.h.b16 %v39
  %v786 = vunpack.c.l.b16 %v40
  %v787 = vunpack.c.h.b16 %v40
  %v788 = vunpack.c.l.b16 %v41
  %v789 = vunpack.c.h.b16 %v41
  %v790 = vunpack.c.l.b16 %v42
  %v791 = vunpack.c.h.b16 %v42
  %v792 = vunpack.c.l.b16 %v43
  %v793 = vunpack.c.h.b16 %v43
  %v794 = vunpack.c.l.b16 %v44
  %v795 = vunpack.c.h.b16 %v44
  %v796 = vunpack.c.l.b16 %v45
  %v797 = vunpack.c.h.b16 %v45
  %v798 = vunpack.c.l.b16 %v46
  %v799 = vunpack.c.h.b16 %v46
  %v800 = vunpack.c.l.b16 %v47
  %v801 = vunpack.c.h.b16 %v47
  %v802 = vunpack.c.l.b16 %v48
  %v803 = vunpack.c.h.b16 %v48
  %v804 = vunpack.c.l.b16 %v49
  %v805 = vunpack.c.h.b16 %v49
  %v806 = vunpack.c.l.b16 %v50
  %v807 = vunpack.c.h.b16 %v50
  %v808 = vunpack.c.l.b16 %v51
  %v809 = vunpack.c.h.b16 %v51
  %v810 = vunpack.c.l.b16 %v52
  %v811 = vunpack.c.h.b16 %v52
  %v812 = vunpack.c.l.b16 %v53
  %v813 = vunpack.c.h.b16 %v53
  %v814 = vunpack.c.l.b16 %v54
  %v815 = vunpack.c.h.b16 %v54
  %v816 = vunpack.c.l.b16 %v55
  %v817 = vunpack.c.h.b16 %v55
  %v818 = vunpack.c.l.b16 %v56
  %v819 = vunpack.c.h.b16 %v56
  %v820 = vunpack.c.l.b16 %v57
  %v821 = vunpack.c.h.b16 %v57
  %v822 = vunpack.c.l.b16 %v58
  %v823 = vunpack.c.h.b16 %v58
  %v824 = vunpack.c.l.b16 %v59
  %v825 = vunpack.c.h.b16 %v59
  %v826 = vunpack.c.l.b16 %v60
  %v827 = vunpack.c.h.b16 %v60
  %v828 = vunpack.c.l.b16 %v61
  %v829 = vunpack.c.h.b16 %v61
  %v830 = vunpack.c.l.b16 %v62
  %v831 = vunpack.c.h.b16 %v62
  %v832 = vunpack.c.l.b16 %v63
  %v833 = vunpack.c.h.b16 %v63
  %v834 = vunpack.c.l.b16 %v64
  %v835 = vunpack.c.h.b16 %v64
  %v836 = vunpack.c.l.b16 %v65
  %v837 = vunpack.c.h.b16 %v65
  %v838 = vunpack.c.l.b16 %v66
  %v839 = vunpack.c.h.b16 %v66
  %v840 = vunpack.c.l.b16 %v67
  %v841 = vunpack.c.h.b16 %v67
  %v842 = vunpack.c.l.b16 %v68
  %v843 = vunpack.c.h.b16 %v68
  %v844 = vunpack.c.l.b16 %v69
  %v845 = vunpack.c.h.b16 %v69
  %v846 = vunpack.c.l.b16 %v70
  %v847 = vunpack.c.h.b16 %v70
  %v848 = vunpack.c.l.b16 %v71
  %v849 = vunpack.c.h.b16 %v71
  %v850 = vunpack.c.l.b16 %v72
  %v851 = vunpack.c.h.b16 %v72
  %v852 = vunpack.c.l.b16 %v73
  %v853 = vunpack.c.h.b16 %v73
  %v854 = vunpack.c.l.b16 %v74
  %v855 = vunpack.c.h.b16 %v74
  %v856 = vunpack.c.l.b16 %v75
  %v857 = vunpack.c.h.b16 %v75
  %v858 = vunpack.c.l.b16 %v76
  %v859 = vunpack.c.h.b16 %v76
  %v860 = vunpack.c.l.b16 %v77
  %v861 = vunpack.c.h.b16 %v77
  %v862 = vunpack.c.l.b16 %v78
  %v863 = vunpack.c.h.b16 %v78
  %v864 = vunpack.c.l.b16 %v79
  %v865 = vunpack.c.h.b16 %v79
  %v866 = vunpack.c.l.b16 %v80
  %v867 = vunpack.c.h.b16 %v80
  %v868 = vunpack.c.l.b16 %v81
  %v869 = vunpack.c.h.b16 %v81
  %v870 = vunpack.c.l.b16 %v82
  %v871 = vunpack.c.h.b16 %v82
  %v872 = vunpack.c.l.b16 %v83
  %v873 = vunpack.c.h.b16 %v83
  %v874 = vunpack.c.l.b16 %v84
  %v875 = vunpack.c.h.b16 %v84
  %v876 = vunpack.c.l.b16 %v85
  %v877 = vunpack.c.h.b16 %v85
  %v878 = vunpack.c.l.b16 %v86
  %v879 = vunpack.c.h.b16 %v86
  %v880 = vunpack.c.l.b16 %v87
  %v881 = vunpack.c.h.b16 %v87
  %v882 = vunpack.c.l.b16 %v88
  %v883 = vunpack.c.h.b16 %v88
  %v884 = vunpack.c.l.b16 %v89
  %v885 = vunpack.c.h.b16 %v89
  %v886 = vunpack.c.l.b16 %v90
  %v887 = vunpack.c.h.b16 %v90
  %v888 = vunpack.c.l.b16 %v91
  %v889 = vunpack.c.h.b16 %v91
  %v890 = vunpack.c.l.b16 %v92
  %v891 = vunpack.c.h.b16 %v92
  %v892 = vpack.c.b16 %v784, %v748
  %v893 = vpack.c.b16 %v785, %v749
  %v894 = vpack.c.b16 %v786, %v750
  %v895 = vpack.c.b16 %v787, %v751
  %v896 = vpack.c.b16 %v788, %v752
  %v897 = vpack.c.b16 %v789, %v753
  %v898 = vpack.c.b16 %v790, %v754
  %v899 = vpack.c.b16 %v791, %v755
  %v900 = vpack.c.b16 %v792, %v756
  %v901 = vpack.c.b16 %v793, %v757
  %v902 = vpack.c.b16 %v794, %v758
  %v903 = vpack.c.b16 %v795, %v759
  %v904 = vpack.c.b16 %v796, %v760
  %v905 = vpack.c.b16 %v797, %v761
  %v906 = vpack.c.b16 %v798, %v762
  %v907 = vpack.c.b16 %v799, %v763
  %v908 = vpack.c.b16 %v800, %v764
  %v909 = vpack.c.b16 %v801, %v765
  %v910 = vpack.c.b16 %v802, %v766
  %v911 = vpack.c.b16 %v803, %v767
  %v912 = vpack.c.b16 %v804, %v768
  %v913 = vpack.c.b16 %v805, %v769
  %v914 = vpack.c.b16 %v806, %v770
  %v915 = vpack.c.b16 %v807, %v771
  %v916 = vpack.c.b16 %v808, %v772
  %v917 = vpack.c.b16 %v809, %v773
  %v918 = vpack.c.b16 %v810, %v774
  %v919 = vpack.c.b16 %v811, %v775
  %v920 = vpack.c.b16 %v812, %v776
  %v921 = vpack.c.b16 %v813, %v777
  %v922 = vpack.c.b16 %v814, %v778
  %v923 = vpack.c.b16 %v815, %v779
  %v924 = vpack.c.b16 %v816, %v780
  %v925 = vpack.c.b16 %v817, %v781
  %v926 = vpack.c.b16 %v818, %v782
  %v927 = vpack.c.b16 %v819, %v783
  %v928 = vpack.c.b16 %v856, %v820
  %v929 = vpack.c.b16 %v857, %v821
  %v930 = vpack.c.b16 %v858, %v822
  %v931 = vpack.c.b16 %v859, %v823
  %v932 = vpack.c.b16 %v860, %v824
  %v933 = vpack.c.b16 %v861, %v825
  %v934 = vpack.c.b16 %v862, %v826
  %v935 = vpack.c.b16 %v863, %v827
  %v936 = vpack.c.b16 %v864, %v828
  %v937 = vpack.c.b16 %v865, %v829
  %v938 = vpack.c.b16 %v866, %v830
  %v939 = vpack.c.b16 %v867, %v831
  %v940 = vpack.c.b16 %v868, %v832
  %v941 = vpack.c.b16 %v869, %v833
  %v942 = vpack.c.b16 %v870, %v834
  %v943 = vpack.c.b16 %v871, %v835
  %v944 = vpack.c.b16 %v872, %v836
  %v945 = vpack.c.b16 %v873, %v837
  %v946 = vpack.c.b16 %v874, %v838
  %v947 = vpack.c.b16 %v875, %v839
  %v948 = vpack.c.b16 %v876, %v840
  %v949 = vpack.c.b16 %v877, %v841
  %v950 = vpack.c.b16 %v878, %v842
  %v951 = vpack.c.b16 %v879, %v843
  %v952 = vpack.c.b16 %v880, %v844
  %v953 = vpack.c.b16 %v881, %v845
  %v954 = vpack.c.b16 %v882, %v846
  %v955 = vpack.c.b16 %v883, %v847
  %v956 = vpack.c.b16 %v884, %v848
  %v957 = vpack.c.b16 %v885, %v849
  %v958 = vpack.c.b16 %v886, %v850
  %v959 = vpack.c.b16 %v887, %v851
  %v960 = vpack.c.b16 %v888, %v852
  %v961 = vpack.c.b16 %v889, %v853
  %v962 = vpack.c.b16 %v890, %v854
  %v963 = vpack.c.b16 %v891, %v855
  %v1612 = vunpack.c.l.b16 %v93
  %v1613 = vunpack.c.l.b16 %v94
  %v1614 = vunpack.c.l.b16 %v95
  %v1615 = vunpack.c.l.b16 %v96
  %v1616 = vunpack.c.l.b16 %v97
  %v1617 = vunpack.c.l.b16 %v98
  %v1618 = vunpack.c.l.b16 %v99
  %v1619 = vunpack.c.l.b16 %v100
  %v1620 = vunpack.c.l.b16 %v101
  %v1621 = vunpack.c.l.b16 %v102
  %v1622 = vunpack.c.l.b16 %v103
  %v1623 = vunpack.c.l.b16 %v104
  %v1624 = vunpack.c.l.b16 %v105
  %v1625 = vunpack.c.l.b16 %v106
  %v1626 = vunpack.c.l.b16 %v107
  %v1627 = vunpack.c.l.b16 %v108
  %v1628 = vunpack.c.l.b16 %v109
  %v1629 = vunpack.c.l.b16 %v110
  %v1630 = vunpack.c.l.b16 %v111
  %v1631 = vunpack.c.l.b16 %v112
  %v1632 = vunpack.c.l.b16 %v113
  %v1633 = vunpack.c.l.b16 %v114
  %v1634 = vunpack.c.l.b16 %v115
  %v1635 = vunpack.c.l.b16 %v116
  %v1636 = vunpack.c.l.b16 %v117
  %v1637 = vunpack.c.l.b16 %v118
  %v1638 = vunpack.c.l.b16 %v119
  %v1639 = vunpack.c.l.b16 %v120
  %v1640 = vunpack.c.l.b16 %v121
  %v1641 = vunpack.c.l.b16 %v122
  %v1642 = vunpack.c.l.b16 %v123
  %v1643 = vunpack.c.l.b16 %v124
  %v1644 = vunpack.c.l.b16 %v125
  %v1645 = vunpack.c.l.b16 %v126
  %v1646 = vunpack.c.l.b16 %v127
  %v1647 = vunpack.c.l.b16 %v128
  %v1648 = vunpack.c.l.b16 %v129
  %v1649 = vunpack.c.l.b16 %v130
  %v1650 = vunpack.c.l.b16 %v131
  %v1651 = vunpack.c.l.b16 %v132
  %v1652 = vunpack.c.l.b16 %v133
  %v1653 = vunpack.c.l.b16 %v134
  %v1654 = vunpack.c.l.b16 %v135
  %v1655 = vunpack.c.l.b16 %v136
  %v1656 = vunpack.c.l.b16 %v137
  %v1657 = vunpack.c.l.b16 %v138
  %v1658 = vunpack.c.l.b16 %v139
  %v1659 = vunpack.c.l.b16 %v140
  %v1660 = vunpack.c.l.b16 %v141
  %v1661 = vunpack.c.l.b16 %v142
  %v1662 = vunpack.c.l.b16 %v143
  %v1663 = vunpack.c.l.b16 %v144
  %v1664 = vunpack.c.l.b16 %v145
  %v1665 = vunpack.c.l.b16 %v146
  %v1666 = vunpack.c.l.b16 %v147
  %v1667 = vunpack.c.l.b16 %v148
  %v1668 = vunpack.c.l.b16 %v149
  %v1669 = vunpack.c.l.b16 %v150
  %v1670 = vunpack.c.l.b16 %v151
  %v1671 = vunpack.c.l.b16 %v152
  %v1672 = vunpack.c.l.b16 %v153
  %v1673 = vunpack.c.l.b16 %v154
  %v1674 = vunpack.c.l.b16 %v155
  %v1675 = vunpack.c.l.b16 %v156
  %v1676 = vunpack.c.l.b16 %v157
  %v1677 = vunpack.c.l.b16 %v158
  %v1678 = vunpack.c.l.b16 %v159
  %v1679 = vunpack.c.l.b16 %v160
  %v1680 = vunpack.c.l.b16 %v161
  %v1681 = vunpack.c.l.b16 %v162
  %v1682 = vunpack.c.l.b16 %v163
  %v1683 = vunpack.c.l.b16 %v164
  %v1684 = vunpack.c.l.b16 %v165
  %v1685 = vunpack.c.l.b16 %v166
  %v1686 = vunpack.c.l.b16 %v167
  %v1687 = vunpack.c.l.b16 %v168
  %v1688 = vunpack.c.l.b16 %v169
  %v1689 = vunpack.c.l.b16 %v170
  %v1690 = vunpack.c.l.b16 %v171
  %v1691 = vunpack.c.l.b16 %v172
  %v1692 = vunpack.c.l.b16 %v173
  %v1693 = vunpack.c.l.b16 %v174
  %v1694 = vunpack.c.l.b16 %v175
  %v1695 = vunpack.c.l.b16 %v176
  %v1696 = vunpack.c.l.b16 %v177
  %v1697 = vunpack.c.l.b16 %v178
  %v1698 = vunpack.c.l.b16 %v179
  %v1699 = vunpack.c.l.b16 %v180
  %v1700 = vunpack.c.l.b16 %v181
  %v1701 = vunpack.c.l.b16 %v182
  %v1702 = vunpack.c.l.b16 %v183
  %v1703 = vunpack.c.l.b16 %v184
  %v1704 = vunpack.c.l.b16 %v185
  %v1705 = vunpack.c.l.b16 %v186
  %v1706 = vunpack.c.l.b16 %v187
  %v1707 = vunpack.c.l.b16 %v188
  %v1708 = vunpack.c.l.b16 %v189
  %v1709 = vunpack.c.l.b16 %v190
  %v1710 = vunpack.c.l.b16 %v191
  %v1711 = vunpack.c.l.b16 %v192
  %v1712 = vunpack.c.l.b16 %v193
  %v1713 = vunpack.c.l.b16 %v194
  %v1714 = vunpack.c.l.b16 %v195
  %v1715 = vunpack.c.l.b16 %v196
  %v1716 = vunpack.c.l.b16 %v197
  %v1717 = vunpack.c.l.b16 %v198
  %v1718 = vunpack.c.l.b16 %v199
  %v1719 = vunpack.c.l.b16 %v200
  %v1720 = vunpack.c.l.b16 %v201
  %v1721 = vunpack.c.l.b16 %v202
  %v1722 = vunpack.c.l.b16 %v203
  %v1723 = vunpack.c.l.b16 %v204
  %v1724 = vunpack.c.l.b16 %v205
  %v1725 = vunpack.c.l.b16 %v206
  %v1726 = vunpack.c.l.b16 %v207
  %v1727 = vunpack.c.l.b16 %v208
  %v1728 = vunpack.c.l.b16 %v209
  %v1729 = vunpack.c.l.b16 %v210
  %v1730 = vunpack.c.l.b16 %v211
  %v1731 = vunpack.c.l.b16 %v212
  %v1732 = vunpack.c.l.b16 %v213
  %v1733 = vunpack.c.l.b16 %v214
  %v1734 = vunpack.c.l.b16 %v215
  %v1735 = vunpack.c.l.b16 %v216
  %v1736 = vunpack.c.l.b16 %v217
  %v1737 = vunpack.c.l.b16 %v218
  %v1738 = vunpack.c.l.b16 %v219
  %v1739 = vunpack.c.l.b16 %v220
  %v1740 = vunpack.c.l.b16 %v221
  %v1741 = vunpack.c.l.b16 %v222
  %v1742 = vunpack.c.l.b16 %v223
  %v1743 = vunpack.c.l.b16 %v224
  %v1744 = vunpack.c.l.b16 %v225
  %v1745 = vunpack.c.l.b16 %v226
  %v1746 = vunpack.c.l.b16 %v227
  %v1747 = vunpack.c.l.b16 %v228
  %v1748 = vunpack.c.l.b16 %v229
  %v1749 = vunpack.c.l.b16 %v230
  %v1750 = vunpack.c.l.b16 %v231
  %v1751 = vunpack.c.l.b16 %v232
  %v1752 = vunpack.c.l.b16 %v233
  %v1753 = vunpack.c.l.b16 %v234
  %v1754 = vunpack.c.l.b16 %v235
  %v1755 = vunpack.c.l.b16 %v236
  %v1756 = vunpack.c.l.b16 %v237
  %v1757 = vunpack.c.l.b16 %v238
  %v1758 = vunpack.c.l.b16 %v239
  %v1759 = vunpack.c.l.b16 %v240
  %v1760 = vunpack.c.l.b16 %v241
  %v1761 = vunpack.c.l.b16 %v242
  %v1762 = vunpack.c.l.b16 %v243
  %v1763 = vunpack.c.l.b16 %v244
  %v1764 = vunpack.c.l.b16 %v245
  %v1765 = vunpack.c.l.b16 %v246
  %v1766 = vunpack.c.l.b16 %v247
  %v1767 = vunpack.c.l.b16 %v248
  %v1768 = vunpack.c.l.b16 %v249
  %v1769 = vunpack.c.l.b16 %v250
  %v1770 = vunpack.c.l.b16 %v251
  %v1771 = vunpack.c.l.b16 %v252
  %v1772 = vunpack.c.l.b16 %v253
  %v1773 = vunpack.c.l.b16 %v254
  %v1774 = vunpack.c.l.b16 %v255
  %v1775 = vunpack.c.l.b16 %v256
  %v1776 = vunpack.c.l.b16 %v257
  %v1777 = vunpack.c.l.b16 %v258
  %v1778 = vunpack.c.l.b16 %v259
  %v1779 = vunpack.c.l.b16 %v260
  %v1780 = vunpack.c.l.b16 %v261
  %v1781 = vunpack.c.l.b16 %v262
  %v1782 = vunpack.c.l.b16 %v263
  %v1783 = vunpack.c.l.b16 %v264
  %v1784 = vunpack.c.l.b16 %v265
  %v1785 = vunpack.c.l.b16 %v266
  %v1786 = vunpack.c.l.b16 %v267
  %v1787 = vunpack.c.l.b16 %v268
  %v1788 = vunpack.c.l.b16 %v269
  %v1789 = vunpack.c.l.b16 %v270
  %v1790 = vunpack.c.l.b16 %v271
  %v1791 = vunpack.c.l.b16 %v272
  %v1792 = vunpack.c.l.b16 %v273
  %v1793 = vunpack.c.l.b16 %v274
  %v1794 = vunpack.c.l.b16 %v275
  %v1795 = vunpack.c.l.b16 %v276
  %v1796 = vunpack.c.l.b16 %v277
  %v1797 = vunpack.c.l.b16 %v278
  %v1798 = vunpack.c.l.b16 %v279
  %v1799 = vunpack.c.l.b16 %v280
  %v1800 = vunpack.c.l.b16 %v281
  %v1801 = vunpack.c.l.b16 %v282
  %v1802 = vunpack.c.l.b16 %v283
  %v1803 = vunpack.c.l.b16 %v284
  %v1804 = vunpack.c.l.b16 %v285
  %v1805 = vunpack.c.l.b16 %v286
  %v1806 = vunpack.c.l.b16 %v287
  %v1807 = vunpack.c.l.b16 %v288
  %v1808 = vunpack.c.l.b16 %v289
  %v1809 = vunpack.c.l.b16 %v290
  %v1810 = vunpack.c.l.b16 %v291
  %v1811 = vunpack.c.l.b16 %v292
  %v1812 = vunpack.c.l.b16 %v293
  %v1813 = vunpack.c.l.b16 %v294
  %v1814 = vunpack.c.l.b16 %v295
  %v1815 = vunpack.c.l.b16 %v296
  %v1816 = vunpack.c.l.b16 %v297
  %v1817 = vunpack.c.l.b16 %v298
  %v1818 = vunpack.c.l.b16 %v299
  %v1819 = vunpack.c.l.b16 %v300
  %v1820 = vunpack.c.l.b16 %v301
  %v1821 = vunpack.c.l.b16 %v302
  %v1822 = vunpack.c.l.b16 %v303
  %v1823 = vunpack.c.l.b16 %v304
  %v1824 = vunpack.c.l.b16 %v305
  %v1825 = vunpack.c.l.b16 %v306
  %v1826 = vunpack.c.l.b16 %v307
  %v1827 = vunpack.c.l.b16 %v308
  %v1828 = vunpack.c.l.b16 %v309
  %v1829 = vunpack.c.l.b16 %v310
  %v1830 = vunpack.c.l.b16 %v311
  %v1831 = vunpack.c.l.b16 %v312
  %v1832 = vunpack.c.l.b16 %v313
  %v1833 = vunpack.c.l.b16 %v314
  %v1834 = vunpack.c.l.b16 %v315
  %v1835 = vunpack.c.l.b16 %v316
  %v1836 = vunpack.c.l.b16 %v317
  %v1837 = vunpack.c.l.b16 %v318
  %v1838 = vunpack.c.l.b16 %v319
  %v1839 = vunpack.c.l.b16 %v320
  %v1840 = vunpack.c.l.b16 %v321
  %v1841 = vunpack.c.l.b16 %v322
  %v1842 = vunpack.c.l.b16 %v323
  %v1843 = vunpack.c.l.b16 %v324
  %v1844 = vunpack.c.l.b16 %v325
  %v1845 = vunpack.c.l.b16 %v326
  %v1846 = vunpack.c.l.b16 %v327
  %v1847 = vunpack.c.l.b16 %v328
  %v1848 = vunpack.c.l.b16 %v329
  %v1849 = vunpack.c.l.b16 %v330
  %v1850 = vunpack.c.l.b16 %v331
  %v1851 = vunpack.c.l.b16 %v332
  %v1852 = vunpack.c.l.b16 %v333
  %v1853 = vunpack.c.l.b16 %v334
  %v1854 = vunpack.c.l.b16 %v335
  %v1855 = vunpack.c.l.b16 %v336
  %v1856 = vunpack.c.l.b16 %v337
  %v1857 = vunpack.c.l.b16 %v338
  %v1858 = vunpack.c.l.b16 %v339
  %v1859 = vunpack.c.l.b16 %v340
  %v1860 = vunpack.c.l.b16 %v341
  %v1861 = vunpack.c.l.b16 %v342
  %v1862 = vunpack.c.l.b16 %v343
  %v1863 = vunpack.c.l.b16 %v344
  %v1864 = vunpack.c.l.b16 %v345
  %v1865 = vunpack.c.l.b16 %v346
  %v1866 = vunpack.c.l.b16 %v347
  %v1867 = vunpack.c.l.b16 %v348
  %v1868 = vunpack.c.l.b16 %v349
  %v1869 = vunpack.c.l.b16 %v350
  %v1870 = vunpack.c.l.b16 %v351
  %v1871 = vunpack.c.l.b16 %v352
  %v1872 = vunpack.c.l.b16 %v353
  %v1873 = vunpack.c.l.b16 %v354
  %v1874 = vunpack.c.l.b16 %v355
  %v1875 = vunpack.c.l.b16 %v356
  %v1876 = vunpack.c.l.b16 %v357
  %v1877 = vunpack.c.l.b16 %v358
  %v1878 = vunpack.c.l.b16 %v359
  %v1879 = vunpack.c.l.b16 %v360
  %v1880 = vunpack.c.l.b16 %v361
  %v1881 = vunpack.c.l.b16 %v362
  %v1882 = vunpack.c.l.b16 %v363
  %v1883 = vunpack.c.l.b16 %v364
  %v1884 = vunpack.c.l.b16 %v365
  %v1885 = vunpack.c.l.b16 %v366
  %v1886 = vunpack.c.l.b16 %v367
  %v1887 = vunpack.c.l.b16 %v368
  %v1888 = vunpack.c.l.b16 %v369
  %v1889 = vunpack.c.l.b16 %v370
  %v1890 = vunpack.c.l.b16 %v371
  %v1891 = vunpack.c.l.b16 %v372
  %v1892 = vunpack.c.l.b16 %v373
  %v1893 = vunpack.c.l.b16 %v374
  %v1894 = vunpack.c.l.b16 %v375
  %v1895 = vunpack.c.l.b16 %v376
  %v1896 = vunpack.c.l.b16 %v377
  %v1897 = vunpack.c.l.b16 %v378
  %v1898 = vunpack.c.l.b16 %v379
  %v1899 = vunpack.c.l.b16 %v380
  %v1900 = vunpack.c.l.b16 %v381
  %v1901 = vunpack.c.l.b16 %v382
  %v1902 = vunpack.c.l.b16 %v383
  %v1903 = vunpack.c.l.b16 %v384
  %v1904 = vunpack.c.l.b16 %v385
  %v1905 = vunpack.c.l.b16 %v386
  %v1906 = vunpack.c.l.b16 %v387
  %v1907 = vunpack.c.l.b16 %v388
  %v1908 = vunpack.c.l.b16 %v389
  %v1909 = vunpack.c.l.b16 %v390
  %v1910 = vunpack.c.l.b16 %v391
  %v1911 = vunpack.c.l.b16 %v392
  %v1912 = vunpack.c.l.b16 %v393
  %v1913 = vunpack.c.l.b16 %v394
  %v1914 = vunpack.c.l.b16 %v395
  %v1915 = vunpack.c.l.b16 %v396
  %v1916 = vunpack.c.l.b16 %v397
  %v1917 = vunpack.c.l.b16 %v398
  %v1918 = vunpack.c.l.b16 %v399
  %v1919 = vunpack.c.l.b16 %v400
  %v1920 = vunpack.c.l.b16 %v401
  %v1921 = vunpack.c.l.b16 %v402
  %v1922 = vunpack.c.l.b16 %v403
  %v1923 = vunpack.c.l.b16 %v404
  %v1924 = vunpack.c.l.b16 %v405
  %v1925 = vunpack.c.l.b16 %v406
  %v1926 = vunpack.c.l.b16 %v407
  %v1927 = vunpack.c.l.b16 %v408
  %v1928 = vunpack.c.l.b16 %v409
  %v1929 = vunpack.c.l.b16 %v410
  %v1930 = vunpack.c.l.b16 %v411
  %v1931 = vunpack.c.l.b16 %v412
  %v1932 = vunpack.c.l.b16 %v413
  %v1933 = vunpack.c.l.b16 %v414
  %v1934 = vunpack.c.l.b16 %v415
  %v1935 = vunpack.c.l.b16 %v416
  %v1936 = vunpack.c.l.b16 %v417
  %v1937 = vunpack.c.l.b16 %v418
  %v1938 = vunpack.c.l.b16 %v419
  %v1939 = vunpack.c.l.b16 %v420
  %v1940 = vunpack.c.l.b16 %v421
  %v1941 = vunpack.c.l.b16 %v422
  %v1942 = vunpack.c.l.b16 %v423
  %v1943 = vunpack.c.l.b16 %v424
  %v1944 = vunpack.c.l.b16 %v425
  %v1945 = vunpack.c.l.b16 %v426
  %v1946 = vunpack.c.l.b16 %v427
  %v1947 = vunpack.c.l.b16 %v428
  %v1948 = vunpack.c.l.b16 %v429
  %v1949 = vunpack.c.l.b16 %v430
  %v1950 = vunpack.c.l.b16 %v431
  %v1951 = vunpack.c.l.b16 %v432
  %v1952 = vunpack.c.l.b16 %v433
  %v1953 = vunpack.c.l.b16 %v434
  %v1954 = vunpack.c.l.b16 %v435
  %v1955 = vunpack.c.l.b16 %v436
  %v1956 = vunpack.c.l.b16 %v437
  %v1957 = vunpack.c.l.b16 %v438
  %v1958 = vunpack.c.l.b16 %v439
  %v1959 = vunpack.c.l.b16 %v440
  %v1960 = vunpack.c.l.b16 %v441
  %v1961 = vunpack.c.l.b16 %v442
  %v1962 = vunpack.c.l.b16 %v443
  %v1963 = vunpack.c.l.b16 %v444
  %v1964 = vunpack.c.l.b16 %v445
  %v1965 = vunpack.c.l.b16 %v446
  %v1966 = vunpack.c.l.b16 %v447
  %v1967 = vunpack.c.l.b16 %v448
  %v1968 = vunpack.c.l.b16 %v449
  %v1969 = vunpack.c.l.b16 %v450
  %v1970 = vunpack.c.l.b16 %v451
  %v1971 = vunpack.c.l.b16 %v452
  %v1972 = vunpack.c.l.b16 %v453
  %v1973 = vunpack.c.l.b16 %v454
  %v1974 = vunpack.c.l.b16 %v455
  %v1975 = vunpack.c.l.b16 %v456
  %v1976 = vunpack.c.l.b16 %v457
  %v1977 = vunpack.c.l.b16 %v458
  %v1978 = vunpack.c.l.b16 %v459
  %v1979 = vunpack.c.l.b16 %v460
  %v1980 = vunpack.c.l.b16 %v461
  %v1981 = vunpack.c.l.b16 %v462
  %v1982 = vunpack.c.l.b16 %v463
  %v1983 = vunpack.c.l.b16 %v464
  %v1984 = vunpack.c.l.b16 %v465
  %v1985 = vunpack.c.l.b16 %v466
  %v1986 = vunpack.c.l.b16 %v467
  %v1987 = vunpack.c.l.b16 %v468
  %v1988 = vunpack.c.l.b16 %v469
  %v1989 = vunpack.c.l.b16 %v470
  %v1990 = vunpack.c.l.b16 %v471
  %v1991 = vunpack.c.l.b16 %v472
  %v1992 = vunpack.c.l.b16 %v473
  %v1993 = vunpack.c.l.b16 %v474
  %v1994 = vunpack.c.l.b16 %v475
  %v1995 = vunpack.c.l.b16 %v476
  %v1996 = vunpack.c.l.b16 %v477
  %v1997 = vunpack.c.l.b16 %v478
  %v1998 = vunpack.c.l.b16 %v479
  %v1999 = vunpack.c.l.b16 %v480
  %v2000 = vunpack.c.l.b16 %v481
  %v2001 = vunpack.c.l.b16 %v482
  %v2002 = vunpack.c.l.b16 %v483
  %v2003 = vunpack.c.l.b16 %v484
  %v2004 = vunpack.c.l.b16 %v485
  %v2005 = vunpack.c.l.b16 %v486
  %v2006 = vunpack.c.l.b16 %v487
  %v2007 = vunpack.c.l.b16 %v488
  %v2008 = vunpack.c.l.b16 %v489
  %v2009 = vunpack.c.l.b16 %v490
  %v2010 = vunpack.c.l.b16 %v491
  %v2011 = vunpack.c.l.b16 %v492
  %v2012 = vunpack.c.l.b16 %v493
  %v2013 = vunpack.c.l.b16 %v494
  %v2014 = vunpack.c.l.b16 %v495
  %v2015 = vunpack.c.l.b16 %v496
  %v2016 = vunpack.c.l.b16 %v497
  %v2017 = vunpack.c.l.b16 %v498
  %v2018 = vunpack.c.l.b16 %v499
  %v2019 = vunpack.c.l.b16 %v500
  %v2020 = vunpack.c.l.b16 %v501
  %v2021 = vunpack.c.l.b16 %v502
  %v2022 = vunpack.c.l.b16 %v503
  %v2023 = vunpack.c.l.b16 %v504
  %v2024 = vunpack.c.l.b16 %v505
  %v2025 = vunpack.c.l.b16 %v506
  %v2026 = vunpack.c.l.b16 %v507
  %v2027 = vunpack.c.l.b16 %v508
  %v2028 = vunpack.c.l.b16 %v509
  %v2029 = vunpack.c.l.b16 %v510
  %v2030 = vunpack.c.l.b16 %v511
  %v2031 = vunpack.c.l.b16 %v512
  %v2032 = vunpack.c.l.b16 %v513
  %v2033 = vunpack.c.l.b16 %v514
  %v2034 = vunpack.c.l.b16 %v515
  %v2035 = vunpack.c.l.b16 %v516
  %v2036 = vunpack.c.l.b16 %v517
  %v2037 = vunpack.c.l.b16 %v518
  %v2038 = vunpack.c.l.b16 %v519
  %v2039 = vunpack.c.l.b16 %v520
  %v2040 = vunpack.c.l.b16 %v521
  %v2041 = vunpack.c.l.b16 %v522
  %v2042 = vunpack.c.l.b16 %v523
  %v2043 = vunpack.c.l.b16 %v524
  %v2044 = vunpack.c.l.b16 %v525
  %v2045 = vunpack.c.l.b16 %v526
  %v2046 = vunpack.c.l.b16 %v527
  %v2047 = vunpack.c.l.b16 %v528
  %v2048 = vunpack.c.l.b16 %v529
  %v2049 = vunpack.c.l.b16 %v530
  %v2050 = vunpack.c.l.b16 %v531
  %v2051 = vunpack.c.l.b16 %v532
  %v2052 = vunpack.c.l.b16 %v533
  %v2053 = vunpack.c.l.b16 %v534
  %v2054 = vunpack.c.l.b16 %v535
  %v2055 = vunpack.c.l.b16 %v536
  %v2056 = vunpack.c.l.b16 %v537
  %v2057 = vunpack.c.l.b16 %v538
  %v2058 = vunpack.c.l.b16 %v539
  %v2059 = vunpack.c.l.b16 %v540
  %v2060 = vunpack.c.l.b16 %v541
  %v2061 = vunpack.c.l.b16 %v542
  %v2062 = vunpack.c.l.b16 %v543
  %v2063 = vunpack.c.l.b16 %v544
  %v2064 = vunpack.c.l.b16 %v545
  %v2065 = vunpack.c.l.b16 %v546
  %v2066 = vunpack.c.l.b16 %v547
  %v2067 = vunpack.c.l.b16 %v548
  %v2068 = vunpack.c.l.b16 %v549
  %v2069 = vunpack.c.l.b16 %v550
  %v2070 = vunpack.c.l.b16 %v551
  %v2071 = vunpack.c.l.b16 %v552
  %v2072 = vunpack.c.l.b16 %v553
  %v2073 = vunpack.c.l.b16 %v554
  %v2074 = vunpack.c.l.b16 %v555
  %v2075 = vunpack.c.l.b16 %v556
  %v2076 = vunpack.c.l.b16 %v557
  %v2077 = vunpack.c.l.b16 %v558
  %v2078 = vunpack.c.l.b16 %v559
  %v2079 = vunpack.c.l.b16 %v560
  %v2080 = vunpack.c.l.b16 %v561
  %v2081 = vunpack.c.l.b16 %v562
  %v2082 = vunpack.c.l.b16 %v563
  %v2083 = vunpack.c.l.b16 %v564
  %v2084 = vunpack.c.l.b16 %v565
  %v2085 = vunpack.c.l.b16 %v566
  %v2086 = vunpack.c.l.b16 %v567
  %v2087 = vunpack.c.l.b16 %v568
  %v2088 = vunpack.c.l.b16 %v569
  %v2089 = vunpack.c.l.b16 %v570
  %v2090 = vunpack.c.l.b16 %v571
  %v2091 = vunpack.c.l.b16 %v572
  %v2092 = vunpack.c.l.b16 %v573
  %v2093 = vunpack.c.l.b16 %v574
  %v2094 = vunpack.c.l.b16 %v575
  %v2095 = vunpack.c.l.b16 %v576
  %v2096 = vunpack.c.l.b16 %v577
  %v2097 = vunpack.c.l.b16 %v578
  %v2098 = vunpack.c.l.b16 %v579
  %v2099 = vunpack.c.l.b16 %v580
  %v2100 = vunpack.c.l.b16 %v581
  %v2101 = vunpack.c.l.b16 %v582
  %v2102 = vunpack.c.l.b16 %v583
  %v2103 = vunpack.c.l.b16 %v584
  %v2104 = vunpack.c.l.b16 %v585
  %v2105 = vunpack.c.l.b16 %v586
  %v2106 = vunpack.c.l.b16 %v587
  %v2107 = vunpack.c.l.b16 %v588
  %v2108 = vunpack.c.l.b16 %v589
  %v2109 = vunpack.c.l.b16 %v590
  %v2110 = vunpack.c.l.b16 %v591
  %v2111 = vunpack.c.l.b16 %v592
  %v2112 = vunpack.c.l.b16 %v593
  %v2113 = vunpack.c.l.b16 %v594
  %v2114 = vunpack.c.l.b16 %v595
  %v2115 = vunpack.c.l.b16 %v596
  %v2116 = vunpack.c.l.b16 %v597
  %v2117 = vunpack.c.l.b16 %v598
  %v2118 = vunpack.c.l.b16 %v599
  %v2119 = vunpack.c.l.b16 %v600
  %v2120 = vunpack.c.l.b16 %v601
  %v2121 = vunpack.c.l.b16 %v602
  %v2122 = vunpack.c.l.b16 %v603
  %v2123 = vunpack.c.l.b16 %v604
  %v2124 = vunpack.c.l.b16 %v605
  %v2125 = vunpack.c.l.b16 %v606
  %v2126 = vunpack.c.l.b16 %v607
  %v2127 = vunpack.c.l.b16 %v608
  %v2128 = vunpack.c.l.b16 %v609
  %v2129 = vunpack.c.l.b16 %v610
  %v2130 = vunpack.c.l.b16 %v611
  %v2131 = vunpack.c.l.b16 %v612
  %v2132 = vunpack.c.l.b16 %v613
  %v2133 = vunpack.c.l.b16 %v614
  %v2134 = vunpack.c.l.b16 %v615
  %v2135 = vunpack.c.l.b16 %v616
  %v2136 = vunpack.c.l.b16 %v617
  %v2137 = vunpack.c.l.b16 %v618
  %v2138 = vunpack.c.l.b16 %v619
  %v2139 = vunpack.c.l.b16 %v620
  %v2140 = vunpack.c.l.b16 %v621
  %v2141 = vunpack.c.l.b16 %v622
  %v2142 = vunpack.c.l.b16 %v623
  %v2143 = vunpack.c.l.b16 %v624
  %v2144 = vunpack.c.l.b16 %v625
  %v2145 = vunpack.c.l.b16 %v626
  %v2146 = vunpack.c.l.b16 %v627
  %v2147 = vunpack.c.l.b16 %v628
  %v2148 = vunpack.c.l.b16 %v629
  %v2149 = vunpack.c.l.b16 %v630
  %v2150 = vunpack.c.l.b16 %v631
  %v2151 = vunpack.c.l.b16 %v632
  %v2152 = vunpack.c.l.b16 %v633
  %v2153 = vunpack.c.l.b16 %v634
  %v2154 = vunpack.c.l.b16 %v635
  %v2155 = vunpack.c.l.b16 %v636
  %v2156 = vunpack.c.l.b16 %v637
  %v2157 = vunpack.c.l.b16 %v638
  %v2158 = vunpack.c.l.b16 %v639
  %v2159 = vunpack.c.l.b16 %v640
  %v2160 = vunpack.c.l.b16 %v641
  %v2161 = vunpack.c.l.b16 %v642
  %v2162 = vunpack.c.l.b16 %v643
  %v2163 = vunpack.c.l.b16 %v644
  %v2164 = vunpack.c.l.b16 %v645
  %v2165 = vunpack.c.l.b16 %v646
  %v2166 = vunpack.c.l.b16 %v647
  %v2167 = vunpack.c.l.b16 %v648
  %v2168 = vunpack.c.l.b16 %v649
  %v2169 = vunpack.c.l.b16 %v650
  %v2170 = vunpack.c.l.b16 %v651
  %v2171 = vunpack.c.l.b16 %v652
  %v2172 = vunpack.c.l.b16 %v653
  %v2173 = vunpack.c.l.b16 %v654
  %v2174 = vunpack.c.l.b16 %v655
  %v2175 = vunpack.c.l.b16 %v656
  %v2176 = vunpack.c.l.b16 %v657
  %v2177 = vunpack.c.l.b16 %v658
  %v2178 = vunpack.c.l.b16 %v659
  %v2179 = vunpack.c.l.b16 %v660
  %v2180 = vunpack.c.l.b16 %v661
  %v2181 = vunpack.c.l.b16 %v662
  %v2182 = vunpack.c.l.b16 %v663
  %v2183 = vunpack.c.l.b16 %v664
  %v2184 = vunpack.c.l.b16 %v665
  %v2185 = vunpack.c.l.b16 %v666
  %v2186 = vunpack.c.l.b16 %v667
  %v2187 = vunpack.c.l.b16 %v668
  %v2188 = vpack.c.b16 %v1613, %v1612
  %v2189 = vpack.c.b16 %v1615, %v1614
  %v2190 = vpack.c.b16 %v1617, %v1616
  %v2191 = vpack.c.b16 %v1619, %v1618
  %v2192 = vpack.c.b16 %v1621, %v1620
  %v2193 = vpack.c.b16 %v1623, %v1622
  %v2194 = vpack.c.b16 %v1625, %v1624
  %v2195 = vpack.c.b16 %v1627, %v1626
  %v2196 = vpack.c.b16 %v1629, %v1628
  %v2197 = vpack.c.b16 %v1631, %v1630
  %v2198 = vpack.c.b16 %v1633, %v1632
  %v2199 = vpack.c.b16 %v1635, %v1634
  %v2200 = vpack.c.b16 %v1637, %v1636
  %v2201 = vpack.c.b16 %v1639, %v1638
  %v2202 = vpack.c.b16 %v1641, %v1640
  %v2203 = vpack.c.b16 %v1643, %v1642
  %v2204 = vpack.c.b16 %v1645, %v1644
  %v2205 = vpack.c.b16 %v1647, %v1646
  %v2206 = vpack.c.b16 %v1649, %v1648
  %v2207 = vpack.c.b16 %v1651, %v1650
  %v2208 = vpack.c.b16 %v1653, %v1652
  %v2209 = vpack.c.b16 %v1655, %v1654
  %v2210 = vpack.c.b16 %v1657, %v1656
  %v2211 = vpack.c.b16 %v1659, %v1658
  %v2212 = vpack.c.b16 %v1661, %v1660
  %v2213 = vpack.c.b16 %v1663, %v1662
  %v2214 = vpack.c.b16 %v1665, %v1664
  %v2215 = vpack.c.b16 %v1667, %v1666
  %v2216 = vpack.c.b16 %v1669, %v1668
  %v2217 = vpack.c.b16 %v1671, %v1670
  %v2218 = vpack.c.b16 %v1673, %v1672
  %v2219 = vpack.c.b16 %v1675, %v1674
  %v2220 = vpack.c.b16 %v1677, %v1676
  %v2221 = vpack.c.b16 %v1679, %v1678
  %v2222 = vpack.c.b16 %v1681, %v1680
  %v2223 = vpack.c.b16 %v1683, %v1682
  %v2224 = vpack.c.b16 %v1685, %v1684
  %v2225 = vpack.c.b16 %v1687, %v1686
  %v2226 = vpack.c.b16 %v1689, %v1688
  %v2227 = vpack.c.b16 %v1691, %v1690
  %v2228 = vpack.c.b16 %v1693, %v1692
  %v2229 = vpack.c.b16 %v1695, %v1694
  %v2230 = vpack.c.b16 %v1697, %v1696
  %v2231 = vpack.c.b16 %v1699, %v1698
  %v2232 = vpack.c.b16 %v1701, %v1700
  %v2233 = vpack.c.b16 %v1703, %v1702
  %v2234 = vpack.c.b16 %v1705, %v1704
  %v2235 = vpack.c.b16 %v1707, %v1706
  %v2236 = vpack.c.b16 %v1709, %v1708
  %v2237 = vpack.c.b16 %v1711, %v1710
  %v2238 = vpack.c.b16 %v1713, %v1712
  %v2239 = vpack.c.b16 %v1715, %v1714
  %v2240 = vpack.c.b16 %v1717, %v1716
  %v2241 = vpack.c.b16 %v1719, %v1718
  %v2242 = vpack.c.b16 %v1721, %v1720
  %v2243 = vpack.c.b16 %v1723, %v1722
  %v2244 = vpack.c.b16 %v1725, %v1724
  %v2245 = vpack.c.b16 %v1727, %v1726
  %v2246 = vpack.c.b16 %v1729, %v1728
  %v2247 = vpack.c.b16 %v1731, %v1730
  %v2248 = vpack.c.b16 %v1733, %v1732
  %v2249 = vpack.c.b16 %v1735, %v1734
  %v2250 = vpack.c.b16 %v1737, %v1736
  %v2251 = vpack.c.b16 %v1739, %v1738
  %v2252 = vpack.c.b16 %v1741, %v1740
  %v2253 = vpack.c.b16 %v1743, %v1742
  %v2254 = vpack.c.b16 %v1745, %v1744
  %v2255 = vpack.c.b16 %v1747, %v1746
  %v2256 = vpack.c.b16 %v1749, %v1748
  %v2257 = vpack.c.b16 %v1751, %v1750
  %v2258 = vpack.c.b16 %v1753, %v1752
  %v2259 = vpack.c.b16 %v1755, %v1754
  %v2260 = vpack.c.b16 %v1757, %v1756
  %v2261 = vpack.c.b16 %v1759, %v1758
  %v2262 = vpack.c.b16 %v1761, %v1760
  %v2263 = vpack.c.b16 %v1763, %v1762
  %v2264 = vpack.c.b16 %v1765, %v1764
  %v2265 = vpack.c.b16 %v1767, %v1766
  %v2266 = vpack.c.b16 %v1769, %v1768
  %v2267 = vpack.c.b16 %v1771, %v1770
  %v2268 = vpack.c.b16 %v1773, %v1772
  %v2269 = vpack.c.b16 %v1775, %v1774
  %v2270 = vpack.c.b16 %v1777, %v1776
  %v2271 = vpack.c.b16 %v1779, %v1778
  %v2272 = vpack.c.b16 %v1781, %v1780
  %v2273 = vpack.c.b16 %v1783, %v1782
  %v2274 = vpack.c.b16 %v1785, %v1784
  %v2275 = vpack.c.b16 %v1787, %v1786
  %v2276 = vpack.c.b16 %v1789, %v1788
  %v2277 = vpack.c.b16 %v1791, %v1790
  %v2278 = vpack.c.b16 %v1793, %v1792
  %v2279 = vpack.c.b16 %v1795, %v1794
  %v2280 = vpack.c.b16 %v1797, %v1796
  %v2281 = vpack.c.b16 %v1799, %v1798
  %v2282 = vpack.c.b16 %v1801, %v1800
  %v2283 = vpack.c.b16 %v1803, %v1802
  %v2284 = vpack.c.b16 %v1805, %v1804
  %v2285 = vpack.c.b16 %v1807, %v1806
  %v2286 = vpack.c.b16 %v1809, %v1808
  %v2287 = vpack.c.b16 %v1811, %v1810
  %v2288 = vpack.c.b16 %v1813, %v1812
  %v2289 = vpack.c.b16 %v1815, %v1814
  %v2290 = vpack.c.b16 %v1817, %v1816
  %v2291 = vpack.c.b16 %v1819, %v1818
  %v2292 = vpack.c.b16 %v1821, %v1820
  %v2293 = vpack.c.b16 %v1823, %v1822
  %v2294 = vpack.c.b16 %v1825, %v1824
  %v2295 = vpack.c.b16 %v1827, %v1826
  %v2296 = vpack.c.b16 %v1829, %v1828
  %v2297 = vpack.c.b16 %v1831, %v1830
  %v2298 = vpack.c.b16 %v1833, %v1832
  %v2299 = vpack.c.b16 %v1835, %v1834
  %v2300 = vpack.c.b16 %v1837, %v1836
  %v2301 = vpack.c.b16 %v1839, %v1838
  %v2302 = vpack.c.b16 %v1841, %v1840
  %v2303 = vpack.c.b16 %v1843, %v1842
  %v2304 = vpack.c.b16 %v1845, %v1844
  %v2305 = vpack.c.b16 %v1847, %v1846
  %v2306 = vpack.c.b16 %v1849, %v1848
  %v2307 = vpack.c.b16 %v1851, %v1850
  %v2308 = vpack.c.b16 %v1853, %v1852
  %v2309 = vpack.c.b16 %v1855, %v1854
  %v2310 = vpack.c.b16 %v1857, %v1856
  %v2311 = vpack.c.b16 %v1859, %v1858
  %v2312 = vpack.c.b16 %v1861, %v1860
  %v2313 = vpack.c.b16 %v1863, %v1862
  %v2314 = vpack.c.b16 %v1865, %v1864
  %v2315 = vpack.c.b16 %v1867, %v1866
  %v2316 = vpack.c.b16 %v1869, %v1868
  %v2317 = vpack.c.b16 %v1871, %v1870
  %v2318 = vpack.c.b16 %v1873, %v1872
  %v2319 = vpack.c.b16 %v1875, %v1874
  %v2320 = vpack.c.b16 %v1877, %v1876
  %v2321 = vpack.c.b16 %v1879, %v1878
  %v2322 = vpack.c.b16 %v1881, %v1880
  %v2323 = vpack.c.b16 %v1883, %v1882
  %v2324 = vpack.c.b16 %v1885, %v1884
  %v2325 = vpack.c.b16 %v1887, %v1886
  %v2326 = vpack.c.b16 %v1889, %v1888
  %v2327 = vpack.c.b16 %v1891, %v1890
  %v2328 = vpack.c.b16 %v1893, %v1892
  %v2329 = vpack.c.b16 %v1895, %v1894
  %v2330 = vpack.c.b16 %v1897, %v1896
  %v2331 = vpack.c.b16 %v1899, %v1898
  %v2332 = vpack.c.b16 %v1901, %v1900
  %v2333 = vpack.c.b16 %v1903, %v1902
  %v2334 = vpack.c.b16 %v1905, %v1904
  %v2335 = vpack.c.b16 %v1907, %v1906
  %v2336 = vpack.c.b16 %v1909, %v1908
  %v2337 = vpack.c.b16 %v1911, %v1910
  %v2338 = vpack.c.b16 %v1913, %v1912
  %v2339 = vpack.c.b16 %v1915, %v1914
  %v2340 = vpack.c.b16 %v1917, %v1916
  %v2341 = vpack.c.b16 %v1919, %v1918
  %v2342 = vpack.c.b16 %v1921, %v1920
  %v2343 = vpack.c.b16 %v1923, %v1922
  %v2344 = vpack.c.b16 %v1925, %v1924
  %v2345 = vpack.c.b16 %v1927, %v1926
  %v2346 = vpack.c.b16 %v1929, %v1928
  %v2347 = vpack.c.b16 %v1931, %v1930
  %v2348 = vpack.c.b16 %v1933, %v1932
  %v2349 = vpack.c.b16 %v1935, %v1934
  %v2350 = vpack.c.b16 %v1937, %v1936
  %v2351 = vpack.c.b16 %v1939, %v1938
  %v2352 = vpack.c.b16 %v1941, %v1940
  %v2353 = vpack.c.b16 %v1943, %v1942
  %v2354 = vpack.c.b16 %v1945, %v1944
  %v2355 = vpack.c.b16 %v1947, %v1946
  %v2356 = vpack.c.b16 %v1949, %v1948
  %v2357 = vpack.c.b16 %v1951, %v1950
  %v2358 = vpack.c.b16 %v1953, %v1952
  %v2359 = vpack.c.b16 %v1955, %v1954
  %v2360 = vpack.c.b16 %v1957, %v1956
  %v2361 = vpack.c.b16 %v1959, %v1958
  %v2362 = vpack.c.b16 %v1961, %v1960
  %v2363 = vpack.c.b16 %v1963, %v1962
  %v2364 = vpack.c.b16 %v1965, %v1964
  %v2365 = vpack.c.b16 %v1967, %v1966
  %v2366 = vpack.c.b16 %v1969, %v1968
  %v2367 = vpack.c.b16 %v1971, %v1970
  %v2368 = vpack.c.b16 %v1973, %v1972
  %v2369 = vpack.c.b16 %v1975, %v1974
  %v2370 = vpack.c.b16 %v1977, %v1976
  %v2371 = vpack.c.b16 %v1979, %v1978
  %v2372 = vpack.c.b16 %v1981, %v1980
  %v2373 = vpack.c.b16 %v1983, %v1982
  %v2374 = vpack.c.b16 %v1985, %v1984
  %v2375 = vpack.c.b16 %v1987, %v1986
  %v2376 = vpack.c.b16 %v1989, %v1988
  %v2377 = vpack.c.b16 %v1991, %v1990
  %v2378 = vpack.c.b16 %v1993, %v1992
  %v2379 = vpack.c.b16 %v1995, %v1994
  %v2380 = vpack.c.b16 %v1997, %v1996
  %v2381 = vpack.c.b16 %v1999, %v1998
  %v2382 = vpack.c.b16 %v2001, %v2000
  %v2383 = vpack.c.b16 %v2003, %v2002
  %v2384 = vpack.c.b16 %v2005, %v2004
  %v2385 = vpack.c.b16 %v2007, %v2006
  %v2386 = vpack.c.b16 %v2009, %v2008
  %v2387 = vpack.c.b16 %v2011, %v2010
  %v2388 = vpack.c.b16 %v2013, %v2012
  %v2389 = vpack.c.b16 %v2015, %v2014
  %v2390 = vpack.c.b16 %v2017, %v2016
  %v2391 = vpack.c.b16 %v2019, %v2018
  %v2392 = vpack.c.b16 %v2021, %v2020
  %v2393 = vpack.c.b16 %v2023, %v2022
  %v2394 = vpack.c.b16 %v2025, %v2024
  %v2395 = vpack.c.b16 %v2027, %v2026
  %v2396 = vpack.c.b16 %v2029, %v2028
  %v2397 = vpack.c.b16 %v2031, %v2030
  %v2398 = vpack.c.b16 %v2033, %v2032
  %v2399 = vpack.c.b16 %v2035, %v2034
  %v2400 = vpack.c.b16 %v2037, %v2036
  %v2401 = vpack.c.b16 %v2039, %v2038
  %v2402 = vpack.c.b16 %v2041, %v2040
  %v2403 = vpack.c.b16 %v2043, %v2042
  %v2404 = vpack.c.b16 %v2045, %v2044
  %v2405 = vpack.c.b16 %v2047, %v2046
  %v2406 = vpack.c.b16 %v2049, %v2048
  %v2407 = vpack.c.b16 %v2051, %v2050
  %v2408 = vpack.c.b16 %v2053, %v2052
  %v2409 = vpack.c.b16 %v2055, %v2054
  %v2410 = vpack.c.b16 %v2057, %v2056
  %v2411 = vpack.c.b16 %v2059, %v2058
  %v2412 = vpack.c.b16 %v2061, %v2060
  %v2413 = vpack.c.b16 %v2063, %v2062
  %v2414 = vpack.c.b16 %v2065, %v2064
  %v2415 = vpack.c.b16 %v2067, %v2066
  %v2416 = vpack.c.b16 %v2069, %v2068
  %v2417 = vpack.c.b16 %v2071, %v2070
  %v2418 = vpack.c.b16 %v2073, %v2072
  %v2419 = vpack.c.b16 %v2075, %v2074
  %v2420 = vpack.c.b16 %v2077, %v2076
  %v2421 = vpack.c.b16 %v2079, %v2078
  %v2422 = vpack.c.b16 %v2081, %v2080
  %v2423 = vpack.c.b16 %v2083, %v2082
  %v2424 = vpack.c.b16 %v2085, %v2084
  %v2425 = vpack.c.b16 %v2087, %v2086
  %v2426 = vpack.c.b16 %v2089, %v2088
  %v2427 = vpack.c.b16 %v2091, %v2090
  %v2428 = vpack.c.b16 %v2093, %v2092
  %v2429 = vpack.c.b16 %v2095, %v2094
  %v2430 = vpack.c.b16 %v2097, %v2096
  %v2431 = vpack.c.b16 %v2099, %v2098
  %v2432 = vpack.c.b16 %v2101, %v2100
  %v2433 = vpack.c.b16 %v2103, %v2102
  %v2434 = vpack.c.b16 %v2105, %v2104
  %v2435 = vpack.c.b16 %v2107, %v2106
  %v2436 = vpack.c.b16 %v2109, %v2108
  %v2437 = vpack.c.b16 %v2111, %v2110
  %v2438 = vpack.c.b16 %v2113, %v2112
  %v2439 = vpack.c.b16 %v2115, %v2114
  %v2440 = vpack.c.b16 %v2117, %v2116
  %v2441 = vpack.c.b16 %v2119, %v2118
  %v2442 = vpack.c.b16 %v2121, %v2120
  %v2443 = vpack.c.b16 %v2123, %v2122
  %v2444 = vpack.c.b16 %v2125, %v2124
  %v2445 = vpack.c.b16 %v2127, %v2126
  %v2446 = vpack.c.b16 %v2129, %v2128
  %v2447 = vpack.c.b16 %v2131, %v2130
  %v2448 = vpack.c.b16 %v2133, %v2132
  %v2449 = vpack.c.b16 %v2135, %v2134
  %v2450 = vpack.c.b16 %v2137, %v2136
  %v2451 = vpack.c.b16 %v2139, %v2138
  %v2452 = vpack.c.b16 %v2141, %v2140
  %v2453 = vpack.c.b16 %v2143, %v2142
  %v2454 = vpack.c.b16 %v2145, %v2144
  %v2455 = vpack.c.b16 %v2147, %v2146
  %v2456 = vpack.c.b16 %v2149, %v2148
  %v2457 = vpack.c.b16 %v2151, %v2150
  %v2458 = vpack.c.b16 %v2153, %v2152
  %v2459 = vpack.c.b16 %v2155, %v2154
  %v2460 = vpack.c.b16 %v2157, %v2156
  %v2461 = vpack.c.b16 %v2159, %v2158
  %v2462 = vpack.c.b16 %v2161, %v2160
  %v2463 = vpack.c.b16 %v2163, %v2162
  %v2464 = vpack.c.b16 %v2165, %v2164
  %v2465 = vpack.c.b16 %v2167, %v2166
  %v2466 = vpack.c.b16 %v2169, %v2168
  %v2467 = vpack.c.b16 %v2171, %v2170
  %v2468 = vpack.c.b16 %v2173, %v2172
  %v2469 = vpack.c.b16 %v2175, %v2174
  %v2470 = vpack.c.b16 %v2177, %v2176
  %v2471 = vpack.c.b16 %v2179, %v2178
  %v2472 = vpack.c.b16 %v2181, %v2180
  %v2473 = vpack.c.b16 %v2183, %v2182
  %v2474 = vpack.c.b16 %v2185, %v2184
  %v2475 = vpack.c.b16 %v2187, %v2186
  %2764 = vmatprep.subr.bf16.mxu0 0
  %2765 = vmatpush1.bf16.msra.mxu0 %v2188
  %2766 = vmatprep.subr.bf16.mxu0 0
  %2767 = vmatpush1.bf16.msra.mxu0 %v2189
  %2768 = vmatprep.subr.bf16.mxu0 0
  %2769 = vmatpush1.bf16.msra.mxu0 %v2190
  %2770 = vmatprep.subr.bf16.mxu0 0
  %2771 = vmatpush1.bf16.msra.mxu0 %v2191
  %2772 = vmatprep.subr.bf16.mxu0 0
  %2773 = vmatpush1.bf16.msra.mxu0 %v2192
  %2774 = vmatprep.subr.bf16.mxu0 0
  %2775 = vmatpush1.bf16.msra.mxu0 %v2193
  %2776 = vmatprep.subr.bf16.mxu0 0
  %2777 = vmatpush1.bf16.msra.mxu0 %v2194
  %2778 = vmatprep.subr.bf16.mxu0 0
  %2779 = vmatpush1.bf16.msra.mxu0 %v2195
  %2780 = vmatprep.subr.bf16.mxu0 0
  %2781 = vmatpush1.bf16.msra.mxu0 %v2196
  %2782 = vmatprep.subr.bf16.mxu0 0
  %2783 = vmatpush1.bf16.msra.mxu0 %v2197
  %2784 = vmatprep.subr.bf16.mxu0 0
  %2785 = vmatpush1.bf16.msra.mxu0 %v2198
  %2786 = vmatprep.subr.bf16.mxu0 0
  %2787 = vmatpush1.bf16.msra.mxu0 %v2199
  %2788 = vmatprep.subr.bf16.mxu0 0
  %2789 = vmatpush1.bf16.msra.mxu0 %v2200
  %2790 = vmatprep.subr.bf16.mxu0 0
  %2791 = vmatpush1.bf16.msra.mxu0 %v2201
  %2792 = vmatprep.subr.bf16.mxu0 0
  %2793 = vmatpush1.bf16.msra.mxu0 %v2202
  %2794 = vmatprep.subr.bf16.mxu0 0
  %2795 = vmatpush1.bf16.msra.mxu0 %v2203
  %2796 = vmatprep.mubr.bf16.mxu0 %v893
  %2797 = vmatmul.mubr.bf16.gmra.mrb[0].mxu0 %v892
  %v2798 = vpop.f32.mrb[0].mxu0
  %v2799 = vadd.f32 %v674, %v2798
  %v2800 = vpop.f32.mrb[0].mxu0
  %v2801 = vpop.f32.mrb[0].mxu0
  %v2802 = vadd.f32 %v674, %v2801
  %v2803 = vpop.f32.mrb[0].mxu0
  %2804 = vmatprep.mubr.bf16.mxu0 %v929
  %2805 = vmatmul.mubr.bf16.gmra.mrb[0].mxu0 %v928
  %v2806 = vpop.f32.mrb[0].mxu0
  %v2807 = vadd.f32 %v674, %v2806
  %v2808 = vpop.f32.mrb[0].mxu0
  %v2809 = vpop.f32.mrb[0].mxu0
  %v2810 = vadd.f32 %v674, %v2809
  %v2811 = vpop.f32.mrb[0].mxu0
  %2812 = vdwg.mxu0
  %2813 = vmatprep.subr.bf16.mxu0 0
  %2814 = vmatpush1.bf16.msra.mxu0 %v2204
  %2815 = vmatprep.subr.bf16.mxu0 0
  %2816 = vmatpush1.bf16.msra.mxu0 %v2205
  %2817 = vmatprep.subr.bf16.mxu0 0
  %2818 = vmatpush1.bf16.msra.mxu0 %v2206
  %2819 = vmatprep.subr.bf16.mxu0 0
  %2820 = vmatpush1.bf16.msra.mxu0 %v2207
  %2821 = vmatprep.subr.bf16.mxu0 0
  %2822 = vmatpush1.bf16.msra.mxu0 %v2208
  %2823 = vmatprep.subr.bf16.mxu0 0
  %2824 = vmatpush1.bf16.msra.mxu0 %v2209
  %2825 = vmatprep.subr.bf16.mxu0 0
  %2826 = vmatpush1.bf16.msra.mxu0 %v2210
  %2827 = vmatprep.subr.bf16.mxu0 0
  %2828 = vmatpush1.bf16.msra.mxu0 %v2211
  %2829 = vmatprep.subr.bf16.mxu0 0
  %2830 = vmatpush1.bf16.msra.mxu0 %v2212
  %2831 = vmatprep.subr.bf16.mxu0 0
  %2832 = vmatpush1.bf16.msra.mxu0 %v2213
  %2833 = vmatprep.subr.bf16.mxu0 0
  %2834 = vmatpush1.bf16.msra.mxu0 %v2214
  %2835 = vmatprep.subr.bf16.mxu0 0
  %2836 = vmatpush1.bf16.msra.mxu0 %v2215
  %2837 = vmatprep.subr.bf16.mxu0 0
  %2838 = vmatpush1.bf16.msra.mxu0 %v2216
  %2839 = vmatprep.subr.bf16.mxu0 0
  %2840 = vmatpush1.bf16.msra.mxu0 %v2217
  %2841 = vmatprep.subr.bf16.mxu0 0
  %2842 = vmatpush1.bf16.msra.mxu0 %v2218
  %2843 = vmatprep.subr.bf16.mxu0 0
  %2844 = vmatpush1.bf16.msra.mxu0 %v2219
  %2845 = vmatprep.mubr.bf16.mxu0 %v895
  %2846 = vmatmul.mubr.bf16.gmra.mrb[0].mxu0 %v894
  %v2847 = vpop.f32.mrb[0].mxu0
  %v2848 = vadd.f32 %v2799, %v2847
  %v2849 = vpop.f32.mrb[0].mxu0
  %v2850 = vpop.f32.mrb[0].mxu0
  %v2851 = vadd.f32 %v2802, %v2850
  %v2852 = vpop.f32.mrb[0].mxu0
  %2853 = vmatprep.mubr.bf16.mxu0 %v931
  %2854 = vmatmul.mubr.bf16.gmra.mrb[0].mxu0 %v930
  %v2855 = vpop.f32.mrb[0].mxu0
  %v2856 = vadd.f32 %v2807, %v2855
  %v2857 = vpop.f32.mrb[0].mxu0
  %v2858 = vpop.f32.mrb[0].mxu0
  %v2859 = vadd.f32 %v2810, %v2858
  %v2860 = vpop.f32.mrb[0].mxu0
  %2861 = vdwg.mxu0
  %2862 = vmatprep.subr.bf16.mxu0 0
  %2863 = vmatpush1.bf16.msra.mxu0 %v2220
  %2864 = vmatprep.subr.bf16.mxu0 0
  %2865 = vmatpush1.bf16.msra.mxu0 %v2221
  %2866 = vmatprep.subr.bf16.mxu0 0
  %2867 = vmatpush1.bf16.msra.mxu0 %v2222
  %2868 = vmatprep.subr.bf16.mxu0 0
  %2869 = vmatpush1.bf16.msra.mxu0 %v2223
  %2870 = vmatprep.subr.bf16.mxu0 0
  %2871 = vmatpush1.bf16.msra.mxu0 %v2224
  %2872 = vmatprep.subr.bf16.mxu0 0
  %2873 = vmatpush1.bf16.msra.mxu0 %v2225
  %2874 = vmatprep.subr.bf16.mxu0 0
  %2875 = vmatpush1.bf16.msra.mxu0 %v2226
  %2876 = vmatprep.subr.bf16.mxu0 0
  %2877 = vmatpush1.bf16.msra.mxu0 %v2227
  %2878 = vmatprep.subr.bf16.mxu0 0
  %2879 = vmatpush1.bf16.msra.mxu0 %v2228
  %2880 = vmatprep.subr.bf16.mxu0 0
  %2881 = vmatpush1.bf16.msra.mxu0 %v2229
  %2882 = vmatprep.subr.bf16.mxu0 0
  %2883 = vmatpush1.bf16.msra.mxu0 %v2230
  %2884 = vmatprep.subr.bf16.mxu0 0
  %2885 = vmatpush1.bf16.msra.mxu0 %v2231
  %2886 = vmatprep.subr.bf16.mxu0 0
  %2887 = vmatpush1.bf16.msra.mxu0 %v2232
  %2888 = vmatprep.subr.bf16.mxu0 0
  %2889 = vmatpush1.bf16.msra.mxu0 %v2233
  %2890 = vmatprep.subr.bf16.mxu0 0
  %2891 = vmatpush1.bf16.msra.mxu0 %v2234
  %2892 = vmatprep.subr.bf16.mxu0 0
  %2893 = vmatpush1.bf16.msra.mxu0 %v2235
  %2894 = vmatprep.mubr.bf16.mxu0 %v897
  %2895 = vmatmul.mubr.bf16.gmra.mrb[0].mxu0 %v896
  %v2896 = vpop.f32.mrb[0].mxu0
  %v2897 = vadd.f32 %v2848, %v2896
  %v2898 = vpop.f32.mrb[0].mxu0
  %v2899 = vpop.f32.mrb[0].mxu0
  %v2900 = vadd.f32 %v2851, %v2899
  %v2901 = vpop.f32.mrb[0].mxu0
  %2902 = vmatprep.mubr.bf16.mxu0 %v933
  %2903 = vmatmul.mubr.bf16.gmra.mrb[0].mxu0 %v932
  %v2904 = vpop.f32.mrb[0].mxu0
  %v2905 = vadd.f32 %v2856, %v2904
  %v2906 = vpop.f32.mrb[0].mxu0
  %v2907 = vpop.f32.mrb[0].mxu0
  %v2908 = vadd.f32 %v2859, %v2907
  %v2909 = vpop.f32.mrb[0].mxu0
  %2910 = vdwg.mxu0
  %2911 = vmatprep.subr.bf16.mxu0 0
  %2912 = vmatpush1.bf16.msra.mxu0 %v2236
  %2913 = vmatprep.subr.bf16.mxu0 0
  %2914 = vmatpush1.bf16.msra.mxu0 %v2237
  %2915 = vmatprep.subr.bf16.mxu0 0
  %2916 = vmatpush1.bf16.msra.mxu0 %v2238
  %2917 = vmatprep.subr.bf16.mxu0 0
  %2918 = vmatpush1.bf16.msra.mxu0 %v2239
  %2919 = vmatprep.subr.bf16.mxu0 0
  %2920 = vmatpush1.bf16.msra.mxu0 %v2240
  %2921 = vmatprep.subr.bf16.mxu0 0
  %2922 = vmatpush1.bf16.msra.mxu0 %v2241
  %2923 = vmatprep.subr.bf16.mxu0 0
  %2924 = vmatpush1.bf16.msra.mxu0 %v2242
  %2925 = vmatprep.subr.bf16.mxu0 0
  %2926 = vmatpush1.bf16.msra.mxu0 %v2243
  %2927 = vmatprep.subr.bf16.mxu0 0
  %2928 = vmatpush1.bf16.msra.mxu0 %v2244
  %2929 = vmatprep.subr.bf16.mxu0 0
  %2930 = vmatpush1.bf16.msra.mxu0 %v2245
  %2931 = vmatprep.subr.bf16.mxu0 0
  %2932 = vmatpush1.bf16.msra.mxu0 %v2246
  %2933 = vmatprep.subr.bf16.mxu0 0
  %2934 = vmatpush1.bf16.msra.mxu0 %v2247
  %2935 = vmatprep.subr.bf16.mxu0 0
  %2936 = vmatpush1.bf16.msra.mxu0 %v2248
  %2937 = vmatprep.subr.bf16.mxu0 0
  %2938 = vmatpush1.bf16.msra.mxu0 %v2249
  %2939 = vmatprep.subr.bf16.mxu0 0
  %2940 = vmatpush1.bf16.msra.mxu0 %v2250
  %2941 = vmatprep.subr.bf16.mxu0 0
  %2942 = vmatpush1.bf16.msra.mxu0 %v2251
  %2943 = vmatprep.mubr.bf16.mxu0 %v899
  %2944 = vmatmul.mubr.bf16.gmra.mrb[0].mxu0 %v898
  %v2945 = vpop.f32.mrb[0].mxu0
  %v2946 = vadd.f32 %v2897, %v2945
  %v2947 = vpop.f32.mrb[0].mxu0
  %v2948 = vpop.f32.mrb[0].mxu0
  %v2949 = vadd.f32 %v2900, %v2948
  %v2950 = vpop.f32.mrb[0].mxu0
  %2951 = vmatprep.mubr.bf16.mxu0 %v935
  %2952 = vmatmul.mubr.bf16.gmra.mrb[0].mxu0 %v934
  %v2953 = vpop.f32.mrb[0].mxu0
  %v2954 = vadd.f32 %v2905, %v2953
  %v2955 = vpop.f32.mrb[0].mxu0
  %v2956 = vpop.f32.mrb[0].mxu0
  %v2957 = vadd.f32 %v2908, %v2956
  %v2958 = vpop.f32.mrb[0].mxu0
  %2959 = vdwg.mxu0
  %2960 = vmatprep.subr.bf16.mxu0 0
  %2961 = vmatpush1.bf16.msra.mxu0 %v2252
  %2962 = vmatprep.subr.bf16.mxu0 0
  %2963 = vmatpush1.bf16.msra.mxu0 %v2253
  %2964 = vmatprep.subr.bf16.mxu0 0
  %2965 = vmatpush1.bf16.msra.mxu0 %v2254
  %2966 = vmatprep.subr.bf16.mxu0 0
  %2967 = vmatpush1.bf16.msra.mxu0 %v2255
  %2968 = vmatprep.subr.bf16.mxu0 0
  %2969 = vmatpush1.bf16.msra.mxu0 %v2256
  %2970 = vmatprep.subr.bf16.mxu0 0
  %2971 = vmatpush1.bf16.msra.mxu0 %v2257
  %2972 = vmatprep.subr.bf16.mxu0 0
  %2973 = vmatpush1.bf16.msra.mxu0 %v2258
  %2974 = vmatprep.subr.bf16.mxu0 0
  %2975 = vmatpush1.bf16.msra.mxu0 %v2259
  %2976 = vmatprep.subr.bf16.mxu0 0
  %2977 = vmatpush1.bf16.msra.mxu0 %v2260
  %2978 = vmatprep.subr.bf16.mxu0 0
  %2979 = vmatpush1.bf16.msra.mxu0 %v2261
  %2980 = vmatprep.subr.bf16.mxu0 0
  %2981 = vmatpush1.bf16.msra.mxu0 %v2262
  %2982 = vmatprep.subr.bf16.mxu0 0
  %2983 = vmatpush1.bf16.msra.mxu0 %v2263
  %2984 = vmatprep.subr.bf16.mxu0 0
  %2985 = vmatpush1.bf16.msra.mxu0 %v2264
  %2986 = vmatprep.subr.bf16.mxu0 0
  %2987 = vmatpush1.bf16.msra.mxu0 %v2265
  %2988 = vmatprep.subr.bf16.mxu0 0
  %2989 = vmatpush1.bf16.msra.mxu0 %v2266
  %2990 = vmatprep.subr.bf16.mxu0 0
  %2991 = vmatpush1.bf16.msra.mxu0 %v2267
  %2992 = vmatprep.mubr.bf16.mxu0 %v901
  %2993 = vmatmul.mubr.bf16.gmra.mrb[0].mxu0 %v900
  %v2994 = vpop.f32.mrb[0].mxu0
  %v2995 = vadd.f32 %v2946, %v2994
  %v2996 = vpop.f32.mrb[0].mxu0
  %v2997 = vpop.f32.mrb[0].mxu0
  %v2998 = vadd.f32 %v2949, %v2997
  %v2999 = vpop.f32.mrb[0].mxu0
  %3000 = vmatprep.mubr.bf16.mxu0 %v937
  %3001 = vmatmul.mubr.bf16.gmra.mrb[0].mxu0 %v936
  %v3002 = vpop.f32.mrb[0].mxu0
  %v3003 = vadd.f32 %v2954, %v3002
  %v3004 = vpop.f32.mrb[0].mxu0
  %v3005 = vpop.f32.mrb[0].mxu0
  %v3006 = vadd.f32 %v2957, %v3005
  %v3007 = vpop.f32.mrb[0].mxu0
  %3008 = vdwg.mxu0
  %3009 = vmatprep.subr.bf16.mxu0 0
  %3010 = vmatpush1.bf16.msra.mxu0 %v2268
  %3011 = vmatprep.subr.bf16.mxu0 0
  %3012 = vmatpush1.bf16.msra.mxu0 %v2269
  %3013 = vmatprep.subr.bf16.mxu0 0
  %3014 = vmatpush1.bf16.msra.mxu0 %v2270
  %3015 = vmatprep.subr.bf16.mxu0 0
  %3016 = vmatpush1.bf16.msra.mxu0 %v2271
  %3017 = vmatprep.subr.bf16.mxu0 0
  %3018 = vmatpush1.bf16.msra.mxu0 %v2272
  %3019 = vmatprep.subr.bf16.mxu0 0
  %3020 = vmatpush1.bf16.msra.mxu0 %v2273
  %3021 = vmatprep.subr.bf16.mxu0 0
  %3022 = vmatpush1.bf16.msra.mxu0 %v2274
  %3023 = vmatprep.subr.bf16.mxu0 0
  %3024 = vmatpush1.bf16.msra.mxu0 %v2275
  %3025 = vmatprep.subr.bf16.mxu0 0
  %3026 = vmatpush1.bf16.msra.mxu0 %v2276
  %3027 = vmatprep.subr.bf16.mxu0 0
  %3028 = vmatpush1.bf16.msra.mxu0 %v2277
  %3029 = vmatprep.subr.bf16.mxu0 0
  %3030 = vmatpush1.bf16.msra.mxu0 %v2278
  %3031 = vmatprep.subr.bf16.mxu0 0
  %3032 = vmatpush1.bf16.msra.mxu0 %v2279
  %3033 = vmatprep.subr.bf16.mxu0 0
  %3034 = vmatpush1.bf16.msra.mxu0 %v2280
  %3035 = vmatprep.subr.bf16.mxu0 0
  %3036 = vmatpush1.bf16.msra.mxu0 %v2281
  %3037 = vmatprep.subr.bf16.mxu0 0
  %3038 = vmatpush1.bf16.msra.mxu0 %v2282
  %3039 = vmatprep.subr.bf16.mxu0 0
  %3040 = vmatpush1.bf16.msra.mxu0 %v2283
  %3041 = vmatprep.mubr.bf16.mxu0 %v903
  %3042 = vmatmul.mubr.bf16.gmra.mrb[0].mxu0 %v902
  %v3043 = vpop.f32.mrb[0].mxu0
  %v3044 = vadd.f32 %v2995, %v3043
  %v3045 = vpop.f32.mrb[0].mxu0
  %v3046 = vpop.f32.mrb[0].mxu0
  %v3047 = vadd.f32 %v2998, %v3046
  %v3048 = vpop.f32.mrb[0].mxu0
  %3049 = vmatprep.mubr.bf16.mxu0 %v939
  %3050 = vmatmul.mubr.bf16.gmra.mrb[0].mxu0 %v938
  %v3051 = vpop.f32.mrb[0].mxu0
  %v3052 = vadd.f32 %v3003, %v3051
  %v3053 = vpop.f32.mrb[0].mxu0
  %v3054 = vpop.f32.mrb[0].mxu0
  %v3055 = vadd.f32 %v3006, %v3054
  %v3056 = vpop.f32.mrb[0].mxu0
  %3057 = vdwg.mxu0
  %3058 = vmatprep.subr.bf16.mxu0 0
  %3059 = vmatpush1.bf16.msra.mxu0 %v2284
  %3060 = vmatprep.subr.bf16.mxu0 0
  %3061 = vmatpush1.bf16.msra.mxu0 %v2285
  %3062 = vmatprep.subr.bf16.mxu0 0
  %3063 = vmatpush1.bf16.msra.mxu0 %v2286
  %3064 = vmatprep.subr.bf16.mxu0 0
  %3065 = vmatpush1.bf16.msra.mxu0 %v2287
  %3066 = vmatprep.subr.bf16.mxu0 0
  %3067 = vmatpush1.bf16.msra.mxu0 %v2288
  %3068 = vmatprep.subr.bf16.mxu0 0
  %3069 = vmatpush1.bf16.msra.mxu0 %v2289
  %3070 = vmatprep.subr.bf16.mxu0 0
  %3071 = vmatpush1.bf16.msra.mxu0 %v2290
  %3072 = vmatprep.subr.bf16.mxu0 0
  %3073 = vmatpush1.bf16.msra.mxu0 %v2291
  %3074 = vmatprep.subr.bf16.mxu0 0
  %3075 = vmatpush1.bf16.msra.mxu0 %v2292
  %3076 = vmatprep.subr.bf16.mxu0 0
  %3077 = vmatpush1.bf16.msra.mxu0 %v2293
  %3078 = vmatprep.subr.bf16.mxu0 0
  %3079 = vmatpush1.bf16.msra.mxu0 %v2294
  %3080 = vmatprep.subr.bf16.mxu0 0
  %3081 = vmatpush1.bf16.msra.mxu0 %v2295
  %3082 = vmatprep.subr.bf16.mxu0 0
  %3083 = vmatpush1.bf16.msra.mxu0 %v2296
  %3084 = vmatprep.subr.bf16.mxu0 0
  %3085 = vmatpush1.bf16.msra.mxu0 %v2297
  %3086 = vmatprep.subr.bf16.mxu0 0
  %3087 = vmatpush1.bf16.msra.mxu0 %v2298
  %3088 = vmatprep.subr.bf16.mxu0 0
  %3089 = vmatpush1.bf16.msra.mxu0 %v2299
  %3090 = vmatprep.mubr.bf16.mxu0 %v905
  %3091 = vmatmul.mubr.bf16.gmra.mrb[0].mxu0 %v904
  %v3092 = vpop.f32.mrb[0].mxu0
  %v3093 = vadd.f32 %v3044, %v3092
  %v3094 = vpop.f32.mrb[0].mxu0
  %v3095 = vpop.f32.mrb[0].mxu0
  %v3096 = vadd.f32 %v3047, %v3095
  %v3097 = vpop.f32.mrb[0].mxu0
  %3098 = vmatprep.mubr.bf16.mxu0 %v941
  %3099 = vmatmul.mubr.bf16.gmra.mrb[0].mxu0 %v940
  %v3100 = vpop.f32.mrb[0].mxu0
  %v3101 = vadd.f32 %v3052, %v3100
  %v3102 = vpop.f32.mrb[0].mxu0
  %v3103 = vpop.f32.mrb[0].mxu0
  %v3104 = vadd.f32 %v3055, %v3103
  %v3105 = vpop.f32.mrb[0].mxu0
  %3106 = vdwg.mxu0
  %3107 = vmatprep.subr.bf16.mxu0 0
  %3108 = vmatpush1.bf16.msra.mxu0 %v2300
  %3109 = vmatprep.subr.bf16.mxu0 0
  %3110 = vmatpush1.bf16.msra.mxu0 %v2301
  %3111 = vmatprep.subr.bf16.mxu0 0
  %3112 = vmatpush1.bf16.msra.mxu0 %v2302
  %3113 = vmatprep.subr.bf16.mxu0 0
  %3114 = vmatpush1.bf16.msra.mxu0 %v2303
  %3115 = vmatprep.subr.bf16.mxu0 0
  %3116 = vmatpush1.bf16.msra.mxu0 %v2304
  %3117 = vmatprep.subr.bf16.mxu0 0
  %3118 = vmatpush1.bf16.msra.mxu0 %v2305
  %3119 = vmatprep.subr.bf16.mxu0 0
  %3120 = vmatpush1.bf16.msra.mxu0 %v2306
  %3121 = vmatprep.subr.bf16.mxu0 0
  %3122 = vmatpush1.bf16.msra.mxu0 %v2307
  %3123 = vmatprep.subr.bf16.mxu0 0
  %3124 = vmatpush1.bf16.msra.mxu0 %v2308
  %3125 = vmatprep.subr.bf16.mxu0 0
  %3126 = vmatpush1.bf16.msra.mxu0 %v2309
  %3127 = vmatprep.subr.bf16.mxu0 0
  %3128 = vmatpush1.bf16.msra.mxu0 %v2310
  %3129 = vmatprep.subr.bf16.mxu0 0
  %3130 = vmatpush1.bf16.msra.mxu0 %v2311
  %3131 = vmatprep.subr.bf16.mxu0 0
  %3132 = vmatpush1.bf16.msra.mxu0 %v2312
  %3133 = vmatprep.subr.bf16.mxu0 0
  %3134 = vmatpush1.bf16.msra.mxu0 %v2313
  %3135 = vmatprep.subr.bf16.mxu0 0
  %3136 = vmatpush1.bf16.msra.mxu0 %v2314
  %3137 = vmatprep.subr.bf16.mxu0 0
  %3138 = vmatpush1.bf16.msra.mxu0 %v2315
  %3139 = vmatprep.mubr.bf16.mxu0 %v907
  %3140 = vmatmul.mubr.bf16.gmra.mrb[0].mxu0 %v906
  %v3141 = vpop.f32.mrb[0].mxu0
  %v3142 = vadd.f32 %v3093, %v3141
  %v3143 = vpop.f32.mrb[0].mxu0
  %v3144 = vpop.f32.mrb[0].mxu0
  %v3145 = vadd.f32 %v3096, %v3144
  %v3146 = vpop.f32.mrb[0].mxu0
  %3147 = vmatprep.mubr.bf16.mxu0 %v943
  %3148 = vmatmul.mubr.bf16.gmra.mrb[0].mxu0 %v942
  %v3149 = vpop.f32.mrb[0].mxu0
  %v3150 = vadd.f32 %v3101, %v3149
  %v3151 = vpop.f32.mrb[0].mxu0
  %v3152 = vpop.f32.mrb[0].mxu0
  %v3153 = vadd.f32 %v3104, %v3152
  %v3154 = vpop.f32.mrb[0].mxu0
  %3155 = vdwg.mxu0
  %3156 = vmatprep.subr.bf16.mxu0 0
  %3157 = vmatpush1.bf16.msra.mxu0 %v2316
  %3158 = vmatprep.subr.bf16.mxu0 0
  %3159 = vmatpush1.bf16.msra.mxu0 %v2317
  %3160 = vmatprep.subr.bf16.mxu0 0
  %3161 = vmatpush1.bf16.msra.mxu0 %v2318
  %3162 = vmatprep.subr.bf16.mxu0 0
  %3163 = vmatpush1.bf16.msra.mxu0 %v2319
  %3164 = vmatprep.subr.bf16.mxu0 0
  %3165 = vmatpush1.bf16.msra.mxu0 %v2320
  %3166 = vmatprep.subr.bf16.mxu0 0
  %3167 = vmatpush1.bf16.msra.mxu0 %v2321
  %3168 = vmatprep.subr.bf16.mxu0 0
  %3169 = vmatpush1.bf16.msra.mxu0 %v2322
  %3170 = vmatprep.subr.bf16.mxu0 0
  %3171 = vmatpush1.bf16.msra.mxu0 %v2323
  %3172 = vmatprep.subr.bf16.mxu0 0
  %3173 = vmatpush1.bf16.msra.mxu0 %v2324
  %3174 = vmatprep.subr.bf16.mxu0 0
  %3175 = vmatpush1.bf16.msra.mxu0 %v2325
  %3176 = vmatprep.subr.bf16.mxu0 0
  %3177 = vmatpush1.bf16.msra.mxu0 %v2326
  %3178 = vmatprep.subr.bf16.mxu0 0
  %3179 = vmatpush1.bf16.msra.mxu0 %v2327
  %3180 = vmatprep.subr.bf16.mxu0 0
  %3181 = vmatpush1.bf16.msra.mxu0 %v2328
  %3182 = vmatprep.subr.bf16.mxu0 0
  %3183 = vmatpush1.bf16.msra.mxu0 %v2329
  %3184 = vmatprep.subr.bf16.mxu0 0
  %3185 = vmatpush1.bf16.msra.mxu0 %v2330
  %3186 = vmatprep.subr.bf16.mxu0 0
  %3187 = vmatpush1.bf16.msra.mxu0 %v2331
  %3188 = vmatprep.mubr.bf16.mxu0 %v909
  %3189 = vmatmul.mubr.bf16.gmra.mrb[0].mxu0 %v908
  %v3190 = vpop.f32.mrb[0].mxu0
  %v3191 = vadd.f32 %v3142, %v3190
  %v3192 = vpop.f32.mrb[0].mxu0
  %v3193 = vpop.f32.mrb[0].mxu0
  %v3194 = vadd.f32 %v3145, %v3193
  %v3195 = vpop.f32.mrb[0].mxu0
  %3196 = vmatprep.mubr.bf16.mxu0 %v945
  %3197 = vmatmul.mubr.bf16.gmra.mrb[0].mxu0 %v944
  %v3198 = vpop.f32.mrb[0].mxu0
  %v3199 = vadd.f32 %v3150, %v3198
  %v3200 = vpop.f32.mrb[0].mxu0
  %v3201 = vpop.f32.mrb[0].mxu0
  %v3202 = vadd.f32 %v3153, %v3201
  %v3203 = vpop.f32.mrb[0].mxu0
  %3204 = vdwg.mxu0
  %3205 = vmatprep.subr.bf16.mxu0 0
  %3206 = vmatpush1.bf16.msra.mxu0 %v2332
  %3207 = vmatprep.subr.bf16.mxu0 0
  %3208 = vmatpush1.bf16.msra.mxu0 %v2333
  %3209 = vmatprep.subr.bf16.mxu0 0
  %3210 = vmatpush1.bf16.msra.mxu0 %v2334
  %3211 = vmatprep.subr.bf16.mxu0 0
  %3212 = vmatpush1.bf16.msra.mxu0 %v2335
  %3213 = vmatprep.subr.bf16.mxu0 0
  %3214 = vmatpush1.bf16.msra.mxu0 %v2336
  %3215 = vmatprep.subr.bf16.mxu0 0
  %3216 = vmatpush1.bf16.msra.mxu0 %v2337
  %3217 = vmatprep.subr.bf16.mxu0 0
  %3218 = vmatpush1.bf16.msra.mxu0 %v2338
  %3219 = vmatprep.subr.bf16.mxu0 0
  %3220 = vmatpush1.bf16.msra.mxu0 %v2339
  %3221 = vmatprep.subr.bf16.mxu0 0
  %3222 = vmatpush1.bf16.msra.mxu0 %v2340
  %3223 = vmatprep.subr.bf16.mxu0 0
  %3224 = vmatpush1.bf16.msra.mxu0 %v2341
  %3225 = vmatprep.subr.bf16.mxu0 0
  %3226 = vmatpush1.bf16.msra.mxu0 %v2342
  %3227 = vmatprep.subr.bf16.mxu0 0
  %3228 = vmatpush1.bf16.msra.mxu0 %v2343
  %3229 = vmatprep.subr.bf16.mxu0 0
  %3230 = vmatpush1.bf16.msra.mxu0 %v2344
  %3231 = vmatprep.subr.bf16.mxu0 0
  %3232 = vmatpush1.bf16.msra.mxu0 %v2345
  %3233 = vmatprep.subr.bf16.mxu0 0
  %3234 = vmatpush1.bf16.msra.mxu0 %v2346
  %3235 = vmatprep.subr.bf16.mxu0 0
  %3236 = vmatpush1.bf16.msra.mxu0 %v2347
  %3237 = vmatprep.mubr.bf16.mxu0 %v911
  %3238 = vmatmul.mubr.bf16.gmra.mrb[0].mxu0 %v910
  %v3239 = vpop.f32.mrb[0].mxu0
  %v3240 = vadd.f32 %v3191, %v3239
  %v3241 = vpop.f32.mrb[0].mxu0
  %v3242 = vpop.f32.mrb[0].mxu0
  %v3243 = vadd.f32 %v3194, %v3242
  %v3244 = vpop.f32.mrb[0].mxu0
  %3245 = vmatprep.mubr.bf16.mxu0 %v947
  %3246 = vmatmul.mubr.bf16.gmra.mrb[0].mxu0 %v946
  %v3247 = vpop.f32.mrb[0].mxu0
  %v3248 = vadd.f32 %v3199, %v3247
  %v3249 = vpop.f32.mrb[0].mxu0
  %v3250 = vpop.f32.mrb[0].mxu0
  %v3251 = vadd.f32 %v3202, %v3250
  %v3252 = vpop.f32.mrb[0].mxu0
  %3253 = vdwg.mxu0
  %3254 = vmatprep.subr.bf16.mxu0 0
  %3255 = vmatpush1.bf16.msra.mxu0 %v2348
  %3256 = vmatprep.subr.bf16.mxu0 0
  %3257 = vmatpush1.bf16.msra.mxu0 %v2349
  %3258 = vmatprep.subr.bf16.mxu0 0
  %3259 = vmatpush1.bf16.msra.mxu0 %v2350
  %3260 = vmatprep.subr.bf16.mxu0 0
  %3261 = vmatpush1.bf16.msra.mxu0 %v2351
  %3262 = vmatprep.subr.bf16.mxu0 0
  %3263 = vmatpush1.bf16.msra.mxu0 %v2352
  %3264 = vmatprep.subr.bf16.mxu0 0
  %3265 = vmatpush1.bf16.msra.mxu0 %v2353
  %3266 = vmatprep.subr.bf16.mxu0 0
  %3267 = vmatpush1.bf16.msra.mxu0 %v2354
  %3268 = vmatprep.subr.bf16.mxu0 0
  %3269 = vmatpush1.bf16.msra.mxu0 %v2355
  %3270 = vmatprep.subr.bf16.mxu0 0
  %3271 = vmatpush1.bf16.msra.mxu0 %v2356
  %3272 = vmatprep.subr.bf16.mxu0 0
  %3273 = vmatpush1.bf16.msra.mxu0 %v2357
  %3274 = vmatprep.subr.bf16.mxu0 0
  %3275 = vmatpush1.bf16.msra.mxu0 %v2358
  %3276 = vmatprep.subr.bf16.mxu0 0
  %3277 = vmatpush1.bf16.msra.mxu0 %v2359
  %3278 = vmatprep.subr.bf16.mxu0 0
  %3279 = vmatpush1.bf16.msra.mxu0 %v2360
  %3280 = vmatprep.subr.bf16.mxu0 0
  %3281 = vmatpush1.bf16.msra.mxu0 %v2361
  %3282 = vmatprep.subr.bf16.mxu0 0
  %3283 = vmatpush1.bf16.msra.mxu0 %v2362
  %3284 = vmatprep.subr.bf16.mxu0 0
  %3285 = vmatpush1.bf16.msra.mxu0 %v2363
  %3286 = vmatprep.mubr.bf16.mxu0 %v913
  %3287 = vmatmul.mubr.bf16.gmra.mrb[0].mxu0 %v912
  %v3288 = vpop.f32.mrb[0].mxu0
  %v3289 = vadd.f32 %v3240, %v3288
  %v3290 = vpop.f32.mrb[0].mxu0
  %v3291 = vpop.f32.mrb[0].mxu0
  %v3292 = vadd.f32 %v3243, %v3291
  %v3293 = vpop.f32.mrb[0].mxu0
  %3294 = vmatprep.mubr.bf16.mxu0 %v949
  %3295 = vmatmul.mubr.bf16.gmra.mrb[0].mxu0 %v948
  %v3296 = vpop.f32.mrb[0].mxu0
  %v3297 = vadd.f32 %v3248, %v3296
  %v3298 = vpop.f32.mrb[0].mxu0
  %v3299 = vpop.f32.mrb[0].mxu0
  %v3300 = vadd.f32 %v3251, %v3299
  %v3301 = vpop.f32.mrb[0].mxu0
  %3302 = vdwg.mxu0
  %3303 = vmatprep.subr.bf16.mxu0 0
  %3304 = vmatpush1.bf16.msra.mxu0 %v2364
  %3305 = vmatprep.subr.bf16.mxu0 0
  %3306 = vmatpush1.bf16.msra.mxu0 %v2365
  %3307 = vmatprep.subr.bf16.mxu0 0
  %3308 = vmatpush1.bf16.msra.mxu0 %v2366
  %3309 = vmatprep.subr.bf16.mxu0 0
  %3310 = vmatpush1.bf16.msra.mxu0 %v2367
  %3311 = vmatprep.subr.bf16.mxu0 0
  %3312 = vmatpush1.bf16.msra.mxu0 %v2368
  %3313 = vmatprep.subr.bf16.mxu0 0
  %3314 = vmatpush1.bf16.msra.mxu0 %v2369
  %3315 = vmatprep.subr.bf16.mxu0 0
  %3316 = vmatpush1.bf16.msra.mxu0 %v2370
  %3317 = vmatprep.subr.bf16.mxu0 0
  %3318 = vmatpush1.bf16.msra.mxu0 %v2371
  %3319 = vmatprep.subr.bf16.mxu0 0
  %3320 = vmatpush1.bf16.msra.mxu0 %v2372
  %3321 = vmatprep.subr.bf16.mxu0 0
  %3322 = vmatpush1.bf16.msra.mxu0 %v2373
  %3323 = vmatprep.subr.bf16.mxu0 0
  %3324 = vmatpush1.bf16.msra.mxu0 %v2374
  %3325 = vmatprep.subr.bf16.mxu0 0
  %3326 = vmatpush1.bf16.msra.mxu0 %v2375
  %3327 = vmatprep.subr.bf16.mxu0 0
  %3328 = vmatpush1.bf16.msra.mxu0 %v2376
  %3329 = vmatprep.subr.bf16.mxu0 0
  %3330 = vmatpush1.bf16.msra.mxu0 %v2377
  %3331 = vmatprep.subr.bf16.mxu0 0
  %3332 = vmatpush1.bf16.msra.mxu0 %v2378
  %3333 = vmatprep.subr.bf16.mxu0 0
  %3334 = vmatpush1.bf16.msra.mxu0 %v2379
  %3335 = vmatprep.mubr.bf16.mxu0 %v915
  %3336 = vmatmul.mubr.bf16.gmra.mrb[0].mxu0 %v914
  %v3337 = vpop.f32.mrb[0].mxu0
  %v3338 = vadd.f32 %v3289, %v3337
  %v3339 = vpop.f32.mrb[0].mxu0
  %v3340 = vpop.f32.mrb[0].mxu0
  %v3341 = vadd.f32 %v3292, %v3340
  %v3342 = vpop.f32.mrb[0].mxu0
  %3343 = vmatprep.mubr.bf16.mxu0 %v951
  %3344 = vmatmul.mubr.bf16.gmra.mrb[0].mxu0 %v950
  %v3345 = vpop.f32.mrb[0].mxu0
  %v3346 = vadd.f32 %v3297, %v3345
  %v3347 = vpop.f32.mrb[0].mxu0
  %v3348 = vpop.f32.mrb[0].mxu0
  %v3349 = vadd.f32 %v3300, %v3348
  %v3350 = vpop.f32.mrb[0].mxu0
  %3351 = vdwg.mxu0
  %3352 = vmatprep.subr.bf16.mxu0 0
  %3353 = vmatpush1.bf16.msra.mxu0 %v2380
  %3354 = vmatprep.subr.bf16.mxu0 0
  %3355 = vmatpush1.bf16.msra.mxu0 %v2381
  %3356 = vmatprep.subr.bf16.mxu0 0
  %3357 = vmatpush1.bf16.msra.mxu0 %v2382
  %3358 = vmatprep.subr.bf16.mxu0 0
  %3359 = vmatpush1.bf16.msra.mxu0 %v2383
  %3360 = vmatprep.subr.bf16.mxu0 0
  %3361 = vmatpush1.bf16.msra.mxu0 %v2384
  %3362 = vmatprep.subr.bf16.mxu0 0
  %3363 = vmatpush1.bf16.msra.mxu0 %v2385
  %3364 = vmatprep.subr.bf16.mxu0 0
  %3365 = vmatpush1.bf16.msra.mxu0 %v2386
  %3366 = vmatprep.subr.bf16.mxu0 0
  %3367 = vmatpush1.bf16.msra.mxu0 %v2387
  %3368 = vmatprep.subr.bf16.mxu0 0
  %3369 = vmatpush1.bf16.msra.mxu0 %v2388
  %3370 = vmatprep.subr.bf16.mxu0 0
  %3371 = vmatpush1.bf16.msra.mxu0 %v2389
  %3372 = vmatprep.subr.bf16.mxu0 0
  %3373 = vmatpush1.bf16.msra.mxu0 %v2390
  %3374 = vmatprep.subr.bf16.mxu0 0
  %3375 = vmatpush1.bf16.msra.mxu0 %v2391
  %3376 = vmatprep.subr.bf16.mxu0 0
  %3377 = vmatpush1.bf16.msra.mxu0 %v2392
  %3378 = vmatprep.subr.bf16.mxu0 0
  %3379 = vmatpush1.bf16.msra.mxu0 %v2393
  %3380 = vmatprep.subr.bf16.mxu0 0
  %3381 = vmatpush1.bf16.msra.mxu0 %v2394
  %3382 = vmatprep.subr.bf16.mxu0 0
  %3383 = vmatpush1.bf16.msra.mxu0 %v2395
  %3384 = vmatprep.mubr.bf16.mxu0 %v917
  %3385 = vmatmul.mubr.bf16.gmra.mrb[0].mxu0 %v916
  %v3386 = vpop.f32.mrb[0].mxu0
  %v3387 = vadd.f32 %v3338, %v3386
  %v3388 = vpop.f32.mrb[0].mxu0
  %v3389 = vpop.f32.mrb[0].mxu0
  %v3390 = vadd.f32 %v3341, %v3389
  %v3391 = vpop.f32.mrb[0].mxu0
  %3392 = vmatprep.mubr.bf16.mxu0 %v953
  %3393 = vmatmul.mubr.bf16.gmra.mrb[0].mxu0 %v952
  %v3394 = vpop.f32.mrb[0].mxu0
  %v3395 = vadd.f32 %v3346, %v3394
  %v3396 = vpop.f32.mrb[0].mxu0
  %v3397 = vpop.f32.mrb[0].mxu0
  %v3398 = vadd.f32 %v3349, %v3397
  %v3399 = vpop.f32.mrb[0].mxu0
  %3400 = vdwg.mxu0
  %3401 = vmatprep.subr.bf16.mxu0 0
  %3402 = vmatpush1.bf16.msra.mxu0 %v2396
  %3403 = vmatprep.subr.bf16.mxu0 0
  %3404 = vmatpush1.bf16.msra.mxu0 %v2397
  %3405 = vmatprep.subr.bf16.mxu0 0
  %3406 = vmatpush1.bf16.msra.mxu0 %v2398
  %3407 = vmatprep.subr.bf16.mxu0 0
  %3408 = vmatpush1.bf16.msra.mxu0 %v2399
  %3409 = vmatprep.subr.bf16.mxu0 0
  %3410 = vmatpush1.bf16.msra.mxu0 %v2400
  %3411 = vmatprep.subr.bf16.mxu0 0
  %3412 = vmatpush1.bf16.msra.mxu0 %v2401
  %3413 = vmatprep.subr.bf16.mxu0 0
  %3414 = vmatpush1.bf16.msra.mxu0 %v2402
  %3415 = vmatprep.subr.bf16.mxu0 0
  %3416 = vmatpush1.bf16.msra.mxu0 %v2403
  %3417 = vmatprep.subr.bf16.mxu0 0
  %3418 = vmatpush1.bf16.msra.mxu0 %v2404
  %3419 = vmatprep.subr.bf16.mxu0 0
  %3420 = vmatpush1.bf16.msra.mxu0 %v2405
  %3421 = vmatprep.subr.bf16.mxu0 0
  %3422 = vmatpush1.bf16.msra.mxu0 %v2406
  %3423 = vmatprep.subr.bf16.mxu0 0
  %3424 = vmatpush1.bf16.msra.mxu0 %v2407
  %3425 = vmatprep.subr.bf16.mxu0 0
  %3426 = vmatpush1.bf16.msra.mxu0 %v2408
  %3427 = vmatprep.subr.bf16.mxu0 0
  %3428 = vmatpush1.bf16.msra.mxu0 %v2409
  %3429 = vmatprep.subr.bf16.mxu0 0
  %3430 = vmatpush1.bf16.msra.mxu0 %v2410
  %3431 = vmatprep.subr.bf16.mxu0 0
  %3432 = vmatpush1.bf16.msra.mxu0 %v2411
  %3433 = vmatprep.mubr.bf16.mxu0 %v919
  %3434 = vmatmul.mubr.bf16.gmra.mrb[0].mxu0 %v918
  %v3435 = vpop.f32.mrb[0].mxu0
  %v3436 = vadd.f32 %v3387, %v3435
  %v3437 = vpop.f32.mrb[0].mxu0
  %v3438 = vpop.f32.mrb[0].mxu0
  %v3439 = vadd.f32 %v3390, %v3438
  %v3440 = vpop.f32.mrb[0].mxu0
  %3441 = vmatprep.mubr.bf16.mxu0 %v955
  %3442 = vmatmul.mubr.bf16.gmra.mrb[0].mxu0 %v954
  %v3443 = vpop.f32.mrb[0].mxu0
  %v3444 = vadd.f32 %v3395, %v3443
  %v3445 = vpop.f32.mrb[0].mxu0
  %v3446 = vpop.f32.mrb[0].mxu0
  %v3447 = vadd.f32 %v3398, %v3446
  %v3448 = vpop.f32.mrb[0].mxu0
  %3449 = vdwg.mxu0
  %3450 = vmatprep.subr.bf16.mxu0 0
  %3451 = vmatpush1.bf16.msra.mxu0 %v2412
  %3452 = vmatprep.subr.bf16.mxu0 0
  %3453 = vmatpush1.bf16.msra.mxu0 %v2413
  %3454 = vmatprep.subr.bf16.mxu0 0
  %3455 = vmatpush1.bf16.msra.mxu0 %v2414
  %3456 = vmatprep.subr.bf16.mxu0 0
  %3457 = vmatpush1.bf16.msra.mxu0 %v2415
  %3458 = vmatprep.subr.bf16.mxu0 0
  %3459 = vmatpush1.bf16.msra.mxu0 %v2416
  %3460 = vmatprep.subr.bf16.mxu0 0
  %3461 = vmatpush1.bf16.msra.mxu0 %v2417
  %3462 = vmatprep.subr.bf16.mxu0 0
  %3463 = vmatpush1.bf16.msra.mxu0 %v2418
  %3464 = vmatprep.subr.bf16.mxu0 0
  %3465 = vmatpush1.bf16.msra.mxu0 %v2419
  %3466 = vmatprep.subr.bf16.mxu0 0
  %3467 = vmatpush1.bf16.msra.mxu0 %v2420
  %3468 = vmatprep.subr.bf16.mxu0 0
  %3469 = vmatpush1.bf16.msra.mxu0 %v2421
  %3470 = vmatprep.subr.bf16.mxu0 0
  %3471 = vmatpush1.bf16.msra.mxu0 %v2422
  %3472 = vmatprep.subr.bf16.mxu0 0
  %3473 = vmatpush1.bf16.msra.mxu0 %v2423
  %3474 = vmatprep.subr.bf16.mxu0 0
  %3475 = vmatpush1.bf16.msra.mxu0 %v2424
  %3476 = vmatprep.subr.bf16.mxu0 0
  %3477 = vmatpush1.bf16.msra.mxu0 %v2425
  %3478 = vmatprep.subr.bf16.mxu0 0
  %3479 = vmatpush1.bf16.msra.mxu0 %v2426
  %3480 = vmatprep.subr.bf16.mxu0 0
  %3481 = vmatpush1.bf16.msra.mxu0 %v2427
  %3482 = vmatprep.mubr.bf16.mxu0 %v921
  %3483 = vmatmul.mubr.bf16.gmra.mrb[0].mxu0 %v920
  %v3484 = vpop.f32.mrb[0].mxu0
  %v3485 = vadd.f32 %v3436, %v3484
  %v3486 = vpop.f32.mrb[0].mxu0
  %v3487 = vpop.f32.mrb[0].mxu0
  %v3488 = vadd.f32 %v3439, %v3487
  %v3489 = vpop.f32.mrb[0].mxu0
  %3490 = vmatprep.mubr.bf16.mxu0 %v957
  %3491 = vmatmul.mubr.bf16.gmra.mrb[0].mxu0 %v956
  %v3492 = vpop.f32.mrb[0].mxu0
  %v3493 = vadd.f32 %v3444, %v3492
  %v3494 = vpop.f32.mrb[0].mxu0
  %v3495 = vpop.f32.mrb[0].mxu0
  %v3496 = vadd.f32 %v3447, %v3495
  %v3497 = vpop.f32.mrb[0].mxu0
  %3498 = vdwg.mxu0
  %3499 = vmatprep.subr.bf16.mxu0 0
  %3500 = vmatpush1.bf16.msra.mxu0 %v2428
  %3501 = vmatprep.subr.bf16.mxu0 0
  %3502 = vmatpush1.bf16.msra.mxu0 %v2429
  %3503 = vmatprep.subr.bf16.mxu0 0
  %3504 = vmatpush1.bf16.msra.mxu0 %v2430
  %3505 = vmatprep.subr.bf16.mxu0 0
  %3506 = vmatpush1.bf16.msra.mxu0 %v2431
  %3507 = vmatprep.subr.bf16.mxu0 0
  %3508 = vmatpush1.bf16.msra.mxu0 %v2432
  %3509 = vmatprep.subr.bf16.mxu0 0
  %3510 = vmatpush1.bf16.msra.mxu0 %v2433
  %3511 = vmatprep.subr.bf16.mxu0 0
  %3512 = vmatpush1.bf16.msra.mxu0 %v2434
  %3513 = vmatprep.subr.bf16.mxu0 0
  %3514 = vmatpush1.bf16.msra.mxu0 %v2435
  %3515 = vmatprep.subr.bf16.mxu0 0
  %3516 = vmatpush1.bf16.msra.mxu0 %v2436
  %3517 = vmatprep.subr.bf16.mxu0 0
  %3518 = vmatpush1.bf16.msra.mxu0 %v2437
  %3519 = vmatprep.subr.bf16.mxu0 0
  %3520 = vmatpush1.bf16.msra.mxu0 %v2438
  %3521 = vmatprep.subr.bf16.mxu0 0
  %3522 = vmatpush1.bf16.msra.mxu0 %v2439
  %3523 = vmatprep.subr.bf16.mxu0 0
  %3524 = vmatpush1.bf16.msra.mxu0 %v2440
  %3525 = vmatprep.subr.bf16.mxu0 0
  %3526 = vmatpush1.bf16.msra.mxu0 %v2441
  %3527 = vmatprep.subr.bf16.mxu0 0
  %3528 = vmatpush1.bf16.msra.mxu0 %v2442
  %3529 = vmatprep.subr.bf16.mxu0 0
  %3530 = vmatpush1.bf16.msra.mxu0 %v2443
  %3531 = vmatprep.mubr.bf16.mxu0 %v923
  %3532 = vmatmul.mubr.bf16.gmra.mrb[0].mxu0 %v922
  %v3533 = vpop.f32.mrb[0].mxu0
  %v3534 = vadd.f32 %v3485, %v3533
  %v3535 = vpop.f32.mrb[0].mxu0
  %v3536 = vpop.f32.mrb[0].mxu0
  %v3537 = vadd.f32 %v3488, %v3536
  %v3538 = vpop.f32.mrb[0].mxu0
  %3539 = vmatprep.mubr.bf16.mxu0 %v959
  %3540 = vmatmul.mubr.bf16.gmra.mrb[0].mxu0 %v958
  %v3541 = vpop.f32.mrb[0].mxu0
  %v3542 = vadd.f32 %v3493, %v3541
  %v3543 = vpop.f32.mrb[0].mxu0
  %v3544 = vpop.f32.mrb[0].mxu0
  %v3545 = vadd.f32 %v3496, %v3544
  %v3546 = vpop.f32.mrb[0].mxu0
  %3547 = vdwg.mxu0
  %3548 = vmatprep.subr.bf16.mxu0 0
  %3549 = vmatpush1.bf16.msra.mxu0 %v2444
  %3550 = vmatprep.subr.bf16.mxu0 0
  %3551 = vmatpush1.bf16.msra.mxu0 %v2445
  %3552 = vmatprep.subr.bf16.mxu0 0
  %3553 = vmatpush1.bf16.msra.mxu0 %v2446
  %3554 = vmatprep.subr.bf16.mxu0 0
  %3555 = vmatpush1.bf16.msra.mxu0 %v2447
  %3556 = vmatprep.subr.bf16.mxu0 0
  %3557 = vmatpush1.bf16.msra.mxu0 %v2448
  %3558 = vmatprep.subr.bf16.mxu0 0
  %3559 = vmatpush1.bf16.msra.mxu0 %v2449
  %3560 = vmatprep.subr.bf16.mxu0 0
  %3561 = vmatpush1.bf16.msra.mxu0 %v2450
  %3562 = vmatprep.subr.bf16.mxu0 0
  %3563 = vmatpush1.bf16.msra.mxu0 %v2451
  %3564 = vmatprep.subr.bf16.mxu0 0
  %3565 = vmatpush1.bf16.msra.mxu0 %v2452
  %3566 = vmatprep.subr.bf16.mxu0 0
  %3567 = vmatpush1.bf16.msra.mxu0 %v2453
  %3568 = vmatprep.subr.bf16.mxu0 0
  %3569 = vmatpush1.bf16.msra.mxu0 %v2454
  %3570 = vmatprep.subr.bf16.mxu0 0
  %3571 = vmatpush1.bf16.msra.mxu0 %v2455
  %3572 = vmatprep.subr.bf16.mxu0 0
  %3573 = vmatpush1.bf16.msra.mxu0 %v2456
  %3574 = vmatprep.subr.bf16.mxu0 0
  %3575 = vmatpush1.bf16.msra.mxu0 %v2457
  %3576 = vmatprep.subr.bf16.mxu0 0
  %3577 = vmatpush1.bf16.msra.mxu0 %v2458
  %3578 = vmatprep.subr.bf16.mxu0 0
  %3579 = vmatpush1.bf16.msra.mxu0 %v2459
  %3580 = vmatprep.mubr.bf16.mxu0 %v925
  %3581 = vmatmul.mubr.bf16.gmra.mrb[0].mxu0 %v924
  %v3582 = vpop.f32.mrb[0].mxu0
  %v3583 = vadd.f32 %v3534, %v3582
  %v3584 = vpop.f32.mrb[0].mxu0
  %v3585 = vpop.f32.mrb[0].mxu0
  %v3586 = vadd.f32 %v3537, %v3585
  %v3587 = vpop.f32.mrb[0].mxu0
  %3588 = vmatprep.mubr.bf16.mxu0 %v961
  %3589 = vmatmul.mubr.bf16.gmra.mrb[0].mxu0 %v960
  %v3590 = vpop.f32.mrb[0].mxu0
  %v3591 = vadd.f32 %v3542, %v3590
  %v3592 = vpop.f32.mrb[0].mxu0
  %v3593 = vpop.f32.mrb[0].mxu0
  %v3594 = vadd.f32 %v3545, %v3593
  %v3595 = vpop.f32.mrb[0].mxu0
  %3596 = vdwg.mxu0
  %3597 = vmatprep.subr.bf16.mxu0 0
  %3598 = vmatpush1.bf16.msra.mxu0 %v2460
  %3599 = vmatprep.subr.bf16.mxu0 0
  %3600 = vmatpush1.bf16.msra.mxu0 %v2461
  %3601 = vmatprep.subr.bf16.mxu0 0
  %3602 = vmatpush1.bf16.msra.mxu0 %v2462
  %3603 = vmatprep.subr.bf16.mxu0 0
  %3604 = vmatpush1.bf16.msra.mxu0 %v2463
  %3605 = vmatprep.subr.bf16.mxu0 0
  %3606 = vmatpush1.bf16.msra.mxu0 %v2464
  %3607 = vmatprep.subr.bf16.mxu0 0
  %3608 = vmatpush1.bf16.msra.mxu0 %v2465
  %3609 = vmatprep.subr.bf16.mxu0 0
  %3610 = vmatpush1.bf16.msra.mxu0 %v2466
  %3611 = vmatprep.subr.bf16.mxu0 0
  %3612 = vmatpush1.bf16.msra.mxu0 %v2467
  %3613 = vmatprep.subr.bf16.mxu0 0
  %3614 = vmatpush1.bf16.msra.mxu0 %v2468
  %3615 = vmatprep.subr.bf16.mxu0 0
  %3616 = vmatpush1.bf16.msra.mxu0 %v2469
  %3617 = vmatprep.subr.bf16.mxu0 0
  %3618 = vmatpush1.bf16.msra.mxu0 %v2470
  %3619 = vmatprep.subr.bf16.mxu0 0
  %3620 = vmatpush1.bf16.msra.mxu0 %v2471
  %3621 = vmatprep.subr.bf16.mxu0 0
  %3622 = vmatpush1.bf16.msra.mxu0 %v2472
  %3623 = vmatprep.subr.bf16.mxu0 0
  %3624 = vmatpush1.bf16.msra.mxu0 %v2473
  %3625 = vmatprep.subr.bf16.mxu0 0
  %3626 = vmatpush1.bf16.msra.mxu0 %v2474
  %3627 = vmatprep.subr.bf16.mxu0 0
  %3628 = vmatpush1.bf16.msra.mxu0 %v2475
  %3629 = vmatprep.mubr.bf16.mxu0 %v927
  %3630 = vmatmul.mubr.bf16.gmra.mrb[0].mxu0 %v926
  %v3631 = vpop.f32.mrb[0].mxu0
  %v3632 = vadd.f32 %v3583, %v3631
  %v3633 = vpop.f32.mrb[0].mxu0
  %v3634 = vpop.f32.mrb[0].mxu0
  %v3635 = vadd.f32 %v3586, %v3634
  %v3636 = vpop.f32.mrb[0].mxu0
  %3637 = vmatprep.mubr.bf16.mxu0 %v963
  %3638 = vmatmul.mubr.bf16.gmra.mrb[0].mxu0 %v962
  %v3639 = vpop.f32.mrb[0].mxu0
  %v3640 = vadd.f32 %v3591, %v3639
  %v3641 = vpop.f32.mrb[0].mxu0
  %v3642 = vpop.f32.mrb[0].mxu0
  %v3643 = vadd.f32 %v3594, %v3642
  %v3644 = vpop.f32.mrb[0].mxu0
  %3645 = vdwg.mxu0
  %v3646 = vmax.f32 %v3632, 0.0
  %v3647 = vmax.f32 %v3635, 0.0
  %v3648 = vmax.f32 %v3640, 0.0
  %v3649 = vmax.f32 %v3643, 0.0
  %v3650 = vpack.c.bf16 %v3647, %v3646
  %v3651 = vpack.c.bf16 %v3649, %v3648
  %v3652 = vld [vmem:[%s3] sm:$0xf]
  %v3653 = vld [vmem:[%s3 + $0x4] sm:$0xf]
  %v3654 = vld [vmem:[%s3 + $0x8] sm:$0xf]
  %v3655 = vld [vmem:[%s3 + $0xc] sm:$0xf]
  %v3656 = vld [vmem:[%s3 + $0x10] sm:$0xf]
  %v3657 = vld [vmem:[%s3 + $0x14] sm:$0xf]
  %v3658 = vld [vmem:[%s3 + $0x18] sm:$0xf]
  %v3659 = vld [vmem:[%s3 + $0x1c] sm:$0xf]
  %v3660 = vld [vmem:[%s3 + $0x20] sm:$0xf]
  %v3661 = vld [vmem:[%s3 + $0x24] sm:$0xf]
  %v3662 = vld [vmem:[%s3 + $0x28] sm:$0xf]
  %v3663 = vld [vmem:[%s3 + $0x2c] sm:$0xf]
  %v3664 = vld [vmem:[%s3 + $0x30] sm:$0xf]
  %v3665 = vld [vmem:[%s3 + $0x34] sm:$0xf]
  %v3666 = vld [vmem:[%s3 + $0x38] sm:$0xf]
  %v3667 = vld [vmem:[%s3 + $0x3c] sm:$0xf]
  %v3668 = vld [vmem:[%s4] sm:$0x1]
  %v3670 = vlaneseq
  %v3671 = vshrl.u32 %v3670, 7
  %v3672 = vsub.s32 0, %v3671
  %v3673 = vrot.slane %v3668, %v3672
  %v3691 = vunpack.c.l.b16 %v3652
  %v3692 = vunpack.c.l.b16 %v3653
  %v3693 = vunpack.c.l.b16 %v3654
  %v3694 = vunpack.c.l.b16 %v3655
  %v3695 = vunpack.c.l.b16 %v3656
  %v3696 = vunpack.c.l.b16 %v3657
  %v3697 = vunpack.c.l.b16 %v3658
  %v3698 = vunpack.c.l.b16 %v3659
  %v3699 = vunpack.c.l.b16 %v3660
  %v3700 = vunpack.c.l.b16 %v3661
  %v3701 = vunpack.c.l.b16 %v3662
  %v3702 = vunpack.c.l.b16 %v3663
  %v3703 = vunpack.c.l.b16 %v3664
  %v3704 = vunpack.c.l.b16 %v3665
  %v3705 = vunpack.c.l.b16 %v3666
  %v3706 = vunpack.c.l.b16 %v3667
  %v3707 = vpack.c.b16 %v3692, %v3691
  %v3708 = vpack.c.b16 %v3694, %v3693
  %v3709 = vpack.c.b16 %v3696, %v3695
  %v3710 = vpack.c.b16 %v3698, %v3697
  %v3711 = vpack.c.b16 %v3700, %v3699
  %v3712 = vpack.c.b16 %v3702, %v3701
  %v3713 = vpack.c.b16 %v3704, %v3703
  %v3714 = vpack.c.b16 %v3706, %v3705
  %3723 = vmatprep.subr.bf16.mxu0 0
  %3724 = vmatpush1.bf16.msra.mxu0 %v3707
  %3725 = vmatprep.subr.bf16.mxu0 0
  %3726 = vmatpush1.bf16.msra.mxu0 %v3708
  %3727 = vmatprep.subr.bf16.mxu0 0
  %3728 = vmatpush1.bf16.msra.mxu0 %v3709
  %3729 = vmatprep.subr.bf16.mxu0 0
  %3730 = vmatpush1.bf16.msra.mxu0 %v3710
  %3731 = vmatprep.subr.bf16.mxu0 0
  %3732 = vmatpush1.bf16.msra.mxu0 %v3711
  %3733 = vmatprep.subr.bf16.mxu0 0
  %3734 = vmatpush1.bf16.msra.mxu0 %v3712
  %3735 = vmatprep.subr.bf16.mxu0 0
  %3736 = vmatpush1.bf16.msra.mxu0 %v3713
  %3737 = vmatprep.subr.bf16.mxu0 0
  %3738 = vmatpush1.bf16.msra.mxu0 %v3714
  %3739 = vmatprep.subr.bf16.mxu0 0
  %3740 = vmatpush1.bf16.msra.mxu0 0
  %3741 = vmatprep.subr.bf16.mxu0 0
  %3742 = vmatpush1.bf16.msra.mxu0 0
  %3743 = vmatprep.subr.bf16.mxu0 0
  %3744 = vmatpush1.bf16.msra.mxu0 0
  %3745 = vmatprep.subr.bf16.mxu0 0
  %3746 = vmatpush1.bf16.msra.mxu0 0
  %3747 = vmatprep.subr.bf16.mxu0 0
  %3748 = vmatpush1.bf16.msra.mxu0 0
  %3749 = vmatprep.subr.bf16.mxu0 0
  %3750 = vmatpush1.bf16.msra.mxu0 0
  %3751 = vmatprep.subr.bf16.mxu0 0
  %3752 = vmatpush1.bf16.msra.mxu0 0
  %3753 = vmatprep.subr.bf16.mxu0 0
  %3754 = vmatpush1.bf16.msra.mxu0 0
  %3755 = vmatprep.mubr.bf16.mxu0 0
  %3756 = vmatmul.mubr.bf16.gmra.mrb[0].mxu0 %v3650
  %v3757 = vpop.f32.mrb[0].mxu0
  %v3758 = vadd.f32 %v3673, %v3757
  %v3759 = vpop.f32.mrb[0].mxu0
  %v3760 = vpop.f32.mrb[0].mxu0
  %v3761 = vadd.f32 %v3673, %v3760
  %v3762 = vpop.f32.mrb[0].mxu0
  %3763 = vmatprep.mubr.bf16.mxu0 0
  %3764 = vmatmul.mubr.bf16.gmra.mrb[0].mxu0 %v3651
  %v3765 = vpop.f32.mrb[0].mxu0
  %v3766 = vadd.f32 %v3673, %v3765
  %v3767 = vpop.f32.mrb[0].mxu0
  %v3768 = vpop.f32.mrb[0].mxu0
  %v3769 = vadd.f32 %v3673, %v3768
  %v3770 = vpop.f32.mrb[0].mxu0
  %3771 = vdwg.mxu0
  %3772 = vst [vmem:[%s5] sm:$0xff] %v3758
  %3773 = vst [vmem:[%s5 + $0x8] sm:$0xff] %v3761
  %3774 = vst [vmem:[%s5 + $0x10] sm:$0xff] %v3766
  %3775 = vst [vmem:[%s5 + $0x18] sm:$0xff] %v3769
  // Predicated region
  $region22: #{_lambda_.8} parent=0 // pred_check
    _
  $region23: #{_lambda_.8} parent=0 // pred_check_branch
    %3777 = sbr.rel (0) target = $region25
  $region24: #{_lambda_.8} parent=0 // pred_region
    _
  $region25: #{_lambda_.8} parent=0 // pred_fallthru
    _
  // Predicated region
  $region26: #{_lambda_.8} parent=0 // pred_check
    _
  $region27: #{_lambda_.8} parent=0 // pred_check_branch
    %3779 = sbr.rel (0) target = $region29
  $region28: #{_lambda_.8} parent=0 // pred_region
    _
  $region29: #{_lambda_.8} parent=0 // pred_fallthru
    _

</llo_original>
